<compile_context>
chip_gen: v7x
topology: tpu7x:2x2x1
jax: 0.10.0
libtpu: 0.0.40
codegen_flags: <defaults>
</compile_context>

<pallas_src>
import jax
import jax.numpy as jnp
from jax import lax
from jax.experimental import pallas as pl
from jax.experimental.pallas import tpu as pltpu


def _make_baseblock_kernel(H, W, C):
    """Fused conv1+bn1+relu -> conv2+bn2 -> +identity -> relu for one image."""
    HP, WP = H + 2, W + 2          # extended conv1 domain == zero-padded-h extent
    HW = H * W

    def kernel(x_ref, w1_ref, w2_ref, b1_ref, b2_ref, o_ref, hp_ref):
        # ---- conv1 (+folded BN1) on the (H+2)x(W+2) extended domain ----------
        # 9 accumulating MXU matmuls over the taps (unrolled in-kernel loop; no
        # per-tap grid steps).  f32 accumulation, bf16 operands.
        acc1 = jnp.zeros((HP * WP, C), jnp.float32)
        for t in range(9):
            ky, kx = divmod(t, 3)
            tap = x_ref[0, ky:ky + HP, kx:kx + WP, :].reshape(HP * WP, C)
            acc1 = acc1 + jnp.dot(tap, w1_ref[t],
                                  preferred_element_type=jnp.float32)
        h = jnp.maximum(acc1 + b1_ref[...], 0.0).reshape(HP, WP, C)

        # Zero the 1-px halo -> hp_ref holds exactly zero-pad(relu(bn1(conv1(x)))).
        row = lax.broadcasted_iota(jnp.int32, (HP, WP, C), 0)
        col = lax.broadcasted_iota(jnp.int32, (HP, WP, C), 1)
        interior = (row >= 1) & (row <= H) & (col >= 1) & (col <= W)
        hp_ref[...] = jnp.where(interior, h, 0.0).astype(hp_ref.dtype)

        # ---- conv2 (+folded BN2) + residual + ReLU on the HxW interior --------
        acc2 = jnp.zeros((HW, C), jnp.float32)
        for t in range(9):
            ky, kx = divmod(t, 3)
            tap = hp_ref[ky:ky + H, kx:kx + W, :].reshape(HW, C)
            acc2 = acc2 + jnp.dot(tap, w2_ref[t],
                                  preferred_element_type=jnp.float32)
        identity = x_ref[0, 2:2 + H, 2:2 + W, :].reshape(HW, C)
        y = acc2 + b2_ref[...] + identity.astype(jnp.float32)
        o_ref[0] = jnp.maximum(y, 0.0).astype(o_ref.dtype)

    return kernel


def baseblock_pallas(x_nhwc, w1_hwio, w2_hwio, s1, b1, s2, b2):
    """Fused baseblock on NHWC input. stride=1, Cin==Cout, no downsample."""
    N, H, W, C = x_nhwc.shape
    assert w1_hwio.shape == (3, 3, C, C) and w2_hwio.shape == (3, 3, C, C)
    HW = H * W

    # Fold BN scale into the conv weights (conv is linear); keep bias separate.
    w1f = (w1_hwio * s1[None, None, None, :]).reshape(9, C, C).astype(jnp.bfloat16)
    w2f = (w2_hwio * s2[None, None, None, :]).reshape(9, C, C).astype(jnp.bfloat16)
    b1v = b1.reshape(1, C).astype(jnp.float32)
    b2v = b2.reshape(1, C).astype(jnp.float32)

    # Pad spatially by 2: conv1 is evaluated on the (H+2)x(W+2) extended domain so
    # conv2's zero halo falls out of a simple mask.  bf16 halves the input DMA.
    xp = jnp.pad(x_nhwc.astype(jnp.bfloat16), ((0, 0), (2, 2), (2, 2), (0, 0)))

    kernel = _make_baseblock_kernel(H, W, C)

    out = pl.pallas_call(
        kernel,
        out_shape=jax.ShapeDtypeStruct((N, HW, C), x_nhwc.dtype),
        grid_spec=pltpu.PrefetchScalarGridSpec(
            num_scalar_prefetch=0,
            grid=(N,),                        # batch only; taps reduced in-kernel
            in_specs=[
                pl.BlockSpec((1, H + 4, W + 4, C), lambda n: (n, 0, 0, 0)),
                pl.BlockSpec((9, C, C), lambda n: (0, 0, 0)),   # VMEM-resident
                pl.BlockSpec((9, C, C), lambda n: (0, 0, 0)),   # VMEM-resident
                pl.BlockSpec((1, C), lambda n: (0, 0)),
                pl.BlockSpec((1, C), lambda n: (0, 0)),
            ],
            out_specs=pl.BlockSpec((1, HW, C), lambda n: (n, 0, 0)),
            scratch_shapes=[pltpu.VMEM((H + 2, W + 2, C), jnp.bfloat16)],
        ),
        compiler_params=pltpu.CompilerParams(
            dimension_semantics=("parallel",),   # batch across TensorCores (v7x)
        ),
    )(xp, w1f, w2f, b1v, b2v)
    # TODO(synk): for large feature maps (e.g. ResNet stage-1 56x56x64) add an HW
    #             tile axis sized for v7x's 64 MiB VMEM; at these shapes the whole
    #             plane is a few KiB and fits trivially.
    # TODO(synk): with C < 128 the output stores are lane-masked; packing spatial
    #             positions into the lane dim would make them fully dense.
    return out.reshape(N, H, W, C)


def fold_bn(gamma, beta, mean, var, eps=1e-5):
    s = gamma / jnp.sqrt(var + eps)
    return s, beta - mean * s


@jax.jit
def baseblock_forward(x_nchw, w1, w2, s1, b1, s2, b2):
    """Pallas baseblock forward. Input/output in PyTorch NCHW."""
    # TODO(synk): inference-mode (running-stats) BatchNorm only; training-mode
    #             batch statistics and the identity_downsample path are not
    #             implemented.
    x = jnp.transpose(x_nchw, (0, 2, 3, 1))               # NCHW -> NHWC (once)
    y = baseblock_pallas(x, w1, w2, s1, b1, s2, b2)
    return jnp.transpose(y, (0, 3, 1, 2))                 # NHWC -> NCHW (once)


def baseblock_reference(x_nchw, w1, w2, s1, b1, s2, b2):
    """Pure-JAX f32 reference (lax conv) for verification."""
    dn = ("NHWC", "HWIO", "NHWC")
    x = jnp.transpose(x_nchw, (0, 2, 3, 1))
    h = lax.conv_general_dilated(x, w1, (1, 1), "SAME", dimension_numbers=dn)
    h = jnp.maximum(h * s1 + b1, 0.0)
    y = lax.conv_general_dilated(h, w2, (1, 1), "SAME", dimension_numbers=dn)
    y = jnp.maximum(y * s2 + b2 + x, 0.0)
    return jnp.transpose(y, (0, 3, 1, 2))


if __name__ == "__main__":
    key = jax.random.PRNGKey(0)
    ks = jax.random.split(key, 13)

    N, C, H, W = 2, 8, 8, 8  # in_channels == out_channels, stride=1, no downsample

    x = jax.random.normal(ks[0], (N, C, H, W), jnp.float32)

    # Conv weights: init in PyTorch OIHW shape, convert to HWIO for NHWC conv.
    w1_oihw = jax.random.normal(ks[1], (C, C, 3, 3), jnp.float32) * 0.1
    w2_oihw = jax.random.normal(ks[2], (C, C, 3, 3), jnp.float32) * 0.1
    w1 = jnp.transpose(w1_oihw, (2, 3, 1, 0))
    w2 = jnp.transpose(w2_oihw, (2, 3, 1, 0))

    # BatchNorm parameters / running stats (deterministic).
    g1 = jax.random.uniform(ks[3], (C,), jnp.float32, 0.5, 1.5)
    beta1 = jax.random.normal(ks[4], (C,)) * 0.1
    m1 = jax.random.normal(ks[5], (C,)) * 0.1
    v1 = jax.random.uniform(ks[6], (C,), jnp.float32, 0.5, 1.5)
    g2 = jax.random.uniform(ks[7], (C,), jnp.float32, 0.5, 1.5)
    beta2 = jax.random.normal(ks[8], (C,)) * 0.1
    m2 = jax.random.normal(ks[9], (C,)) * 0.1
    v2 = jax.random.uniform(ks[10], (C,), jnp.float32, 0.5, 1.5)

    s1, b1 = fold_bn(g1, beta1, m1, v1)
    s2, b2 = fold_bn(g2, beta2, m2, v2)

    out = baseblock_forward(x, w1, w2, s1, b1, s2, b2)
    out = jax.block_until_ready(out)

    ref = baseblock_reference(x, w1, w2, s1, b1, s2, b2)
    assert out.shape == (N, C, H, W)
    assert jnp.allclose(out, ref, rtol=5e-2, atol=5e-2), "mismatch vs reference"

    print("KERNEL_OK")
</pallas_src>

<mosaic_0001>
module attributes {stable_mosaic.version = 11 : i64} {
  func.func @kernel(%arg0: i32, %arg1: memref<1x12x12x8xbf16, #tpu.memory_space<vmem>>, %arg2: memref<9x8x8xbf16, #tpu.memory_space<vmem>>, %arg3: memref<9x8x8xbf16, #tpu.memory_space<vmem>>, %arg4: memref<1x8xf32, #tpu.memory_space<vmem>>, %arg5: memref<1x8xf32, #tpu.memory_space<vmem>>, %arg6: memref<1x64x8xf32, #tpu.memory_space<vmem>>, %arg7: memref<10x10x8xbf16, #tpu.memory_space<vmem>>) attributes {dimension_semantics = [#tpu.dimension_semantics<parallel>], iteration_bounds = array<i64: 2>, scalar_prefetch = 0 : i64, scratch_operands = 1 : i64, tpu.core_type = #tpu.core_type<tc>, window_params = [{transform_indices = @transform_0, window_bounds = array<i64: 1, 12, 12, 8>}, {pipeline_mode = #tpu.pipeline_mode<synchronous>, transform_indices = @transform_1, window_bounds = array<i64: 9, 8, 8>}, {pipeline_mode = #tpu.pipeline_mode<synchronous>, transform_indices = @transform_2, window_bounds = array<i64: 9, 8, 8>}, {pipeline_mode = #tpu.pipeline_mode<synchronous>, transform_indices = @transform_3, window_bounds = array<i64: 1, 8>}, {pipeline_mode = #tpu.pipeline_mode<synchronous>, transform_indices = @transform_4, window_bounds = array<i64: 1, 8>}, {transform_indices = @transform_5, window_bounds = array<i64: 1, 64, 8>}]} {
    %cst = arith.constant 0.000000e+00 : f32
    %0 = vector.broadcast %cst : f32 to vector<100x8xf32>
    %c0 = arith.constant 0 : index
    %c0_0 = arith.constant 0 : index
    %c0_1 = arith.constant 0 : index
    %c0_2 = arith.constant 0 : index
    %1 = vector.load %arg1[%c0, %c0_0, %c0_1, %c0_2] : memref<1x12x12x8xbf16, #tpu.memory_space<vmem>>, vector<1x10x10x8xbf16>
    %2 = vector.shape_cast %1 : vector<1x10x10x8xbf16> to vector<10x10x8xbf16>
    %3 = vector.shape_cast %2 : vector<10x10x8xbf16> to vector<100x8xbf16>
    %c0_3 = arith.constant 0 : index
    %c0_4 = arith.constant 0 : index
    %c0_5 = arith.constant 0 : index
    %4 = vector.load %arg2[%c0_3, %c0_4, %c0_5] : memref<9x8x8xbf16, #tpu.memory_space<vmem>>, vector<1x8x8xbf16>
    %5 = vector.shape_cast %4 : vector<1x8x8xbf16> to vector<8x8xbf16>
    %cst_6 = arith.constant dense<0.000000e+00> : vector<100x8xf32>
    %6 = tpu.matmul %3, %5, %cst_6 {dimension_numbers = #tpu.dot_dimension_numbers<[1], [0], [0], [1], [0, 0, 1, 1], [], []>} : vector<100x8xbf16>, vector<8x8xbf16>, vector<100x8xf32> -> vector<100x8xf32>
    %7 = arith.addf %0, %6 : vector<100x8xf32>
    %c0_7 = arith.constant 0 : index
    %c0_8 = arith.constant 0 : index
    %c1 = arith.constant 1 : index
    %c0_9 = arith.constant 0 : index
    %8 = vector.load %arg1[%c0_7, %c0_8, %c1, %c0_9] : memref<1x12x12x8xbf16, #tpu.memory_space<vmem>>, vector<1x10x10x8xbf16>
    %9 = vector.shape_cast %8 : vector<1x10x10x8xbf16> to vector<10x10x8xbf16>
    %10 = vector.shape_cast %9 : vector<10x10x8xbf16> to vector<100x8xbf16>
    %c1_10 = arith.constant 1 : index
    %c0_11 = arith.constant 0 : index
    %c0_12 = arith.constant 0 : index
    %11 = vector.load %arg2[%c1_10, %c0_11, %c0_12] : memref<9x8x8xbf16, #tpu.memory_space<vmem>>, vector<1x8x8xbf16>
    %12 = vector.shape_cast %11 : vector<1x8x8xbf16> to vector<8x8xbf16>
    %cst_13 = arith.constant dense<0.000000e+00> : vector<100x8xf32>
    %13 = tpu.matmul %10, %12, %cst_13 {dimension_numbers = #tpu.dot_dimension_numbers<[1], [0], [0], [1], [0, 0, 1, 1], [], []>} : vector<100x8xbf16>, vector<8x8xbf16>, vector<100x8xf32> -> vector<100x8xf32>
    %14 = arith.addf %7, %13 : vector<100x8xf32>
    %c0_14 = arith.constant 0 : index
    %c0_15 = arith.constant 0 : index
    %c2 = arith.constant 2 : index
    %c0_16 = arith.constant 0 : index
    %15 = vector.load %arg1[%c0_14, %c0_15, %c2, %c0_16] : memref<1x12x12x8xbf16, #tpu.memory_space<vmem>>, vector<1x10x10x8xbf16>
    %16 = vector.shape_cast %15 : vector<1x10x10x8xbf16> to vector<10x10x8xbf16>
    %17 = vector.shape_cast %16 : vector<10x10x8xbf16> to vector<100x8xbf16>
    %c2_17 = arith.constant 2 : index
    %c0_18 = arith.constant 0 : index
    %c0_19 = arith.constant 0 : index
    %18 = vector.load %arg2[%c2_17, %c0_18, %c0_19] : memref<9x8x8xbf16, #tpu.memory_space<vmem>>, vector<1x8x8xbf16>
    %19 = vector.shape_cast %18 : vector<1x8x8xbf16> to vector<8x8xbf16>
    %cst_20 = arith.constant dense<0.000000e+00> : vector<100x8xf32>
    %20 = tpu.matmul %17, %19, %cst_20 {dimension_numbers = #tpu.dot_dimension_numbers<[1], [0], [0], [1], [0, 0, 1, 1], [], []>} : vector<100x8xbf16>, vector<8x8xbf16>, vector<100x8xf32> -> vector<100x8xf32>
    %21 = arith.addf %14, %20 : vector<100x8xf32>
    %c0_21 = arith.constant 0 : index
    %c1_22 = arith.constant 1 : index
    %c0_23 = arith.constant 0 : index
    %c0_24 = arith.constant 0 : index
    %22 = vector.load %arg1[%c0_21, %c1_22, %c0_23, %c0_24] : memref<1x12x12x8xbf16, #tpu.memory_space<vmem>>, vector<1x10x10x8xbf16>
    %23 = vector.shape_cast %22 : vector<1x10x10x8xbf16> to vector<10x10x8xbf16>
    %24 = vector.shape_cast %23 : vector<10x10x8xbf16> to vector<100x8xbf16>
    %c3 = arith.constant 3 : index
    %c0_25 = arith.constant 0 : index
    %c0_26 = arith.constant 0 : index
    %25 = vector.load %arg2[%c3, %c0_25, %c0_26] : memref<9x8x8xbf16, #tpu.memory_space<vmem>>, vector<1x8x8xbf16>
    %26 = vector.shape_cast %25 : vector<1x8x8xbf16> to vector<8x8xbf16>
    %cst_27 = arith.constant dense<0.000000e+00> : vector<100x8xf32>
    %27 = tpu.matmul %24, %26, %cst_27 {dimension_numbers = #tpu.dot_dimension_numbers<[1], [0], [0], [1], [0, 0, 1, 1], [], []>} : vector<100x8xbf16>, vector<8x8xbf16>, vector<100x8xf32> -> vector<100x8xf32>
    %28 = arith.addf %21, %27 : vector<100x8xf32>
    %c0_28 = arith.constant 0 : index
    %c1_29 = arith.constant 1 : index
    %c1_30 = arith.constant 1 : index
    %c0_31 = arith.constant 0 : index
    %29 = vector.load %arg1[%c0_28, %c1_29, %c1_30, %c0_31] : memref<1x12x12x8xbf16, #tpu.memory_space<vmem>>, vector<1x10x10x8xbf16>
    %30 = vector.shape_cast %29 : vector<1x10x10x8xbf16> to vector<10x10x8xbf16>
    %31 = vector.shape_cast %30 : vector<10x10x8xbf16> to vector<100x8xbf16>
    %c4 = arith.constant 4 : index
    %c0_32 = arith.constant 0 : index
    %c0_33 = arith.constant 0 : index
    %32 = vector.load %arg2[%c4, %c0_32, %c0_33] : memref<9x8x8xbf16, #tpu.memory_space<vmem>>, vector<1x8x8xbf16>
    %33 = vector.shape_cast %32 : vector<1x8x8xbf16> to vector<8x8xbf16>
    %cst_34 = arith.constant dense<0.000000e+00> : vector<100x8xf32>
    %34 = tpu.matmul %31, %33, %cst_34 {dimension_numbers = #tpu.dot_dimension_numbers<[1], [0], [0], [1], [0, 0, 1, 1], [], []>} : vector<100x8xbf16>, vector<8x8xbf16>, vector<100x8xf32> -> vector<100x8xf32>
    %35 = arith.addf %28, %34 : vector<100x8xf32>
    %c0_35 = arith.constant 0 : index
    %c1_36 = arith.constant 1 : index
    %c2_37 = arith.constant 2 : index
    %c0_38 = arith.constant 0 : index
    %36 = vector.load %arg1[%c0_35, %c1_36, %c2_37, %c0_38] : memref<1x12x12x8xbf16, #tpu.memory_space<vmem>>, vector<1x10x10x8xbf16>
    %37 = vector.shape_cast %36 : vector<1x10x10x8xbf16> to vector<10x10x8xbf16>
    %38 = vector.shape_cast %37 : vector<10x10x8xbf16> to vector<100x8xbf16>
    %c5 = arith.constant 5 : index
    %c0_39 = arith.constant 0 : index
    %c0_40 = arith.constant 0 : index
    %39 = vector.load %arg2[%c5, %c0_39, %c0_40] : memref<9x8x8xbf16, #tpu.memory_space<vmem>>, vector<1x8x8xbf16>
    %40 = vector.shape_cast %39 : vector<1x8x8xbf16> to vector<8x8xbf16>
    %cst_41 = arith.constant dense<0.000000e+00> : vector<100x8xf32>
    %41 = tpu.matmul %38, %40, %cst_41 {dimension_numbers = #tpu.dot_dimension_numbers<[1], [0], [0], [1], [0, 0, 1, 1], [], []>} : vector<100x8xbf16>, vector<8x8xbf16>, vector<100x8xf32> -> vector<100x8xf32>
    %42 = arith.addf %35, %41 : vector<100x8xf32>
    %c0_42 = arith.constant 0 : index
    %c2_43 = arith.constant 2 : index
    %c0_44 = arith.constant 0 : index
    %c0_45 = arith.constant 0 : index
    %43 = vector.load %arg1[%c0_42, %c2_43, %c0_44, %c0_45] : memref<1x12x12x8xbf16, #tpu.memory_space<vmem>>, vector<1x10x10x8xbf16>
    %44 = vector.shape_cast %43 : vector<1x10x10x8xbf16> to vector<10x10x8xbf16>
    %45 = vector.shape_cast %44 : vector<10x10x8xbf16> to vector<100x8xbf16>
    %c6 = arith.constant 6 : index
    %c0_46 = arith.constant 0 : index
    %c0_47 = arith.constant 0 : index
    %46 = vector.load %arg2[%c6, %c0_46, %c0_47] : memref<9x8x8xbf16, #tpu.memory_space<vmem>>, vector<1x8x8xbf16>
    %47 = vector.shape_cast %46 : vector<1x8x8xbf16> to vector<8x8xbf16>
    %cst_48 = arith.constant dense<0.000000e+00> : vector<100x8xf32>
    %48 = tpu.matmul %45, %47, %cst_48 {dimension_numbers = #tpu.dot_dimension_numbers<[1], [0], [0], [1], [0, 0, 1, 1], [], []>} : vector<100x8xbf16>, vector<8x8xbf16>, vector<100x8xf32> -> vector<100x8xf32>
    %49 = arith.addf %42, %48 : vector<100x8xf32>
    %c0_49 = arith.constant 0 : index
    %c2_50 = arith.constant 2 : index
    %c1_51 = arith.constant 1 : index
    %c0_52 = arith.constant 0 : index
    %50 = vector.load %arg1[%c0_49, %c2_50, %c1_51, %c0_52] : memref<1x12x12x8xbf16, #tpu.memory_space<vmem>>, vector<1x10x10x8xbf16>
    %51 = vector.shape_cast %50 : vector<1x10x10x8xbf16> to vector<10x10x8xbf16>
    %52 = vector.shape_cast %51 : vector<10x10x8xbf16> to vector<100x8xbf16>
    %c7 = arith.constant 7 : index
    %c0_53 = arith.constant 0 : index
    %c0_54 = arith.constant 0 : index
    %53 = vector.load %arg2[%c7, %c0_53, %c0_54] : memref<9x8x8xbf16, #tpu.memory_space<vmem>>, vector<1x8x8xbf16>
    %54 = vector.shape_cast %53 : vector<1x8x8xbf16> to vector<8x8xbf16>
    %cst_55 = arith.constant dense<0.000000e+00> : vector<100x8xf32>
    %55 = tpu.matmul %52, %54, %cst_55 {dimension_numbers = #tpu.dot_dimension_numbers<[1], [0], [0], [1], [0, 0, 1, 1], [], []>} : vector<100x8xbf16>, vector<8x8xbf16>, vector<100x8xf32> -> vector<100x8xf32>
    %56 = arith.addf %49, %55 : vector<100x8xf32>
    %c0_56 = arith.constant 0 : index
    %c2_57 = arith.constant 2 : index
    %c2_58 = arith.constant 2 : index
    %c0_59 = arith.constant 0 : index
    %57 = vector.load %arg1[%c0_56, %c2_57, %c2_58, %c0_59] : memref<1x12x12x8xbf16, #tpu.memory_space<vmem>>, vector<1x10x10x8xbf16>
    %58 = vector.shape_cast %57 : vector<1x10x10x8xbf16> to vector<10x10x8xbf16>
    %59 = vector.shape_cast %58 : vector<10x10x8xbf16> to vector<100x8xbf16>
    %c8 = arith.constant 8 : index
    %c0_60 = arith.constant 0 : index
    %c0_61 = arith.constant 0 : index
    %60 = vector.load %arg2[%c8, %c0_60, %c0_61] : memref<9x8x8xbf16, #tpu.memory_space<vmem>>, vector<1x8x8xbf16>
    %61 = vector.shape_cast %60 : vector<1x8x8xbf16> to vector<8x8xbf16>
    %cst_62 = arith.constant dense<0.000000e+00> : vector<100x8xf32>
    %62 = tpu.matmul %59, %61, %cst_62 {dimension_numbers = #tpu.dot_dimension_numbers<[1], [0], [0], [1], [0, 0, 1, 1], [], []>} : vector<100x8xbf16>, vector<8x8xbf16>, vector<100x8xf32> -> vector<100x8xf32>
    %63 = arith.addf %56, %62 : vector<100x8xf32>
    %c0_63 = arith.constant 0 : index
    %c0_64 = arith.constant 0 : index
    %64 = vector.load %arg4[%c0_63, %c0_64] : memref<1x8xf32, #tpu.memory_space<vmem>>, vector<1x8xf32>
    %65 = vector.broadcast %64 : vector<1x8xf32> to vector<100x8xf32>
    %66 = arith.addf %63, %65 : vector<100x8xf32>
    %cst_65 = arith.constant 0.000000e+00 : f32
    %67 = vector.broadcast %cst_65 : f32 to vector<100x8xf32>
    %68 = arith.maximumf %66, %67 : vector<100x8xf32>
    %69 = vector.shape_cast %68 : vector<100x8xf32> to vector<10x10x8xf32>
    %70 = tpu.iota {dimensions = array<i32: 0>} : vector<10x10x8xi32>
    %71 = tpu.iota {dimensions = array<i32: 1>} : vector<10x10x8xi32>
    %c1_i32 = arith.constant 1 : i32
    %72 = vector.broadcast %c1_i32 : i32 to vector<10x10x8xi32>
    %73 = arith.cmpi sge, %70, %72 : vector<10x10x8xi32>
    %c8_i32 = arith.constant 8 : i32
    %74 = vector.broadcast %c8_i32 : i32 to vector<10x10x8xi32>
    %75 = arith.cmpi sle, %70, %74 : vector<10x10x8xi32>
    %76 = arith.andi %73, %75 : vector<10x10x8xi1>
    %c1_i32_66 = arith.constant 1 : i32
    %77 = vector.broadcast %c1_i32_66 : i32 to vector<10x10x8xi32>
    %78 = arith.cmpi sge, %71, %77 : vector<10x10x8xi32>
    %79 = arith.andi %76, %78 : vector<10x10x8xi1>
    %c8_i32_67 = arith.constant 8 : i32
    %80 = vector.broadcast %c8_i32_67 : i32 to vector<10x10x8xi32>
    %81 = arith.cmpi sle, %71, %80 : vector<10x10x8xi32>
    %82 = arith.andi %79, %81 : vector<10x10x8xi1>
    %cst_68 = arith.constant 0.000000e+00 : f32
    %83 = vector.broadcast %cst_68 : f32 to vector<10x10x8xf32>
    %84 = arith.select %82, %69, %83 : vector<10x10x8xi1>, vector<10x10x8xf32>
    %85 = arith.truncf %84 : vector<10x10x8xf32> to vector<10x10x8xbf16>
    %c0_69 = arith.constant 0 : index
    %c0_70 = arith.constant 0 : index
    %c0_71 = arith.constant 0 : index
    %86 = vector.load %arg7[%c0_69, %c0_70, %c0_71] : memref<10x10x8xbf16, #tpu.memory_space<vmem>>, vector<10x10x8xbf16>
    tpu.vector_store %arg7[%c0_69, %c0_70, %c0_71], %85 {strides = array<i32>} : memref<10x10x8xbf16, #tpu.memory_space<vmem>>, vector<10x10x8xbf16>,
    %cst_72 = arith.constant 0.000000e+00 : f32
    %87 = vector.broadcast %cst_72 : f32 to vector<64x8xf32>
    %c0_73 = arith.constant 0 : index
    %c0_74 = arith.constant 0 : index
    %c0_75 = arith.constant 0 : index
    %88 = vector.load %arg7[%c0_73, %c0_74, %c0_75] : memref<10x10x8xbf16, #tpu.memory_space<vmem>>, vector<8x8x8xbf16>
    %89 = vector.shape_cast %88 : vector<8x8x8xbf16> to vector<64x8xbf16>
    %c0_76 = arith.constant 0 : index
    %c0_77 = arith.constant 0 : index
    %c0_78 = arith.constant 0 : index
    %90 = vector.load %arg3[%c0_76, %c0_77, %c0_78] : memref<9x8x8xbf16, #tpu.memory_space<vmem>>, vector<1x8x8xbf16>
    %91 = vector.shape_cast %90 : vector<1x8x8xbf16> to vector<8x8xbf16>
    %cst_79 = arith.constant dense<0.000000e+00> : vector<64x8xf32>
    %92 = tpu.matmul %89, %91, %cst_79 {dimension_numbers = #tpu.dot_dimension_numbers<[1], [0], [0], [1], [0, 0, 1, 1], [], []>} : vector<64x8xbf16>, vector<8x8xbf16>, vector<64x8xf32> -> vector<64x8xf32>
    %93 = arith.addf %87, %92 : vector<64x8xf32>
    %c0_80 = arith.constant 0 : index
    %c1_81 = arith.constant 1 : index
    %c0_82 = arith.constant 0 : index
    %94 = vector.load %arg7[%c0_80, %c1_81, %c0_82] : memref<10x10x8xbf16, #tpu.memory_space<vmem>>, vector<8x8x8xbf16>
    %95 = vector.shape_cast %94 : vector<8x8x8xbf16> to vector<64x8xbf16>
    %c1_83 = arith.constant 1 : index
    %c0_84 = arith.constant 0 : index
    %c0_85 = arith.constant 0 : index
    %96 = vector.load %arg3[%c1_83, %c0_84, %c0_85] : memref<9x8x8xbf16, #tpu.memory_space<vmem>>, vector<1x8x8xbf16>
    %97 = vector.shape_cast %96 : vector<1x8x8xbf16> to vector<8x8xbf16>
    %cst_86 = arith.constant dense<0.000000e+00> : vector<64x8xf32>
    %98 = tpu.matmul %95, %97, %cst_86 {dimension_numbers = #tpu.dot_dimension_numbers<[1], [0], [0], [1], [0, 0, 1, 1], [], []>} : vector<64x8xbf16>, vector<8x8xbf16>, vector<64x8xf32> -> vector<64x8xf32>
    %99 = arith.addf %93, %98 : vector<64x8xf32>
    %c0_87 = arith.constant 0 : index
    %c2_88 = arith.constant 2 : index
    %c0_89 = arith.constant 0 : index
    %100 = vector.load %arg7[%c0_87, %c2_88, %c0_89] : memref<10x10x8xbf16, #tpu.memory_space<vmem>>, vector<8x8x8xbf16>
    %101 = vector.shape_cast %100 : vector<8x8x8xbf16> to vector<64x8xbf16>
    %c2_90 = arith.constant 2 : index
    %c0_91 = arith.constant 0 : index
    %c0_92 = arith.constant 0 : index
    %102 = vector.load %arg3[%c2_90, %c0_91, %c0_92] : memref<9x8x8xbf16, #tpu.memory_space<vmem>>, vector<1x8x8xbf16>
    %103 = vector.shape_cast %102 : vector<1x8x8xbf16> to vector<8x8xbf16>
    %cst_93 = arith.constant dense<0.000000e+00> : vector<64x8xf32>
    %104 = tpu.matmul %101, %103, %cst_93 {dimension_numbers = #tpu.dot_dimension_numbers<[1], [0], [0], [1], [0, 0, 1, 1], [], []>} : vector<64x8xbf16>, vector<8x8xbf16>, vector<64x8xf32> -> vector<64x8xf32>
    %105 = arith.addf %99, %104 : vector<64x8xf32>
    %c1_94 = arith.constant 1 : index
    %c0_95 = arith.constant 0 : index
    %c0_96 = arith.constant 0 : index
    %106 = vector.load %arg7[%c1_94, %c0_95, %c0_96] : memref<10x10x8xbf16, #tpu.memory_space<vmem>>, vector<8x8x8xbf16>
    %107 = vector.shape_cast %106 : vector<8x8x8xbf16> to vector<64x8xbf16>
    %c3_97 = arith.constant 3 : index
    %c0_98 = arith.constant 0 : index
    %c0_99 = arith.constant 0 : index
    %108 = vector.load %arg3[%c3_97, %c0_98, %c0_99] : memref<9x8x8xbf16, #tpu.memory_space<vmem>>, vector<1x8x8xbf16>
    %109 = vector.shape_cast %108 : vector<1x8x8xbf16> to vector<8x8xbf16>
    %cst_100 = arith.constant dense<0.000000e+00> : vector<64x8xf32>
    %110 = tpu.matmul %107, %109, %cst_100 {dimension_numbers = #tpu.dot_dimension_numbers<[1], [0], [0], [1], [0, 0, 1, 1], [], []>} : vector<64x8xbf16>, vector<8x8xbf16>, vector<64x8xf32> -> vector<64x8xf32>
    %111 = arith.addf %105, %110 : vector<64x8xf32>
    %c1_101 = arith.constant 1 : index
    %c1_102 = arith.constant 1 : index
    %c0_103 = arith.constant 0 : index
    %112 = vector.load %arg7[%c1_101, %c1_102, %c0_103] : memref<10x10x8xbf16, #tpu.memory_space<vmem>>, vector<8x8x8xbf16>
    %113 = vector.shape_cast %112 : vector<8x8x8xbf16> to vector<64x8xbf16>
    %c4_104 = arith.constant 4 : index
    %c0_105 = arith.constant 0 : index
    %c0_106 = arith.constant 0 : index
    %114 = vector.load %arg3[%c4_104, %c0_105, %c0_106] : memref<9x8x8xbf16, #tpu.memory_space<vmem>>, vector<1x8x8xbf16>
    %115 = vector.shape_cast %114 : vector<1x8x8xbf16> to vector<8x8xbf16>
    %cst_107 = arith.constant dense<0.000000e+00> : vector<64x8xf32>
    %116 = tpu.matmul %113, %115, %cst_107 {dimension_numbers = #tpu.dot_dimension_numbers<[1], [0], [0], [1], [0, 0, 1, 1], [], []>} : vector<64x8xbf16>, vector<8x8xbf16>, vector<64x8xf32> -> vector<64x8xf32>
    %117 = arith.addf %111, %116 : vector<64x8xf32>
    %c1_108 = arith.constant 1 : index
    %c2_109 = arith.constant 2 : index
    %c0_110 = arith.constant 0 : index
    %118 = vector.load %arg7[%c1_108, %c2_109, %c0_110] : memref<10x10x8xbf16, #tpu.memory_space<vmem>>, vector<8x8x8xbf16>
    %119 = vector.shape_cast %118 : vector<8x8x8xbf16> to vector<64x8xbf16>
    %c5_111 = arith.constant 5 : index
    %c0_112 = arith.constant 0 : index
    %c0_113 = arith.constant 0 : index
    %120 = vector.load %arg3[%c5_111, %c0_112, %c0_113] : memref<9x8x8xbf16, #tpu.memory_space<vmem>>, vector<1x8x8xbf16>
    %121 = vector.shape_cast %120 : vector<1x8x8xbf16> to vector<8x8xbf16>
    %cst_114 = arith.constant dense<0.000000e+00> : vector<64x8xf32>
    %122 = tpu.matmul %119, %121, %cst_114 {dimension_numbers = #tpu.dot_dimension_numbers<[1], [0], [0], [1], [0, 0, 1, 1], [], []>} : vector<64x8xbf16>, vector<8x8xbf16>, vector<64x8xf32> -> vector<64x8xf32>
    %123 = arith.addf %117, %122 : vector<64x8xf32>
    %c2_115 = arith.constant 2 : index
    %c0_116 = arith.constant 0 : index
    %c0_117 = arith.constant 0 : index
    %124 = vector.load %arg7[%c2_115, %c0_116, %c0_117] : memref<10x10x8xbf16, #tpu.memory_space<vmem>>, vector<8x8x8xbf16>
    %125 = vector.shape_cast %124 : vector<8x8x8xbf16> to vector<64x8xbf16>
    %c6_118 = arith.constant 6 : index
    %c0_119 = arith.constant 0 : index
    %c0_120 = arith.constant 0 : index
    %126 = vector.load %arg3[%c6_118, %c0_119, %c0_120] : memref<9x8x8xbf16, #tpu.memory_space<vmem>>, vector<1x8x8xbf16>
    %127 = vector.shape_cast %126 : vector<1x8x8xbf16> to vector<8x8xbf16>
    %cst_121 = arith.constant dense<0.000000e+00> : vector<64x8xf32>
    %128 = tpu.matmul %125, %127, %cst_121 {dimension_numbers = #tpu.dot_dimension_numbers<[1], [0], [0], [1], [0, 0, 1, 1], [], []>} : vector<64x8xbf16>, vector<8x8xbf16>, vector<64x8xf32> -> vector<64x8xf32>
    %129 = arith.addf %123, %128 : vector<64x8xf32>
    %c2_122 = arith.constant 2 : index
    %c1_123 = arith.constant 1 : index
    %c0_124 = arith.constant 0 : index
    %130 = vector.load %arg7[%c2_122, %c1_123, %c0_124] : memref<10x10x8xbf16, #tpu.memory_space<vmem>>, vector<8x8x8xbf16>
    %131 = vector.shape_cast %130 : vector<8x8x8xbf16> to vector<64x8xbf16>
    %c7_125 = arith.constant 7 : index
    %c0_126 = arith.constant 0 : index
    %c0_127 = arith.constant 0 : index
    %132 = vector.load %arg3[%c7_125, %c0_126, %c0_127] : memref<9x8x8xbf16, #tpu.memory_space<vmem>>, vector<1x8x8xbf16>
    %133 = vector.shape_cast %132 : vector<1x8x8xbf16> to vector<8x8xbf16>
    %cst_128 = arith.constant dense<0.000000e+00> : vector<64x8xf32>
    %134 = tpu.matmul %131, %133, %cst_128 {dimension_numbers = #tpu.dot_dimension_numbers<[1], [0], [0], [1], [0, 0, 1, 1], [], []>} : vector<64x8xbf16>, vector<8x8xbf16>, vector<64x8xf32> -> vector<64x8xf32>
    %135 = arith.addf %129, %134 : vector<64x8xf32>
    %c2_129 = arith.constant 2 : index
    %c2_130 = arith.constant 2 : index
    %c0_131 = arith.constant 0 : index
    %136 = vector.load %arg7[%c2_129, %c2_130, %c0_131] : memref<10x10x8xbf16, #tpu.memory_space<vmem>>, vector<8x8x8xbf16>
    %137 = vector.shape_cast %136 : vector<8x8x8xbf16> to vector<64x8xbf16>
    %c8_132 = arith.constant 8 : index
    %c0_133 = arith.constant 0 : index
    %c0_134 = arith.constant 0 : index
    %138 = vector.load %arg3[%c8_132, %c0_133, %c0_134] : memref<9x8x8xbf16, #tpu.memory_space<vmem>>, vector<1x8x8xbf16>
    %139 = vector.shape_cast %138 : vector<1x8x8xbf16> to vector<8x8xbf16>
    %cst_135 = arith.constant dense<0.000000e+00> : vector<64x8xf32>
    %140 = tpu.matmul %137, %139, %cst_135 {dimension_numbers = #tpu.dot_dimension_numbers<[1], [0], [0], [1], [0, 0, 1, 1], [], []>} : vector<64x8xbf16>, vector<8x8xbf16>, vector<64x8xf32> -> vector<64x8xf32>
    %141 = arith.addf %135, %140 : vector<64x8xf32>
    %c0_136 = arith.constant 0 : index
    %c2_137 = arith.constant 2 : index
    %c2_138 = arith.constant 2 : index
    %c0_139 = arith.constant 0 : index
    %142 = vector.load %arg1[%c0_136, %c2_137, %c2_138, %c0_139] : memref<1x12x12x8xbf16, #tpu.memory_space<vmem>>, vector<1x8x8x8xbf16>
    %143 = vector.shape_cast %142 : vector<1x8x8x8xbf16> to vector<8x8x8xbf16>
    %144 = vector.shape_cast %143 : vector<8x8x8xbf16> to vector<64x8xbf16>
    %c0_140 = arith.constant 0 : index
    %c0_141 = arith.constant 0 : index
    %145 = vector.load %arg5[%c0_140, %c0_141] : memref<1x8xf32, #tpu.memory_space<vmem>>, vector<1x8xf32>
    %146 = vector.broadcast %145 : vector<1x8xf32> to vector<64x8xf32>
    %147 = arith.addf %141, %146 : vector<64x8xf32>
    %148 = arith.extf %144 : vector<64x8xbf16> to vector<64x8xf32>
    %149 = arith.addf %147, %148 : vector<64x8xf32>
    %cst_142 = arith.constant 0.000000e+00 : f32
    %150 = vector.broadcast %cst_142 : f32 to vector<64x8xf32>
    %151 = arith.maximumf %149, %150 : vector<64x8xf32>
    %c0_143 = arith.constant 0 : index
    %c0_144 = arith.constant 0 : index
    %c0_145 = arith.constant 0 : index
    %152 = vector.load %arg6[%c0_143, %c0_144, %c0_145] : memref<1x64x8xf32, #tpu.memory_space<vmem>>, vector<1x64x8xf32>
    %153 = vector.shape_cast %152 : vector<1x64x8xf32> to vector<64x8xf32>
    %154 = vector.shape_cast %151 : vector<64x8xf32> to vector<1x64x8xf32>
    tpu.vector_store %arg6[%c0_143, %c0_144, %c0_145], %154 {strides = array<i32>} : memref<1x64x8xf32, #tpu.memory_space<vmem>>, vector<1x64x8xf32>,
    return
  }
  func.func @transform_0(%arg0: i32) -> (i32, i32, i32, i32) {
    %c0_i32 = arith.constant 0 : i32
    %c0_i32_0 = arith.constant 0 : i32
    %c0_i32_1 = arith.constant 0 : i32
    %c0_i32_2 = arith.constant 0 : i32
    return %arg0, %c0_i32, %c0_i32_0, %c0_i32_1 : i32, i32, i32, i32
  }
  func.func @transform_1(%arg0: i32) -> (i32, i32, i32) {
    %c0_i32 = arith.constant 0 : i32
    %c0_i32_0 = arith.constant 0 : i32
    %c0_i32_1 = arith.constant 0 : i32
    %c0_i32_2 = arith.constant 0 : i32
    return %c0_i32, %c0_i32_0, %c0_i32_1 : i32, i32, i32
  }
  func.func @transform_2(%arg0: i32) -> (i32, i32, i32) {
    %c0_i32 = arith.constant 0 : i32
    %c0_i32_0 = arith.constant 0 : i32
    %c0_i32_1 = arith.constant 0 : i32
    %c0_i32_2 = arith.constant 0 : i32
    return %c0_i32, %c0_i32_0, %c0_i32_1 : i32, i32, i32
  }
  func.func @transform_3(%arg0: i32) -> (i32, i32) {
    %c0_i32 = arith.constant 0 : i32
    %c0_i32_0 = arith.constant 0 : i32
    %c0_i32_1 = arith.constant 0 : i32
    return %c0_i32, %c0_i32_0 : i32, i32
  }
  func.func @transform_4(%arg0: i32) -> (i32, i32) {
    %c0_i32 = arith.constant 0 : i32
    %c0_i32_0 = arith.constant 0 : i32
    %c0_i32_1 = arith.constant 0 : i32
    return %c0_i32, %c0_i32_0 : i32, i32
  }
  func.func @transform_5(%arg0: i32) -> (i32, i32, i32) {
    %c0_i32 = arith.constant 0 : i32
    %c0_i32_0 = arith.constant 0 : i32
    %c0_i32_1 = arith.constant 0 : i32
    return %arg0, %c0_i32, %c0_i32_0 : i32, i32, i32
  }
}

</mosaic_0001>

<llo_original>
// kernel: baseblock_forward.1
$region0: #{baseblock_forward.1}
  #allocation0 [shape = 'u32[]', space=smem, size = 0x4, offset = 0x4, fixed_abs, tag = 'smem constant byte address 0x4 - core index']
  #allocation1 [shape = 'u32[144,128]{1,0:T(1,128)}', space=vmem, size = 0x12000, scoped, tag = 'internal scratch']
  #allocation2 [shape = 'bf16[10,10,8]{2,1,0:T(8,128)(2,1)}', space=vmem, size = 0xa000, scoped, tag = 'scratch operand']
  %s0 = inlined_call_operand.vmem [shape: bf16[2,12,12,8], index: 0, kind: input, shape index: {}]
  %s1 = inlined_call_operand.vmem [shape: bf16[9,8,8], index: 1, kind: input, shape index: {}]
  %s2 = inlined_call_operand.vmem [shape: bf16[9,8,8], index: 2, kind: input, shape index: {}]
  %s3 = inlined_call_operand.vmem [shape: f32[1,8], index: 3, kind: input, shape index: {}]
  %s4 = inlined_call_operand.vmem [shape: f32[1,8], index: 4, kind: input, shape index: {}]
  %s5 = inlined_call_operand.vmem [shape: f32[2,64,8], index: 5, kind: output, shape index: {}]
  %s6 = sld [smem:[#allocation0]]
  $region53: #{baseblock_forward.1} parent=0
    _
  %s8 = ssub.s32 1, %s6
  %s9 = scalar_select 0, %s8, %s6
  loop: start=0, step=1, limit=4
  $region2: #{baseblock_forward.1} parent=0 // loop_pre_header
    _
  $region3: #{baseblock_forward.1} parent=0 // loop_header
    %s11 = sphi 0, %s15
    %p12 = scmp.ge.s32.totalorder %s11, 4
    %s21 = sphi 0, %s23
    %s24 = sphi 0, %s21
    %s25 = sphi 0, %s24
    %s41 = sphi 0, %s25
    %s45 = sphi 0, %s45
    %s47 = sphi 0, %s45
    %s48 = sphi 0, %s47
    %s62 = sphi 0, %s48
    %s66 = sphi 0, %s66
    %s68 = sphi 0, %s66
    %s69 = sphi 0, %s68
    %s83 = sphi 0, %s69
    %s87 = sphi 0, %s87
    %s89 = sphi 0, %s87
    %s90 = sphi 0, %s89
    %s104 = sphi 0, %s90
    %s108 = sphi 0, %s108
    %s110 = sphi 0, %s108
    %s111 = sphi 0, %s110
    %s125 = sphi 0, %s111
    %s131 = sphi 0, %s133
    %s134 = sphi 0, %s131
    %s135 = sphi 0, %s134
    %s151 = sphi 0, %s135
  $region4: #{baseblock_forward.1} parent=0 // loop_header_branch
    %14 = sbr.rel (%p12) target = $region8
  $region5: #{baseblock_forward.1} parent=0 // loop_body
    %s16 = ssub.s32 %s11, 1
    %s17 = ssub.s32 %s11, 2
    %s18 = sadd.s32 %s11, 1
    %s19 = ssub.s32 %s11, %s18
    %p20 = scmp.eq.s32.totalorder %s19, 0
    %s22 = sadd.s32 %s21, 1
    %s23 = scalar_select %p20, %s21, %s22
    %p26 = pneg %p20
    %p27 = scmp.eq.s32.totalorder %s11, 1
    %p28 = por %p26, %p27
    %p29 = scmp.ne.s32.totalorder %s21, %s24
    %p30 = scmp.eq.s32.totalorder %s11, 0
    %p31 = por %p29, %p30
    %p32 = scmp.ne.s32.totalorder %s21, %s24
    %p33 = scmp.eq.s32.totalorder %s16, 1
    %p34 = por %p32, %p33
    %p35 = scmp.ne.s32.totalorder %s24, %s25
    %p36 = scmp.eq.s32.totalorder %s16, 0
    %p37 = por %p35, %p36
    %p38 = scmp.ne.s32.totalorder %s24, %s25
    %p39 = scmp.eq.s32.totalorder %s17, 1
    %p40 = por %p38, %p39
    %p42 = scmp.ne.s32.totalorder %s25, %s41
    %p43 = scmp.eq.s32.totalorder %s17, 0
    %p44 = por %p42, %p43
    %s46 = sadd.s32 %s45, 1
    %p49 = scmp.eq.s32.totalorder %s11, 1
    %p50 = scmp.ne.s32.totalorder %s45, %s47
    %p51 = scmp.eq.s32.totalorder %s11, 0
    %p52 = por %p50, %p51
    %p53 = scmp.ne.s32.totalorder %s45, %s47
    %p54 = scmp.eq.s32.totalorder %s16, 1
    %p55 = por %p53, %p54
    %p56 = scmp.ne.s32.totalorder %s47, %s48
    %p57 = scmp.eq.s32.totalorder %s16, 0
    %p58 = por %p56, %p57
    %p59 = scmp.ne.s32.totalorder %s47, %s48
    %p60 = scmp.eq.s32.totalorder %s17, 1
    %p61 = por %p59, %p60
    %p63 = scmp.ne.s32.totalorder %s48, %s62
    %p64 = scmp.eq.s32.totalorder %s17, 0
    %p65 = por %p63, %p64
    %s67 = sadd.s32 %s66, 1
    %p70 = scmp.eq.s32.totalorder %s11, 1
    %p71 = scmp.ne.s32.totalorder %s66, %s68
    %p72 = scmp.eq.s32.totalorder %s11, 0
    %p73 = por %p71, %p72
    %p74 = scmp.ne.s32.totalorder %s66, %s68
    %p75 = scmp.eq.s32.totalorder %s16, 1
    %p76 = por %p74, %p75
    %p77 = scmp.ne.s32.totalorder %s68, %s69
    %p78 = scmp.eq.s32.totalorder %s16, 0
    %p79 = por %p77, %p78
    %p80 = scmp.ne.s32.totalorder %s68, %s69
    %p81 = scmp.eq.s32.totalorder %s17, 1
    %p82 = por %p80, %p81
    %p84 = scmp.ne.s32.totalorder %s69, %s83
    %p85 = scmp.eq.s32.totalorder %s17, 0
    %p86 = por %p84, %p85
    %s88 = sadd.s32 %s87, 1
    %p91 = scmp.eq.s32.totalorder %s11, 1
    %p92 = scmp.ne.s32.totalorder %s87, %s89
    %p93 = scmp.eq.s32.totalorder %s11, 0
    %p94 = por %p92, %p93
    %p95 = scmp.ne.s32.totalorder %s87, %s89
    %p96 = scmp.eq.s32.totalorder %s16, 1
    %p97 = por %p95, %p96
    %p98 = scmp.ne.s32.totalorder %s89, %s90
    %p99 = scmp.eq.s32.totalorder %s16, 0
    %p100 = por %p98, %p99
    %p101 = scmp.ne.s32.totalorder %s89, %s90
    %p102 = scmp.eq.s32.totalorder %s17, 1
    %p103 = por %p101, %p102
    %p105 = scmp.ne.s32.totalorder %s90, %s104
    %p106 = scmp.eq.s32.totalorder %s17, 0
    %p107 = por %p105, %p106
    %s109 = sadd.s32 %s108, 1
    %p112 = scmp.eq.s32.totalorder %s11, 1
    %p113 = scmp.ne.s32.totalorder %s108, %s110
    %p114 = scmp.eq.s32.totalorder %s11, 0
    %p115 = por %p113, %p114
    %p116 = scmp.ne.s32.totalorder %s108, %s110
    %p117 = scmp.eq.s32.totalorder %s16, 1
    %p118 = por %p116, %p117
    %p119 = scmp.ne.s32.totalorder %s110, %s111
    %p120 = scmp.eq.s32.totalorder %s16, 0
    %p121 = por %p119, %p120
    %p122 = scmp.ne.s32.totalorder %s110, %s111
    %p123 = scmp.eq.s32.totalorder %s17, 1
    %p124 = por %p122, %p123
    %p126 = scmp.ne.s32.totalorder %s111, %s125
    %p127 = scmp.eq.s32.totalorder %s17, 0
    %p128 = por %p126, %p127
    %s129 = ssub.s32 %s11, %s18
    %p130 = scmp.eq.s32.totalorder %s129, 0
    %s132 = sadd.s32 %s131, 1
    %s133 = scalar_select %p130, %s131, %s132
    %p136 = pneg %p130
    %p137 = scmp.eq.s32.totalorder %s11, 1
    %p138 = por %p136, %p137
    %p139 = scmp.ne.s32.totalorder %s131, %s134
    %p140 = scmp.eq.s32.totalorder %s11, 0
    %p141 = por %p139, %p140
    %p142 = scmp.ne.s32.totalorder %s131, %s134
    %p143 = scmp.eq.s32.totalorder %s16, 1
    %p144 = por %p142, %p143
    %p145 = scmp.ne.s32.totalorder %s134, %s135
    %p146 = scmp.eq.s32.totalorder %s16, 0
    %p147 = por %p145, %p146
    %p148 = scmp.ne.s32.totalorder %s134, %s135
    %p149 = scmp.eq.s32.totalorder %s17, 1
    %p150 = por %p148, %p149
    %p152 = scmp.ne.s32.totalorder %s135, %s151
    %p153 = scmp.eq.s32.totalorder %s17, 0
    %p154 = por %p152, %p153
    %p155 = scmp.le.s32.totalorder 1, %s11
    %p156 = scmp.lt.s32.totalorder %s11, 3
    %p157 = pnand %p155, %p156
    %p158 = pneg %p157
    // Predicated region
    $region9: #{baseblock_forward.1} parent=5 // pred_check
      _
    $region10: #{baseblock_forward.1} parent=5 // pred_check_branch
      %160 = sbr.rel (%p157) target = $region12
    $region11: #{baseblock_forward.1} parent=5 // pred_region
      %s161 = ssub.s32 %s11, 1
      // Predicated region
      $region13: #{baseblock_forward.1} parent=11 // pred_check
        %p162 = pneg %p58
      $region14: #{baseblock_forward.1} parent=11 // pred_check_branch
        %164 = sbr.rel (%p162) target = $region16
      $region15: #{baseblock_forward.1} parent=11 // pred_region
        _
      $region16: #{baseblock_forward.1} parent=11 // pred_fallthru
        _
      // Predicated region
      $region17: #{baseblock_forward.1} parent=11 // pred_check
        %p165 = pneg %p79
      $region18: #{baseblock_forward.1} parent=11 // pred_check_branch
        %167 = sbr.rel (%p165) target = $region20
      $region19: #{baseblock_forward.1} parent=11 // pred_region
        _
      $region20: #{baseblock_forward.1} parent=11 // pred_fallthru
        _
      // Predicated region
      $region21: #{baseblock_forward.1} parent=11 // pred_check
        %p168 = pneg %p100
      $region22: #{baseblock_forward.1} parent=11 // pred_check_branch
        %170 = sbr.rel (%p168) target = $region24
      $region23: #{baseblock_forward.1} parent=11 // pred_region
        _
      $region24: #{baseblock_forward.1} parent=11 // pred_fallthru
        _
      // Predicated region
      $region25: #{baseblock_forward.1} parent=11 // pred_check
        %p171 = pneg %p121
      $region26: #{baseblock_forward.1} parent=11 // pred_check_branch
        %173 = sbr.rel (%p171) target = $region28
      $region27: #{baseblock_forward.1} parent=11 // pred_region
        _
      $region28: #{baseblock_forward.1} parent=11 // pred_fallthru
        _
    $region12: #{baseblock_forward.1} parent=5 // pred_fallthru
      _
    %p174 = scmp.lt.s32.totalorder %s11, 2
    // Predicated region
    $region29: #{baseblock_forward.1} parent=5 // pred_check
      %p175 = pneg %p174
    $region30: #{baseblock_forward.1} parent=5 // pred_check_branch
      %177 = sbr.rel (%p175) target = $region32
    $region31: #{baseblock_forward.1} parent=5 // pred_region
      // Predicated region
      $region33: #{baseblock_forward.1} parent=31 // pred_check
        %p178 = pneg %p31
      $region34: #{baseblock_forward.1} parent=31 // pred_check_branch
        %180 = sbr.rel (%p178) target = $region36
      $region35: #{baseblock_forward.1} parent=31 // pred_region
        %p181 = scmp.lt.s32.totalorder %s11, 1
        %s182 = scalar_select %p181, %s11, 1
        %s183 = smul.addr %s182, 24
        %s184 = smul.addr %s183, 4
        %s185 = scalar_lea.vmem %s0, %s184
      $region36: #{baseblock_forward.1} parent=31 // pred_fallthru
        _
    $region32: #{baseblock_forward.1} parent=5 // pred_fallthru
      _
    %p186 = scmp.le.s32.totalorder 1, %s11
    %p187 = scmp.lt.s32.totalorder %s11, 3
    %p188 = pnand %p186, %p187
    %p189 = pneg %p188
    // Predicated region
    $region37: #{baseblock_forward.1} parent=5 // pred_check
      _
    $region38: #{baseblock_forward.1} parent=5 // pred_check_branch
      %191 = sbr.rel (%p188) target = $region40
    $region39: #{baseblock_forward.1} parent=5 // pred_region
      %s192 = ssub.s32 %s11, 1
      %p193 = scmp.lt.s32.totalorder %s16, 1
      %s194 = scalar_select %p193, %s16, 1
      %s195 = smul.addr %s194, 24
      %s196 = smul.addr %s195, 4
      %s197 = scalar_lea.vmem %s0, %s196
      %p198 = pneg %p37
      %p199 = pneg %p34
      %p200 = pneg %p58
      %p201 = pneg %p55
      %p202 = pneg %p79
      %p203 = pneg %p76
      %p204 = pneg %p100
      %p205 = pneg %p97
      %p206 = pneg %p121
      %p207 = pneg %p118
      %p208 = pneg %p147
      %p209 = pneg %p144
      %p210 = scmp.lt.s32.totalorder %s16, 1
      %s211 = scalar_select %p210, %s16, 1
      %s212 = smul.addr %s211, 8
      %s213 = smul.addr %s212, 8
      %s214 = scalar_lea.vmem %s5, %s213
      %p215 = scmp.lt.s32.totalorder %s16, 1
      %s216 = scalar_select %p215, %s16, 1
      %s217 = smul.addr %s216, 24
      %s218 = smul.addr %s217, 4
      %s219 = scalar_lea.vmem %s0, %s218
      %p220 = scmp.lt.s32.totalorder %s16, 1
      %s221 = scalar_select %p220, %s16, 1
      %s222 = smul.addr %s221, 8
      %s223 = smul.addr %s222, 8
      %s224 = scalar_lea.vmem %s5, %s223
      %v226 = vld [vmem:[%s219] sm:$0xf]
      %v227 = vld [vmem:[%s219 + $0x4] sm:$0x1]
      %v228 = vld [vmem:[%s219 + $0x8] sm:$0xf]
      %v229 = vld [vmem:[%s219 + $0xc] sm:$0x1]
      %v230 = vld [vmem:[%s219 + $0x10] sm:$0xf]
      %v231 = vld [vmem:[%s219 + $0x14] sm:$0x1]
      %v232 = vld [vmem:[%s219 + $0x18] sm:$0xf]
      %v233 = vld [vmem:[%s219 + $0x1c] sm:$0x1]
      %v234 = vld [vmem:[%s219 + $0x20] sm:$0xf]
      %v235 = vld [vmem:[%s219 + $0x24] sm:$0x1]
      %v236 = vld [vmem:[%s219 + $0x28] sm:$0xf]
      %v237 = vld [vmem:[%s219 + $0x2c] sm:$0x1]
      %v238 = vld [vmem:[%s219 + $0x30] sm:$0xf]
      %v239 = vld [vmem:[%s219 + $0x34] sm:$0x1]
      %v240 = vld [vmem:[%s219 + $0x38] sm:$0xf]
      %v241 = vld [vmem:[%s219 + $0x3c] sm:$0x1]
      %v242 = vld [vmem:[%s219 + $0x40] sm:$0xf]
      %v243 = vld [vmem:[%s219 + $0x44] sm:$0x1]
      %v244 = vld [vmem:[%s219 + $0x48] sm:$0xf]
      %v245 = vld [vmem:[%s219 + $0x4c] sm:$0x1]
      %v267 = vunpack.c.l.s4 1966171168
      %v268 = vunpack.c.0.s8 %v267
      %v269 = vlaneseq
      %v270 = vshrl.u32 %v269, 7
      %v271 = vsub.s32 %v268, %v270
      %v272 = vrot.slane %v226, %v271
      %v273 = vcombine.high %v272, %v272
      %v275 = vunpack.c.l.s4 1966171168
      %v276 = vunpack.c.0.s8 %v275
      %v277 = vlaneseq
      %v278 = vshrl.u32 %v277, 7
      %v279 = vsub.s32 %v276, %v278
      %v280 = vrot.slane %v272, %v279
      %v282 = vunpack.c.l.s4 1966171168
      %v283 = vunpack.c.0.s8 %v282
      %v284 = vlaneseq
      %v285 = vshrl.u32 %v284, 7
      %v286 = vsub.s32 %v283, %v285
      %v287 = vrot.slane %v273, %v286
      %v288 = vcombine.high %v280, %v280
      %v289 = vcombine.high %v287, %v287
      %v291 = vunpack.c.l.s4 1966171168
      %v292 = vunpack.c.0.s8 %v291
      %v293 = vlaneseq
      %v294 = vshrl.u32 %v293, 7
      %v295 = vsub.s32 %v292, %v294
      %v296 = vrot.slane %v227, %v295
      %v298 = vunpack.c.l.s4 1966171168
      %v299 = vunpack.c.0.s8 %v298
      %v300 = vlaneseq
      %v301 = vshrl.u32 %v300, 7
      %v302 = vsub.s32 %v299, %v301
      %v303 = vrot.slane %v296, %v302
      %v305 = vunpack.c.l.s4 1966171168
      %v306 = vunpack.c.0.s8 %v305
      %v307 = vlaneseq
      %v308 = vshrl.u32 %v307, 7
      %v309 = vsub.s32 %v306, %v308
      %v310 = vrot.slane %v228, %v309
      %v311 = vcombine.high %v310, %v310
      %v313 = vunpack.c.l.s4 1966171168
      %v314 = vunpack.c.0.s8 %v313
      %v315 = vlaneseq
      %v316 = vshrl.u32 %v315, 7
      %v317 = vsub.s32 %v314, %v316
      %v318 = vrot.slane %v310, %v317
      %v320 = vunpack.c.l.s4 1966171168
      %v321 = vunpack.c.0.s8 %v320
      %v322 = vlaneseq
      %v323 = vshrl.u32 %v322, 7
      %v324 = vsub.s32 %v321, %v323
      %v325 = vrot.slane %v311, %v324
      %v326 = vcombine.high %v318, %v318
      %v327 = vcombine.high %v325, %v325
      %v329 = vunpack.c.l.s4 1966171168
      %v330 = vunpack.c.0.s8 %v329
      %v331 = vlaneseq
      %v332 = vshrl.u32 %v331, 7
      %v333 = vsub.s32 %v330, %v332
      %v334 = vrot.slane %v229, %v333
      %v336 = vunpack.c.l.s4 1966171168
      %v337 = vunpack.c.0.s8 %v336
      %v338 = vlaneseq
      %v339 = vshrl.u32 %v338, 7
      %v340 = vsub.s32 %v337, %v339
      %v341 = vrot.slane %v334, %v340
      %v343 = vunpack.c.l.s4 1966171168
      %v344 = vunpack.c.0.s8 %v343
      %v345 = vlaneseq
      %v346 = vshrl.u32 %v345, 7
      %v347 = vsub.s32 %v344, %v346
      %v348 = vrot.slane %v230, %v347
      %v349 = vcombine.high %v348, %v348
      %v351 = vunpack.c.l.s4 1966171168
      %v352 = vunpack.c.0.s8 %v351
      %v353 = vlaneseq
      %v354 = vshrl.u32 %v353, 7
      %v355 = vsub.s32 %v352, %v354
      %v356 = vrot.slane %v348, %v355
      %v358 = vunpack.c.l.s4 1966171168
      %v359 = vunpack.c.0.s8 %v358
      %v360 = vlaneseq
      %v361 = vshrl.u32 %v360, 7
      %v362 = vsub.s32 %v359, %v361
      %v363 = vrot.slane %v349, %v362
      %v364 = vcombine.high %v356, %v356
      %v365 = vcombine.high %v363, %v363
      %v367 = vunpack.c.l.s4 1966171168
      %v368 = vunpack.c.0.s8 %v367
      %v369 = vlaneseq
      %v370 = vshrl.u32 %v369, 7
      %v371 = vsub.s32 %v368, %v370
      %v372 = vrot.slane %v231, %v371
      %v374 = vunpack.c.l.s4 1966171168
      %v375 = vunpack.c.0.s8 %v374
      %v376 = vlaneseq
      %v377 = vshrl.u32 %v376, 7
      %v378 = vsub.s32 %v375, %v377
      %v379 = vrot.slane %v372, %v378
      %v381 = vunpack.c.l.s4 1966171168
      %v382 = vunpack.c.0.s8 %v381
      %v383 = vlaneseq
      %v384 = vshrl.u32 %v383, 7
      %v385 = vsub.s32 %v382, %v384
      %v386 = vrot.slane %v232, %v385
      %v387 = vcombine.high %v386, %v386
      %v389 = vunpack.c.l.s4 1966171168
      %v390 = vunpack.c.0.s8 %v389
      %v391 = vlaneseq
      %v392 = vshrl.u32 %v391, 7
      %v393 = vsub.s32 %v390, %v392
      %v394 = vrot.slane %v386, %v393
      %v396 = vunpack.c.l.s4 1966171168
      %v397 = vunpack.c.0.s8 %v396
      %v398 = vlaneseq
      %v399 = vshrl.u32 %v398, 7
      %v400 = vsub.s32 %v397, %v399
      %v401 = vrot.slane %v387, %v400
      %v402 = vcombine.high %v394, %v394
      %v403 = vcombine.high %v401, %v401
      %v405 = vunpack.c.l.s4 1966171168
      %v406 = vunpack.c.0.s8 %v405
      %v407 = vlaneseq
      %v408 = vshrl.u32 %v407, 7
      %v409 = vsub.s32 %v406, %v408
      %v410 = vrot.slane %v233, %v409
      %v412 = vunpack.c.l.s4 1966171168
      %v413 = vunpack.c.0.s8 %v412
      %v414 = vlaneseq
      %v415 = vshrl.u32 %v414, 7
      %v416 = vsub.s32 %v413, %v415
      %v417 = vrot.slane %v410, %v416
      %v419 = vunpack.c.l.s4 1966171168
      %v420 = vunpack.c.0.s8 %v419
      %v421 = vlaneseq
      %v422 = vshrl.u32 %v421, 7
      %v423 = vsub.s32 %v420, %v422
      %v424 = vrot.slane %v234, %v423
      %v425 = vcombine.high %v424, %v424
      %v427 = vunpack.c.l.s4 1966171168
      %v428 = vunpack.c.0.s8 %v427
      %v429 = vlaneseq
      %v430 = vshrl.u32 %v429, 7
      %v431 = vsub.s32 %v428, %v430
      %v432 = vrot.slane %v424, %v431
      %v434 = vunpack.c.l.s4 1966171168
      %v435 = vunpack.c.0.s8 %v434
      %v436 = vlaneseq
      %v437 = vshrl.u32 %v436, 7
      %v438 = vsub.s32 %v435, %v437
      %v439 = vrot.slane %v425, %v438
      %v440 = vcombine.high %v432, %v432
      %v441 = vcombine.high %v439, %v439
      %v443 = vunpack.c.l.s4 1966171168
      %v444 = vunpack.c.0.s8 %v443
      %v445 = vlaneseq
      %v446 = vshrl.u32 %v445, 7
      %v447 = vsub.s32 %v444, %v446
      %v448 = vrot.slane %v235, %v447
      %v450 = vunpack.c.l.s4 1966171168
      %v451 = vunpack.c.0.s8 %v450
      %v452 = vlaneseq
      %v453 = vshrl.u32 %v452, 7
      %v454 = vsub.s32 %v451, %v453
      %v455 = vrot.slane %v448, %v454
      %v457 = vunpack.c.l.s4 1966171168
      %v458 = vunpack.c.0.s8 %v457
      %v459 = vlaneseq
      %v460 = vshrl.u32 %v459, 7
      %v461 = vsub.s32 %v458, %v460
      %v462 = vrot.slane %v236, %v461
      %v463 = vcombine.high %v462, %v462
      %v465 = vunpack.c.l.s4 1966171168
      %v466 = vunpack.c.0.s8 %v465
      %v467 = vlaneseq
      %v468 = vshrl.u32 %v467, 7
      %v469 = vsub.s32 %v466, %v468
      %v470 = vrot.slane %v462, %v469
      %v472 = vunpack.c.l.s4 1966171168
      %v473 = vunpack.c.0.s8 %v472
      %v474 = vlaneseq
      %v475 = vshrl.u32 %v474, 7
      %v476 = vsub.s32 %v473, %v475
      %v477 = vrot.slane %v463, %v476
      %v478 = vcombine.high %v470, %v470
      %v479 = vcombine.high %v477, %v477
      %v481 = vunpack.c.l.s4 1966171168
      %v482 = vunpack.c.0.s8 %v481
      %v483 = vlaneseq
      %v484 = vshrl.u32 %v483, 7
      %v485 = vsub.s32 %v482, %v484
      %v486 = vrot.slane %v237, %v485
      %v488 = vunpack.c.l.s4 1966171168
      %v489 = vunpack.c.0.s8 %v488
      %v490 = vlaneseq
      %v491 = vshrl.u32 %v490, 7
      %v492 = vsub.s32 %v489, %v491
      %v493 = vrot.slane %v486, %v492
      %v495 = vunpack.c.l.s4 1966171168
      %v496 = vunpack.c.0.s8 %v495
      %v497 = vlaneseq
      %v498 = vshrl.u32 %v497, 7
      %v499 = vsub.s32 %v496, %v498
      %v500 = vrot.slane %v238, %v499
      %v501 = vcombine.high %v500, %v500
      %v503 = vunpack.c.l.s4 1966171168
      %v504 = vunpack.c.0.s8 %v503
      %v505 = vlaneseq
      %v506 = vshrl.u32 %v505, 7
      %v507 = vsub.s32 %v504, %v506
      %v508 = vrot.slane %v500, %v507
      %v510 = vunpack.c.l.s4 1966171168
      %v511 = vunpack.c.0.s8 %v510
      %v512 = vlaneseq
      %v513 = vshrl.u32 %v512, 7
      %v514 = vsub.s32 %v511, %v513
      %v515 = vrot.slane %v501, %v514
      %v516 = vcombine.high %v508, %v508
      %v517 = vcombine.high %v515, %v515
      %v519 = vunpack.c.l.s4 1966171168
      %v520 = vunpack.c.0.s8 %v519
      %v521 = vlaneseq
      %v522 = vshrl.u32 %v521, 7
      %v523 = vsub.s32 %v520, %v522
      %v524 = vrot.slane %v239, %v523
      %v526 = vunpack.c.l.s4 1966171168
      %v527 = vunpack.c.0.s8 %v526
      %v528 = vlaneseq
      %v529 = vshrl.u32 %v528, 7
      %v530 = vsub.s32 %v527, %v529
      %v531 = vrot.slane %v524, %v530
      %v533 = vunpack.c.l.s4 1966171168
      %v534 = vunpack.c.0.s8 %v533
      %v535 = vlaneseq
      %v536 = vshrl.u32 %v535, 7
      %v537 = vsub.s32 %v534, %v536
      %v538 = vrot.slane %v240, %v537
      %v539 = vcombine.high %v538, %v538
      %v541 = vunpack.c.l.s4 1966171168
      %v542 = vunpack.c.0.s8 %v541
      %v543 = vlaneseq
      %v544 = vshrl.u32 %v543, 7
      %v545 = vsub.s32 %v542, %v544
      %v546 = vrot.slane %v538, %v545
      %v548 = vunpack.c.l.s4 1966171168
      %v549 = vunpack.c.0.s8 %v548
      %v550 = vlaneseq
      %v551 = vshrl.u32 %v550, 7
      %v552 = vsub.s32 %v549, %v551
      %v553 = vrot.slane %v539, %v552
      %v554 = vcombine.high %v546, %v546
      %v555 = vcombine.high %v553, %v553
      %v557 = vunpack.c.l.s4 1966171168
      %v558 = vunpack.c.0.s8 %v557
      %v559 = vlaneseq
      %v560 = vshrl.u32 %v559, 7
      %v561 = vsub.s32 %v558, %v560
      %v562 = vrot.slane %v241, %v561
      %v564 = vunpack.c.l.s4 1966171168
      %v565 = vunpack.c.0.s8 %v564
      %v566 = vlaneseq
      %v567 = vshrl.u32 %v566, 7
      %v568 = vsub.s32 %v565, %v567
      %v569 = vrot.slane %v562, %v568
      %v571 = vunpack.c.l.s4 1966171168
      %v572 = vunpack.c.0.s8 %v571
      %v573 = vlaneseq
      %v574 = vshrl.u32 %v573, 7
      %v575 = vsub.s32 %v572, %v574
      %v576 = vrot.slane %v242, %v575
      %v577 = vcombine.high %v576, %v576
      %v579 = vunpack.c.l.s4 1966171168
      %v580 = vunpack.c.0.s8 %v579
      %v581 = vlaneseq
      %v582 = vshrl.u32 %v581, 7
      %v583 = vsub.s32 %v580, %v582
      %v584 = vrot.slane %v576, %v583
      %v586 = vunpack.c.l.s4 1966171168
      %v587 = vunpack.c.0.s8 %v586
      %v588 = vlaneseq
      %v589 = vshrl.u32 %v588, 7
      %v590 = vsub.s32 %v587, %v589
      %v591 = vrot.slane %v577, %v590
      %v592 = vcombine.high %v584, %v584
      %v593 = vcombine.high %v591, %v591
      %v595 = vunpack.c.l.s4 1966171168
      %v596 = vunpack.c.0.s8 %v595
      %v597 = vlaneseq
      %v598 = vshrl.u32 %v597, 7
      %v599 = vsub.s32 %v596, %v598
      %v600 = vrot.slane %v243, %v599
      %v602 = vunpack.c.l.s4 1966171168
      %v603 = vunpack.c.0.s8 %v602
      %v604 = vlaneseq
      %v605 = vshrl.u32 %v604, 7
      %v606 = vsub.s32 %v603, %v605
      %v607 = vrot.slane %v600, %v606
      %v609 = vunpack.c.l.s4 1966171168
      %v610 = vunpack.c.0.s8 %v609
      %v611 = vlaneseq
      %v612 = vshrl.u32 %v611, 7
      %v613 = vsub.s32 %v610, %v612
      %v614 = vrot.slane %v244, %v613
      %v615 = vcombine.high %v614, %v614
      %v617 = vunpack.c.l.s4 1966171168
      %v618 = vunpack.c.0.s8 %v617
      %v619 = vlaneseq
      %v620 = vshrl.u32 %v619, 7
      %v621 = vsub.s32 %v618, %v620
      %v622 = vrot.slane %v614, %v621
      %v624 = vunpack.c.l.s4 1966171168
      %v625 = vunpack.c.0.s8 %v624
      %v626 = vlaneseq
      %v627 = vshrl.u32 %v626, 7
      %v628 = vsub.s32 %v625, %v627
      %v629 = vrot.slane %v615, %v628
      %v630 = vcombine.high %v622, %v622
      %v631 = vcombine.high %v629, %v629
      %v633 = vunpack.c.l.s4 1966171168
      %v634 = vunpack.c.0.s8 %v633
      %v635 = vlaneseq
      %v636 = vshrl.u32 %v635, 7
      %v637 = vsub.s32 %v634, %v636
      %v638 = vrot.slane %v245, %v637
      %v640 = vunpack.c.l.s4 1966171168
      %v641 = vunpack.c.0.s8 %v640
      %v642 = vlaneseq
      %v643 = vshrl.u32 %v642, 7
      %v644 = vsub.s32 %v641, %v643
      %v645 = vrot.slane %v638, %v644
      %v646 = vld [vmem:[%s1] sm:$0xf]
      %v647 = vld [vmem:[%s219 + $0x4] sm:$0x3]
      %v648 = vld [vmem:[%s219 + $0xc] sm:$0x3]
      %v649 = vld [vmem:[%s219 + $0x14] sm:$0x3]
      %v650 = vld [vmem:[%s219 + $0x1c] sm:$0x3]
      %v651 = vld [vmem:[%s219 + $0x24] sm:$0x3]
      %v652 = vld [vmem:[%s219 + $0x2c] sm:$0x3]
      %v653 = vld [vmem:[%s219 + $0x34] sm:$0x3]
      %v654 = vld [vmem:[%s219 + $0x3c] sm:$0x3]
      %v655 = vld [vmem:[%s219 + $0x44] sm:$0x3]
      %v656 = vld [vmem:[%s219 + $0x4c] sm:$0x3]
      %v668 = vunpack.c.l.s4 1966171168
      %v669 = vunpack.c.0.s8 %v668
      %v670 = vlaneseq
      %v671 = vshrl.u32 %v670, 7
      %v672 = vsub.s32 %v669, %v671
      %v673 = vrot.slane %v647, %v672
      %v674 = vcombine.high %v673, %v673
      %v676 = vunpack.c.l.s4 1966171168
      %v677 = vunpack.c.0.s8 %v676
      %v678 = vlaneseq
      %v679 = vshrl.u32 %v678, 7
      %v680 = vsub.s32 %v677, %v679
      %v681 = vrot.slane %v673, %v680
      %v683 = vunpack.c.l.s4 1966171168
      %v684 = vunpack.c.0.s8 %v683
      %v685 = vlaneseq
      %v686 = vshrl.u32 %v685, 7
      %v687 = vsub.s32 %v684, %v686
      %v688 = vrot.slane %v674, %v687
      %v690 = vunpack.c.l.s4 1966171168
      %v691 = vunpack.c.0.s8 %v690
      %v692 = vlaneseq
      %v693 = vshrl.u32 %v692, 7
      %v694 = vsub.s32 %v691, %v693
      %v695 = vrot.slane %v648, %v694
      %v696 = vcombine.high %v695, %v695
      %v698 = vunpack.c.l.s4 1966171168
      %v699 = vunpack.c.0.s8 %v698
      %v700 = vlaneseq
      %v701 = vshrl.u32 %v700, 7
      %v702 = vsub.s32 %v699, %v701
      %v703 = vrot.slane %v695, %v702
      %v705 = vunpack.c.l.s4 1966171168
      %v706 = vunpack.c.0.s8 %v705
      %v707 = vlaneseq
      %v708 = vshrl.u32 %v707, 7
      %v709 = vsub.s32 %v706, %v708
      %v710 = vrot.slane %v696, %v709
      %v712 = vunpack.c.l.s4 1966171168
      %v713 = vunpack.c.0.s8 %v712
      %v714 = vlaneseq
      %v715 = vshrl.u32 %v714, 7
      %v716 = vsub.s32 %v713, %v715
      %v717 = vrot.slane %v649, %v716
      %v718 = vcombine.high %v717, %v717
      %v720 = vunpack.c.l.s4 1966171168
      %v721 = vunpack.c.0.s8 %v720
      %v722 = vlaneseq
      %v723 = vshrl.u32 %v722, 7
      %v724 = vsub.s32 %v721, %v723
      %v725 = vrot.slane %v717, %v724
      %v727 = vunpack.c.l.s4 1966171168
      %v728 = vunpack.c.0.s8 %v727
      %v729 = vlaneseq
      %v730 = vshrl.u32 %v729, 7
      %v731 = vsub.s32 %v728, %v730
      %v732 = vrot.slane %v718, %v731
      %v734 = vunpack.c.l.s4 1966171168
      %v735 = vunpack.c.0.s8 %v734
      %v736 = vlaneseq
      %v737 = vshrl.u32 %v736, 7
      %v738 = vsub.s32 %v735, %v737
      %v739 = vrot.slane %v650, %v738
      %v740 = vcombine.high %v739, %v739
      %v742 = vunpack.c.l.s4 1966171168
      %v743 = vunpack.c.0.s8 %v742
      %v744 = vlaneseq
      %v745 = vshrl.u32 %v744, 7
      %v746 = vsub.s32 %v743, %v745
      %v747 = vrot.slane %v739, %v746
      %v749 = vunpack.c.l.s4 1966171168
      %v750 = vunpack.c.0.s8 %v749
      %v751 = vlaneseq
      %v752 = vshrl.u32 %v751, 7
      %v753 = vsub.s32 %v750, %v752
      %v754 = vrot.slane %v740, %v753
      %v756 = vunpack.c.l.s4 1966171168
      %v757 = vunpack.c.0.s8 %v756
      %v758 = vlaneseq
      %v759 = vshrl.u32 %v758, 7
      %v760 = vsub.s32 %v757, %v759
      %v761 = vrot.slane %v651, %v760
      %v762 = vcombine.high %v761, %v761
      %v764 = vunpack.c.l.s4 1966171168
      %v765 = vunpack.c.0.s8 %v764
      %v766 = vlaneseq
      %v767 = vshrl.u32 %v766, 7
      %v768 = vsub.s32 %v765, %v767
      %v769 = vrot.slane %v761, %v768
      %v771 = vunpack.c.l.s4 1966171168
      %v772 = vunpack.c.0.s8 %v771
      %v773 = vlaneseq
      %v774 = vshrl.u32 %v773, 7
      %v775 = vsub.s32 %v772, %v774
      %v776 = vrot.slane %v762, %v775
      %v778 = vunpack.c.l.s4 1966171168
      %v779 = vunpack.c.0.s8 %v778
      %v780 = vlaneseq
      %v781 = vshrl.u32 %v780, 7
      %v782 = vsub.s32 %v779, %v781
      %v783 = vrot.slane %v652, %v782
      %v784 = vcombine.high %v783, %v783
      %v786 = vunpack.c.l.s4 1966171168
      %v787 = vunpack.c.0.s8 %v786
      %v788 = vlaneseq
      %v789 = vshrl.u32 %v788, 7
      %v790 = vsub.s32 %v787, %v789
      %v791 = vrot.slane %v783, %v790
      %v793 = vunpack.c.l.s4 1966171168
      %v794 = vunpack.c.0.s8 %v793
      %v795 = vlaneseq
      %v796 = vshrl.u32 %v795, 7
      %v797 = vsub.s32 %v794, %v796
      %v798 = vrot.slane %v784, %v797
      %v800 = vunpack.c.l.s4 1966171168
      %v801 = vunpack.c.0.s8 %v800
      %v802 = vlaneseq
      %v803 = vshrl.u32 %v802, 7
      %v804 = vsub.s32 %v801, %v803
      %v805 = vrot.slane %v653, %v804
      %v806 = vcombine.high %v805, %v805
      %v808 = vunpack.c.l.s4 1966171168
      %v809 = vunpack.c.0.s8 %v808
      %v810 = vlaneseq
      %v811 = vshrl.u32 %v810, 7
      %v812 = vsub.s32 %v809, %v811
      %v813 = vrot.slane %v805, %v812
      %v815 = vunpack.c.l.s4 1966171168
      %v816 = vunpack.c.0.s8 %v815
      %v817 = vlaneseq
      %v818 = vshrl.u32 %v817, 7
      %v819 = vsub.s32 %v816, %v818
      %v820 = vrot.slane %v806, %v819
      %v822 = vunpack.c.l.s4 1966171168
      %v823 = vunpack.c.0.s8 %v822
      %v824 = vlaneseq
      %v825 = vshrl.u32 %v824, 7
      %v826 = vsub.s32 %v823, %v825
      %v827 = vrot.slane %v654, %v826
      %v828 = vcombine.high %v827, %v827
      %v830 = vunpack.c.l.s4 1966171168
      %v831 = vunpack.c.0.s8 %v830
      %v832 = vlaneseq
      %v833 = vshrl.u32 %v832, 7
      %v834 = vsub.s32 %v831, %v833
      %v835 = vrot.slane %v827, %v834
      %v837 = vunpack.c.l.s4 1966171168
      %v838 = vunpack.c.0.s8 %v837
      %v839 = vlaneseq
      %v840 = vshrl.u32 %v839, 7
      %v841 = vsub.s32 %v838, %v840
      %v842 = vrot.slane %v828, %v841
      %v844 = vunpack.c.l.s4 1966171168
      %v845 = vunpack.c.0.s8 %v844
      %v846 = vlaneseq
      %v847 = vshrl.u32 %v846, 7
      %v848 = vsub.s32 %v845, %v847
      %v849 = vrot.slane %v655, %v848
      %v850 = vcombine.high %v849, %v849
      %v852 = vunpack.c.l.s4 1966171168
      %v853 = vunpack.c.0.s8 %v852
      %v854 = vlaneseq
      %v855 = vshrl.u32 %v854, 7
      %v856 = vsub.s32 %v853, %v855
      %v857 = vrot.slane %v849, %v856
      %v859 = vunpack.c.l.s4 1966171168
      %v860 = vunpack.c.0.s8 %v859
      %v861 = vlaneseq
      %v862 = vshrl.u32 %v861, 7
      %v863 = vsub.s32 %v860, %v862
      %v864 = vrot.slane %v850, %v863
      %v866 = vunpack.c.l.s4 1966171168
      %v867 = vunpack.c.0.s8 %v866
      %v868 = vlaneseq
      %v869 = vshrl.u32 %v868, 7
      %v870 = vsub.s32 %v867, %v869
      %v871 = vrot.slane %v656, %v870
      %v872 = vcombine.high %v871, %v871
      %v874 = vunpack.c.l.s4 1966171168
      %v875 = vunpack.c.0.s8 %v874
      %v876 = vlaneseq
      %v877 = vshrl.u32 %v876, 7
      %v878 = vsub.s32 %v875, %v877
      %v879 = vrot.slane %v871, %v878
      %v881 = vunpack.c.l.s4 1966171168
      %v882 = vunpack.c.0.s8 %v881
      %v883 = vlaneseq
      %v884 = vshrl.u32 %v883, 7
      %v885 = vsub.s32 %v882, %v884
      %v886 = vrot.slane %v872, %v885
      %vm887 = vsmask.f32 256
      %vm888 = vsmask.f32 1284
      %vm889 = vmor %vm887, %vm888
      %vm890 = vsmask.f32 2312
      %vm891 = vmor %vm889, %vm890
      %vm892 = vsmask.f32 3340
      %vm893 = vmor %vm891, %vm892
      %vm894 = vsmask.f32 4368
      %vm895 = vmor %vm893, %vm894
      %vm896 = vsmask.f32 5396
      %vm897 = vmor %vm895, %vm896
      %vm898 = vsmask.f32 6424
      %vm899 = vmor %vm897, %vm898
      %vm900 = vsmask.f32 7452
      %vm901 = vmor %vm899, %vm900
      %v903 = vshrl.u32 %v280, 16
      %v905 = vrot.slane %v903, 7
      %v906 = vrot.slane %v905, 1
      %v908 = vshll.u32 %v287, 16
      %v910 = vsel %vm901, %v906, %v908
      %v911 = vshrl.u32 %v287, 16
      %v913 = vrot.slane %v911, 7
      %v914 = vrot.slane %v913, 1
      %v916 = vshll.u32 %v288, 16
      %v918 = vsel %vm901, %v914, %v916
      %v919 = vshrl.u32 %v288, 16
      %v921 = vrot.slane %v919, 7
      %v922 = vrot.slane %v921, 1
      %v924 = vshll.u32 %v289, 16
      %v926 = vsel %vm901, %v922, %v924
      %v927 = vshrl.u32 %v289, 16
      %v929 = vrot.slane %v927, 7
      %v930 = vrot.slane %v929, 1
      %v932 = vshll.u32 %v681, 16
      %v934 = vsel %vm901, %v930, %v932
      %v935 = vshrl.u32 %v681, 16
      %v937 = vrot.slane %v935, 7
      %v938 = vrot.slane %v937, 1
      %v940 = vshll.u32 %v688, 16
      %v942 = vsel %vm901, %v938, %v940
      %v944 = vshrl.u32 %v318, 16
      %v946 = vrot.slane %v944, 7
      %v947 = vrot.slane %v946, 1
      %v949 = vshll.u32 %v325, 16
      %v951 = vsel %vm901, %v947, %v949
      %v952 = vshrl.u32 %v325, 16
      %v954 = vrot.slane %v952, 7
      %v955 = vrot.slane %v954, 1
      %v957 = vshll.u32 %v326, 16
      %v959 = vsel %vm901, %v955, %v957
      %v960 = vshrl.u32 %v326, 16
      %v962 = vrot.slane %v960, 7
      %v963 = vrot.slane %v962, 1
      %v965 = vshll.u32 %v327, 16
      %v967 = vsel %vm901, %v963, %v965
      %v968 = vshrl.u32 %v327, 16
      %v970 = vrot.slane %v968, 7
      %v971 = vrot.slane %v970, 1
      %v973 = vshll.u32 %v703, 16
      %v975 = vsel %vm901, %v971, %v973
      %v976 = vshrl.u32 %v703, 16
      %v978 = vrot.slane %v976, 7
      %v979 = vrot.slane %v978, 1
      %v981 = vshll.u32 %v710, 16
      %v983 = vsel %vm901, %v979, %v981
      %v985 = vshrl.u32 %v356, 16
      %v987 = vrot.slane %v985, 7
      %v988 = vrot.slane %v987, 1
      %v990 = vshll.u32 %v363, 16
      %v992 = vsel %vm901, %v988, %v990
      %v993 = vshrl.u32 %v363, 16
      %v995 = vrot.slane %v993, 7
      %v996 = vrot.slane %v995, 1
      %v998 = vshll.u32 %v364, 16
      %v1000 = vsel %vm901, %v996, %v998
      %v1001 = vshrl.u32 %v364, 16
      %v1003 = vrot.slane %v1001, 7
      %v1004 = vrot.slane %v1003, 1
      %v1006 = vshll.u32 %v365, 16
      %v1008 = vsel %vm901, %v1004, %v1006
      %v1009 = vshrl.u32 %v365, 16
      %v1011 = vrot.slane %v1009, 7
      %v1012 = vrot.slane %v1011, 1
      %v1014 = vshll.u32 %v725, 16
      %v1016 = vsel %vm901, %v1012, %v1014
      %v1017 = vshrl.u32 %v725, 16
      %v1019 = vrot.slane %v1017, 7
      %v1020 = vrot.slane %v1019, 1
      %v1022 = vshll.u32 %v732, 16
      %v1024 = vsel %vm901, %v1020, %v1022
      %v1026 = vshrl.u32 %v394, 16
      %v1028 = vrot.slane %v1026, 7
      %v1029 = vrot.slane %v1028, 1
      %v1031 = vshll.u32 %v401, 16
      %v1033 = vsel %vm901, %v1029, %v1031
      %v1034 = vshrl.u32 %v401, 16
      %v1036 = vrot.slane %v1034, 7
      %v1037 = vrot.slane %v1036, 1
      %v1039 = vshll.u32 %v402, 16
      %v1041 = vsel %vm901, %v1037, %v1039
      %v1042 = vshrl.u32 %v402, 16
      %v1044 = vrot.slane %v1042, 7
      %v1045 = vrot.slane %v1044, 1
      %v1047 = vshll.u32 %v403, 16
      %v1049 = vsel %vm901, %v1045, %v1047
      %v1050 = vshrl.u32 %v403, 16
      %v1052 = vrot.slane %v1050, 7
      %v1053 = vrot.slane %v1052, 1
      %v1055 = vshll.u32 %v747, 16
      %v1057 = vsel %vm901, %v1053, %v1055
      %v1058 = vshrl.u32 %v747, 16
      %v1060 = vrot.slane %v1058, 7
      %v1061 = vrot.slane %v1060, 1
      %v1063 = vshll.u32 %v754, 16
      %v1065 = vsel %vm901, %v1061, %v1063
      %v1067 = vshrl.u32 %v432, 16
      %v1069 = vrot.slane %v1067, 7
      %v1070 = vrot.slane %v1069, 1
      %v1072 = vshll.u32 %v439, 16
      %v1074 = vsel %vm901, %v1070, %v1072
      %v1075 = vshrl.u32 %v439, 16
      %v1077 = vrot.slane %v1075, 7
      %v1078 = vrot.slane %v1077, 1
      %v1080 = vshll.u32 %v440, 16
      %v1082 = vsel %vm901, %v1078, %v1080
      %v1083 = vshrl.u32 %v440, 16
      %v1085 = vrot.slane %v1083, 7
      %v1086 = vrot.slane %v1085, 1
      %v1088 = vshll.u32 %v441, 16
      %v1090 = vsel %vm901, %v1086, %v1088
      %v1091 = vshrl.u32 %v441, 16
      %v1093 = vrot.slane %v1091, 7
      %v1094 = vrot.slane %v1093, 1
      %v1096 = vshll.u32 %v769, 16
      %v1098 = vsel %vm901, %v1094, %v1096
      %v1099 = vshrl.u32 %v769, 16
      %v1101 = vrot.slane %v1099, 7
      %v1102 = vrot.slane %v1101, 1
      %v1104 = vshll.u32 %v776, 16
      %v1106 = vsel %vm901, %v1102, %v1104
      %v1108 = vshrl.u32 %v470, 16
      %v1110 = vrot.slane %v1108, 7
      %v1111 = vrot.slane %v1110, 1
      %v1113 = vshll.u32 %v477, 16
      %v1115 = vsel %vm901, %v1111, %v1113
      %v1116 = vshrl.u32 %v477, 16
      %v1118 = vrot.slane %v1116, 7
      %v1119 = vrot.slane %v1118, 1
      %v1121 = vshll.u32 %v478, 16
      %v1123 = vsel %vm901, %v1119, %v1121
      %v1124 = vshrl.u32 %v478, 16
      %v1126 = vrot.slane %v1124, 7
      %v1127 = vrot.slane %v1126, 1
      %v1129 = vshll.u32 %v479, 16
      %v1131 = vsel %vm901, %v1127, %v1129
      %v1132 = vshrl.u32 %v479, 16
      %v1134 = vrot.slane %v1132, 7
      %v1135 = vrot.slane %v1134, 1
      %v1137 = vshll.u32 %v791, 16
      %v1139 = vsel %vm901, %v1135, %v1137
      %v1140 = vshrl.u32 %v791, 16
      %v1142 = vrot.slane %v1140, 7
      %v1143 = vrot.slane %v1142, 1
      %v1145 = vshll.u32 %v798, 16
      %v1147 = vsel %vm901, %v1143, %v1145
      %v1149 = vshrl.u32 %v508, 16
      %v1151 = vrot.slane %v1149, 7
      %v1152 = vrot.slane %v1151, 1
      %v1154 = vshll.u32 %v515, 16
      %v1156 = vsel %vm901, %v1152, %v1154
      %v1157 = vshrl.u32 %v515, 16
      %v1159 = vrot.slane %v1157, 7
      %v1160 = vrot.slane %v1159, 1
      %v1162 = vshll.u32 %v516, 16
      %v1164 = vsel %vm901, %v1160, %v1162
      %v1165 = vshrl.u32 %v516, 16
      %v1167 = vrot.slane %v1165, 7
      %v1168 = vrot.slane %v1167, 1
      %v1170 = vshll.u32 %v517, 16
      %v1172 = vsel %vm901, %v1168, %v1170
      %v1173 = vshrl.u32 %v517, 16
      %v1175 = vrot.slane %v1173, 7
      %v1176 = vrot.slane %v1175, 1
      %v1178 = vshll.u32 %v813, 16
      %v1180 = vsel %vm901, %v1176, %v1178
      %v1181 = vshrl.u32 %v813, 16
      %v1183 = vrot.slane %v1181, 7
      %v1184 = vrot.slane %v1183, 1
      %v1186 = vshll.u32 %v820, 16
      %v1188 = vsel %vm901, %v1184, %v1186
      %v1190 = vshrl.u32 %v546, 16
      %v1192 = vrot.slane %v1190, 7
      %v1193 = vrot.slane %v1192, 1
      %v1195 = vshll.u32 %v553, 16
      %v1197 = vsel %vm901, %v1193, %v1195
      %v1198 = vshrl.u32 %v553, 16
      %v1200 = vrot.slane %v1198, 7
      %v1201 = vrot.slane %v1200, 1
      %v1203 = vshll.u32 %v554, 16
      %v1205 = vsel %vm901, %v1201, %v1203
      %v1206 = vshrl.u32 %v554, 16
      %v1208 = vrot.slane %v1206, 7
      %v1209 = vrot.slane %v1208, 1
      %v1211 = vshll.u32 %v555, 16
      %v1213 = vsel %vm901, %v1209, %v1211
      %v1214 = vshrl.u32 %v555, 16
      %v1216 = vrot.slane %v1214, 7
      %v1217 = vrot.slane %v1216, 1
      %v1219 = vshll.u32 %v835, 16
      %v1221 = vsel %vm901, %v1217, %v1219
      %v1222 = vshrl.u32 %v835, 16
      %v1224 = vrot.slane %v1222, 7
      %v1225 = vrot.slane %v1224, 1
      %v1227 = vshll.u32 %v842, 16
      %v1229 = vsel %vm901, %v1225, %v1227
      %v1231 = vshrl.u32 %v584, 16
      %v1233 = vrot.slane %v1231, 7
      %v1234 = vrot.slane %v1233, 1
      %v1236 = vshll.u32 %v591, 16
      %v1238 = vsel %vm901, %v1234, %v1236
      %v1239 = vshrl.u32 %v591, 16
      %v1241 = vrot.slane %v1239, 7
      %v1242 = vrot.slane %v1241, 1
      %v1244 = vshll.u32 %v592, 16
      %v1246 = vsel %vm901, %v1242, %v1244
      %v1247 = vshrl.u32 %v592, 16
      %v1249 = vrot.slane %v1247, 7
      %v1250 = vrot.slane %v1249, 1
      %v1252 = vshll.u32 %v593, 16
      %v1254 = vsel %vm901, %v1250, %v1252
      %v1255 = vshrl.u32 %v593, 16
      %v1257 = vrot.slane %v1255, 7
      %v1258 = vrot.slane %v1257, 1
      %v1260 = vshll.u32 %v857, 16
      %v1262 = vsel %vm901, %v1258, %v1260
      %v1263 = vshrl.u32 %v857, 16
      %v1265 = vrot.slane %v1263, 7
      %v1266 = vrot.slane %v1265, 1
      %v1268 = vshll.u32 %v864, 16
      %v1270 = vsel %vm901, %v1266, %v1268
      %v1272 = vshrl.u32 %v622, 16
      %v1274 = vrot.slane %v1272, 7
      %v1275 = vrot.slane %v1274, 1
      %v1277 = vshll.u32 %v629, 16
      %v1279 = vsel %vm901, %v1275, %v1277
      %v1280 = vshrl.u32 %v629, 16
      %v1282 = vrot.slane %v1280, 7
      %v1283 = vrot.slane %v1282, 1
      %v1285 = vshll.u32 %v630, 16
      %v1287 = vsel %vm901, %v1283, %v1285
      %v1288 = vshrl.u32 %v630, 16
      %v1290 = vrot.slane %v1288, 7
      %v1291 = vrot.slane %v1290, 1
      %v1293 = vshll.u32 %v631, 16
      %v1295 = vsel %vm901, %v1291, %v1293
      %v1296 = vshrl.u32 %v631, 16
      %v1298 = vrot.slane %v1296, 7
      %v1299 = vrot.slane %v1298, 1
      %v1301 = vshll.u32 %v879, 16
      %v1303 = vsel %vm901, %v1299, %v1301
      %v1304 = vshrl.u32 %v879, 16
      %v1306 = vrot.slane %v1304, 7
      %v1307 = vrot.slane %v1306, 1
      %v1309 = vshll.u32 %v886, 16
      %v1311 = vsel %vm901, %v1307, %v1309
      %s1312 = scalar_lea.vmem %s1, 4
      %v1313 = vld [vmem:[%s1312] sm:$0xf]
      %v1314 = vcombine.low %v910, %v918
      %v1315 = vcombine.low %v926, %v934
      %v1316 = vcombine.low %v942, %v951
      %v1317 = vcombine.low %v959, %v967
      %v1319 = vunpack.c.l.s4 1966171168
      %v1320 = vunpack.c.0.s8 %v1319
      %v1321 = vlaneseq
      %v1322 = vshrl.u32 %v1321, 7
      %v1323 = vsub.s32 %v1320, %v1322
      %v1324 = vrot.slane %v1314, %v1323
      %v1326 = vunpack.c.l.s4 1966171168
      %v1327 = vunpack.c.0.s8 %v1326
      %v1328 = vlaneseq
      %v1329 = vshrl.u32 %v1328, 7
      %v1330 = vsub.s32 %v1327, %v1329
      %v1331 = vrot.slane %v1315, %v1330
      %v1333 = vunpack.c.l.s4 1966171168
      %v1334 = vunpack.c.0.s8 %v1333
      %v1335 = vlaneseq
      %v1336 = vshrl.u32 %v1335, 7
      %v1337 = vsub.s32 %v1334, %v1336
      %v1338 = vrot.slane %v1316, %v1337
      %v1340 = vunpack.c.l.s4 1966171168
      %v1341 = vunpack.c.0.s8 %v1340
      %v1342 = vlaneseq
      %v1343 = vshrl.u32 %v1342, 7
      %v1344 = vsub.s32 %v1341, %v1343
      %v1345 = vrot.slane %v1317, %v1344
      %v1346 = vcombine.low %v1324, %v1331
      %v1347 = vcombine.low %v1338, %v1345
      %v1349 = vunpack.c.l.s4 1966171168
      %v1350 = vunpack.c.0.s8 %v1349
      %v1351 = vlaneseq
      %v1352 = vshrl.u32 %v1351, 7
      %v1353 = vsub.s32 %v1350, %v1352
      %v1354 = vrot.slane %v1346, %v1353
      %v1356 = vunpack.c.l.s4 1966171168
      %v1357 = vunpack.c.0.s8 %v1356
      %v1358 = vlaneseq
      %v1359 = vshrl.u32 %v1358, 7
      %v1360 = vsub.s32 %v1357, %v1359
      %v1361 = vrot.slane %v1347, %v1360
      %v1362 = vcombine.low %v1354, %v1361
      %v1363 = vcombine.low %v975, %v983
      %v1364 = vcombine.low %v992, %v1000
      %v1365 = vcombine.low %v1008, %v1016
      %v1366 = vcombine.low %v1024, %v1033
      %v1368 = vunpack.c.l.s4 1966171168
      %v1369 = vunpack.c.0.s8 %v1368
      %v1370 = vlaneseq
      %v1371 = vshrl.u32 %v1370, 7
      %v1372 = vsub.s32 %v1369, %v1371
      %v1373 = vrot.slane %v1363, %v1372
      %v1375 = vunpack.c.l.s4 1966171168
      %v1376 = vunpack.c.0.s8 %v1375
      %v1377 = vlaneseq
      %v1378 = vshrl.u32 %v1377, 7
      %v1379 = vsub.s32 %v1376, %v1378
      %v1380 = vrot.slane %v1364, %v1379
      %v1382 = vunpack.c.l.s4 1966171168
      %v1383 = vunpack.c.0.s8 %v1382
      %v1384 = vlaneseq
      %v1385 = vshrl.u32 %v1384, 7
      %v1386 = vsub.s32 %v1383, %v1385
      %v1387 = vrot.slane %v1365, %v1386
      %v1389 = vunpack.c.l.s4 1966171168
      %v1390 = vunpack.c.0.s8 %v1389
      %v1391 = vlaneseq
      %v1392 = vshrl.u32 %v1391, 7
      %v1393 = vsub.s32 %v1390, %v1392
      %v1394 = vrot.slane %v1366, %v1393
      %v1395 = vcombine.low %v1373, %v1380
      %v1396 = vcombine.low %v1387, %v1394
      %v1398 = vunpack.c.l.s4 1966171168
      %v1399 = vunpack.c.0.s8 %v1398
      %v1400 = vlaneseq
      %v1401 = vshrl.u32 %v1400, 7
      %v1402 = vsub.s32 %v1399, %v1401
      %v1403 = vrot.slane %v1395, %v1402
      %v1405 = vunpack.c.l.s4 1966171168
      %v1406 = vunpack.c.0.s8 %v1405
      %v1407 = vlaneseq
      %v1408 = vshrl.u32 %v1407, 7
      %v1409 = vsub.s32 %v1406, %v1408
      %v1410 = vrot.slane %v1396, %v1409
      %v1411 = vcombine.low %v1403, %v1410
      %v1412 = vcombine.low %v1041, %v1049
      %v1413 = vcombine.low %v1057, %v1065
      %v1414 = vcombine.low %v1074, %v1082
      %v1415 = vcombine.low %v1090, %v1098
      %v1417 = vunpack.c.l.s4 1966171168
      %v1418 = vunpack.c.0.s8 %v1417
      %v1419 = vlaneseq
      %v1420 = vshrl.u32 %v1419, 7
      %v1421 = vsub.s32 %v1418, %v1420
      %v1422 = vrot.slane %v1412, %v1421
      %v1424 = vunpack.c.l.s4 1966171168
      %v1425 = vunpack.c.0.s8 %v1424
      %v1426 = vlaneseq
      %v1427 = vshrl.u32 %v1426, 7
      %v1428 = vsub.s32 %v1425, %v1427
      %v1429 = vrot.slane %v1413, %v1428
      %v1431 = vunpack.c.l.s4 1966171168
      %v1432 = vunpack.c.0.s8 %v1431
      %v1433 = vlaneseq
      %v1434 = vshrl.u32 %v1433, 7
      %v1435 = vsub.s32 %v1432, %v1434
      %v1436 = vrot.slane %v1414, %v1435
      %v1438 = vunpack.c.l.s4 1966171168
      %v1439 = vunpack.c.0.s8 %v1438
      %v1440 = vlaneseq
      %v1441 = vshrl.u32 %v1440, 7
      %v1442 = vsub.s32 %v1439, %v1441
      %v1443 = vrot.slane %v1415, %v1442
      %v1444 = vcombine.low %v1422, %v1429
      %v1445 = vcombine.low %v1436, %v1443
      %v1447 = vunpack.c.l.s4 1966171168
      %v1448 = vunpack.c.0.s8 %v1447
      %v1449 = vlaneseq
      %v1450 = vshrl.u32 %v1449, 7
      %v1451 = vsub.s32 %v1448, %v1450
      %v1452 = vrot.slane %v1444, %v1451
      %v1454 = vunpack.c.l.s4 1966171168
      %v1455 = vunpack.c.0.s8 %v1454
      %v1456 = vlaneseq
      %v1457 = vshrl.u32 %v1456, 7
      %v1458 = vsub.s32 %v1455, %v1457
      %v1459 = vrot.slane %v1445, %v1458
      %v1460 = vcombine.low %v1452, %v1459
      %v1461 = vcombine.low %v1106, %v1115
      %v1462 = vcombine.low %v1123, %v1131
      %v1463 = vcombine.low %v1139, %v1147
      %v1464 = vcombine.low %v1156, %v1164
      %v1466 = vunpack.c.l.s4 1966171168
      %v1467 = vunpack.c.0.s8 %v1466
      %v1468 = vlaneseq
      %v1469 = vshrl.u32 %v1468, 7
      %v1470 = vsub.s32 %v1467, %v1469
      %v1471 = vrot.slane %v1461, %v1470
      %v1473 = vunpack.c.l.s4 1966171168
      %v1474 = vunpack.c.0.s8 %v1473
      %v1475 = vlaneseq
      %v1476 = vshrl.u32 %v1475, 7
      %v1477 = vsub.s32 %v1474, %v1476
      %v1478 = vrot.slane %v1462, %v1477
      %v1480 = vunpack.c.l.s4 1966171168
      %v1481 = vunpack.c.0.s8 %v1480
      %v1482 = vlaneseq
      %v1483 = vshrl.u32 %v1482, 7
      %v1484 = vsub.s32 %v1481, %v1483
      %v1485 = vrot.slane %v1463, %v1484
      %v1487 = vunpack.c.l.s4 1966171168
      %v1488 = vunpack.c.0.s8 %v1487
      %v1489 = vlaneseq
      %v1490 = vshrl.u32 %v1489, 7
      %v1491 = vsub.s32 %v1488, %v1490
      %v1492 = vrot.slane %v1464, %v1491
      %v1493 = vcombine.low %v1471, %v1478
      %v1494 = vcombine.low %v1485, %v1492
      %v1496 = vunpack.c.l.s4 1966171168
      %v1497 = vunpack.c.0.s8 %v1496
      %v1498 = vlaneseq
      %v1499 = vshrl.u32 %v1498, 7
      %v1500 = vsub.s32 %v1497, %v1499
      %v1501 = vrot.slane %v1493, %v1500
      %v1503 = vunpack.c.l.s4 1966171168
      %v1504 = vunpack.c.0.s8 %v1503
      %v1505 = vlaneseq
      %v1506 = vshrl.u32 %v1505, 7
      %v1507 = vsub.s32 %v1504, %v1506
      %v1508 = vrot.slane %v1494, %v1507
      %v1509 = vcombine.low %v1501, %v1508
      %v1510 = vcombine.low %v1172, %v1180
      %v1511 = vcombine.low %v1188, %v1197
      %v1512 = vcombine.low %v1205, %v1213
      %v1513 = vcombine.low %v1221, %v1229
      %v1515 = vunpack.c.l.s4 1966171168
      %v1516 = vunpack.c.0.s8 %v1515
      %v1517 = vlaneseq
      %v1518 = vshrl.u32 %v1517, 7
      %v1519 = vsub.s32 %v1516, %v1518
      %v1520 = vrot.slane %v1510, %v1519
      %v1522 = vunpack.c.l.s4 1966171168
      %v1523 = vunpack.c.0.s8 %v1522
      %v1524 = vlaneseq
      %v1525 = vshrl.u32 %v1524, 7
      %v1526 = vsub.s32 %v1523, %v1525
      %v1527 = vrot.slane %v1511, %v1526
      %v1529 = vunpack.c.l.s4 1966171168
      %v1530 = vunpack.c.0.s8 %v1529
      %v1531 = vlaneseq
      %v1532 = vshrl.u32 %v1531, 7
      %v1533 = vsub.s32 %v1530, %v1532
      %v1534 = vrot.slane %v1512, %v1533
      %v1536 = vunpack.c.l.s4 1966171168
      %v1537 = vunpack.c.0.s8 %v1536
      %v1538 = vlaneseq
      %v1539 = vshrl.u32 %v1538, 7
      %v1540 = vsub.s32 %v1537, %v1539
      %v1541 = vrot.slane %v1513, %v1540
      %v1542 = vcombine.low %v1520, %v1527
      %v1543 = vcombine.low %v1534, %v1541
      %v1545 = vunpack.c.l.s4 1966171168
      %v1546 = vunpack.c.0.s8 %v1545
      %v1547 = vlaneseq
      %v1548 = vshrl.u32 %v1547, 7
      %v1549 = vsub.s32 %v1546, %v1548
      %v1550 = vrot.slane %v1542, %v1549
      %v1552 = vunpack.c.l.s4 1966171168
      %v1553 = vunpack.c.0.s8 %v1552
      %v1554 = vlaneseq
      %v1555 = vshrl.u32 %v1554, 7
      %v1556 = vsub.s32 %v1553, %v1555
      %v1557 = vrot.slane %v1543, %v1556
      %v1558 = vcombine.low %v1550, %v1557
      %v1559 = vcombine.low %v1238, %v1246
      %v1560 = vcombine.low %v1254, %v1262
      %v1561 = vcombine.low %v1270, %v1279
      %v1562 = vcombine.low %v1287, %v1295
      %v1564 = vunpack.c.l.s4 1966171168
      %v1565 = vunpack.c.0.s8 %v1564
      %v1566 = vlaneseq
      %v1567 = vshrl.u32 %v1566, 7
      %v1568 = vsub.s32 %v1565, %v1567
      %v1569 = vrot.slane %v1559, %v1568
      %v1571 = vunpack.c.l.s4 1966171168
      %v1572 = vunpack.c.0.s8 %v1571
      %v1573 = vlaneseq
      %v1574 = vshrl.u32 %v1573, 7
      %v1575 = vsub.s32 %v1572, %v1574
      %v1576 = vrot.slane %v1560, %v1575
      %v1578 = vunpack.c.l.s4 1966171168
      %v1579 = vunpack.c.0.s8 %v1578
      %v1580 = vlaneseq
      %v1581 = vshrl.u32 %v1580, 7
      %v1582 = vsub.s32 %v1579, %v1581
      %v1583 = vrot.slane %v1561, %v1582
      %v1585 = vunpack.c.l.s4 1966171168
      %v1586 = vunpack.c.0.s8 %v1585
      %v1587 = vlaneseq
      %v1588 = vshrl.u32 %v1587, 7
      %v1589 = vsub.s32 %v1586, %v1588
      %v1590 = vrot.slane %v1562, %v1589
      %v1591 = vcombine.low %v1569, %v1576
      %v1592 = vcombine.low %v1583, %v1590
      %v1594 = vunpack.c.l.s4 1966171168
      %v1595 = vunpack.c.0.s8 %v1594
      %v1596 = vlaneseq
      %v1597 = vshrl.u32 %v1596, 7
      %v1598 = vsub.s32 %v1595, %v1597
      %v1599 = vrot.slane %v1591, %v1598
      %v1601 = vunpack.c.l.s4 1966171168
      %v1602 = vunpack.c.0.s8 %v1601
      %v1603 = vlaneseq
      %v1604 = vshrl.u32 %v1603, 7
      %v1605 = vsub.s32 %v1602, %v1604
      %v1606 = vrot.slane %v1592, %v1605
      %v1607 = vcombine.low %v1599, %v1606
      %v1608 = vcombine.low %v1303, %v1311
      %v1610 = vunpack.c.l.s4 1966171168
      %v1611 = vunpack.c.0.s8 %v1610
      %v1612 = vlaneseq
      %v1613 = vshrl.u32 %v1612, 7
      %v1614 = vsub.s32 %v1611, %v1613
      %v1615 = vrot.slane %v1608, %v1614
      %v1617 = vunpack.c.l.s4 1966171168
      %v1618 = vunpack.c.0.s8 %v1617
      %v1619 = vlaneseq
      %v1620 = vshrl.u32 %v1619, 7
      %v1621 = vsub.s32 %v1618, %v1620
      %v1622 = vrot.slane %v1615, %v1621
      %vm1623 = vcmask 64512
      %v1625 = vsel %vm1623, %v1362, 0
      %v1628 = vsel %vm1623, %v1411, 0
      %v1631 = vsel %vm1623, %v1460, 0
      %v1634 = vsel %vm1623, %v1509, 0
      %v1637 = vsel %vm1623, %v1558, 0
      %v1640 = vsel %vm1623, %v1607, 0
      %v1643 = vsel %vm1623, %v1622, 0
      %vm1645 = vcmask 1043456
      %v1647 = vsel %vm1645, %v1313, 0
      %1649 = vmatprep.subr.bf16.mxu0 0
      %1650 = vmatpush1.bf16.msra.mxu0 %v1647
      %1651 = vmatprep.subr.bf16.mxu0 0
      %1652 = vmatpush1.bf16.msra.mxu0 0
      %1653 = vmatprep.subr.bf16.mxu0 0
      %1654 = vmatpush1.bf16.msra.mxu0 0
      %1655 = vmatprep.subr.bf16.mxu0 0
      %1656 = vmatpush1.bf16.msra.mxu0 0
      %1657 = vmatprep.subr.bf16.mxu0 0
      %1658 = vmatpush1.bf16.msra.mxu0 0
      %1659 = vmatprep.subr.bf16.mxu0 0
      %1660 = vmatpush1.bf16.msra.mxu0 0
      %1661 = vmatprep.subr.bf16.mxu0 0
      %1662 = vmatpush1.bf16.msra.mxu0 0
      %1663 = vmatprep.subr.bf16.mxu0 0
      %1664 = vmatpush1.bf16.msra.mxu0 0
      %1665 = vmatprep.subr.bf16.mxu0 0
      %1666 = vmatpush1.bf16.msra.mxu0 0
      %1667 = vmatprep.subr.bf16.mxu0 0
      %1668 = vmatpush1.bf16.msra.mxu0 0
      %1669 = vmatprep.subr.bf16.mxu0 0
      %1670 = vmatpush1.bf16.msra.mxu0 0
      %1671 = vmatprep.subr.bf16.mxu0 0
      %1672 = vmatpush1.bf16.msra.mxu0 0
      %1673 = vmatprep.subr.bf16.mxu0 0
      %1674 = vmatpush1.bf16.msra.mxu0 0
      %1675 = vmatprep.subr.bf16.mxu0 0
      %1676 = vmatpush1.bf16.msra.mxu0 0
      %1677 = vmatprep.subr.bf16.mxu0 0
      %1678 = vmatpush1.bf16.msra.mxu0 0
      %1679 = vmatprep.subr.bf16.mxu0 0
      %1680 = vmatpush1.bf16.msra.mxu0 0
      %1681 = vmatprep.mubr.bf16.mxu0 0
      %1682 = vmatmul.mubr.bf16.gmra.mrb[0].mxu0 %v1625
      %v1683 = vpop.f32.mrb[0].mxu0
      %v1684 = vadd.f32 0.0, %v1683
      %v1685 = vpop.f32.mrb[0].mxu0
      %v1686 = vpop.f32.mrb[0].mxu0
      %v1687 = vadd.f32 0.0, %v1686
      %v1688 = vpop.f32.mrb[0].mxu0
      %1689 = vmatprep.mubr.bf16.mxu0 0
      %1690 = vmatmul.mubr.bf16.gmra.mrb[0].mxu0 %v1628
      %v1691 = vpop.f32.mrb[0].mxu0
      %v1692 = vadd.f32 0.0, %v1691
      %v1693 = vpop.f32.mrb[0].mxu0
      %v1694 = vpop.f32.mrb[0].mxu0
      %v1695 = vadd.f32 0.0, %v1694
      %v1696 = vpop.f32.mrb[0].mxu0
      %1697 = vmatprep.mubr.bf16.mxu0 0
      %1698 = vmatmul.mubr.bf16.gmra.mrb[0].mxu0 %v1631
      %v1699 = vpop.f32.mrb[0].mxu0
      %v1700 = vadd.f32 0.0, %v1699
      %v1701 = vpop.f32.mrb[0].mxu0
      %v1702 = vpop.f32.mrb[0].mxu0
      %v1703 = vadd.f32 0.0, %v1702
      %v1704 = vpop.f32.mrb[0].mxu0
      %1705 = vmatprep.mubr.bf16.mxu0 0
      %1706 = vmatmul.mubr.bf16.gmra.mrb[0].mxu0 %v1634
      %v1707 = vpop.f32.mrb[0].mxu0
      %v1708 = vadd.f32 0.0, %v1707
      %v1709 = vpop.f32.mrb[0].mxu0
      %v1710 = vpop.f32.mrb[0].mxu0
      %v1711 = vadd.f32 0.0, %v1710
      %v1712 = vpop.f32.mrb[0].mxu0
      %1713 = vmatprep.mubr.bf16.mxu0 0
      %1714 = vmatmul.mubr.bf16.gmra.mrb[0].mxu0 %v1637
      %v1715 = vpop.f32.mrb[0].mxu0
      %v1716 = vadd.f32 0.0, %v1715
      %v1717 = vpop.f32.mrb[0].mxu0
      %v1718 = vpop.f32.mrb[0].mxu0
      %v1719 = vadd.f32 0.0, %v1718
      %v1720 = vpop.f32.mrb[0].mxu0
      %1721 = vmatprep.mubr.bf16.mxu0 0
      %1722 = vmatmul.mubr.bf16.gmra.mrb[0].mxu0 %v1640
      %v1723 = vpop.f32.mrb[0].mxu0
      %v1724 = vadd.f32 0.0, %v1723
      %v1725 = vpop.f32.mrb[0].mxu0
      %v1726 = vpop.f32.mrb[0].mxu0
      %v1727 = vadd.f32 0.0, %v1726
      %v1728 = vpop.f32.mrb[0].mxu0
      %1729 = vmatprep.mubr.bf16.mxu0 0
      %1730 = vmatmul.mubr.bf16.gmra.mrb[0].mxu0 %v1643
      %v1731 = vpop.f32.mrb[0].mxu0
      %v1732 = vadd.f32 0.0, %v1731
      %v1733 = vpop.f32.mrb[0].mxu0
      %v1734 = vpop.f32.mrb[0].mxu0
      %v1735 = vpop.f32.mrb[0].mxu0
      %1736 = vdwg.mxu0
      %v1737 = vcombine.low %v280, %v287
      %v1738 = vcombine.low %v288, %v289
      %v1739 = vcombine.low %v303, %v318
      %v1740 = vcombine.low %v325, %v326
      %v1742 = vunpack.c.l.s4 1966171168
      %v1743 = vunpack.c.0.s8 %v1742
      %v1744 = vlaneseq
      %v1745 = vshrl.u32 %v1744, 7
      %v1746 = vsub.s32 %v1743, %v1745
      %v1747 = vrot.slane %v1737, %v1746
      %v1749 = vunpack.c.l.s4 1966171168
      %v1750 = vunpack.c.0.s8 %v1749
      %v1751 = vlaneseq
      %v1752 = vshrl.u32 %v1751, 7
      %v1753 = vsub.s32 %v1750, %v1752
      %v1754 = vrot.slane %v1738, %v1753
      %v1756 = vunpack.c.l.s4 1966171168
      %v1757 = vunpack.c.0.s8 %v1756
      %v1758 = vlaneseq
      %v1759 = vshrl.u32 %v1758, 7
      %v1760 = vsub.s32 %v1757, %v1759
      %v1761 = vrot.slane %v1739, %v1760
      %v1763 = vunpack.c.l.s4 1966171168
      %v1764 = vunpack.c.0.s8 %v1763
      %v1765 = vlaneseq
      %v1766 = vshrl.u32 %v1765, 7
      %v1767 = vsub.s32 %v1764, %v1766
      %v1768 = vrot.slane %v1740, %v1767
      %v1769 = vcombine.low %v1747, %v1754
      %v1770 = vcombine.low %v1761, %v1768
      %v1772 = vunpack.c.l.s4 1966171168
      %v1773 = vunpack.c.0.s8 %v1772
      %v1774 = vlaneseq
      %v1775 = vshrl.u32 %v1774, 7
      %v1776 = vsub.s32 %v1773, %v1775
      %v1777 = vrot.slane %v1769, %v1776
      %v1779 = vunpack.c.l.s4 1966171168
      %v1780 = vunpack.c.0.s8 %v1779
      %v1781 = vlaneseq
      %v1782 = vshrl.u32 %v1781, 7
      %v1783 = vsub.s32 %v1780, %v1782
      %v1784 = vrot.slane %v1770, %v1783
      %v1785 = vcombine.low %v1777, %v1784
      %v1786 = vcombine.low %v327, %v341
      %v1787 = vcombine.low %v356, %v363
      %v1788 = vcombine.low %v364, %v365
      %v1789 = vcombine.low %v379, %v394
      %v1791 = vunpack.c.l.s4 1966171168
      %v1792 = vunpack.c.0.s8 %v1791
      %v1793 = vlaneseq
      %v1794 = vshrl.u32 %v1793, 7
      %v1795 = vsub.s32 %v1792, %v1794
      %v1796 = vrot.slane %v1786, %v1795
      %v1798 = vunpack.c.l.s4 1966171168
      %v1799 = vunpack.c.0.s8 %v1798
      %v1800 = vlaneseq
      %v1801 = vshrl.u32 %v1800, 7
      %v1802 = vsub.s32 %v1799, %v1801
      %v1803 = vrot.slane %v1787, %v1802
      %v1805 = vunpack.c.l.s4 1966171168
      %v1806 = vunpack.c.0.s8 %v1805
      %v1807 = vlaneseq
      %v1808 = vshrl.u32 %v1807, 7
      %v1809 = vsub.s32 %v1806, %v1808
      %v1810 = vrot.slane %v1788, %v1809
      %v1812 = vunpack.c.l.s4 1966171168
      %v1813 = vunpack.c.0.s8 %v1812
      %v1814 = vlaneseq
      %v1815 = vshrl.u32 %v1814, 7
      %v1816 = vsub.s32 %v1813, %v1815
      %v1817 = vrot.slane %v1789, %v1816
      %v1818 = vcombine.low %v1796, %v1803
      %v1819 = vcombine.low %v1810, %v1817
      %v1821 = vunpack.c.l.s4 1966171168
      %v1822 = vunpack.c.0.s8 %v1821
      %v1823 = vlaneseq
      %v1824 = vshrl.u32 %v1823, 7
      %v1825 = vsub.s32 %v1822, %v1824
      %v1826 = vrot.slane %v1818, %v1825
      %v1828 = vunpack.c.l.s4 1966171168
      %v1829 = vunpack.c.0.s8 %v1828
      %v1830 = vlaneseq
      %v1831 = vshrl.u32 %v1830, 7
      %v1832 = vsub.s32 %v1829, %v1831
      %v1833 = vrot.slane %v1819, %v1832
      %v1834 = vcombine.low %v1826, %v1833
      %v1835 = vcombine.low %v401, %v402
      %v1836 = vcombine.low %v403, %v417
      %v1837 = vcombine.low %v432, %v439
      %v1838 = vcombine.low %v440, %v441
      %v1840 = vunpack.c.l.s4 1966171168
      %v1841 = vunpack.c.0.s8 %v1840
      %v1842 = vlaneseq
      %v1843 = vshrl.u32 %v1842, 7
      %v1844 = vsub.s32 %v1841, %v1843
      %v1845 = vrot.slane %v1835, %v1844
      %v1847 = vunpack.c.l.s4 1966171168
      %v1848 = vunpack.c.0.s8 %v1847
      %v1849 = vlaneseq
      %v1850 = vshrl.u32 %v1849, 7
      %v1851 = vsub.s32 %v1848, %v1850
      %v1852 = vrot.slane %v1836, %v1851
      %v1854 = vunpack.c.l.s4 1966171168
      %v1855 = vunpack.c.0.s8 %v1854
      %v1856 = vlaneseq
      %v1857 = vshrl.u32 %v1856, 7
      %v1858 = vsub.s32 %v1855, %v1857
      %v1859 = vrot.slane %v1837, %v1858
      %v1861 = vunpack.c.l.s4 1966171168
      %v1862 = vunpack.c.0.s8 %v1861
      %v1863 = vlaneseq
      %v1864 = vshrl.u32 %v1863, 7
      %v1865 = vsub.s32 %v1862, %v1864
      %v1866 = vrot.slane %v1838, %v1865
      %v1867 = vcombine.low %v1845, %v1852
      %v1868 = vcombine.low %v1859, %v1866
      %v1870 = vunpack.c.l.s4 1966171168
      %v1871 = vunpack.c.0.s8 %v1870
      %v1872 = vlaneseq
      %v1873 = vshrl.u32 %v1872, 7
      %v1874 = vsub.s32 %v1871, %v1873
      %v1875 = vrot.slane %v1867, %v1874
      %v1877 = vunpack.c.l.s4 1966171168
      %v1878 = vunpack.c.0.s8 %v1877
      %v1879 = vlaneseq
      %v1880 = vshrl.u32 %v1879, 7
      %v1881 = vsub.s32 %v1878, %v1880
      %v1882 = vrot.slane %v1868, %v1881
      %v1883 = vcombine.low %v1875, %v1882
      %v1884 = vcombine.low %v455, %v470
      %v1885 = vcombine.low %v477, %v478
      %v1886 = vcombine.low %v479, %v493
      %v1887 = vcombine.low %v508, %v515
      %v1889 = vunpack.c.l.s4 1966171168
      %v1890 = vunpack.c.0.s8 %v1889
      %v1891 = vlaneseq
      %v1892 = vshrl.u32 %v1891, 7
      %v1893 = vsub.s32 %v1890, %v1892
      %v1894 = vrot.slane %v1884, %v1893
      %v1896 = vunpack.c.l.s4 1966171168
      %v1897 = vunpack.c.0.s8 %v1896
      %v1898 = vlaneseq
      %v1899 = vshrl.u32 %v1898, 7
      %v1900 = vsub.s32 %v1897, %v1899
      %v1901 = vrot.slane %v1885, %v1900
      %v1903 = vunpack.c.l.s4 1966171168
      %v1904 = vunpack.c.0.s8 %v1903
      %v1905 = vlaneseq
      %v1906 = vshrl.u32 %v1905, 7
      %v1907 = vsub.s32 %v1904, %v1906
      %v1908 = vrot.slane %v1886, %v1907
      %v1910 = vunpack.c.l.s4 1966171168
      %v1911 = vunpack.c.0.s8 %v1910
      %v1912 = vlaneseq
      %v1913 = vshrl.u32 %v1912, 7
      %v1914 = vsub.s32 %v1911, %v1913
      %v1915 = vrot.slane %v1887, %v1914
      %v1916 = vcombine.low %v1894, %v1901
      %v1917 = vcombine.low %v1908, %v1915
      %v1919 = vunpack.c.l.s4 1966171168
      %v1920 = vunpack.c.0.s8 %v1919
      %v1921 = vlaneseq
      %v1922 = vshrl.u32 %v1921, 7
      %v1923 = vsub.s32 %v1920, %v1922
      %v1924 = vrot.slane %v1916, %v1923
      %v1926 = vunpack.c.l.s4 1966171168
      %v1927 = vunpack.c.0.s8 %v1926
      %v1928 = vlaneseq
      %v1929 = vshrl.u32 %v1928, 7
      %v1930 = vsub.s32 %v1927, %v1929
      %v1931 = vrot.slane %v1917, %v1930
      %v1932 = vcombine.low %v1924, %v1931
      %v1933 = vcombine.low %v516, %v517
      %v1934 = vcombine.low %v531, %v546
      %v1935 = vcombine.low %v553, %v554
      %v1936 = vcombine.low %v555, %v569
      %v1938 = vunpack.c.l.s4 1966171168
      %v1939 = vunpack.c.0.s8 %v1938
      %v1940 = vlaneseq
      %v1941 = vshrl.u32 %v1940, 7
      %v1942 = vsub.s32 %v1939, %v1941
      %v1943 = vrot.slane %v1933, %v1942
      %v1945 = vunpack.c.l.s4 1966171168
      %v1946 = vunpack.c.0.s8 %v1945
      %v1947 = vlaneseq
      %v1948 = vshrl.u32 %v1947, 7
      %v1949 = vsub.s32 %v1946, %v1948
      %v1950 = vrot.slane %v1934, %v1949
      %v1952 = vunpack.c.l.s4 1966171168
      %v1953 = vunpack.c.0.s8 %v1952
      %v1954 = vlaneseq
      %v1955 = vshrl.u32 %v1954, 7
      %v1956 = vsub.s32 %v1953, %v1955
      %v1957 = vrot.slane %v1935, %v1956
      %v1959 = vunpack.c.l.s4 1966171168
      %v1960 = vunpack.c.0.s8 %v1959
      %v1961 = vlaneseq
      %v1962 = vshrl.u32 %v1961, 7
      %v1963 = vsub.s32 %v1960, %v1962
      %v1964 = vrot.slane %v1936, %v1963
      %v1965 = vcombine.low %v1943, %v1950
      %v1966 = vcombine.low %v1957, %v1964
      %v1968 = vunpack.c.l.s4 1966171168
      %v1969 = vunpack.c.0.s8 %v1968
      %v1970 = vlaneseq
      %v1971 = vshrl.u32 %v1970, 7
      %v1972 = vsub.s32 %v1969, %v1971
      %v1973 = vrot.slane %v1965, %v1972
      %v1975 = vunpack.c.l.s4 1966171168
      %v1976 = vunpack.c.0.s8 %v1975
      %v1977 = vlaneseq
      %v1978 = vshrl.u32 %v1977, 7
      %v1979 = vsub.s32 %v1976, %v1978
      %v1980 = vrot.slane %v1966, %v1979
      %v1981 = vcombine.low %v1973, %v1980
      %v1982 = vcombine.low %v584, %v591
      %v1983 = vcombine.low %v592, %v593
      %v1984 = vcombine.low %v607, %v622
      %v1985 = vcombine.low %v629, %v630
      %v1987 = vunpack.c.l.s4 1966171168
      %v1988 = vunpack.c.0.s8 %v1987
      %v1989 = vlaneseq
      %v1990 = vshrl.u32 %v1989, 7
      %v1991 = vsub.s32 %v1988, %v1990
      %v1992 = vrot.slane %v1982, %v1991
      %v1994 = vunpack.c.l.s4 1966171168
      %v1995 = vunpack.c.0.s8 %v1994
      %v1996 = vlaneseq
      %v1997 = vshrl.u32 %v1996, 7
      %v1998 = vsub.s32 %v1995, %v1997
      %v1999 = vrot.slane %v1983, %v1998
      %v2001 = vunpack.c.l.s4 1966171168
      %v2002 = vunpack.c.0.s8 %v2001
      %v2003 = vlaneseq
      %v2004 = vshrl.u32 %v2003, 7
      %v2005 = vsub.s32 %v2002, %v2004
      %v2006 = vrot.slane %v1984, %v2005
      %v2008 = vunpack.c.l.s4 1966171168
      %v2009 = vunpack.c.0.s8 %v2008
      %v2010 = vlaneseq
      %v2011 = vshrl.u32 %v2010, 7
      %v2012 = vsub.s32 %v2009, %v2011
      %v2013 = vrot.slane %v1985, %v2012
      %v2014 = vcombine.low %v1992, %v1999
      %v2015 = vcombine.low %v2006, %v2013
      %v2017 = vunpack.c.l.s4 1966171168
      %v2018 = vunpack.c.0.s8 %v2017
      %v2019 = vlaneseq
      %v2020 = vshrl.u32 %v2019, 7
      %v2021 = vsub.s32 %v2018, %v2020
      %v2022 = vrot.slane %v2014, %v2021
      %v2024 = vunpack.c.l.s4 1966171168
      %v2025 = vunpack.c.0.s8 %v2024
      %v2026 = vlaneseq
      %v2027 = vshrl.u32 %v2026, 7
      %v2028 = vsub.s32 %v2025, %v2027
      %v2029 = vrot.slane %v2015, %v2028
      %v2030 = vcombine.low %v2022, %v2029
      %v2031 = vcombine.low %v631, %v645
      %v2033 = vunpack.c.l.s4 1966171168
      %v2034 = vunpack.c.0.s8 %v2033
      %v2035 = vlaneseq
      %v2036 = vshrl.u32 %v2035, 7
      %v2037 = vsub.s32 %v2034, %v2036
      %v2038 = vrot.slane %v2031, %v2037
      %v2040 = vunpack.c.l.s4 1966171168
      %v2041 = vunpack.c.0.s8 %v2040
      %v2042 = vlaneseq
      %v2043 = vshrl.u32 %v2042, 7
      %v2044 = vsub.s32 %v2041, %v2043
      %v2045 = vrot.slane %v2038, %v2044
      %v2047 = vsel %vm1623, %v1785, 0
      %v2050 = vsel %vm1623, %v1834, 0
      %v2053 = vsel %vm1623, %v1883, 0
      %v2056 = vsel %vm1623, %v1932, 0
      %v2059 = vsel %vm1623, %v1981, 0
      %v2062 = vsel %vm1623, %v2030, 0
      %v2065 = vsel %vm1623, %v2045, 0
      %v2068 = vsel %vm1645, %v646, 0
      %2070 = vmatprep.subr.bf16.mxu0 0
      %2071 = vmatpush1.bf16.msra.mxu0 %v2068
      %2072 = vmatprep.subr.bf16.mxu0 0
      %2073 = vmatpush1.bf16.msra.mxu0 0
      %2074 = vmatprep.subr.bf16.mxu0 0
      %2075 = vmatpush1.bf16.msra.mxu0 0
      %2076 = vmatprep.subr.bf16.mxu0 0
      %2077 = vmatpush1.bf16.msra.mxu0 0
      %2078 = vmatprep.subr.bf16.mxu0 0
      %2079 = vmatpush1.bf16.msra.mxu0 0
      %2080 = vmatprep.subr.bf16.mxu0 0
      %2081 = vmatpush1.bf16.msra.mxu0 0
      %2082 = vmatprep.subr.bf16.mxu0 0
      %2083 = vmatpush1.bf16.msra.mxu0 0
      %2084 = vmatprep.subr.bf16.mxu0 0
      %2085 = vmatpush1.bf16.msra.mxu0 0
      %2086 = vmatprep.subr.bf16.mxu0 0
      %2087 = vmatpush1.bf16.msra.mxu0 0
      %2088 = vmatprep.subr.bf16.mxu0 0
      %2089 = vmatpush1.bf16.msra.mxu0 0
      %2090 = vmatprep.subr.bf16.mxu0 0
      %2091 = vmatpush1.bf16.msra.mxu0 0
      %2092 = vmatprep.subr.bf16.mxu0 0
      %2093 = vmatpush1.bf16.msra.mxu0 0
      %2094 = vmatprep.subr.bf16.mxu0 0
      %2095 = vmatpush1.bf16.msra.mxu0 0
      %2096 = vmatprep.subr.bf16.mxu0 0
      %2097 = vmatpush1.bf16.msra.mxu0 0
      %2098 = vmatprep.subr.bf16.mxu0 0
      %2099 = vmatpush1.bf16.msra.mxu0 0
      %2100 = vmatprep.subr.bf16.mxu0 0
      %2101 = vmatpush1.bf16.msra.mxu0 0
      %2102 = vmatprep.mubr.bf16.mxu0 0
      %2103 = vmatmul.mubr.bf16.gmra.mrb[0].mxu0 %v2047
      %v2104 = vpop.f32.mrb[0].mxu0
      %v2105 = vadd.f32 %v1684, %v2104
      %v2106 = vpop.f32.mrb[0].mxu0
      %v2107 = vpop.f32.mrb[0].mxu0
      %v2108 = vadd.f32 %v1687, %v2107
      %v2109 = vpop.f32.mrb[0].mxu0
      %2110 = vmatprep.mubr.bf16.mxu0 0
      %2111 = vmatmul.mubr.bf16.gmra.mrb[0].mxu0 %v2050
      %v2112 = vpop.f32.mrb[0].mxu0
      %v2113 = vadd.f32 %v1692, %v2112
      %v2114 = vpop.f32.mrb[0].mxu0
      %v2115 = vpop.f32.mrb[0].mxu0
      %v2116 = vadd.f32 %v1695, %v2115
      %v2117 = vpop.f32.mrb[0].mxu0
      %2118 = vmatprep.mubr.bf16.mxu0 0
      %2119 = vmatmul.mubr.bf16.gmra.mrb[0].mxu0 %v2053
      %v2120 = vpop.f32.mrb[0].mxu0
      %v2121 = vadd.f32 %v1700, %v2120
      %v2122 = vpop.f32.mrb[0].mxu0
      %v2123 = vpop.f32.mrb[0].mxu0
      %v2124 = vadd.f32 %v1703, %v2123
      %v2125 = vpop.f32.mrb[0].mxu0
      %2126 = vmatprep.mubr.bf16.mxu0 0
      %2127 = vmatmul.mubr.bf16.gmra.mrb[0].mxu0 %v2056
      %v2128 = vpop.f32.mrb[0].mxu0
      %v2129 = vadd.f32 %v1708, %v2128
      %v2130 = vpop.f32.mrb[0].mxu0
      %v2131 = vpop.f32.mrb[0].mxu0
      %v2132 = vadd.f32 %v1711, %v2131
      %v2133 = vpop.f32.mrb[0].mxu0
      %2134 = vmatprep.mubr.bf16.mxu0 0
      %2135 = vmatmul.mubr.bf16.gmra.mrb[0].mxu0 %v2059
      %v2136 = vpop.f32.mrb[0].mxu0
      %v2137 = vadd.f32 %v1716, %v2136
      %v2138 = vpop.f32.mrb[0].mxu0
      %v2139 = vpop.f32.mrb[0].mxu0
      %v2140 = vadd.f32 %v1719, %v2139
      %v2141 = vpop.f32.mrb[0].mxu0
      %2142 = vmatprep.mubr.bf16.mxu0 0
      %2143 = vmatmul.mubr.bf16.gmra.mrb[0].mxu0 %v2062
      %v2144 = vpop.f32.mrb[0].mxu0
      %v2145 = vadd.f32 %v1724, %v2144
      %v2146 = vpop.f32.mrb[0].mxu0
      %v2147 = vpop.f32.mrb[0].mxu0
      %v2148 = vadd.f32 %v1727, %v2147
      %v2149 = vpop.f32.mrb[0].mxu0
      %2150 = vmatprep.mubr.bf16.mxu0 0
      %2151 = vmatmul.mubr.bf16.gmra.mrb[0].mxu0 %v2065
      %v2152 = vpop.f32.mrb[0].mxu0
      %v2153 = vadd.f32 %v1732, %v2152
      %v2154 = vpop.f32.mrb[0].mxu0
      %v2155 = vpop.f32.mrb[0].mxu0
      %v2156 = vpop.f32.mrb[0].mxu0
      %2157 = vdwg.mxu0
      %v2158 = vld [vmem:[%s219] sm:$0xe]
      %v2159 = vld [vmem:[%s219 + $0x4] sm:$0x3]
      %v2160 = vld [vmem:[%s219 + $0x8] sm:$0xe]
      %v2161 = vld [vmem:[%s219 + $0xc] sm:$0x3]
      %v2162 = vld [vmem:[%s219 + $0x10] sm:$0xe]
      %v2163 = vld [vmem:[%s219 + $0x14] sm:$0x3]
      %v2164 = vld [vmem:[%s219 + $0x18] sm:$0xe]
      %v2165 = vld [vmem:[%s219 + $0x1c] sm:$0x3]
      %v2166 = vld [vmem:[%s219 + $0x20] sm:$0xe]
      %v2167 = vld [vmem:[%s219 + $0x24] sm:$0x3]
      %v2168 = vld [vmem:[%s219 + $0x28] sm:$0xe]
      %v2169 = vld [vmem:[%s219 + $0x2c] sm:$0x3]
      %v2170 = vld [vmem:[%s219 + $0x30] sm:$0xe]
      %v2171 = vld [vmem:[%s219 + $0x34] sm:$0x3]
      %v2172 = vld [vmem:[%s219 + $0x38] sm:$0xe]
      %v2173 = vld [vmem:[%s219 + $0x3c] sm:$0x3]
      %v2174 = vld [vmem:[%s219 + $0x40] sm:$0xe]
      %v2175 = vld [vmem:[%s219 + $0x44] sm:$0x3]
      %v2176 = vld [vmem:[%s219 + $0x48] sm:$0xe]
      %v2177 = vld [vmem:[%s219 + $0x4c] sm:$0x3]
      %v2199 = vunpack.c.l.s4 1966171168
      %v2200 = vunpack.c.0.s8 %v2199
      %v2201 = vlaneseq
      %v2202 = vshrl.u32 %v2201, 7
      %v2203 = vsub.s32 %v2200, %v2202
      %v2204 = vrot.slane %v2158, %v2203
      %v2205 = vcombine.high %v2204, %v2204
      %v2207 = vunpack.c.l.s4 1966171168
      %v2208 = vunpack.c.0.s8 %v2207
      %v2209 = vlaneseq
      %v2210 = vshrl.u32 %v2209, 7
      %v2211 = vsub.s32 %v2208, %v2210
      %v2212 = vrot.slane %v2204, %v2211
      %v2214 = vunpack.c.l.s4 1966171168
      %v2215 = vunpack.c.0.s8 %v2214
      %v2216 = vlaneseq
      %v2217 = vshrl.u32 %v2216, 7
      %v2218 = vsub.s32 %v2215, %v2217
      %v2219 = vrot.slane %v2205, %v2218
      %v2220 = vcombine.high %v2212, %v2212
      %v2221 = vcombine.high %v2219, %v2219
      %v2223 = vunpack.c.l.s4 1966171168
      %v2224 = vunpack.c.0.s8 %v2223
      %v2225 = vlaneseq
      %v2226 = vshrl.u32 %v2225, 7
      %v2227 = vsub.s32 %v2224, %v2226
      %v2228 = vrot.slane %v2159, %v2227
      %v2229 = vcombine.high %v2228, %v2228
      %v2231 = vunpack.c.l.s4 1966171168
      %v2232 = vunpack.c.0.s8 %v2231
      %v2233 = vlaneseq
      %v2234 = vshrl.u32 %v2233, 7
      %v2235 = vsub.s32 %v2232, %v2234
      %v2236 = vrot.slane %v2228, %v2235
      %v2238 = vunpack.c.l.s4 1966171168
      %v2239 = vunpack.c.0.s8 %v2238
      %v2240 = vlaneseq
      %v2241 = vshrl.u32 %v2240, 7
      %v2242 = vsub.s32 %v2239, %v2241
      %v2243 = vrot.slane %v2229, %v2242
      %v2245 = vunpack.c.l.s4 1966171168
      %v2246 = vunpack.c.0.s8 %v2245
      %v2247 = vlaneseq
      %v2248 = vshrl.u32 %v2247, 7
      %v2249 = vsub.s32 %v2246, %v2248
      %v2250 = vrot.slane %v2160, %v2249
      %v2251 = vcombine.high %v2250, %v2250
      %v2253 = vunpack.c.l.s4 1966171168
      %v2254 = vunpack.c.0.s8 %v2253
      %v2255 = vlaneseq
      %v2256 = vshrl.u32 %v2255, 7
      %v2257 = vsub.s32 %v2254, %v2256
      %v2258 = vrot.slane %v2250, %v2257
      %v2260 = vunpack.c.l.s4 1966171168
      %v2261 = vunpack.c.0.s8 %v2260
      %v2262 = vlaneseq
      %v2263 = vshrl.u32 %v2262, 7
      %v2264 = vsub.s32 %v2261, %v2263
      %v2265 = vrot.slane %v2251, %v2264
      %v2266 = vcombine.high %v2258, %v2258
      %v2267 = vcombine.high %v2265, %v2265
      %v2269 = vunpack.c.l.s4 1966171168
      %v2270 = vunpack.c.0.s8 %v2269
      %v2271 = vlaneseq
      %v2272 = vshrl.u32 %v2271, 7
      %v2273 = vsub.s32 %v2270, %v2272
      %v2274 = vrot.slane %v2161, %v2273
      %v2275 = vcombine.high %v2274, %v2274
      %v2277 = vunpack.c.l.s4 1966171168
      %v2278 = vunpack.c.0.s8 %v2277
      %v2279 = vlaneseq
      %v2280 = vshrl.u32 %v2279, 7
      %v2281 = vsub.s32 %v2278, %v2280
      %v2282 = vrot.slane %v2274, %v2281
      %v2284 = vunpack.c.l.s4 1966171168
      %v2285 = vunpack.c.0.s8 %v2284
      %v2286 = vlaneseq
      %v2287 = vshrl.u32 %v2286, 7
      %v2288 = vsub.s32 %v2285, %v2287
      %v2289 = vrot.slane %v2275, %v2288
      %v2291 = vunpack.c.l.s4 1966171168
      %v2292 = vunpack.c.0.s8 %v2291
      %v2293 = vlaneseq
      %v2294 = vshrl.u32 %v2293, 7
      %v2295 = vsub.s32 %v2292, %v2294
      %v2296 = vrot.slane %v2162, %v2295
      %v2297 = vcombine.high %v2296, %v2296
      %v2299 = vunpack.c.l.s4 1966171168
      %v2300 = vunpack.c.0.s8 %v2299
      %v2301 = vlaneseq
      %v2302 = vshrl.u32 %v2301, 7
      %v2303 = vsub.s32 %v2300, %v2302
      %v2304 = vrot.slane %v2296, %v2303
      %v2306 = vunpack.c.l.s4 1966171168
      %v2307 = vunpack.c.0.s8 %v2306
      %v2308 = vlaneseq
      %v2309 = vshrl.u32 %v2308, 7
      %v2310 = vsub.s32 %v2307, %v2309
      %v2311 = vrot.slane %v2297, %v2310
      %v2312 = vcombine.high %v2304, %v2304
      %v2313 = vcombine.high %v2311, %v2311
      %v2315 = vunpack.c.l.s4 1966171168
      %v2316 = vunpack.c.0.s8 %v2315
      %v2317 = vlaneseq
      %v2318 = vshrl.u32 %v2317, 7
      %v2319 = vsub.s32 %v2316, %v2318
      %v2320 = vrot.slane %v2163, %v2319
      %v2321 = vcombine.high %v2320, %v2320
      %v2323 = vunpack.c.l.s4 1966171168
      %v2324 = vunpack.c.0.s8 %v2323
      %v2325 = vlaneseq
      %v2326 = vshrl.u32 %v2325, 7
      %v2327 = vsub.s32 %v2324, %v2326
      %v2328 = vrot.slane %v2320, %v2327
      %v2330 = vunpack.c.l.s4 1966171168
      %v2331 = vunpack.c.0.s8 %v2330
      %v2332 = vlaneseq
      %v2333 = vshrl.u32 %v2332, 7
      %v2334 = vsub.s32 %v2331, %v2333
      %v2335 = vrot.slane %v2321, %v2334
      %v2337 = vunpack.c.l.s4 1966171168
      %v2338 = vunpack.c.0.s8 %v2337
      %v2339 = vlaneseq
      %v2340 = vshrl.u32 %v2339, 7
      %v2341 = vsub.s32 %v2338, %v2340
      %v2342 = vrot.slane %v2164, %v2341
      %v2343 = vcombine.high %v2342, %v2342
      %v2345 = vunpack.c.l.s4 1966171168
      %v2346 = vunpack.c.0.s8 %v2345
      %v2347 = vlaneseq
      %v2348 = vshrl.u32 %v2347, 7
      %v2349 = vsub.s32 %v2346, %v2348
      %v2350 = vrot.slane %v2342, %v2349
      %v2352 = vunpack.c.l.s4 1966171168
      %v2353 = vunpack.c.0.s8 %v2352
      %v2354 = vlaneseq
      %v2355 = vshrl.u32 %v2354, 7
      %v2356 = vsub.s32 %v2353, %v2355
      %v2357 = vrot.slane %v2343, %v2356
      %v2358 = vcombine.high %v2350, %v2350
      %v2359 = vcombine.high %v2357, %v2357
      %v2361 = vunpack.c.l.s4 1966171168
      %v2362 = vunpack.c.0.s8 %v2361
      %v2363 = vlaneseq
      %v2364 = vshrl.u32 %v2363, 7
      %v2365 = vsub.s32 %v2362, %v2364
      %v2366 = vrot.slane %v2165, %v2365
      %v2367 = vcombine.high %v2366, %v2366
      %v2369 = vunpack.c.l.s4 1966171168
      %v2370 = vunpack.c.0.s8 %v2369
      %v2371 = vlaneseq
      %v2372 = vshrl.u32 %v2371, 7
      %v2373 = vsub.s32 %v2370, %v2372
      %v2374 = vrot.slane %v2366, %v2373
      %v2376 = vunpack.c.l.s4 1966171168
      %v2377 = vunpack.c.0.s8 %v2376
      %v2378 = vlaneseq
      %v2379 = vshrl.u32 %v2378, 7
      %v2380 = vsub.s32 %v2377, %v2379
      %v2381 = vrot.slane %v2367, %v2380
      %v2383 = vunpack.c.l.s4 1966171168
      %v2384 = vunpack.c.0.s8 %v2383
      %v2385 = vlaneseq
      %v2386 = vshrl.u32 %v2385, 7
      %v2387 = vsub.s32 %v2384, %v2386
      %v2388 = vrot.slane %v2166, %v2387
      %v2389 = vcombine.high %v2388, %v2388
      %v2391 = vunpack.c.l.s4 1966171168
      %v2392 = vunpack.c.0.s8 %v2391
      %v2393 = vlaneseq
      %v2394 = vshrl.u32 %v2393, 7
      %v2395 = vsub.s32 %v2392, %v2394
      %v2396 = vrot.slane %v2388, %v2395
      %v2398 = vunpack.c.l.s4 1966171168
      %v2399 = vunpack.c.0.s8 %v2398
      %v2400 = vlaneseq
      %v2401 = vshrl.u32 %v2400, 7
      %v2402 = vsub.s32 %v2399, %v2401
      %v2403 = vrot.slane %v2389, %v2402
      %v2404 = vcombine.high %v2396, %v2396
      %v2405 = vcombine.high %v2403, %v2403
      %v2407 = vunpack.c.l.s4 1966171168
      %v2408 = vunpack.c.0.s8 %v2407
      %v2409 = vlaneseq
      %v2410 = vshrl.u32 %v2409, 7
      %v2411 = vsub.s32 %v2408, %v2410
      %v2412 = vrot.slane %v2167, %v2411
      %v2413 = vcombine.high %v2412, %v2412
      %v2415 = vunpack.c.l.s4 1966171168
      %v2416 = vunpack.c.0.s8 %v2415
      %v2417 = vlaneseq
      %v2418 = vshrl.u32 %v2417, 7
      %v2419 = vsub.s32 %v2416, %v2418
      %v2420 = vrot.slane %v2412, %v2419
      %v2422 = vunpack.c.l.s4 1966171168
      %v2423 = vunpack.c.0.s8 %v2422
      %v2424 = vlaneseq
      %v2425 = vshrl.u32 %v2424, 7
      %v2426 = vsub.s32 %v2423, %v2425
      %v2427 = vrot.slane %v2413, %v2426
      %v2429 = vunpack.c.l.s4 1966171168
      %v2430 = vunpack.c.0.s8 %v2429
      %v2431 = vlaneseq
      %v2432 = vshrl.u32 %v2431, 7
      %v2433 = vsub.s32 %v2430, %v2432
      %v2434 = vrot.slane %v2168, %v2433
      %v2435 = vcombine.high %v2434, %v2434
      %v2437 = vunpack.c.l.s4 1966171168
      %v2438 = vunpack.c.0.s8 %v2437
      %v2439 = vlaneseq
      %v2440 = vshrl.u32 %v2439, 7
      %v2441 = vsub.s32 %v2438, %v2440
      %v2442 = vrot.slane %v2434, %v2441
      %v2444 = vunpack.c.l.s4 1966171168
      %v2445 = vunpack.c.0.s8 %v2444
      %v2446 = vlaneseq
      %v2447 = vshrl.u32 %v2446, 7
      %v2448 = vsub.s32 %v2445, %v2447
      %v2449 = vrot.slane %v2435, %v2448
      %v2450 = vcombine.high %v2442, %v2442
      %v2451 = vcombine.high %v2449, %v2449
      %v2453 = vunpack.c.l.s4 1966171168
      %v2454 = vunpack.c.0.s8 %v2453
      %v2455 = vlaneseq
      %v2456 = vshrl.u32 %v2455, 7
      %v2457 = vsub.s32 %v2454, %v2456
      %v2458 = vrot.slane %v2169, %v2457
      %v2459 = vcombine.high %v2458, %v2458
      %v2461 = vunpack.c.l.s4 1966171168
      %v2462 = vunpack.c.0.s8 %v2461
      %v2463 = vlaneseq
      %v2464 = vshrl.u32 %v2463, 7
      %v2465 = vsub.s32 %v2462, %v2464
      %v2466 = vrot.slane %v2458, %v2465
      %v2468 = vunpack.c.l.s4 1966171168
      %v2469 = vunpack.c.0.s8 %v2468
      %v2470 = vlaneseq
      %v2471 = vshrl.u32 %v2470, 7
      %v2472 = vsub.s32 %v2469, %v2471
      %v2473 = vrot.slane %v2459, %v2472
      %v2475 = vunpack.c.l.s4 1966171168
      %v2476 = vunpack.c.0.s8 %v2475
      %v2477 = vlaneseq
      %v2478 = vshrl.u32 %v2477, 7
      %v2479 = vsub.s32 %v2476, %v2478
      %v2480 = vrot.slane %v2170, %v2479
      %v2481 = vcombine.high %v2480, %v2480
      %v2483 = vunpack.c.l.s4 1966171168
      %v2484 = vunpack.c.0.s8 %v2483
      %v2485 = vlaneseq
      %v2486 = vshrl.u32 %v2485, 7
      %v2487 = vsub.s32 %v2484, %v2486
      %v2488 = vrot.slane %v2480, %v2487
      %v2490 = vunpack.c.l.s4 1966171168
      %v2491 = vunpack.c.0.s8 %v2490
      %v2492 = vlaneseq
      %v2493 = vshrl.u32 %v2492, 7
      %v2494 = vsub.s32 %v2491, %v2493
      %v2495 = vrot.slane %v2481, %v2494
      %v2496 = vcombine.high %v2488, %v2488
      %v2497 = vcombine.high %v2495, %v2495
      %v2499 = vunpack.c.l.s4 1966171168
      %v2500 = vunpack.c.0.s8 %v2499
      %v2501 = vlaneseq
      %v2502 = vshrl.u32 %v2501, 7
      %v2503 = vsub.s32 %v2500, %v2502
      %v2504 = vrot.slane %v2171, %v2503
      %v2505 = vcombine.high %v2504, %v2504
      %v2507 = vunpack.c.l.s4 1966171168
      %v2508 = vunpack.c.0.s8 %v2507
      %v2509 = vlaneseq
      %v2510 = vshrl.u32 %v2509, 7
      %v2511 = vsub.s32 %v2508, %v2510
      %v2512 = vrot.slane %v2504, %v2511
      %v2514 = vunpack.c.l.s4 1966171168
      %v2515 = vunpack.c.0.s8 %v2514
      %v2516 = vlaneseq
      %v2517 = vshrl.u32 %v2516, 7
      %v2518 = vsub.s32 %v2515, %v2517
      %v2519 = vrot.slane %v2505, %v2518
      %v2521 = vunpack.c.l.s4 1966171168
      %v2522 = vunpack.c.0.s8 %v2521
      %v2523 = vlaneseq
      %v2524 = vshrl.u32 %v2523, 7
      %v2525 = vsub.s32 %v2522, %v2524
      %v2526 = vrot.slane %v2172, %v2525
      %v2527 = vcombine.high %v2526, %v2526
      %v2529 = vunpack.c.l.s4 1966171168
      %v2530 = vunpack.c.0.s8 %v2529
      %v2531 = vlaneseq
      %v2532 = vshrl.u32 %v2531, 7
      %v2533 = vsub.s32 %v2530, %v2532
      %v2534 = vrot.slane %v2526, %v2533
      %v2536 = vunpack.c.l.s4 1966171168
      %v2537 = vunpack.c.0.s8 %v2536
      %v2538 = vlaneseq
      %v2539 = vshrl.u32 %v2538, 7
      %v2540 = vsub.s32 %v2537, %v2539
      %v2541 = vrot.slane %v2527, %v2540
      %v2542 = vcombine.high %v2534, %v2534
      %v2543 = vcombine.high %v2541, %v2541
      %v2545 = vunpack.c.l.s4 1966171168
      %v2546 = vunpack.c.0.s8 %v2545
      %v2547 = vlaneseq
      %v2548 = vshrl.u32 %v2547, 7
      %v2549 = vsub.s32 %v2546, %v2548
      %v2550 = vrot.slane %v2173, %v2549
      %v2551 = vcombine.high %v2550, %v2550
      %v2553 = vunpack.c.l.s4 1966171168
      %v2554 = vunpack.c.0.s8 %v2553
      %v2555 = vlaneseq
      %v2556 = vshrl.u32 %v2555, 7
      %v2557 = vsub.s32 %v2554, %v2556
      %v2558 = vrot.slane %v2550, %v2557
      %v2560 = vunpack.c.l.s4 1966171168
      %v2561 = vunpack.c.0.s8 %v2560
      %v2562 = vlaneseq
      %v2563 = vshrl.u32 %v2562, 7
      %v2564 = vsub.s32 %v2561, %v2563
      %v2565 = vrot.slane %v2551, %v2564
      %v2567 = vunpack.c.l.s4 1966171168
      %v2568 = vunpack.c.0.s8 %v2567
      %v2569 = vlaneseq
      %v2570 = vshrl.u32 %v2569, 7
      %v2571 = vsub.s32 %v2568, %v2570
      %v2572 = vrot.slane %v2174, %v2571
      %v2573 = vcombine.high %v2572, %v2572
      %v2575 = vunpack.c.l.s4 1966171168
      %v2576 = vunpack.c.0.s8 %v2575
      %v2577 = vlaneseq
      %v2578 = vshrl.u32 %v2577, 7
      %v2579 = vsub.s32 %v2576, %v2578
      %v2580 = vrot.slane %v2572, %v2579
      %v2582 = vunpack.c.l.s4 1966171168
      %v2583 = vunpack.c.0.s8 %v2582
      %v2584 = vlaneseq
      %v2585 = vshrl.u32 %v2584, 7
      %v2586 = vsub.s32 %v2583, %v2585
      %v2587 = vrot.slane %v2573, %v2586
      %v2588 = vcombine.high %v2580, %v2580
      %v2589 = vcombine.high %v2587, %v2587
      %v2591 = vunpack.c.l.s4 1966171168
      %v2592 = vunpack.c.0.s8 %v2591
      %v2593 = vlaneseq
      %v2594 = vshrl.u32 %v2593, 7
      %v2595 = vsub.s32 %v2592, %v2594
      %v2596 = vrot.slane %v2175, %v2595
      %v2597 = vcombine.high %v2596, %v2596
      %v2599 = vunpack.c.l.s4 1966171168
      %v2600 = vunpack.c.0.s8 %v2599
      %v2601 = vlaneseq
      %v2602 = vshrl.u32 %v2601, 7
      %v2603 = vsub.s32 %v2600, %v2602
      %v2604 = vrot.slane %v2596, %v2603
      %v2606 = vunpack.c.l.s4 1966171168
      %v2607 = vunpack.c.0.s8 %v2606
      %v2608 = vlaneseq
      %v2609 = vshrl.u32 %v2608, 7
      %v2610 = vsub.s32 %v2607, %v2609
      %v2611 = vrot.slane %v2597, %v2610
      %v2613 = vunpack.c.l.s4 1966171168
      %v2614 = vunpack.c.0.s8 %v2613
      %v2615 = vlaneseq
      %v2616 = vshrl.u32 %v2615, 7
      %v2617 = vsub.s32 %v2614, %v2616
      %v2618 = vrot.slane %v2176, %v2617
      %v2619 = vcombine.high %v2618, %v2618
      %v2621 = vunpack.c.l.s4 1966171168
      %v2622 = vunpack.c.0.s8 %v2621
      %v2623 = vlaneseq
      %v2624 = vshrl.u32 %v2623, 7
      %v2625 = vsub.s32 %v2622, %v2624
      %v2626 = vrot.slane %v2618, %v2625
      %v2628 = vunpack.c.l.s4 1966171168
      %v2629 = vunpack.c.0.s8 %v2628
      %v2630 = vlaneseq
      %v2631 = vshrl.u32 %v2630, 7
      %v2632 = vsub.s32 %v2629, %v2631
      %v2633 = vrot.slane %v2619, %v2632
      %v2634 = vcombine.high %v2626, %v2626
      %v2635 = vcombine.high %v2633, %v2633
      %v2637 = vunpack.c.l.s4 1966171168
      %v2638 = vunpack.c.0.s8 %v2637
      %v2639 = vlaneseq
      %v2640 = vshrl.u32 %v2639, 7
      %v2641 = vsub.s32 %v2638, %v2640
      %v2642 = vrot.slane %v2177, %v2641
      %v2643 = vcombine.high %v2642, %v2642
      %v2645 = vunpack.c.l.s4 1966171168
      %v2646 = vunpack.c.0.s8 %v2645
      %v2647 = vlaneseq
      %v2648 = vshrl.u32 %v2647, 7
      %v2649 = vsub.s32 %v2646, %v2648
      %v2650 = vrot.slane %v2642, %v2649
      %v2652 = vunpack.c.l.s4 1966171168
      %v2653 = vunpack.c.0.s8 %v2652
      %v2654 = vlaneseq
      %v2655 = vshrl.u32 %v2654, 7
      %v2656 = vsub.s32 %v2653, %v2655
      %v2657 = vrot.slane %v2643, %v2656
      %s2658 = scalar_lea.vmem %s1, 8
      %v2659 = vld [vmem:[%s2658] sm:$0xf]
      %v2660 = vcombine.low %v2219, %v2220
      %v2661 = vcombine.low %v2221, %v2236
      %v2662 = vcombine.low %v2243, %v2265
      %v2663 = vcombine.low %v2266, %v2267
      %v2665 = vunpack.c.l.s4 1966171168
      %v2666 = vunpack.c.0.s8 %v2665
      %v2667 = vlaneseq
      %v2668 = vshrl.u32 %v2667, 7
      %v2669 = vsub.s32 %v2666, %v2668
      %v2670 = vrot.slane %v2660, %v2669
      %v2672 = vunpack.c.l.s4 1966171168
      %v2673 = vunpack.c.0.s8 %v2672
      %v2674 = vlaneseq
      %v2675 = vshrl.u32 %v2674, 7
      %v2676 = vsub.s32 %v2673, %v2675
      %v2677 = vrot.slane %v2661, %v2676
      %v2679 = vunpack.c.l.s4 1966171168
      %v2680 = vunpack.c.0.s8 %v2679
      %v2681 = vlaneseq
      %v2682 = vshrl.u32 %v2681, 7
      %v2683 = vsub.s32 %v2680, %v2682
      %v2684 = vrot.slane %v2662, %v2683
      %v2686 = vunpack.c.l.s4 1966171168
      %v2687 = vunpack.c.0.s8 %v2686
      %v2688 = vlaneseq
      %v2689 = vshrl.u32 %v2688, 7
      %v2690 = vsub.s32 %v2687, %v2689
      %v2691 = vrot.slane %v2663, %v2690
      %v2692 = vcombine.low %v2670, %v2677
      %v2693 = vcombine.low %v2684, %v2691
      %v2695 = vunpack.c.l.s4 1966171168
      %v2696 = vunpack.c.0.s8 %v2695
      %v2697 = vlaneseq
      %v2698 = vshrl.u32 %v2697, 7
      %v2699 = vsub.s32 %v2696, %v2698
      %v2700 = vrot.slane %v2692, %v2699
      %v2702 = vunpack.c.l.s4 1966171168
      %v2703 = vunpack.c.0.s8 %v2702
      %v2704 = vlaneseq
      %v2705 = vshrl.u32 %v2704, 7
      %v2706 = vsub.s32 %v2703, %v2705
      %v2707 = vrot.slane %v2693, %v2706
      %v2708 = vcombine.low %v2700, %v2707
      %v2709 = vcombine.low %v2282, %v2289
      %v2710 = vcombine.low %v2311, %v2312
      %v2711 = vcombine.low %v2313, %v2328
      %v2712 = vcombine.low %v2335, %v2357
      %v2714 = vunpack.c.l.s4 1966171168
      %v2715 = vunpack.c.0.s8 %v2714
      %v2716 = vlaneseq
      %v2717 = vshrl.u32 %v2716, 7
      %v2718 = vsub.s32 %v2715, %v2717
      %v2719 = vrot.slane %v2709, %v2718
      %v2721 = vunpack.c.l.s4 1966171168
      %v2722 = vunpack.c.0.s8 %v2721
      %v2723 = vlaneseq
      %v2724 = vshrl.u32 %v2723, 7
      %v2725 = vsub.s32 %v2722, %v2724
      %v2726 = vrot.slane %v2710, %v2725
      %v2728 = vunpack.c.l.s4 1966171168
      %v2729 = vunpack.c.0.s8 %v2728
      %v2730 = vlaneseq
      %v2731 = vshrl.u32 %v2730, 7
      %v2732 = vsub.s32 %v2729, %v2731
      %v2733 = vrot.slane %v2711, %v2732
      %v2735 = vunpack.c.l.s4 1966171168
      %v2736 = vunpack.c.0.s8 %v2735
      %v2737 = vlaneseq
      %v2738 = vshrl.u32 %v2737, 7
      %v2739 = vsub.s32 %v2736, %v2738
      %v2740 = vrot.slane %v2712, %v2739
      %v2741 = vcombine.low %v2719, %v2726
      %v2742 = vcombine.low %v2733, %v2740
      %v2744 = vunpack.c.l.s4 1966171168
      %v2745 = vunpack.c.0.s8 %v2744
      %v2746 = vlaneseq
      %v2747 = vshrl.u32 %v2746, 7
      %v2748 = vsub.s32 %v2745, %v2747
      %v2749 = vrot.slane %v2741, %v2748
      %v2751 = vunpack.c.l.s4 1966171168
      %v2752 = vunpack.c.0.s8 %v2751
      %v2753 = vlaneseq
      %v2754 = vshrl.u32 %v2753, 7
      %v2755 = vsub.s32 %v2752, %v2754
      %v2756 = vrot.slane %v2742, %v2755
      %v2757 = vcombine.low %v2749, %v2756
      %v2758 = vcombine.low %v2358, %v2359
      %v2759 = vcombine.low %v2374, %v2381
      %v2760 = vcombine.low %v2403, %v2404
      %v2761 = vcombine.low %v2405, %v2420
      %v2763 = vunpack.c.l.s4 1966171168
      %v2764 = vunpack.c.0.s8 %v2763
      %v2765 = vlaneseq
      %v2766 = vshrl.u32 %v2765, 7
      %v2767 = vsub.s32 %v2764, %v2766
      %v2768 = vrot.slane %v2758, %v2767
      %v2770 = vunpack.c.l.s4 1966171168
      %v2771 = vunpack.c.0.s8 %v2770
      %v2772 = vlaneseq
      %v2773 = vshrl.u32 %v2772, 7
      %v2774 = vsub.s32 %v2771, %v2773
      %v2775 = vrot.slane %v2759, %v2774
      %v2777 = vunpack.c.l.s4 1966171168
      %v2778 = vunpack.c.0.s8 %v2777
      %v2779 = vlaneseq
      %v2780 = vshrl.u32 %v2779, 7
      %v2781 = vsub.s32 %v2778, %v2780
      %v2782 = vrot.slane %v2760, %v2781
      %v2784 = vunpack.c.l.s4 1966171168
      %v2785 = vunpack.c.0.s8 %v2784
      %v2786 = vlaneseq
      %v2787 = vshrl.u32 %v2786, 7
      %v2788 = vsub.s32 %v2785, %v2787
      %v2789 = vrot.slane %v2761, %v2788
      %v2790 = vcombine.low %v2768, %v2775
      %v2791 = vcombine.low %v2782, %v2789
      %v2793 = vunpack.c.l.s4 1966171168
      %v2794 = vunpack.c.0.s8 %v2793
      %v2795 = vlaneseq
      %v2796 = vshrl.u32 %v2795, 7
      %v2797 = vsub.s32 %v2794, %v2796
      %v2798 = vrot.slane %v2790, %v2797
      %v2800 = vunpack.c.l.s4 1966171168
      %v2801 = vunpack.c.0.s8 %v2800
      %v2802 = vlaneseq
      %v2803 = vshrl.u32 %v2802, 7
      %v2804 = vsub.s32 %v2801, %v2803
      %v2805 = vrot.slane %v2791, %v2804
      %v2806 = vcombine.low %v2798, %v2805
      %v2807 = vcombine.low %v2427, %v2449
      %v2808 = vcombine.low %v2450, %v2451
      %v2809 = vcombine.low %v2466, %v2473
      %v2810 = vcombine.low %v2495, %v2496
      %v2812 = vunpack.c.l.s4 1966171168
      %v2813 = vunpack.c.0.s8 %v2812
      %v2814 = vlaneseq
      %v2815 = vshrl.u32 %v2814, 7
      %v2816 = vsub.s32 %v2813, %v2815
      %v2817 = vrot.slane %v2807, %v2816
      %v2819 = vunpack.c.l.s4 1966171168
      %v2820 = vunpack.c.0.s8 %v2819
      %v2821 = vlaneseq
      %v2822 = vshrl.u32 %v2821, 7
      %v2823 = vsub.s32 %v2820, %v2822
      %v2824 = vrot.slane %v2808, %v2823
      %v2826 = vunpack.c.l.s4 1966171168
      %v2827 = vunpack.c.0.s8 %v2826
      %v2828 = vlaneseq
      %v2829 = vshrl.u32 %v2828, 7
      %v2830 = vsub.s32 %v2827, %v2829
      %v2831 = vrot.slane %v2809, %v2830
      %v2833 = vunpack.c.l.s4 1966171168
      %v2834 = vunpack.c.0.s8 %v2833
      %v2835 = vlaneseq
      %v2836 = vshrl.u32 %v2835, 7
      %v2837 = vsub.s32 %v2834, %v2836
      %v2838 = vrot.slane %v2810, %v2837
      %v2839 = vcombine.low %v2817, %v2824
      %v2840 = vcombine.low %v2831, %v2838
      %v2842 = vunpack.c.l.s4 1966171168
      %v2843 = vunpack.c.0.s8 %v2842
      %v2844 = vlaneseq
      %v2845 = vshrl.u32 %v2844, 7
      %v2846 = vsub.s32 %v2843, %v2845
      %v2847 = vrot.slane %v2839, %v2846
      %v2849 = vunpack.c.l.s4 1966171168
      %v2850 = vunpack.c.0.s8 %v2849
      %v2851 = vlaneseq
      %v2852 = vshrl.u32 %v2851, 7
      %v2853 = vsub.s32 %v2850, %v2852
      %v2854 = vrot.slane %v2840, %v2853
      %v2855 = vcombine.low %v2847, %v2854
      %v2856 = vcombine.low %v2497, %v2512
      %v2857 = vcombine.low %v2519, %v2541
      %v2858 = vcombine.low %v2542, %v2543
      %v2859 = vcombine.low %v2558, %v2565
      %v2861 = vunpack.c.l.s4 1966171168
      %v2862 = vunpack.c.0.s8 %v2861
      %v2863 = vlaneseq
      %v2864 = vshrl.u32 %v2863, 7
      %v2865 = vsub.s32 %v2862, %v2864
      %v2866 = vrot.slane %v2856, %v2865
      %v2868 = vunpack.c.l.s4 1966171168
      %v2869 = vunpack.c.0.s8 %v2868
      %v2870 = vlaneseq
      %v2871 = vshrl.u32 %v2870, 7
      %v2872 = vsub.s32 %v2869, %v2871
      %v2873 = vrot.slane %v2857, %v2872
      %v2875 = vunpack.c.l.s4 1966171168
      %v2876 = vunpack.c.0.s8 %v2875
      %v2877 = vlaneseq
      %v2878 = vshrl.u32 %v2877, 7
      %v2879 = vsub.s32 %v2876, %v2878
      %v2880 = vrot.slane %v2858, %v2879
      %v2882 = vunpack.c.l.s4 1966171168
      %v2883 = vunpack.c.0.s8 %v2882
      %v2884 = vlaneseq
      %v2885 = vshrl.u32 %v2884, 7
      %v2886 = vsub.s32 %v2883, %v2885
      %v2887 = vrot.slane %v2859, %v2886
      %v2888 = vcombine.low %v2866, %v2873
      %v2889 = vcombine.low %v2880, %v2887
      %v2891 = vunpack.c.l.s4 1966171168
      %v2892 = vunpack.c.0.s8 %v2891
      %v2893 = vlaneseq
      %v2894 = vshrl.u32 %v2893, 7
      %v2895 = vsub.s32 %v2892, %v2894
      %v2896 = vrot.slane %v2888, %v2895
      %v2898 = vunpack.c.l.s4 1966171168
      %v2899 = vunpack.c.0.s8 %v2898
      %v2900 = vlaneseq
      %v2901 = vshrl.u32 %v2900, 7
      %v2902 = vsub.s32 %v2899, %v2901
      %v2903 = vrot.slane %v2889, %v2902
      %v2904 = vcombine.low %v2896, %v2903
      %v2905 = vcombine.low %v2587, %v2588
      %v2906 = vcombine.low %v2589, %v2604
      %v2907 = vcombine.low %v2611, %v2633
      %v2908 = vcombine.low %v2634, %v2635
      %v2910 = vunpack.c.l.s4 1966171168
      %v2911 = vunpack.c.0.s8 %v2910
      %v2912 = vlaneseq
      %v2913 = vshrl.u32 %v2912, 7
      %v2914 = vsub.s32 %v2911, %v2913
      %v2915 = vrot.slane %v2905, %v2914
      %v2917 = vunpack.c.l.s4 1966171168
      %v2918 = vunpack.c.0.s8 %v2917
      %v2919 = vlaneseq
      %v2920 = vshrl.u32 %v2919, 7
      %v2921 = vsub.s32 %v2918, %v2920
      %v2922 = vrot.slane %v2906, %v2921
      %v2924 = vunpack.c.l.s4 1966171168
      %v2925 = vunpack.c.0.s8 %v2924
      %v2926 = vlaneseq
      %v2927 = vshrl.u32 %v2926, 7
      %v2928 = vsub.s32 %v2925, %v2927
      %v2929 = vrot.slane %v2907, %v2928
      %v2931 = vunpack.c.l.s4 1966171168
      %v2932 = vunpack.c.0.s8 %v2931
      %v2933 = vlaneseq
      %v2934 = vshrl.u32 %v2933, 7
      %v2935 = vsub.s32 %v2932, %v2934
      %v2936 = vrot.slane %v2908, %v2935
      %v2937 = vcombine.low %v2915, %v2922
      %v2938 = vcombine.low %v2929, %v2936
      %v2940 = vunpack.c.l.s4 1966171168
      %v2941 = vunpack.c.0.s8 %v2940
      %v2942 = vlaneseq
      %v2943 = vshrl.u32 %v2942, 7
      %v2944 = vsub.s32 %v2941, %v2943
      %v2945 = vrot.slane %v2937, %v2944
      %v2947 = vunpack.c.l.s4 1966171168
      %v2948 = vunpack.c.0.s8 %v2947
      %v2949 = vlaneseq
      %v2950 = vshrl.u32 %v2949, 7
      %v2951 = vsub.s32 %v2948, %v2950
      %v2952 = vrot.slane %v2938, %v2951
      %v2953 = vcombine.low %v2945, %v2952
      %v2954 = vcombine.low %v2650, %v2657
      %v2956 = vunpack.c.l.s4 1966171168
      %v2957 = vunpack.c.0.s8 %v2956
      %v2958 = vlaneseq
      %v2959 = vshrl.u32 %v2958, 7
      %v2960 = vsub.s32 %v2957, %v2959
      %v2961 = vrot.slane %v2954, %v2960
      %v2963 = vunpack.c.l.s4 1966171168
      %v2964 = vunpack.c.0.s8 %v2963
      %v2965 = vlaneseq
      %v2966 = vshrl.u32 %v2965, 7
      %v2967 = vsub.s32 %v2964, %v2966
      %v2968 = vrot.slane %v2961, %v2967
      %v2970 = vsel %vm1623, %v2708, 0
      %v2973 = vsel %vm1623, %v2757, 0
      %v2976 = vsel %vm1623, %v2806, 0
      %v2979 = vsel %vm1623, %v2855, 0
      %v2982 = vsel %vm1623, %v2904, 0
      %v2985 = vsel %vm1623, %v2953, 0
      %v2988 = vsel %vm1623, %v2968, 0
      %v2991 = vsel %vm1645, %v2659, 0
      %2993 = vmatprep.subr.bf16.mxu0 0
      %2994 = vmatpush1.bf16.msra.mxu0 %v2991
      %2995 = vmatprep.subr.bf16.mxu0 0
      %2996 = vmatpush1.bf16.msra.mxu0 0
      %2997 = vmatprep.subr.bf16.mxu0 0
      %2998 = vmatpush1.bf16.msra.mxu0 0
      %2999 = vmatprep.subr.bf16.mxu0 0
      %3000 = vmatpush1.bf16.msra.mxu0 0
      %3001 = vmatprep.subr.bf16.mxu0 0
      %3002 = vmatpush1.bf16.msra.mxu0 0
      %3003 = vmatprep.subr.bf16.mxu0 0
      %3004 = vmatpush1.bf16.msra.mxu0 0
      %3005 = vmatprep.subr.bf16.mxu0 0
      %3006 = vmatpush1.bf16.msra.mxu0 0
      %3007 = vmatprep.subr.bf16.mxu0 0
      %3008 = vmatpush1.bf16.msra.mxu0 0
      %3009 = vmatprep.subr.bf16.mxu0 0
      %3010 = vmatpush1.bf16.msra.mxu0 0
      %3011 = vmatprep.subr.bf16.mxu0 0
      %3012 = vmatpush1.bf16.msra.mxu0 0
      %3013 = vmatprep.subr.bf16.mxu0 0
      %3014 = vmatpush1.bf16.msra.mxu0 0
      %3015 = vmatprep.subr.bf16.mxu0 0
      %3016 = vmatpush1.bf16.msra.mxu0 0
      %3017 = vmatprep.subr.bf16.mxu0 0
      %3018 = vmatpush1.bf16.msra.mxu0 0
      %3019 = vmatprep.subr.bf16.mxu0 0
      %3020 = vmatpush1.bf16.msra.mxu0 0
      %3021 = vmatprep.subr.bf16.mxu0 0
      %3022 = vmatpush1.bf16.msra.mxu0 0
      %3023 = vmatprep.subr.bf16.mxu0 0
      %3024 = vmatpush1.bf16.msra.mxu0 0
      %3025 = vmatprep.mubr.bf16.mxu0 0
      %3026 = vmatmul.mubr.bf16.gmra.mrb[0].mxu0 %v2970
      %v3027 = vpop.f32.mrb[0].mxu0
      %v3028 = vadd.f32 0.0, %v3027
      %v3029 = vpop.f32.mrb[0].mxu0
      %v3030 = vpop.f32.mrb[0].mxu0
      %v3031 = vadd.f32 0.0, %v3030
      %v3032 = vpop.f32.mrb[0].mxu0
      %3033 = vmatprep.mubr.bf16.mxu0 0
      %3034 = vmatmul.mubr.bf16.gmra.mrb[0].mxu0 %v2973
      %v3035 = vpop.f32.mrb[0].mxu0
      %v3036 = vadd.f32 0.0, %v3035
      %v3037 = vpop.f32.mrb[0].mxu0
      %v3038 = vpop.f32.mrb[0].mxu0
      %v3039 = vadd.f32 0.0, %v3038
      %v3040 = vpop.f32.mrb[0].mxu0
      %3041 = vmatprep.mubr.bf16.mxu0 0
      %3042 = vmatmul.mubr.bf16.gmra.mrb[0].mxu0 %v2976
      %v3043 = vpop.f32.mrb[0].mxu0
      %v3044 = vadd.f32 0.0, %v3043
      %v3045 = vpop.f32.mrb[0].mxu0
      %v3046 = vpop.f32.mrb[0].mxu0
      %v3047 = vadd.f32 0.0, %v3046
      %v3048 = vpop.f32.mrb[0].mxu0
      %3049 = vmatprep.mubr.bf16.mxu0 0
      %3050 = vmatmul.mubr.bf16.gmra.mrb[0].mxu0 %v2979
      %v3051 = vpop.f32.mrb[0].mxu0
      %v3052 = vadd.f32 0.0, %v3051
      %v3053 = vpop.f32.mrb[0].mxu0
      %v3054 = vpop.f32.mrb[0].mxu0
      %v3055 = vadd.f32 0.0, %v3054
      %v3056 = vpop.f32.mrb[0].mxu0
      %3057 = vmatprep.mubr.bf16.mxu0 0
      %3058 = vmatmul.mubr.bf16.gmra.mrb[0].mxu0 %v2982
      %v3059 = vpop.f32.mrb[0].mxu0
      %v3060 = vadd.f32 0.0, %v3059
      %v3061 = vpop.f32.mrb[0].mxu0
      %v3062 = vpop.f32.mrb[0].mxu0
      %v3063 = vadd.f32 0.0, %v3062
      %v3064 = vpop.f32.mrb[0].mxu0
      %3065 = vmatprep.mubr.bf16.mxu0 0
      %3066 = vmatmul.mubr.bf16.gmra.mrb[0].mxu0 %v2985
      %v3067 = vpop.f32.mrb[0].mxu0
      %v3068 = vadd.f32 0.0, %v3067
      %v3069 = vpop.f32.mrb[0].mxu0
      %v3070 = vpop.f32.mrb[0].mxu0
      %v3071 = vadd.f32 0.0, %v3070
      %v3072 = vpop.f32.mrb[0].mxu0
      %3073 = vmatprep.mubr.bf16.mxu0 0
      %3074 = vmatmul.mubr.bf16.gmra.mrb[0].mxu0 %v2988
      %v3075 = vpop.f32.mrb[0].mxu0
      %v3076 = vadd.f32 0.0, %v3075
      %v3077 = vpop.f32.mrb[0].mxu0
      %v3078 = vpop.f32.mrb[0].mxu0
      %v3079 = vpop.f32.mrb[0].mxu0
      %3080 = vdwg.mxu0
      %v3081 = vadd.f32 %v2105, %v3028
      %v3082 = vadd.f32 %v2108, %v3031
      %v3083 = vadd.f32 %v2113, %v3036
      %v3084 = vadd.f32 %v2116, %v3039
      %v3085 = vadd.f32 %v2121, %v3044
      %v3086 = vadd.f32 %v2124, %v3047
      %v3087 = vadd.f32 %v2129, %v3052
      %v3088 = vadd.f32 %v2132, %v3055
      %v3089 = vadd.f32 %v2137, %v3060
      %v3090 = vadd.f32 %v2140, %v3063
      %v3091 = vadd.f32 %v2145, %v3068
      %v3092 = vadd.f32 %v2148, %v3071
      %v3093 = vadd.f32 %v2153, %v3076
      %s3094 = scalar_lea.vmem %s219, 8
      %v3095 = vld [vmem:[%s3094] sm:$0xf]
      %v3096 = vld [vmem:[%s3094 + $0x4] sm:$0x1]
      %v3097 = vld [vmem:[%s3094 + $0x8] sm:$0xf]
      %v3098 = vld [vmem:[%s3094 + $0xc] sm:$0x1]
      %v3099 = vld [vmem:[%s3094 + $0x10] sm:$0xf]
      %v3100 = vld [vmem:[%s3094 + $0x14] sm:$0x1]
      %v3101 = vld [vmem:[%s3094 + $0x18] sm:$0xf]
      %v3102 = vld [vmem:[%s3094 + $0x1c] sm:$0x1]
      %v3103 = vld [vmem:[%s3094 + $0x20] sm:$0xf]
      %v3104 = vld [vmem:[%s3094 + $0x24] sm:$0x1]
      %v3105 = vld [vmem:[%s3094 + $0x28] sm:$0xf]
      %v3106 = vld [vmem:[%s3094 + $0x2c] sm:$0x1]
      %v3107 = vld [vmem:[%s3094 + $0x30] sm:$0xf]
      %v3108 = vld [vmem:[%s3094 + $0x34] sm:$0x1]
      %v3109 = vld [vmem:[%s3094 + $0x38] sm:$0xf]
      %v3110 = vld [vmem:[%s3094 + $0x3c] sm:$0x1]
      %v3111 = vld [vmem:[%s3094 + $0x40] sm:$0xf]
      %v3112 = vld [vmem:[%s3094 + $0x44] sm:$0x1]
      %v3113 = vld [vmem:[%s3094 + $0x48] sm:$0xf]
      %v3114 = vld [vmem:[%s3094 + $0x4c] sm:$0x1]
      %v3136 = vunpack.c.l.s4 1966171168
      %v3137 = vunpack.c.0.s8 %v3136
      %v3138 = vlaneseq
      %v3139 = vshrl.u32 %v3138, 7
      %v3140 = vsub.s32 %v3137, %v3139
      %v3141 = vrot.slane %v3095, %v3140
      %v3142 = vcombine.high %v3141, %v3141
      %v3144 = vunpack.c.l.s4 1966171168
      %v3145 = vunpack.c.0.s8 %v3144
      %v3146 = vlaneseq
      %v3147 = vshrl.u32 %v3146, 7
      %v3148 = vsub.s32 %v3145, %v3147
      %v3149 = vrot.slane %v3141, %v3148
      %v3151 = vunpack.c.l.s4 1966171168
      %v3152 = vunpack.c.0.s8 %v3151
      %v3153 = vlaneseq
      %v3154 = vshrl.u32 %v3153, 7
      %v3155 = vsub.s32 %v3152, %v3154
      %v3156 = vrot.slane %v3142, %v3155
      %v3157 = vcombine.high %v3149, %v3149
      %v3158 = vcombine.high %v3156, %v3156
      %v3160 = vunpack.c.l.s4 1966171168
      %v3161 = vunpack.c.0.s8 %v3160
      %v3162 = vlaneseq
      %v3163 = vshrl.u32 %v3162, 7
      %v3164 = vsub.s32 %v3161, %v3163
      %v3165 = vrot.slane %v3096, %v3164
      %v3167 = vunpack.c.l.s4 1966171168
      %v3168 = vunpack.c.0.s8 %v3167
      %v3169 = vlaneseq
      %v3170 = vshrl.u32 %v3169, 7
      %v3171 = vsub.s32 %v3168, %v3170
      %v3172 = vrot.slane %v3165, %v3171
      %v3174 = vunpack.c.l.s4 1966171168
      %v3175 = vunpack.c.0.s8 %v3174
      %v3176 = vlaneseq
      %v3177 = vshrl.u32 %v3176, 7
      %v3178 = vsub.s32 %v3175, %v3177
      %v3179 = vrot.slane %v3097, %v3178
      %v3180 = vcombine.high %v3179, %v3179
      %v3182 = vunpack.c.l.s4 1966171168
      %v3183 = vunpack.c.0.s8 %v3182
      %v3184 = vlaneseq
      %v3185 = vshrl.u32 %v3184, 7
      %v3186 = vsub.s32 %v3183, %v3185
      %v3187 = vrot.slane %v3179, %v3186
      %v3189 = vunpack.c.l.s4 1966171168
      %v3190 = vunpack.c.0.s8 %v3189
      %v3191 = vlaneseq
      %v3192 = vshrl.u32 %v3191, 7
      %v3193 = vsub.s32 %v3190, %v3192
      %v3194 = vrot.slane %v3180, %v3193
      %v3195 = vcombine.high %v3187, %v3187
      %v3196 = vcombine.high %v3194, %v3194
      %v3198 = vunpack.c.l.s4 1966171168
      %v3199 = vunpack.c.0.s8 %v3198
      %v3200 = vlaneseq
      %v3201 = vshrl.u32 %v3200, 7
      %v3202 = vsub.s32 %v3199, %v3201
      %v3203 = vrot.slane %v3098, %v3202
      %v3205 = vunpack.c.l.s4 1966171168
      %v3206 = vunpack.c.0.s8 %v3205
      %v3207 = vlaneseq
      %v3208 = vshrl.u32 %v3207, 7
      %v3209 = vsub.s32 %v3206, %v3208
      %v3210 = vrot.slane %v3203, %v3209
      %v3212 = vunpack.c.l.s4 1966171168
      %v3213 = vunpack.c.0.s8 %v3212
      %v3214 = vlaneseq
      %v3215 = vshrl.u32 %v3214, 7
      %v3216 = vsub.s32 %v3213, %v3215
      %v3217 = vrot.slane %v3099, %v3216
      %v3218 = vcombine.high %v3217, %v3217
      %v3220 = vunpack.c.l.s4 1966171168
      %v3221 = vunpack.c.0.s8 %v3220
      %v3222 = vlaneseq
      %v3223 = vshrl.u32 %v3222, 7
      %v3224 = vsub.s32 %v3221, %v3223
      %v3225 = vrot.slane %v3217, %v3224
      %v3227 = vunpack.c.l.s4 1966171168
      %v3228 = vunpack.c.0.s8 %v3227
      %v3229 = vlaneseq
      %v3230 = vshrl.u32 %v3229, 7
      %v3231 = vsub.s32 %v3228, %v3230
      %v3232 = vrot.slane %v3218, %v3231
      %v3233 = vcombine.high %v3225, %v3225
      %v3234 = vcombine.high %v3232, %v3232
      %v3236 = vunpack.c.l.s4 1966171168
      %v3237 = vunpack.c.0.s8 %v3236
      %v3238 = vlaneseq
      %v3239 = vshrl.u32 %v3238, 7
      %v3240 = vsub.s32 %v3237, %v3239
      %v3241 = vrot.slane %v3100, %v3240
      %v3243 = vunpack.c.l.s4 1966171168
      %v3244 = vunpack.c.0.s8 %v3243
      %v3245 = vlaneseq
      %v3246 = vshrl.u32 %v3245, 7
      %v3247 = vsub.s32 %v3244, %v3246
      %v3248 = vrot.slane %v3241, %v3247
      %v3250 = vunpack.c.l.s4 1966171168
      %v3251 = vunpack.c.0.s8 %v3250
      %v3252 = vlaneseq
      %v3253 = vshrl.u32 %v3252, 7
      %v3254 = vsub.s32 %v3251, %v3253
      %v3255 = vrot.slane %v3101, %v3254
      %v3256 = vcombine.high %v3255, %v3255
      %v3258 = vunpack.c.l.s4 1966171168
      %v3259 = vunpack.c.0.s8 %v3258
      %v3260 = vlaneseq
      %v3261 = vshrl.u32 %v3260, 7
      %v3262 = vsub.s32 %v3259, %v3261
      %v3263 = vrot.slane %v3255, %v3262
      %v3265 = vunpack.c.l.s4 1966171168
      %v3266 = vunpack.c.0.s8 %v3265
      %v3267 = vlaneseq
      %v3268 = vshrl.u32 %v3267, 7
      %v3269 = vsub.s32 %v3266, %v3268
      %v3270 = vrot.slane %v3256, %v3269
      %v3271 = vcombine.high %v3263, %v3263
      %v3272 = vcombine.high %v3270, %v3270
      %v3274 = vunpack.c.l.s4 1966171168
      %v3275 = vunpack.c.0.s8 %v3274
      %v3276 = vlaneseq
      %v3277 = vshrl.u32 %v3276, 7
      %v3278 = vsub.s32 %v3275, %v3277
      %v3279 = vrot.slane %v3102, %v3278
      %v3281 = vunpack.c.l.s4 1966171168
      %v3282 = vunpack.c.0.s8 %v3281
      %v3283 = vlaneseq
      %v3284 = vshrl.u32 %v3283, 7
      %v3285 = vsub.s32 %v3282, %v3284
      %v3286 = vrot.slane %v3279, %v3285
      %v3288 = vunpack.c.l.s4 1966171168
      %v3289 = vunpack.c.0.s8 %v3288
      %v3290 = vlaneseq
      %v3291 = vshrl.u32 %v3290, 7
      %v3292 = vsub.s32 %v3289, %v3291
      %v3293 = vrot.slane %v3103, %v3292
      %v3294 = vcombine.high %v3293, %v3293
      %v3296 = vunpack.c.l.s4 1966171168
      %v3297 = vunpack.c.0.s8 %v3296
      %v3298 = vlaneseq
      %v3299 = vshrl.u32 %v3298, 7
      %v3300 = vsub.s32 %v3297, %v3299
      %v3301 = vrot.slane %v3293, %v3300
      %v3303 = vunpack.c.l.s4 1966171168
      %v3304 = vunpack.c.0.s8 %v3303
      %v3305 = vlaneseq
      %v3306 = vshrl.u32 %v3305, 7
      %v3307 = vsub.s32 %v3304, %v3306
      %v3308 = vrot.slane %v3294, %v3307
      %v3309 = vcombine.high %v3301, %v3301
      %v3310 = vcombine.high %v3308, %v3308
      %v3312 = vunpack.c.l.s4 1966171168
      %v3313 = vunpack.c.0.s8 %v3312
      %v3314 = vlaneseq
      %v3315 = vshrl.u32 %v3314, 7
      %v3316 = vsub.s32 %v3313, %v3315
      %v3317 = vrot.slane %v3104, %v3316
      %v3319 = vunpack.c.l.s4 1966171168
      %v3320 = vunpack.c.0.s8 %v3319
      %v3321 = vlaneseq
      %v3322 = vshrl.u32 %v3321, 7
      %v3323 = vsub.s32 %v3320, %v3322
      %v3324 = vrot.slane %v3317, %v3323
      %v3326 = vunpack.c.l.s4 1966171168
      %v3327 = vunpack.c.0.s8 %v3326
      %v3328 = vlaneseq
      %v3329 = vshrl.u32 %v3328, 7
      %v3330 = vsub.s32 %v3327, %v3329
      %v3331 = vrot.slane %v3105, %v3330
      %v3332 = vcombine.high %v3331, %v3331
      %v3334 = vunpack.c.l.s4 1966171168
      %v3335 = vunpack.c.0.s8 %v3334
      %v3336 = vlaneseq
      %v3337 = vshrl.u32 %v3336, 7
      %v3338 = vsub.s32 %v3335, %v3337
      %v3339 = vrot.slane %v3331, %v3338
      %v3341 = vunpack.c.l.s4 1966171168
      %v3342 = vunpack.c.0.s8 %v3341
      %v3343 = vlaneseq
      %v3344 = vshrl.u32 %v3343, 7
      %v3345 = vsub.s32 %v3342, %v3344
      %v3346 = vrot.slane %v3332, %v3345
      %v3347 = vcombine.high %v3339, %v3339
      %v3348 = vcombine.high %v3346, %v3346
      %v3350 = vunpack.c.l.s4 1966171168
      %v3351 = vunpack.c.0.s8 %v3350
      %v3352 = vlaneseq
      %v3353 = vshrl.u32 %v3352, 7
      %v3354 = vsub.s32 %v3351, %v3353
      %v3355 = vrot.slane %v3106, %v3354
      %v3357 = vunpack.c.l.s4 1966171168
      %v3358 = vunpack.c.0.s8 %v3357
      %v3359 = vlaneseq
      %v3360 = vshrl.u32 %v3359, 7
      %v3361 = vsub.s32 %v3358, %v3360
      %v3362 = vrot.slane %v3355, %v3361
      %v3364 = vunpack.c.l.s4 1966171168
      %v3365 = vunpack.c.0.s8 %v3364
      %v3366 = vlaneseq
      %v3367 = vshrl.u32 %v3366, 7
      %v3368 = vsub.s32 %v3365, %v3367
      %v3369 = vrot.slane %v3107, %v3368
      %v3370 = vcombine.high %v3369, %v3369
      %v3372 = vunpack.c.l.s4 1966171168
      %v3373 = vunpack.c.0.s8 %v3372
      %v3374 = vlaneseq
      %v3375 = vshrl.u32 %v3374, 7
      %v3376 = vsub.s32 %v3373, %v3375
      %v3377 = vrot.slane %v3369, %v3376
      %v3379 = vunpack.c.l.s4 1966171168
      %v3380 = vunpack.c.0.s8 %v3379
      %v3381 = vlaneseq
      %v3382 = vshrl.u32 %v3381, 7
      %v3383 = vsub.s32 %v3380, %v3382
      %v3384 = vrot.slane %v3370, %v3383
      %v3385 = vcombine.high %v3377, %v3377
      %v3386 = vcombine.high %v3384, %v3384
      %v3388 = vunpack.c.l.s4 1966171168
      %v3389 = vunpack.c.0.s8 %v3388
      %v3390 = vlaneseq
      %v3391 = vshrl.u32 %v3390, 7
      %v3392 = vsub.s32 %v3389, %v3391
      %v3393 = vrot.slane %v3108, %v3392
      %v3395 = vunpack.c.l.s4 1966171168
      %v3396 = vunpack.c.0.s8 %v3395
      %v3397 = vlaneseq
      %v3398 = vshrl.u32 %v3397, 7
      %v3399 = vsub.s32 %v3396, %v3398
      %v3400 = vrot.slane %v3393, %v3399
      %v3402 = vunpack.c.l.s4 1966171168
      %v3403 = vunpack.c.0.s8 %v3402
      %v3404 = vlaneseq
      %v3405 = vshrl.u32 %v3404, 7
      %v3406 = vsub.s32 %v3403, %v3405
      %v3407 = vrot.slane %v3109, %v3406
      %v3408 = vcombine.high %v3407, %v3407
      %v3410 = vunpack.c.l.s4 1966171168
      %v3411 = vunpack.c.0.s8 %v3410
      %v3412 = vlaneseq
      %v3413 = vshrl.u32 %v3412, 7
      %v3414 = vsub.s32 %v3411, %v3413
      %v3415 = vrot.slane %v3407, %v3414
      %v3417 = vunpack.c.l.s4 1966171168
      %v3418 = vunpack.c.0.s8 %v3417
      %v3419 = vlaneseq
      %v3420 = vshrl.u32 %v3419, 7
      %v3421 = vsub.s32 %v3418, %v3420
      %v3422 = vrot.slane %v3408, %v3421
      %v3423 = vcombine.high %v3415, %v3415
      %v3424 = vcombine.high %v3422, %v3422
      %v3426 = vunpack.c.l.s4 1966171168
      %v3427 = vunpack.c.0.s8 %v3426
      %v3428 = vlaneseq
      %v3429 = vshrl.u32 %v3428, 7
      %v3430 = vsub.s32 %v3427, %v3429
      %v3431 = vrot.slane %v3110, %v3430
      %v3433 = vunpack.c.l.s4 1966171168
      %v3434 = vunpack.c.0.s8 %v3433
      %v3435 = vlaneseq
      %v3436 = vshrl.u32 %v3435, 7
      %v3437 = vsub.s32 %v3434, %v3436
      %v3438 = vrot.slane %v3431, %v3437
      %v3440 = vunpack.c.l.s4 1966171168
      %v3441 = vunpack.c.0.s8 %v3440
      %v3442 = vlaneseq
      %v3443 = vshrl.u32 %v3442, 7
      %v3444 = vsub.s32 %v3441, %v3443
      %v3445 = vrot.slane %v3111, %v3444
      %v3446 = vcombine.high %v3445, %v3445
      %v3448 = vunpack.c.l.s4 1966171168
      %v3449 = vunpack.c.0.s8 %v3448
      %v3450 = vlaneseq
      %v3451 = vshrl.u32 %v3450, 7
      %v3452 = vsub.s32 %v3449, %v3451
      %v3453 = vrot.slane %v3445, %v3452
      %v3455 = vunpack.c.l.s4 1966171168
      %v3456 = vunpack.c.0.s8 %v3455
      %v3457 = vlaneseq
      %v3458 = vshrl.u32 %v3457, 7
      %v3459 = vsub.s32 %v3456, %v3458
      %v3460 = vrot.slane %v3446, %v3459
      %v3461 = vcombine.high %v3453, %v3453
      %v3462 = vcombine.high %v3460, %v3460
      %v3464 = vunpack.c.l.s4 1966171168
      %v3465 = vunpack.c.0.s8 %v3464
      %v3466 = vlaneseq
      %v3467 = vshrl.u32 %v3466, 7
      %v3468 = vsub.s32 %v3465, %v3467
      %v3469 = vrot.slane %v3112, %v3468
      %v3471 = vunpack.c.l.s4 1966171168
      %v3472 = vunpack.c.0.s8 %v3471
      %v3473 = vlaneseq
      %v3474 = vshrl.u32 %v3473, 7
      %v3475 = vsub.s32 %v3472, %v3474
      %v3476 = vrot.slane %v3469, %v3475
      %v3478 = vunpack.c.l.s4 1966171168
      %v3479 = vunpack.c.0.s8 %v3478
      %v3480 = vlaneseq
      %v3481 = vshrl.u32 %v3480, 7
      %v3482 = vsub.s32 %v3479, %v3481
      %v3483 = vrot.slane %v3113, %v3482
      %v3484 = vcombine.high %v3483, %v3483
      %v3486 = vunpack.c.l.s4 1966171168
      %v3487 = vunpack.c.0.s8 %v3486
      %v3488 = vlaneseq
      %v3489 = vshrl.u32 %v3488, 7
      %v3490 = vsub.s32 %v3487, %v3489
      %v3491 = vrot.slane %v3483, %v3490
      %v3493 = vunpack.c.l.s4 1966171168
      %v3494 = vunpack.c.0.s8 %v3493
      %v3495 = vlaneseq
      %v3496 = vshrl.u32 %v3495, 7
      %v3497 = vsub.s32 %v3494, %v3496
      %v3498 = vrot.slane %v3484, %v3497
      %v3499 = vcombine.high %v3491, %v3491
      %v3500 = vcombine.high %v3498, %v3498
      %v3502 = vunpack.c.l.s4 1966171168
      %v3503 = vunpack.c.0.s8 %v3502
      %v3504 = vlaneseq
      %v3505 = vshrl.u32 %v3504, 7
      %v3506 = vsub.s32 %v3503, %v3505
      %v3507 = vrot.slane %v3114, %v3506
      %v3509 = vunpack.c.l.s4 1966171168
      %v3510 = vunpack.c.0.s8 %v3509
      %v3511 = vlaneseq
      %v3512 = vshrl.u32 %v3511, 7
      %v3513 = vsub.s32 %v3510, %v3512
      %v3514 = vrot.slane %v3507, %v3513
      %s3515 = scalar_lea.vmem %s1, 12
      %v3516 = vld [vmem:[%s3515] sm:$0xf]
      %v3517 = vcombine.low %v3149, %v3156
      %v3518 = vcombine.low %v3157, %v3158
      %v3519 = vcombine.low %v3172, %v3187
      %v3520 = vcombine.low %v3194, %v3195
      %v3522 = vunpack.c.l.s4 1966171168
      %v3523 = vunpack.c.0.s8 %v3522
      %v3524 = vlaneseq
      %v3525 = vshrl.u32 %v3524, 7
      %v3526 = vsub.s32 %v3523, %v3525
      %v3527 = vrot.slane %v3517, %v3526
      %v3529 = vunpack.c.l.s4 1966171168
      %v3530 = vunpack.c.0.s8 %v3529
      %v3531 = vlaneseq
      %v3532 = vshrl.u32 %v3531, 7
      %v3533 = vsub.s32 %v3530, %v3532
      %v3534 = vrot.slane %v3518, %v3533
      %v3536 = vunpack.c.l.s4 1966171168
      %v3537 = vunpack.c.0.s8 %v3536
      %v3538 = vlaneseq
      %v3539 = vshrl.u32 %v3538, 7
      %v3540 = vsub.s32 %v3537, %v3539
      %v3541 = vrot.slane %v3519, %v3540
      %v3543 = vunpack.c.l.s4 1966171168
      %v3544 = vunpack.c.0.s8 %v3543
      %v3545 = vlaneseq
      %v3546 = vshrl.u32 %v3545, 7
      %v3547 = vsub.s32 %v3544, %v3546
      %v3548 = vrot.slane %v3520, %v3547
      %v3549 = vcombine.low %v3527, %v3534
      %v3550 = vcombine.low %v3541, %v3548
      %v3552 = vunpack.c.l.s4 1966171168
      %v3553 = vunpack.c.0.s8 %v3552
      %v3554 = vlaneseq
      %v3555 = vshrl.u32 %v3554, 7
      %v3556 = vsub.s32 %v3553, %v3555
      %v3557 = vrot.slane %v3549, %v3556
      %v3559 = vunpack.c.l.s4 1966171168
      %v3560 = vunpack.c.0.s8 %v3559
      %v3561 = vlaneseq
      %v3562 = vshrl.u32 %v3561, 7
      %v3563 = vsub.s32 %v3560, %v3562
      %v3564 = vrot.slane %v3550, %v3563
      %v3565 = vcombine.low %v3557, %v3564
      %v3566 = vcombine.low %v3196, %v3210
      %v3567 = vcombine.low %v3225, %v3232
      %v3568 = vcombine.low %v3233, %v3234
      %v3569 = vcombine.low %v3248, %v3263
      %v3571 = vunpack.c.l.s4 1966171168
      %v3572 = vunpack.c.0.s8 %v3571
      %v3573 = vlaneseq
      %v3574 = vshrl.u32 %v3573, 7
      %v3575 = vsub.s32 %v3572, %v3574
      %v3576 = vrot.slane %v3566, %v3575
      %v3578 = vunpack.c.l.s4 1966171168
      %v3579 = vunpack.c.0.s8 %v3578
      %v3580 = vlaneseq
      %v3581 = vshrl.u32 %v3580, 7
      %v3582 = vsub.s32 %v3579, %v3581
      %v3583 = vrot.slane %v3567, %v3582
      %v3585 = vunpack.c.l.s4 1966171168
      %v3586 = vunpack.c.0.s8 %v3585
      %v3587 = vlaneseq
      %v3588 = vshrl.u32 %v3587, 7
      %v3589 = vsub.s32 %v3586, %v3588
      %v3590 = vrot.slane %v3568, %v3589
      %v3592 = vunpack.c.l.s4 1966171168
      %v3593 = vunpack.c.0.s8 %v3592
      %v3594 = vlaneseq
      %v3595 = vshrl.u32 %v3594, 7
      %v3596 = vsub.s32 %v3593, %v3595
      %v3597 = vrot.slane %v3569, %v3596
      %v3598 = vcombine.low %v3576, %v3583
      %v3599 = vcombine.low %v3590, %v3597
      %v3601 = vunpack.c.l.s4 1966171168
      %v3602 = vunpack.c.0.s8 %v3601
      %v3603 = vlaneseq
      %v3604 = vshrl.u32 %v3603, 7
      %v3605 = vsub.s32 %v3602, %v3604
      %v3606 = vrot.slane %v3598, %v3605
      %v3608 = vunpack.c.l.s4 1966171168
      %v3609 = vunpack.c.0.s8 %v3608
      %v3610 = vlaneseq
      %v3611 = vshrl.u32 %v3610, 7
      %v3612 = vsub.s32 %v3609, %v3611
      %v3613 = vrot.slane %v3599, %v3612
      %v3614 = vcombine.low %v3606, %v3613
      %v3615 = vcombine.low %v3270, %v3271
      %v3616 = vcombine.low %v3272, %v3286
      %v3617 = vcombine.low %v3301, %v3308
      %v3618 = vcombine.low %v3309, %v3310
      %v3620 = vunpack.c.l.s4 1966171168
      %v3621 = vunpack.c.0.s8 %v3620
      %v3622 = vlaneseq
      %v3623 = vshrl.u32 %v3622, 7
      %v3624 = vsub.s32 %v3621, %v3623
      %v3625 = vrot.slane %v3615, %v3624
      %v3627 = vunpack.c.l.s4 1966171168
      %v3628 = vunpack.c.0.s8 %v3627
      %v3629 = vlaneseq
      %v3630 = vshrl.u32 %v3629, 7
      %v3631 = vsub.s32 %v3628, %v3630
      %v3632 = vrot.slane %v3616, %v3631
      %v3634 = vunpack.c.l.s4 1966171168
      %v3635 = vunpack.c.0.s8 %v3634
      %v3636 = vlaneseq
      %v3637 = vshrl.u32 %v3636, 7
      %v3638 = vsub.s32 %v3635, %v3637
      %v3639 = vrot.slane %v3617, %v3638
      %v3641 = vunpack.c.l.s4 1966171168
      %v3642 = vunpack.c.0.s8 %v3641
      %v3643 = vlaneseq
      %v3644 = vshrl.u32 %v3643, 7
      %v3645 = vsub.s32 %v3642, %v3644
      %v3646 = vrot.slane %v3618, %v3645
      %v3647 = vcombine.low %v3625, %v3632
      %v3648 = vcombine.low %v3639, %v3646
      %v3650 = vunpack.c.l.s4 1966171168
      %v3651 = vunpack.c.0.s8 %v3650
      %v3652 = vlaneseq
      %v3653 = vshrl.u32 %v3652, 7
      %v3654 = vsub.s32 %v3651, %v3653
      %v3655 = vrot.slane %v3647, %v3654
      %v3657 = vunpack.c.l.s4 1966171168
      %v3658 = vunpack.c.0.s8 %v3657
      %v3659 = vlaneseq
      %v3660 = vshrl.u32 %v3659, 7
      %v3661 = vsub.s32 %v3658, %v3660
      %v3662 = vrot.slane %v3648, %v3661
      %v3663 = vcombine.low %v3655, %v3662
      %v3664 = vcombine.low %v3324, %v3339
      %v3665 = vcombine.low %v3346, %v3347
      %v3666 = vcombine.low %v3348, %v3362
      %v3667 = vcombine.low %v3377, %v3384
      %v3669 = vunpack.c.l.s4 1966171168
      %v3670 = vunpack.c.0.s8 %v3669
      %v3671 = vlaneseq
      %v3672 = vshrl.u32 %v3671, 7
      %v3673 = vsub.s32 %v3670, %v3672
      %v3674 = vrot.slane %v3664, %v3673
      %v3676 = vunpack.c.l.s4 1966171168
      %v3677 = vunpack.c.0.s8 %v3676
      %v3678 = vlaneseq
      %v3679 = vshrl.u32 %v3678, 7
      %v3680 = vsub.s32 %v3677, %v3679
      %v3681 = vrot.slane %v3665, %v3680
      %v3683 = vunpack.c.l.s4 1966171168
      %v3684 = vunpack.c.0.s8 %v3683
      %v3685 = vlaneseq
      %v3686 = vshrl.u32 %v3685, 7
      %v3687 = vsub.s32 %v3684, %v3686
      %v3688 = vrot.slane %v3666, %v3687
      %v3690 = vunpack.c.l.s4 1966171168
      %v3691 = vunpack.c.0.s8 %v3690
      %v3692 = vlaneseq
      %v3693 = vshrl.u32 %v3692, 7
      %v3694 = vsub.s32 %v3691, %v3693
      %v3695 = vrot.slane %v3667, %v3694
      %v3696 = vcombine.low %v3674, %v3681
      %v3697 = vcombine.low %v3688, %v3695
      %v3699 = vunpack.c.l.s4 1966171168
      %v3700 = vunpack.c.0.s8 %v3699
      %v3701 = vlaneseq
      %v3702 = vshrl.u32 %v3701, 7
      %v3703 = vsub.s32 %v3700, %v3702
      %v3704 = vrot.slane %v3696, %v3703
      %v3706 = vunpack.c.l.s4 1966171168
      %v3707 = vunpack.c.0.s8 %v3706
      %v3708 = vlaneseq
      %v3709 = vshrl.u32 %v3708, 7
      %v3710 = vsub.s32 %v3707, %v3709
      %v3711 = vrot.slane %v3697, %v3710
      %v3712 = vcombine.low %v3704, %v3711
      %v3713 = vcombine.low %v3385, %v3386
      %v3714 = vcombine.low %v3400, %v3415
      %v3715 = vcombine.low %v3422, %v3423
      %v3716 = vcombine.low %v3424, %v3438
      %v3718 = vunpack.c.l.s4 1966171168
      %v3719 = vunpack.c.0.s8 %v3718
      %v3720 = vlaneseq
      %v3721 = vshrl.u32 %v3720, 7
      %v3722 = vsub.s32 %v3719, %v3721
      %v3723 = vrot.slane %v3713, %v3722
      %v3725 = vunpack.c.l.s4 1966171168
      %v3726 = vunpack.c.0.s8 %v3725
      %v3727 = vlaneseq
      %v3728 = vshrl.u32 %v3727, 7
      %v3729 = vsub.s32 %v3726, %v3728
      %v3730 = vrot.slane %v3714, %v3729
      %v3732 = vunpack.c.l.s4 1966171168
      %v3733 = vunpack.c.0.s8 %v3732
      %v3734 = vlaneseq
      %v3735 = vshrl.u32 %v3734, 7
      %v3736 = vsub.s32 %v3733, %v3735
      %v3737 = vrot.slane %v3715, %v3736
      %v3739 = vunpack.c.l.s4 1966171168
      %v3740 = vunpack.c.0.s8 %v3739
      %v3741 = vlaneseq
      %v3742 = vshrl.u32 %v3741, 7
      %v3743 = vsub.s32 %v3740, %v3742
      %v3744 = vrot.slane %v3716, %v3743
      %v3745 = vcombine.low %v3723, %v3730
      %v3746 = vcombine.low %v3737, %v3744
      %v3748 = vunpack.c.l.s4 1966171168
      %v3749 = vunpack.c.0.s8 %v3748
      %v3750 = vlaneseq
      %v3751 = vshrl.u32 %v3750, 7
      %v3752 = vsub.s32 %v3749, %v3751
      %v3753 = vrot.slane %v3745, %v3752
      %v3755 = vunpack.c.l.s4 1966171168
      %v3756 = vunpack.c.0.s8 %v3755
      %v3757 = vlaneseq
      %v3758 = vshrl.u32 %v3757, 7
      %v3759 = vsub.s32 %v3756, %v3758
      %v3760 = vrot.slane %v3746, %v3759
      %v3761 = vcombine.low %v3753, %v3760
      %v3762 = vcombine.low %v3453, %v3460
      %v3763 = vcombine.low %v3461, %v3462
      %v3764 = vcombine.low %v3476, %v3491
      %v3765 = vcombine.low %v3498, %v3499
      %v3767 = vunpack.c.l.s4 1966171168
      %v3768 = vunpack.c.0.s8 %v3767
      %v3769 = vlaneseq
      %v3770 = vshrl.u32 %v3769, 7
      %v3771 = vsub.s32 %v3768, %v3770
      %v3772 = vrot.slane %v3762, %v3771
      %v3774 = vunpack.c.l.s4 1966171168
      %v3775 = vunpack.c.0.s8 %v3774
      %v3776 = vlaneseq
      %v3777 = vshrl.u32 %v3776, 7
      %v3778 = vsub.s32 %v3775, %v3777
      %v3779 = vrot.slane %v3763, %v3778
      %v3781 = vunpack.c.l.s4 1966171168
      %v3782 = vunpack.c.0.s8 %v3781
      %v3783 = vlaneseq
      %v3784 = vshrl.u32 %v3783, 7
      %v3785 = vsub.s32 %v3782, %v3784
      %v3786 = vrot.slane %v3764, %v3785
      %v3788 = vunpack.c.l.s4 1966171168
      %v3789 = vunpack.c.0.s8 %v3788
      %v3790 = vlaneseq
      %v3791 = vshrl.u32 %v3790, 7
      %v3792 = vsub.s32 %v3789, %v3791
      %v3793 = vrot.slane %v3765, %v3792
      %v3794 = vcombine.low %v3772, %v3779
      %v3795 = vcombine.low %v3786, %v3793
      %v3797 = vunpack.c.l.s4 1966171168
      %v3798 = vunpack.c.0.s8 %v3797
      %v3799 = vlaneseq
      %v3800 = vshrl.u32 %v3799, 7
      %v3801 = vsub.s32 %v3798, %v3800
      %v3802 = vrot.slane %v3794, %v3801
      %v3804 = vunpack.c.l.s4 1966171168
      %v3805 = vunpack.c.0.s8 %v3804
      %v3806 = vlaneseq
      %v3807 = vshrl.u32 %v3806, 7
      %v3808 = vsub.s32 %v3805, %v3807
      %v3809 = vrot.slane %v3795, %v3808
      %v3810 = vcombine.low %v3802, %v3809
      %v3811 = vcombine.low %v3500, %v3514
      %v3813 = vunpack.c.l.s4 1966171168
      %v3814 = vunpack.c.0.s8 %v3813
      %v3815 = vlaneseq
      %v3816 = vshrl.u32 %v3815, 7
      %v3817 = vsub.s32 %v3814, %v3816
      %v3818 = vrot.slane %v3811, %v3817
      %v3820 = vunpack.c.l.s4 1966171168
      %v3821 = vunpack.c.0.s8 %v3820
      %v3822 = vlaneseq
      %v3823 = vshrl.u32 %v3822, 7
      %v3824 = vsub.s32 %v3821, %v3823
      %v3825 = vrot.slane %v3818, %v3824
      %v3827 = vsel %vm1623, %v3565, 0
      %v3830 = vsel %vm1623, %v3614, 0
      %v3833 = vsel %vm1623, %v3663, 0
      %v3836 = vsel %vm1623, %v3712, 0
      %v3839 = vsel %vm1623, %v3761, 0
      %v3842 = vsel %vm1623, %v3810, 0
      %v3845 = vsel %vm1623, %v3825, 0
      %v3848 = vsel %vm1645, %v3516, 0
      %3850 = vmatprep.subr.bf16.mxu0 0
      %3851 = vmatpush1.bf16.msra.mxu0 %v3848
      %3852 = vmatprep.subr.bf16.mxu0 0
      %3853 = vmatpush1.bf16.msra.mxu0 0
      %3854 = vmatprep.subr.bf16.mxu0 0
      %3855 = vmatpush1.bf16.msra.mxu0 0
      %3856 = vmatprep.subr.bf16.mxu0 0
      %3857 = vmatpush1.bf16.msra.mxu0 0
      %3858 = vmatprep.subr.bf16.mxu0 0
      %3859 = vmatpush1.bf16.msra.mxu0 0
      %3860 = vmatprep.subr.bf16.mxu0 0
      %3861 = vmatpush1.bf16.msra.mxu0 0
      %3862 = vmatprep.subr.bf16.mxu0 0
      %3863 = vmatpush1.bf16.msra.mxu0 0
      %3864 = vmatprep.subr.bf16.mxu0 0
      %3865 = vmatpush1.bf16.msra.mxu0 0
      %3866 = vmatprep.subr.bf16.mxu0 0
      %3867 = vmatpush1.bf16.msra.mxu0 0
      %3868 = vmatprep.subr.bf16.mxu0 0
      %3869 = vmatpush1.bf16.msra.mxu0 0
      %3870 = vmatprep.subr.bf16.mxu0 0
      %3871 = vmatpush1.bf16.msra.mxu0 0
      %3872 = vmatprep.subr.bf16.mxu0 0
      %3873 = vmatpush1.bf16.msra.mxu0 0
      %3874 = vmatprep.subr.bf16.mxu0 0
      %3875 = vmatpush1.bf16.msra.mxu0 0
      %3876 = vmatprep.subr.bf16.mxu0 0
      %3877 = vmatpush1.bf16.msra.mxu0 0
      %3878 = vmatprep.subr.bf16.mxu0 0
      %3879 = vmatpush1.bf16.msra.mxu0 0
      %3880 = vmatprep.subr.bf16.mxu0 0
      %3881 = vmatpush1.bf16.msra.mxu0 0
      %3882 = vmatprep.mubr.bf16.mxu0 0
      %3883 = vmatmul.mubr.bf16.gmra.mrb[0].mxu0 %v3827
      %v3884 = vpop.f32.mrb[0].mxu0
      %v3885 = vadd.f32 0.0, %v3884
      %v3886 = vpop.f32.mrb[0].mxu0
      %v3887 = vpop.f32.mrb[0].mxu0
      %v3888 = vadd.f32 0.0, %v3887
      %v3889 = vpop.f32.mrb[0].mxu0
      %3890 = vmatprep.mubr.bf16.mxu0 0
      %3891 = vmatmul.mubr.bf16.gmra.mrb[0].mxu0 %v3830
      %v3892 = vpop.f32.mrb[0].mxu0
      %v3893 = vadd.f32 0.0, %v3892
      %v3894 = vpop.f32.mrb[0].mxu0
      %v3895 = vpop.f32.mrb[0].mxu0
      %v3896 = vadd.f32 0.0, %v3895
      %v3897 = vpop.f32.mrb[0].mxu0
      %3898 = vmatprep.mubr.bf16.mxu0 0
      %3899 = vmatmul.mubr.bf16.gmra.mrb[0].mxu0 %v3833
      %v3900 = vpop.f32.mrb[0].mxu0
      %v3901 = vadd.f32 0.0, %v3900
      %v3902 = vpop.f32.mrb[0].mxu0
      %v3903 = vpop.f32.mrb[0].mxu0
      %v3904 = vadd.f32 0.0, %v3903
      %v3905 = vpop.f32.mrb[0].mxu0
      %3906 = vmatprep.mubr.bf16.mxu0 0
      %3907 = vmatmul.mubr.bf16.gmra.mrb[0].mxu0 %v3836
      %v3908 = vpop.f32.mrb[0].mxu0
      %v3909 = vadd.f32 0.0, %v3908
      %v3910 = vpop.f32.mrb[0].mxu0
      %v3911 = vpop.f32.mrb[0].mxu0
      %v3912 = vadd.f32 0.0, %v3911
      %v3913 = vpop.f32.mrb[0].mxu0
      %3914 = vmatprep.mubr.bf16.mxu0 0
      %3915 = vmatmul.mubr.bf16.gmra.mrb[0].mxu0 %v3839
      %v3916 = vpop.f32.mrb[0].mxu0
      %v3917 = vadd.f32 0.0, %v3916
      %v3918 = vpop.f32.mrb[0].mxu0
      %v3919 = vpop.f32.mrb[0].mxu0
      %v3920 = vadd.f32 0.0, %v3919
      %v3921 = vpop.f32.mrb[0].mxu0
      %3922 = vmatprep.mubr.bf16.mxu0 0
      %3923 = vmatmul.mubr.bf16.gmra.mrb[0].mxu0 %v3842
      %v3924 = vpop.f32.mrb[0].mxu0
      %v3925 = vadd.f32 0.0, %v3924
      %v3926 = vpop.f32.mrb[0].mxu0
      %v3927 = vpop.f32.mrb[0].mxu0
      %v3928 = vadd.f32 0.0, %v3927
      %v3929 = vpop.f32.mrb[0].mxu0
      %3930 = vmatprep.mubr.bf16.mxu0 0
      %3931 = vmatmul.mubr.bf16.gmra.mrb[0].mxu0 %v3845
      %v3932 = vpop.f32.mrb[0].mxu0
      %v3933 = vadd.f32 0.0, %v3932
      %v3934 = vpop.f32.mrb[0].mxu0
      %v3935 = vpop.f32.mrb[0].mxu0
      %v3936 = vpop.f32.mrb[0].mxu0
      %3937 = vdwg.mxu0
      %v3938 = vadd.f32 %v3081, %v3885
      %v3939 = vadd.f32 %v3082, %v3888
      %v3940 = vadd.f32 %v3083, %v3893
      %v3941 = vadd.f32 %v3084, %v3896
      %v3942 = vadd.f32 %v3085, %v3901
      %v3943 = vadd.f32 %v3086, %v3904
      %v3944 = vadd.f32 %v3087, %v3909
      %v3945 = vadd.f32 %v3088, %v3912
      %v3946 = vadd.f32 %v3089, %v3917
      %v3947 = vadd.f32 %v3090, %v3920
      %v3948 = vadd.f32 %v3091, %v3925
      %v3949 = vadd.f32 %v3092, %v3928
      %v3950 = vadd.f32 %v3093, %v3933
      %v3951 = vld [vmem:[%s3094] sm:$0xf]
      %v3952 = vld [vmem:[%s3094 + $0x4] sm:$0x3]
      %v3953 = vld [vmem:[%s3094 + $0x8] sm:$0xf]
      %v3954 = vld [vmem:[%s3094 + $0xc] sm:$0x3]
      %v3955 = vld [vmem:[%s3094 + $0x10] sm:$0xf]
      %v3956 = vld [vmem:[%s3094 + $0x14] sm:$0x3]
      %v3957 = vld [vmem:[%s3094 + $0x18] sm:$0xf]
      %v3958 = vld [vmem:[%s3094 + $0x1c] sm:$0x3]
      %v3959 = vld [vmem:[%s3094 + $0x20] sm:$0xf]
      %v3960 = vld [vmem:[%s3094 + $0x24] sm:$0x3]
      %v3961 = vld [vmem:[%s3094 + $0x28] sm:$0xf]
      %v3962 = vld [vmem:[%s3094 + $0x2c] sm:$0x3]
      %v3963 = vld [vmem:[%s3094 + $0x30] sm:$0xf]
      %v3964 = vld [vmem:[%s3094 + $0x34] sm:$0x3]
      %v3965 = vld [vmem:[%s3094 + $0x38] sm:$0xf]
      %v3966 = vld [vmem:[%s3094 + $0x3c] sm:$0x3]
      %v3967 = vld [vmem:[%s3094 + $0x40] sm:$0xf]
      %v3968 = vld [vmem:[%s3094 + $0x44] sm:$0x3]
      %v3969 = vld [vmem:[%s3094 + $0x48] sm:$0xf]
      %v3970 = vld [vmem:[%s3094 + $0x4c] sm:$0x3]
      %v3992 = vunpack.c.l.s4 1966171168
      %v3993 = vunpack.c.0.s8 %v3992
      %v3994 = vlaneseq
      %v3995 = vshrl.u32 %v3994, 7
      %v3996 = vsub.s32 %v3993, %v3995
      %v3997 = vrot.slane %v3951, %v3996
      %v3998 = vcombine.high %v3997, %v3997
      %v4000 = vunpack.c.l.s4 1966171168
      %v4001 = vunpack.c.0.s8 %v4000
      %v4002 = vlaneseq
      %v4003 = vshrl.u32 %v4002, 7
      %v4004 = vsub.s32 %v4001, %v4003
      %v4005 = vrot.slane %v3997, %v4004
      %v4007 = vunpack.c.l.s4 1966171168
      %v4008 = vunpack.c.0.s8 %v4007
      %v4009 = vlaneseq
      %v4010 = vshrl.u32 %v4009, 7
      %v4011 = vsub.s32 %v4008, %v4010
      %v4012 = vrot.slane %v3998, %v4011
      %v4013 = vcombine.high %v4005, %v4005
      %v4014 = vcombine.high %v4012, %v4012
      %v4016 = vunpack.c.l.s4 1966171168
      %v4017 = vunpack.c.0.s8 %v4016
      %v4018 = vlaneseq
      %v4019 = vshrl.u32 %v4018, 7
      %v4020 = vsub.s32 %v4017, %v4019
      %v4021 = vrot.slane %v3952, %v4020
      %v4022 = vcombine.high %v4021, %v4021
      %v4024 = vunpack.c.l.s4 1966171168
      %v4025 = vunpack.c.0.s8 %v4024
      %v4026 = vlaneseq
      %v4027 = vshrl.u32 %v4026, 7
      %v4028 = vsub.s32 %v4025, %v4027
      %v4029 = vrot.slane %v4021, %v4028
      %v4031 = vunpack.c.l.s4 1966171168
      %v4032 = vunpack.c.0.s8 %v4031
      %v4033 = vlaneseq
      %v4034 = vshrl.u32 %v4033, 7
      %v4035 = vsub.s32 %v4032, %v4034
      %v4036 = vrot.slane %v4022, %v4035
      %v4038 = vunpack.c.l.s4 1966171168
      %v4039 = vunpack.c.0.s8 %v4038
      %v4040 = vlaneseq
      %v4041 = vshrl.u32 %v4040, 7
      %v4042 = vsub.s32 %v4039, %v4041
      %v4043 = vrot.slane %v3953, %v4042
      %v4044 = vcombine.high %v4043, %v4043
      %v4046 = vunpack.c.l.s4 1966171168
      %v4047 = vunpack.c.0.s8 %v4046
      %v4048 = vlaneseq
      %v4049 = vshrl.u32 %v4048, 7
      %v4050 = vsub.s32 %v4047, %v4049
      %v4051 = vrot.slane %v4043, %v4050
      %v4053 = vunpack.c.l.s4 1966171168
      %v4054 = vunpack.c.0.s8 %v4053
      %v4055 = vlaneseq
      %v4056 = vshrl.u32 %v4055, 7
      %v4057 = vsub.s32 %v4054, %v4056
      %v4058 = vrot.slane %v4044, %v4057
      %v4059 = vcombine.high %v4051, %v4051
      %v4060 = vcombine.high %v4058, %v4058
      %v4062 = vunpack.c.l.s4 1966171168
      %v4063 = vunpack.c.0.s8 %v4062
      %v4064 = vlaneseq
      %v4065 = vshrl.u32 %v4064, 7
      %v4066 = vsub.s32 %v4063, %v4065
      %v4067 = vrot.slane %v3954, %v4066
      %v4068 = vcombine.high %v4067, %v4067
      %v4070 = vunpack.c.l.s4 1966171168
      %v4071 = vunpack.c.0.s8 %v4070
      %v4072 = vlaneseq
      %v4073 = vshrl.u32 %v4072, 7
      %v4074 = vsub.s32 %v4071, %v4073
      %v4075 = vrot.slane %v4067, %v4074
      %v4077 = vunpack.c.l.s4 1966171168
      %v4078 = vunpack.c.0.s8 %v4077
      %v4079 = vlaneseq
      %v4080 = vshrl.u32 %v4079, 7
      %v4081 = vsub.s32 %v4078, %v4080
      %v4082 = vrot.slane %v4068, %v4081
      %v4084 = vunpack.c.l.s4 1966171168
      %v4085 = vunpack.c.0.s8 %v4084
      %v4086 = vlaneseq
      %v4087 = vshrl.u32 %v4086, 7
      %v4088 = vsub.s32 %v4085, %v4087
      %v4089 = vrot.slane %v3955, %v4088
      %v4090 = vcombine.high %v4089, %v4089
      %v4092 = vunpack.c.l.s4 1966171168
      %v4093 = vunpack.c.0.s8 %v4092
      %v4094 = vlaneseq
      %v4095 = vshrl.u32 %v4094, 7
      %v4096 = vsub.s32 %v4093, %v4095
      %v4097 = vrot.slane %v4089, %v4096
      %v4099 = vunpack.c.l.s4 1966171168
      %v4100 = vunpack.c.0.s8 %v4099
      %v4101 = vlaneseq
      %v4102 = vshrl.u32 %v4101, 7
      %v4103 = vsub.s32 %v4100, %v4102
      %v4104 = vrot.slane %v4090, %v4103
      %v4105 = vcombine.high %v4097, %v4097
      %v4106 = vcombine.high %v4104, %v4104
      %v4108 = vunpack.c.l.s4 1966171168
      %v4109 = vunpack.c.0.s8 %v4108
      %v4110 = vlaneseq
      %v4111 = vshrl.u32 %v4110, 7
      %v4112 = vsub.s32 %v4109, %v4111
      %v4113 = vrot.slane %v3956, %v4112
      %v4114 = vcombine.high %v4113, %v4113
      %v4116 = vunpack.c.l.s4 1966171168
      %v4117 = vunpack.c.0.s8 %v4116
      %v4118 = vlaneseq
      %v4119 = vshrl.u32 %v4118, 7
      %v4120 = vsub.s32 %v4117, %v4119
      %v4121 = vrot.slane %v4113, %v4120
      %v4123 = vunpack.c.l.s4 1966171168
      %v4124 = vunpack.c.0.s8 %v4123
      %v4125 = vlaneseq
      %v4126 = vshrl.u32 %v4125, 7
      %v4127 = vsub.s32 %v4124, %v4126
      %v4128 = vrot.slane %v4114, %v4127
      %v4130 = vunpack.c.l.s4 1966171168
      %v4131 = vunpack.c.0.s8 %v4130
      %v4132 = vlaneseq
      %v4133 = vshrl.u32 %v4132, 7
      %v4134 = vsub.s32 %v4131, %v4133
      %v4135 = vrot.slane %v3957, %v4134
      %v4136 = vcombine.high %v4135, %v4135
      %v4138 = vunpack.c.l.s4 1966171168
      %v4139 = vunpack.c.0.s8 %v4138
      %v4140 = vlaneseq
      %v4141 = vshrl.u32 %v4140, 7
      %v4142 = vsub.s32 %v4139, %v4141
      %v4143 = vrot.slane %v4135, %v4142
      %v4145 = vunpack.c.l.s4 1966171168
      %v4146 = vunpack.c.0.s8 %v4145
      %v4147 = vlaneseq
      %v4148 = vshrl.u32 %v4147, 7
      %v4149 = vsub.s32 %v4146, %v4148
      %v4150 = vrot.slane %v4136, %v4149
      %v4151 = vcombine.high %v4143, %v4143
      %v4152 = vcombine.high %v4150, %v4150
      %v4154 = vunpack.c.l.s4 1966171168
      %v4155 = vunpack.c.0.s8 %v4154
      %v4156 = vlaneseq
      %v4157 = vshrl.u32 %v4156, 7
      %v4158 = vsub.s32 %v4155, %v4157
      %v4159 = vrot.slane %v3958, %v4158
      %v4160 = vcombine.high %v4159, %v4159
      %v4162 = vunpack.c.l.s4 1966171168
      %v4163 = vunpack.c.0.s8 %v4162
      %v4164 = vlaneseq
      %v4165 = vshrl.u32 %v4164, 7
      %v4166 = vsub.s32 %v4163, %v4165
      %v4167 = vrot.slane %v4159, %v4166
      %v4169 = vunpack.c.l.s4 1966171168
      %v4170 = vunpack.c.0.s8 %v4169
      %v4171 = vlaneseq
      %v4172 = vshrl.u32 %v4171, 7
      %v4173 = vsub.s32 %v4170, %v4172
      %v4174 = vrot.slane %v4160, %v4173
      %v4176 = vunpack.c.l.s4 1966171168
      %v4177 = vunpack.c.0.s8 %v4176
      %v4178 = vlaneseq
      %v4179 = vshrl.u32 %v4178, 7
      %v4180 = vsub.s32 %v4177, %v4179
      %v4181 = vrot.slane %v3959, %v4180
      %v4182 = vcombine.high %v4181, %v4181
      %v4184 = vunpack.c.l.s4 1966171168
      %v4185 = vunpack.c.0.s8 %v4184
      %v4186 = vlaneseq
      %v4187 = vshrl.u32 %v4186, 7
      %v4188 = vsub.s32 %v4185, %v4187
      %v4189 = vrot.slane %v4181, %v4188
      %v4191 = vunpack.c.l.s4 1966171168
      %v4192 = vunpack.c.0.s8 %v4191
      %v4193 = vlaneseq
      %v4194 = vshrl.u32 %v4193, 7
      %v4195 = vsub.s32 %v4192, %v4194
      %v4196 = vrot.slane %v4182, %v4195
      %v4197 = vcombine.high %v4189, %v4189
      %v4198 = vcombine.high %v4196, %v4196
      %v4200 = vunpack.c.l.s4 1966171168
      %v4201 = vunpack.c.0.s8 %v4200
      %v4202 = vlaneseq
      %v4203 = vshrl.u32 %v4202, 7
      %v4204 = vsub.s32 %v4201, %v4203
      %v4205 = vrot.slane %v3960, %v4204
      %v4206 = vcombine.high %v4205, %v4205
      %v4208 = vunpack.c.l.s4 1966171168
      %v4209 = vunpack.c.0.s8 %v4208
      %v4210 = vlaneseq
      %v4211 = vshrl.u32 %v4210, 7
      %v4212 = vsub.s32 %v4209, %v4211
      %v4213 = vrot.slane %v4205, %v4212
      %v4215 = vunpack.c.l.s4 1966171168
      %v4216 = vunpack.c.0.s8 %v4215
      %v4217 = vlaneseq
      %v4218 = vshrl.u32 %v4217, 7
      %v4219 = vsub.s32 %v4216, %v4218
      %v4220 = vrot.slane %v4206, %v4219
      %v4222 = vunpack.c.l.s4 1966171168
      %v4223 = vunpack.c.0.s8 %v4222
      %v4224 = vlaneseq
      %v4225 = vshrl.u32 %v4224, 7
      %v4226 = vsub.s32 %v4223, %v4225
      %v4227 = vrot.slane %v3961, %v4226
      %v4228 = vcombine.high %v4227, %v4227
      %v4230 = vunpack.c.l.s4 1966171168
      %v4231 = vunpack.c.0.s8 %v4230
      %v4232 = vlaneseq
      %v4233 = vshrl.u32 %v4232, 7
      %v4234 = vsub.s32 %v4231, %v4233
      %v4235 = vrot.slane %v4227, %v4234
      %v4237 = vunpack.c.l.s4 1966171168
      %v4238 = vunpack.c.0.s8 %v4237
      %v4239 = vlaneseq
      %v4240 = vshrl.u32 %v4239, 7
      %v4241 = vsub.s32 %v4238, %v4240
      %v4242 = vrot.slane %v4228, %v4241
      %v4243 = vcombine.high %v4235, %v4235
      %v4244 = vcombine.high %v4242, %v4242
      %v4246 = vunpack.c.l.s4 1966171168
      %v4247 = vunpack.c.0.s8 %v4246
      %v4248 = vlaneseq
      %v4249 = vshrl.u32 %v4248, 7
      %v4250 = vsub.s32 %v4247, %v4249
      %v4251 = vrot.slane %v3962, %v4250
      %v4252 = vcombine.high %v4251, %v4251
      %v4254 = vunpack.c.l.s4 1966171168
      %v4255 = vunpack.c.0.s8 %v4254
      %v4256 = vlaneseq
      %v4257 = vshrl.u32 %v4256, 7
      %v4258 = vsub.s32 %v4255, %v4257
      %v4259 = vrot.slane %v4251, %v4258
      %v4261 = vunpack.c.l.s4 1966171168
      %v4262 = vunpack.c.0.s8 %v4261
      %v4263 = vlaneseq
      %v4264 = vshrl.u32 %v4263, 7
      %v4265 = vsub.s32 %v4262, %v4264
      %v4266 = vrot.slane %v4252, %v4265
      %v4268 = vunpack.c.l.s4 1966171168
      %v4269 = vunpack.c.0.s8 %v4268
      %v4270 = vlaneseq
      %v4271 = vshrl.u32 %v4270, 7
      %v4272 = vsub.s32 %v4269, %v4271
      %v4273 = vrot.slane %v3963, %v4272
      %v4274 = vcombine.high %v4273, %v4273
      %v4276 = vunpack.c.l.s4 1966171168
      %v4277 = vunpack.c.0.s8 %v4276
      %v4278 = vlaneseq
      %v4279 = vshrl.u32 %v4278, 7
      %v4280 = vsub.s32 %v4277, %v4279
      %v4281 = vrot.slane %v4273, %v4280
      %v4283 = vunpack.c.l.s4 1966171168
      %v4284 = vunpack.c.0.s8 %v4283
      %v4285 = vlaneseq
      %v4286 = vshrl.u32 %v4285, 7
      %v4287 = vsub.s32 %v4284, %v4286
      %v4288 = vrot.slane %v4274, %v4287
      %v4289 = vcombine.high %v4281, %v4281
      %v4290 = vcombine.high %v4288, %v4288
      %v4292 = vunpack.c.l.s4 1966171168
      %v4293 = vunpack.c.0.s8 %v4292
      %v4294 = vlaneseq
      %v4295 = vshrl.u32 %v4294, 7
      %v4296 = vsub.s32 %v4293, %v4295
      %v4297 = vrot.slane %v3964, %v4296
      %v4298 = vcombine.high %v4297, %v4297
      %v4300 = vunpack.c.l.s4 1966171168
      %v4301 = vunpack.c.0.s8 %v4300
      %v4302 = vlaneseq
      %v4303 = vshrl.u32 %v4302, 7
      %v4304 = vsub.s32 %v4301, %v4303
      %v4305 = vrot.slane %v4297, %v4304
      %v4307 = vunpack.c.l.s4 1966171168
      %v4308 = vunpack.c.0.s8 %v4307
      %v4309 = vlaneseq
      %v4310 = vshrl.u32 %v4309, 7
      %v4311 = vsub.s32 %v4308, %v4310
      %v4312 = vrot.slane %v4298, %v4311
      %v4314 = vunpack.c.l.s4 1966171168
      %v4315 = vunpack.c.0.s8 %v4314
      %v4316 = vlaneseq
      %v4317 = vshrl.u32 %v4316, 7
      %v4318 = vsub.s32 %v4315, %v4317
      %v4319 = vrot.slane %v3965, %v4318
      %v4320 = vcombine.high %v4319, %v4319
      %v4322 = vunpack.c.l.s4 1966171168
      %v4323 = vunpack.c.0.s8 %v4322
      %v4324 = vlaneseq
      %v4325 = vshrl.u32 %v4324, 7
      %v4326 = vsub.s32 %v4323, %v4325
      %v4327 = vrot.slane %v4319, %v4326
      %v4329 = vunpack.c.l.s4 1966171168
      %v4330 = vunpack.c.0.s8 %v4329
      %v4331 = vlaneseq
      %v4332 = vshrl.u32 %v4331, 7
      %v4333 = vsub.s32 %v4330, %v4332
      %v4334 = vrot.slane %v4320, %v4333
      %v4335 = vcombine.high %v4327, %v4327
      %v4336 = vcombine.high %v4334, %v4334
      %v4338 = vunpack.c.l.s4 1966171168
      %v4339 = vunpack.c.0.s8 %v4338
      %v4340 = vlaneseq
      %v4341 = vshrl.u32 %v4340, 7
      %v4342 = vsub.s32 %v4339, %v4341
      %v4343 = vrot.slane %v3966, %v4342
      %v4344 = vcombine.high %v4343, %v4343
      %v4346 = vunpack.c.l.s4 1966171168
      %v4347 = vunpack.c.0.s8 %v4346
      %v4348 = vlaneseq
      %v4349 = vshrl.u32 %v4348, 7
      %v4350 = vsub.s32 %v4347, %v4349
      %v4351 = vrot.slane %v4343, %v4350
      %v4353 = vunpack.c.l.s4 1966171168
      %v4354 = vunpack.c.0.s8 %v4353
      %v4355 = vlaneseq
      %v4356 = vshrl.u32 %v4355, 7
      %v4357 = vsub.s32 %v4354, %v4356
      %v4358 = vrot.slane %v4344, %v4357
      %v4360 = vunpack.c.l.s4 1966171168
      %v4361 = vunpack.c.0.s8 %v4360
      %v4362 = vlaneseq
      %v4363 = vshrl.u32 %v4362, 7
      %v4364 = vsub.s32 %v4361, %v4363
      %v4365 = vrot.slane %v3967, %v4364
      %v4366 = vcombine.high %v4365, %v4365
      %v4368 = vunpack.c.l.s4 1966171168
      %v4369 = vunpack.c.0.s8 %v4368
      %v4370 = vlaneseq
      %v4371 = vshrl.u32 %v4370, 7
      %v4372 = vsub.s32 %v4369, %v4371
      %v4373 = vrot.slane %v4365, %v4372
      %v4375 = vunpack.c.l.s4 1966171168
      %v4376 = vunpack.c.0.s8 %v4375
      %v4377 = vlaneseq
      %v4378 = vshrl.u32 %v4377, 7
      %v4379 = vsub.s32 %v4376, %v4378
      %v4380 = vrot.slane %v4366, %v4379
      %v4381 = vcombine.high %v4373, %v4373
      %v4382 = vcombine.high %v4380, %v4380
      %v4384 = vunpack.c.l.s4 1966171168
      %v4385 = vunpack.c.0.s8 %v4384
      %v4386 = vlaneseq
      %v4387 = vshrl.u32 %v4386, 7
      %v4388 = vsub.s32 %v4385, %v4387
      %v4389 = vrot.slane %v3968, %v4388
      %v4390 = vcombine.high %v4389, %v4389
      %v4392 = vunpack.c.l.s4 1966171168
      %v4393 = vunpack.c.0.s8 %v4392
      %v4394 = vlaneseq
      %v4395 = vshrl.u32 %v4394, 7
      %v4396 = vsub.s32 %v4393, %v4395
      %v4397 = vrot.slane %v4389, %v4396
      %v4399 = vunpack.c.l.s4 1966171168
      %v4400 = vunpack.c.0.s8 %v4399
      %v4401 = vlaneseq
      %v4402 = vshrl.u32 %v4401, 7
      %v4403 = vsub.s32 %v4400, %v4402
      %v4404 = vrot.slane %v4390, %v4403
      %v4406 = vunpack.c.l.s4 1966171168
      %v4407 = vunpack.c.0.s8 %v4406
      %v4408 = vlaneseq
      %v4409 = vshrl.u32 %v4408, 7
      %v4410 = vsub.s32 %v4407, %v4409
      %v4411 = vrot.slane %v3969, %v4410
      %v4412 = vcombine.high %v4411, %v4411
      %v4414 = vunpack.c.l.s4 1966171168
      %v4415 = vunpack.c.0.s8 %v4414
      %v4416 = vlaneseq
      %v4417 = vshrl.u32 %v4416, 7
      %v4418 = vsub.s32 %v4415, %v4417
      %v4419 = vrot.slane %v4411, %v4418
      %v4421 = vunpack.c.l.s4 1966171168
      %v4422 = vunpack.c.0.s8 %v4421
      %v4423 = vlaneseq
      %v4424 = vshrl.u32 %v4423, 7
      %v4425 = vsub.s32 %v4422, %v4424
      %v4426 = vrot.slane %v4412, %v4425
      %v4427 = vcombine.high %v4419, %v4419
      %v4428 = vcombine.high %v4426, %v4426
      %v4430 = vunpack.c.l.s4 1966171168
      %v4431 = vunpack.c.0.s8 %v4430
      %v4432 = vlaneseq
      %v4433 = vshrl.u32 %v4432, 7
      %v4434 = vsub.s32 %v4431, %v4433
      %v4435 = vrot.slane %v3970, %v4434
      %v4436 = vcombine.high %v4435, %v4435
      %v4438 = vunpack.c.l.s4 1966171168
      %v4439 = vunpack.c.0.s8 %v4438
      %v4440 = vlaneseq
      %v4441 = vshrl.u32 %v4440, 7
      %v4442 = vsub.s32 %v4439, %v4441
      %v4443 = vrot.slane %v4435, %v4442
      %v4445 = vunpack.c.l.s4 1966171168
      %v4446 = vunpack.c.0.s8 %v4445
      %v4447 = vlaneseq
      %v4448 = vshrl.u32 %v4447, 7
      %v4449 = vsub.s32 %v4446, %v4448
      %v4450 = vrot.slane %v4436, %v4449
      %v4452 = vshrl.u32 %v4005, 16
      %v4454 = vrot.slane %v4452, 7
      %v4455 = vrot.slane %v4454, 1
      %v4457 = vshll.u32 %v4012, 16
      %v4459 = vsel %vm901, %v4455, %v4457
      %v4460 = vshrl.u32 %v4012, 16
      %v4462 = vrot.slane %v4460, 7
      %v4463 = vrot.slane %v4462, 1
      %v4465 = vshll.u32 %v4013, 16
      %v4467 = vsel %vm901, %v4463, %v4465
      %v4468 = vshrl.u32 %v4013, 16
      %v4470 = vrot.slane %v4468, 7
      %v4471 = vrot.slane %v4470, 1
      %v4473 = vshll.u32 %v4014, 16
      %v4475 = vsel %vm901, %v4471, %v4473
      %v4476 = vshrl.u32 %v4014, 16
      %v4478 = vrot.slane %v4476, 7
      %v4479 = vrot.slane %v4478, 1
      %v4481 = vshll.u32 %v4029, 16
      %v4483 = vsel %vm901, %v4479, %v4481
      %v4484 = vshrl.u32 %v4029, 16
      %v4486 = vrot.slane %v4484, 7
      %v4487 = vrot.slane %v4486, 1
      %v4489 = vshll.u32 %v4036, 16
      %v4491 = vsel %vm901, %v4487, %v4489
      %v4493 = vshrl.u32 %v4051, 16
      %v4495 = vrot.slane %v4493, 7
      %v4496 = vrot.slane %v4495, 1
      %v4498 = vshll.u32 %v4058, 16
      %v4500 = vsel %vm901, %v4496, %v4498
      %v4501 = vshrl.u32 %v4058, 16
      %v4503 = vrot.slane %v4501, 7
      %v4504 = vrot.slane %v4503, 1
      %v4506 = vshll.u32 %v4059, 16
      %v4508 = vsel %vm901, %v4504, %v4506
      %v4509 = vshrl.u32 %v4059, 16
      %v4511 = vrot.slane %v4509, 7
      %v4512 = vrot.slane %v4511, 1
      %v4514 = vshll.u32 %v4060, 16
      %v4516 = vsel %vm901, %v4512, %v4514
      %v4517 = vshrl.u32 %v4060, 16
      %v4519 = vrot.slane %v4517, 7
      %v4520 = vrot.slane %v4519, 1
      %v4522 = vshll.u32 %v4075, 16
      %v4524 = vsel %vm901, %v4520, %v4522
      %v4525 = vshrl.u32 %v4075, 16
      %v4527 = vrot.slane %v4525, 7
      %v4528 = vrot.slane %v4527, 1
      %v4530 = vshll.u32 %v4082, 16
      %v4532 = vsel %vm901, %v4528, %v4530
      %v4534 = vshrl.u32 %v4097, 16
      %v4536 = vrot.slane %v4534, 7
      %v4537 = vrot.slane %v4536, 1
      %v4539 = vshll.u32 %v4104, 16
      %v4541 = vsel %vm901, %v4537, %v4539
      %v4542 = vshrl.u32 %v4104, 16
      %v4544 = vrot.slane %v4542, 7
      %v4545 = vrot.slane %v4544, 1
      %v4547 = vshll.u32 %v4105, 16
      %v4549 = vsel %vm901, %v4545, %v4547
      %v4550 = vshrl.u32 %v4105, 16
      %v4552 = vrot.slane %v4550, 7
      %v4553 = vrot.slane %v4552, 1
      %v4555 = vshll.u32 %v4106, 16
      %v4557 = vsel %vm901, %v4553, %v4555
      %v4558 = vshrl.u32 %v4106, 16
      %v4560 = vrot.slane %v4558, 7
      %v4561 = vrot.slane %v4560, 1
      %v4563 = vshll.u32 %v4121, 16
      %v4565 = vsel %vm901, %v4561, %v4563
      %v4566 = vshrl.u32 %v4121, 16
      %v4568 = vrot.slane %v4566, 7
      %v4569 = vrot.slane %v4568, 1
      %v4571 = vshll.u32 %v4128, 16
      %v4573 = vsel %vm901, %v4569, %v4571
      %v4575 = vshrl.u32 %v4143, 16
      %v4577 = vrot.slane %v4575, 7
      %v4578 = vrot.slane %v4577, 1
      %v4580 = vshll.u32 %v4150, 16
      %v4582 = vsel %vm901, %v4578, %v4580
      %v4583 = vshrl.u32 %v4150, 16
      %v4585 = vrot.slane %v4583, 7
      %v4586 = vrot.slane %v4585, 1
      %v4588 = vshll.u32 %v4151, 16
      %v4590 = vsel %vm901, %v4586, %v4588
      %v4591 = vshrl.u32 %v4151, 16
      %v4593 = vrot.slane %v4591, 7
      %v4594 = vrot.slane %v4593, 1
      %v4596 = vshll.u32 %v4152, 16
      %v4598 = vsel %vm901, %v4594, %v4596
      %v4599 = vshrl.u32 %v4152, 16
      %v4601 = vrot.slane %v4599, 7
      %v4602 = vrot.slane %v4601, 1
      %v4604 = vshll.u32 %v4167, 16
      %v4606 = vsel %vm901, %v4602, %v4604
      %v4607 = vshrl.u32 %v4167, 16
      %v4609 = vrot.slane %v4607, 7
      %v4610 = vrot.slane %v4609, 1
      %v4612 = vshll.u32 %v4174, 16
      %v4614 = vsel %vm901, %v4610, %v4612
      %v4616 = vshrl.u32 %v4189, 16
      %v4618 = vrot.slane %v4616, 7
      %v4619 = vrot.slane %v4618, 1
      %v4621 = vshll.u32 %v4196, 16
      %v4623 = vsel %vm901, %v4619, %v4621
      %v4624 = vshrl.u32 %v4196, 16
      %v4626 = vrot.slane %v4624, 7
      %v4627 = vrot.slane %v4626, 1
      %v4629 = vshll.u32 %v4197, 16
      %v4631 = vsel %vm901, %v4627, %v4629
      %v4632 = vshrl.u32 %v4197, 16
      %v4634 = vrot.slane %v4632, 7
      %v4635 = vrot.slane %v4634, 1
      %v4637 = vshll.u32 %v4198, 16
      %v4639 = vsel %vm901, %v4635, %v4637
      %v4640 = vshrl.u32 %v4198, 16
      %v4642 = vrot.slane %v4640, 7
      %v4643 = vrot.slane %v4642, 1
      %v4645 = vshll.u32 %v4213, 16
      %v4647 = vsel %vm901, %v4643, %v4645
      %v4648 = vshrl.u32 %v4213, 16
      %v4650 = vrot.slane %v4648, 7
      %v4651 = vrot.slane %v4650, 1
      %v4653 = vshll.u32 %v4220, 16
      %v4655 = vsel %vm901, %v4651, %v4653
      %v4657 = vshrl.u32 %v4235, 16
      %v4659 = vrot.slane %v4657, 7
      %v4660 = vrot.slane %v4659, 1
      %v4662 = vshll.u32 %v4242, 16
      %v4664 = vsel %vm901, %v4660, %v4662
      %v4665 = vshrl.u32 %v4242, 16
      %v4667 = vrot.slane %v4665, 7
      %v4668 = vrot.slane %v4667, 1
      %v4670 = vshll.u32 %v4243, 16
      %v4672 = vsel %vm901, %v4668, %v4670
      %v4673 = vshrl.u32 %v4243, 16
      %v4675 = vrot.slane %v4673, 7
      %v4676 = vrot.slane %v4675, 1
      %v4678 = vshll.u32 %v4244, 16
      %v4680 = vsel %vm901, %v4676, %v4678
      %v4681 = vshrl.u32 %v4244, 16
      %v4683 = vrot.slane %v4681, 7
      %v4684 = vrot.slane %v4683, 1
      %v4686 = vshll.u32 %v4259, 16
      %v4688 = vsel %vm901, %v4684, %v4686
      %v4689 = vshrl.u32 %v4259, 16
      %v4691 = vrot.slane %v4689, 7
      %v4692 = vrot.slane %v4691, 1
      %v4694 = vshll.u32 %v4266, 16
      %v4696 = vsel %vm901, %v4692, %v4694
      %v4698 = vshrl.u32 %v4281, 16
      %v4700 = vrot.slane %v4698, 7
      %v4701 = vrot.slane %v4700, 1
      %v4703 = vshll.u32 %v4288, 16
      %v4705 = vsel %vm901, %v4701, %v4703
      %v4706 = vshrl.u32 %v4288, 16
      %v4708 = vrot.slane %v4706, 7
      %v4709 = vrot.slane %v4708, 1
      %v4711 = vshll.u32 %v4289, 16
      %v4713 = vsel %vm901, %v4709, %v4711
      %v4714 = vshrl.u32 %v4289, 16
      %v4716 = vrot.slane %v4714, 7
      %v4717 = vrot.slane %v4716, 1
      %v4719 = vshll.u32 %v4290, 16
      %v4721 = vsel %vm901, %v4717, %v4719
      %v4722 = vshrl.u32 %v4290, 16
      %v4724 = vrot.slane %v4722, 7
      %v4725 = vrot.slane %v4724, 1
      %v4727 = vshll.u32 %v4305, 16
      %v4729 = vsel %vm901, %v4725, %v4727
      %v4730 = vshrl.u32 %v4305, 16
      %v4732 = vrot.slane %v4730, 7
      %v4733 = vrot.slane %v4732, 1
      %v4735 = vshll.u32 %v4312, 16
      %v4737 = vsel %vm901, %v4733, %v4735
      %v4739 = vshrl.u32 %v4327, 16
      %v4741 = vrot.slane %v4739, 7
      %v4742 = vrot.slane %v4741, 1
      %v4744 = vshll.u32 %v4334, 16
      %v4746 = vsel %vm901, %v4742, %v4744
      %v4747 = vshrl.u32 %v4334, 16
      %v4749 = vrot.slane %v4747, 7
      %v4750 = vrot.slane %v4749, 1
      %v4752 = vshll.u32 %v4335, 16
      %v4754 = vsel %vm901, %v4750, %v4752
      %v4755 = vshrl.u32 %v4335, 16
      %v4757 = vrot.slane %v4755, 7
      %v4758 = vrot.slane %v4757, 1
      %v4760 = vshll.u32 %v4336, 16
      %v4762 = vsel %vm901, %v4758, %v4760
      %v4763 = vshrl.u32 %v4336, 16
      %v4765 = vrot.slane %v4763, 7
      %v4766 = vrot.slane %v4765, 1
      %v4768 = vshll.u32 %v4351, 16
      %v4770 = vsel %vm901, %v4766, %v4768
      %v4771 = vshrl.u32 %v4351, 16
      %v4773 = vrot.slane %v4771, 7
      %v4774 = vrot.slane %v4773, 1
      %v4776 = vshll.u32 %v4358, 16
      %v4778 = vsel %vm901, %v4774, %v4776
      %v4780 = vshrl.u32 %v4373, 16
      %v4782 = vrot.slane %v4780, 7
      %v4783 = vrot.slane %v4782, 1
      %v4785 = vshll.u32 %v4380, 16
      %v4787 = vsel %vm901, %v4783, %v4785
      %v4788 = vshrl.u32 %v4380, 16
      %v4790 = vrot.slane %v4788, 7
      %v4791 = vrot.slane %v4790, 1
      %v4793 = vshll.u32 %v4381, 16
      %v4795 = vsel %vm901, %v4791, %v4793
      %v4796 = vshrl.u32 %v4381, 16
      %v4798 = vrot.slane %v4796, 7
      %v4799 = vrot.slane %v4798, 1
      %v4801 = vshll.u32 %v4382, 16
      %v4803 = vsel %vm901, %v4799, %v4801
      %v4804 = vshrl.u32 %v4382, 16
      %v4806 = vrot.slane %v4804, 7
      %v4807 = vrot.slane %v4806, 1
      %v4809 = vshll.u32 %v4397, 16
      %v4811 = vsel %vm901, %v4807, %v4809
      %v4812 = vshrl.u32 %v4397, 16
      %v4814 = vrot.slane %v4812, 7
      %v4815 = vrot.slane %v4814, 1
      %v4817 = vshll.u32 %v4404, 16
      %v4819 = vsel %vm901, %v4815, %v4817
      %v4821 = vshrl.u32 %v4419, 16
      %v4823 = vrot.slane %v4821, 7
      %v4824 = vrot.slane %v4823, 1
      %v4826 = vshll.u32 %v4426, 16
      %v4828 = vsel %vm901, %v4824, %v4826
      %v4829 = vshrl.u32 %v4426, 16
      %v4831 = vrot.slane %v4829, 7
      %v4832 = vrot.slane %v4831, 1
      %v4834 = vshll.u32 %v4427, 16
      %v4836 = vsel %vm901, %v4832, %v4834
      %v4837 = vshrl.u32 %v4427, 16
      %v4839 = vrot.slane %v4837, 7
      %v4840 = vrot.slane %v4839, 1
      %v4842 = vshll.u32 %v4428, 16
      %v4844 = vsel %vm901, %v4840, %v4842
      %v4845 = vshrl.u32 %v4428, 16
      %v4847 = vrot.slane %v4845, 7
      %v4848 = vrot.slane %v4847, 1
      %v4850 = vshll.u32 %v4443, 16
      %v4852 = vsel %vm901, %v4848, %v4850
      %v4853 = vshrl.u32 %v4443, 16
      %v4855 = vrot.slane %v4853, 7
      %v4856 = vrot.slane %v4855, 1
      %v4858 = vshll.u32 %v4450, 16
      %v4860 = vsel %vm901, %v4856, %v4858
      %s4861 = scalar_lea.vmem %s1, 16
      %v4862 = vld [vmem:[%s4861] sm:$0xf]
      %v4863 = vcombine.low %v4459, %v4467
      %v4864 = vcombine.low %v4475, %v4483
      %v4865 = vcombine.low %v4491, %v4500
      %v4866 = vcombine.low %v4508, %v4516
      %v4868 = vunpack.c.l.s4 1966171168
      %v4869 = vunpack.c.0.s8 %v4868
      %v4870 = vlaneseq
      %v4871 = vshrl.u32 %v4870, 7
      %v4872 = vsub.s32 %v4869, %v4871
      %v4873 = vrot.slane %v4863, %v4872
      %v4875 = vunpack.c.l.s4 1966171168
      %v4876 = vunpack.c.0.s8 %v4875
      %v4877 = vlaneseq
      %v4878 = vshrl.u32 %v4877, 7
      %v4879 = vsub.s32 %v4876, %v4878
      %v4880 = vrot.slane %v4864, %v4879
      %v4882 = vunpack.c.l.s4 1966171168
      %v4883 = vunpack.c.0.s8 %v4882
      %v4884 = vlaneseq
      %v4885 = vshrl.u32 %v4884, 7
      %v4886 = vsub.s32 %v4883, %v4885
      %v4887 = vrot.slane %v4865, %v4886
      %v4889 = vunpack.c.l.s4 1966171168
      %v4890 = vunpack.c.0.s8 %v4889
      %v4891 = vlaneseq
      %v4892 = vshrl.u32 %v4891, 7
      %v4893 = vsub.s32 %v4890, %v4892
      %v4894 = vrot.slane %v4866, %v4893
      %v4895 = vcombine.low %v4873, %v4880
      %v4896 = vcombine.low %v4887, %v4894
      %v4898 = vunpack.c.l.s4 1966171168
      %v4899 = vunpack.c.0.s8 %v4898
      %v4900 = vlaneseq
      %v4901 = vshrl.u32 %v4900, 7
      %v4902 = vsub.s32 %v4899, %v4901
      %v4903 = vrot.slane %v4895, %v4902
      %v4905 = vunpack.c.l.s4 1966171168
      %v4906 = vunpack.c.0.s8 %v4905
      %v4907 = vlaneseq
      %v4908 = vshrl.u32 %v4907, 7
      %v4909 = vsub.s32 %v4906, %v4908
      %v4910 = vrot.slane %v4896, %v4909
      %v4911 = vcombine.low %v4903, %v4910
      %v4912 = vcombine.low %v4524, %v4532
      %v4913 = vcombine.low %v4541, %v4549
      %v4914 = vcombine.low %v4557, %v4565
      %v4915 = vcombine.low %v4573, %v4582
      %v4917 = vunpack.c.l.s4 1966171168
      %v4918 = vunpack.c.0.s8 %v4917
      %v4919 = vlaneseq
      %v4920 = vshrl.u32 %v4919, 7
      %v4921 = vsub.s32 %v4918, %v4920
      %v4922 = vrot.slane %v4912, %v4921
      %v4924 = vunpack.c.l.s4 1966171168
      %v4925 = vunpack.c.0.s8 %v4924
      %v4926 = vlaneseq
      %v4927 = vshrl.u32 %v4926, 7
      %v4928 = vsub.s32 %v4925, %v4927
      %v4929 = vrot.slane %v4913, %v4928
      %v4931 = vunpack.c.l.s4 1966171168
      %v4932 = vunpack.c.0.s8 %v4931
      %v4933 = vlaneseq
      %v4934 = vshrl.u32 %v4933, 7
      %v4935 = vsub.s32 %v4932, %v4934
      %v4936 = vrot.slane %v4914, %v4935
      %v4938 = vunpack.c.l.s4 1966171168
      %v4939 = vunpack.c.0.s8 %v4938
      %v4940 = vlaneseq
      %v4941 = vshrl.u32 %v4940, 7
      %v4942 = vsub.s32 %v4939, %v4941
      %v4943 = vrot.slane %v4915, %v4942
      %v4944 = vcombine.low %v4922, %v4929
      %v4945 = vcombine.low %v4936, %v4943
      %v4947 = vunpack.c.l.s4 1966171168
      %v4948 = vunpack.c.0.s8 %v4947
      %v4949 = vlaneseq
      %v4950 = vshrl.u32 %v4949, 7
      %v4951 = vsub.s32 %v4948, %v4950
      %v4952 = vrot.slane %v4944, %v4951
      %v4954 = vunpack.c.l.s4 1966171168
      %v4955 = vunpack.c.0.s8 %v4954
      %v4956 = vlaneseq
      %v4957 = vshrl.u32 %v4956, 7
      %v4958 = vsub.s32 %v4955, %v4957
      %v4959 = vrot.slane %v4945, %v4958
      %v4960 = vcombine.low %v4952, %v4959
      %v4961 = vcombine.low %v4590, %v4598
      %v4962 = vcombine.low %v4606, %v4614
      %v4963 = vcombine.low %v4623, %v4631
      %v4964 = vcombine.low %v4639, %v4647
      %v4966 = vunpack.c.l.s4 1966171168
      %v4967 = vunpack.c.0.s8 %v4966
      %v4968 = vlaneseq
      %v4969 = vshrl.u32 %v4968, 7
      %v4970 = vsub.s32 %v4967, %v4969
      %v4971 = vrot.slane %v4961, %v4970
      %v4973 = vunpack.c.l.s4 1966171168
      %v4974 = vunpack.c.0.s8 %v4973
      %v4975 = vlaneseq
      %v4976 = vshrl.u32 %v4975, 7
      %v4977 = vsub.s32 %v4974, %v4976
      %v4978 = vrot.slane %v4962, %v4977
      %v4980 = vunpack.c.l.s4 1966171168
      %v4981 = vunpack.c.0.s8 %v4980
      %v4982 = vlaneseq
      %v4983 = vshrl.u32 %v4982, 7
      %v4984 = vsub.s32 %v4981, %v4983
      %v4985 = vrot.slane %v4963, %v4984
      %v4987 = vunpack.c.l.s4 1966171168
      %v4988 = vunpack.c.0.s8 %v4987
      %v4989 = vlaneseq
      %v4990 = vshrl.u32 %v4989, 7
      %v4991 = vsub.s32 %v4988, %v4990
      %v4992 = vrot.slane %v4964, %v4991
      %v4993 = vcombine.low %v4971, %v4978
      %v4994 = vcombine.low %v4985, %v4992
      %v4996 = vunpack.c.l.s4 1966171168
      %v4997 = vunpack.c.0.s8 %v4996
      %v4998 = vlaneseq
      %v4999 = vshrl.u32 %v4998, 7
      %v5000 = vsub.s32 %v4997, %v4999
      %v5001 = vrot.slane %v4993, %v5000
      %v5003 = vunpack.c.l.s4 1966171168
      %v5004 = vunpack.c.0.s8 %v5003
      %v5005 = vlaneseq
      %v5006 = vshrl.u32 %v5005, 7
      %v5007 = vsub.s32 %v5004, %v5006
      %v5008 = vrot.slane %v4994, %v5007
      %v5009 = vcombine.low %v5001, %v5008
      %v5010 = vcombine.low %v4655, %v4664
      %v5011 = vcombine.low %v4672, %v4680
      %v5012 = vcombine.low %v4688, %v4696
      %v5013 = vcombine.low %v4705, %v4713
      %v5015 = vunpack.c.l.s4 1966171168
      %v5016 = vunpack.c.0.s8 %v5015
      %v5017 = vlaneseq
      %v5018 = vshrl.u32 %v5017, 7
      %v5019 = vsub.s32 %v5016, %v5018
      %v5020 = vrot.slane %v5010, %v5019
      %v5022 = vunpack.c.l.s4 1966171168
      %v5023 = vunpack.c.0.s8 %v5022
      %v5024 = vlaneseq
      %v5025 = vshrl.u32 %v5024, 7
      %v5026 = vsub.s32 %v5023, %v5025
      %v5027 = vrot.slane %v5011, %v5026
      %v5029 = vunpack.c.l.s4 1966171168
      %v5030 = vunpack.c.0.s8 %v5029
      %v5031 = vlaneseq
      %v5032 = vshrl.u32 %v5031, 7
      %v5033 = vsub.s32 %v5030, %v5032
      %v5034 = vrot.slane %v5012, %v5033
      %v5036 = vunpack.c.l.s4 1966171168
      %v5037 = vunpack.c.0.s8 %v5036
      %v5038 = vlaneseq
      %v5039 = vshrl.u32 %v5038, 7
      %v5040 = vsub.s32 %v5037, %v5039
      %v5041 = vrot.slane %v5013, %v5040
      %v5042 = vcombine.low %v5020, %v5027
      %v5043 = vcombine.low %v5034, %v5041
      %v5045 = vunpack.c.l.s4 1966171168
      %v5046 = vunpack.c.0.s8 %v5045
      %v5047 = vlaneseq
      %v5048 = vshrl.u32 %v5047, 7
      %v5049 = vsub.s32 %v5046, %v5048
      %v5050 = vrot.slane %v5042, %v5049
      %v5052 = vunpack.c.l.s4 1966171168
      %v5053 = vunpack.c.0.s8 %v5052
      %v5054 = vlaneseq
      %v5055 = vshrl.u32 %v5054, 7
      %v5056 = vsub.s32 %v5053, %v5055
      %v5057 = vrot.slane %v5043, %v5056
      %v5058 = vcombine.low %v5050, %v5057
      %v5059 = vcombine.low %v4721, %v4729
      %v5060 = vcombine.low %v4737, %v4746
      %v5061 = vcombine.low %v4754, %v4762
      %v5062 = vcombine.low %v4770, %v4778
      %v5064 = vunpack.c.l.s4 1966171168
      %v5065 = vunpack.c.0.s8 %v5064
      %v5066 = vlaneseq
      %v5067 = vshrl.u32 %v5066, 7
      %v5068 = vsub.s32 %v5065, %v5067
      %v5069 = vrot.slane %v5059, %v5068
      %v5071 = vunpack.c.l.s4 1966171168
      %v5072 = vunpack.c.0.s8 %v5071
      %v5073 = vlaneseq
      %v5074 = vshrl.u32 %v5073, 7
      %v5075 = vsub.s32 %v5072, %v5074
      %v5076 = vrot.slane %v5060, %v5075
      %v5078 = vunpack.c.l.s4 1966171168
      %v5079 = vunpack.c.0.s8 %v5078
      %v5080 = vlaneseq
      %v5081 = vshrl.u32 %v5080, 7
      %v5082 = vsub.s32 %v5079, %v5081
      %v5083 = vrot.slane %v5061, %v5082
      %v5085 = vunpack.c.l.s4 1966171168
      %v5086 = vunpack.c.0.s8 %v5085
      %v5087 = vlaneseq
      %v5088 = vshrl.u32 %v5087, 7
      %v5089 = vsub.s32 %v5086, %v5088
      %v5090 = vrot.slane %v5062, %v5089
      %v5091 = vcombine.low %v5069, %v5076
      %v5092 = vcombine.low %v5083, %v5090
      %v5094 = vunpack.c.l.s4 1966171168
      %v5095 = vunpack.c.0.s8 %v5094
      %v5096 = vlaneseq
      %v5097 = vshrl.u32 %v5096, 7
      %v5098 = vsub.s32 %v5095, %v5097
      %v5099 = vrot.slane %v5091, %v5098
      %v5101 = vunpack.c.l.s4 1966171168
      %v5102 = vunpack.c.0.s8 %v5101
      %v5103 = vlaneseq
      %v5104 = vshrl.u32 %v5103, 7
      %v5105 = vsub.s32 %v5102, %v5104
      %v5106 = vrot.slane %v5092, %v5105
      %v5107 = vcombine.low %v5099, %v5106
      %v5108 = vcombine.low %v4787, %v4795
      %v5109 = vcombine.low %v4803, %v4811
      %v5110 = vcombine.low %v4819, %v4828
      %v5111 = vcombine.low %v4836, %v4844
      %v5113 = vunpack.c.l.s4 1966171168
      %v5114 = vunpack.c.0.s8 %v5113
      %v5115 = vlaneseq
      %v5116 = vshrl.u32 %v5115, 7
      %v5117 = vsub.s32 %v5114, %v5116
      %v5118 = vrot.slane %v5108, %v5117
      %v5120 = vunpack.c.l.s4 1966171168
      %v5121 = vunpack.c.0.s8 %v5120
      %v5122 = vlaneseq
      %v5123 = vshrl.u32 %v5122, 7
      %v5124 = vsub.s32 %v5121, %v5123
      %v5125 = vrot.slane %v5109, %v5124
      %v5127 = vunpack.c.l.s4 1966171168
      %v5128 = vunpack.c.0.s8 %v5127
      %v5129 = vlaneseq
      %v5130 = vshrl.u32 %v5129, 7
      %v5131 = vsub.s32 %v5128, %v5130
      %v5132 = vrot.slane %v5110, %v5131
      %v5134 = vunpack.c.l.s4 1966171168
      %v5135 = vunpack.c.0.s8 %v5134
      %v5136 = vlaneseq
      %v5137 = vshrl.u32 %v5136, 7
      %v5138 = vsub.s32 %v5135, %v5137
      %v5139 = vrot.slane %v5111, %v5138
      %v5140 = vcombine.low %v5118, %v5125
      %v5141 = vcombine.low %v5132, %v5139
      %v5143 = vunpack.c.l.s4 1966171168
      %v5144 = vunpack.c.0.s8 %v5143
      %v5145 = vlaneseq
      %v5146 = vshrl.u32 %v5145, 7
      %v5147 = vsub.s32 %v5144, %v5146
      %v5148 = vrot.slane %v5140, %v5147
      %v5150 = vunpack.c.l.s4 1966171168
      %v5151 = vunpack.c.0.s8 %v5150
      %v5152 = vlaneseq
      %v5153 = vshrl.u32 %v5152, 7
      %v5154 = vsub.s32 %v5151, %v5153
      %v5155 = vrot.slane %v5141, %v5154
      %v5156 = vcombine.low %v5148, %v5155
      %v5157 = vcombine.low %v4852, %v4860
      %v5159 = vunpack.c.l.s4 1966171168
      %v5160 = vunpack.c.0.s8 %v5159
      %v5161 = vlaneseq
      %v5162 = vshrl.u32 %v5161, 7
      %v5163 = vsub.s32 %v5160, %v5162
      %v5164 = vrot.slane %v5157, %v5163
      %v5166 = vunpack.c.l.s4 1966171168
      %v5167 = vunpack.c.0.s8 %v5166
      %v5168 = vlaneseq
      %v5169 = vshrl.u32 %v5168, 7
      %v5170 = vsub.s32 %v5167, %v5169
      %v5171 = vrot.slane %v5164, %v5170
      %v5173 = vsel %vm1623, %v4911, 0
      %v5176 = vsel %vm1623, %v4960, 0
      %v5179 = vsel %vm1623, %v5009, 0
      %v5182 = vsel %vm1623, %v5058, 0
      %v5185 = vsel %vm1623, %v5107, 0
      %v5188 = vsel %vm1623, %v5156, 0
      %v5191 = vsel %vm1623, %v5171, 0
      %v5194 = vsel %vm1645, %v4862, 0
      %5196 = vmatprep.subr.bf16.mxu0 0
      %5197 = vmatpush1.bf16.msra.mxu0 %v5194
      %5198 = vmatprep.subr.bf16.mxu0 0
      %5199 = vmatpush1.bf16.msra.mxu0 0
      %5200 = vmatprep.subr.bf16.mxu0 0
      %5201 = vmatpush1.bf16.msra.mxu0 0
      %5202 = vmatprep.subr.bf16.mxu0 0
      %5203 = vmatpush1.bf16.msra.mxu0 0
      %5204 = vmatprep.subr.bf16.mxu0 0
      %5205 = vmatpush1.bf16.msra.mxu0 0
      %5206 = vmatprep.subr.bf16.mxu0 0
      %5207 = vmatpush1.bf16.msra.mxu0 0
      %5208 = vmatprep.subr.bf16.mxu0 0
      %5209 = vmatpush1.bf16.msra.mxu0 0
      %5210 = vmatprep.subr.bf16.mxu0 0
      %5211 = vmatpush1.bf16.msra.mxu0 0
      %5212 = vmatprep.subr.bf16.mxu0 0
      %5213 = vmatpush1.bf16.msra.mxu0 0
      %5214 = vmatprep.subr.bf16.mxu0 0
      %5215 = vmatpush1.bf16.msra.mxu0 0
      %5216 = vmatprep.subr.bf16.mxu0 0
      %5217 = vmatpush1.bf16.msra.mxu0 0
      %5218 = vmatprep.subr.bf16.mxu0 0
      %5219 = vmatpush1.bf16.msra.mxu0 0
      %5220 = vmatprep.subr.bf16.mxu0 0
      %5221 = vmatpush1.bf16.msra.mxu0 0
      %5222 = vmatprep.subr.bf16.mxu0 0
      %5223 = vmatpush1.bf16.msra.mxu0 0
      %5224 = vmatprep.subr.bf16.mxu0 0
      %5225 = vmatpush1.bf16.msra.mxu0 0
      %5226 = vmatprep.subr.bf16.mxu0 0
      %5227 = vmatpush1.bf16.msra.mxu0 0
      %5228 = vmatprep.mubr.bf16.mxu0 0
      %5229 = vmatmul.mubr.bf16.gmra.mrb[0].mxu0 %v5173
      %v5230 = vpop.f32.mrb[0].mxu0
      %v5231 = vadd.f32 0.0, %v5230
      %v5232 = vpop.f32.mrb[0].mxu0
      %v5233 = vpop.f32.mrb[0].mxu0
      %v5234 = vadd.f32 0.0, %v5233
      %v5235 = vpop.f32.mrb[0].mxu0
      %5236 = vmatprep.mubr.bf16.mxu0 0
      %5237 = vmatmul.mubr.bf16.gmra.mrb[0].mxu0 %v5176
      %v5238 = vpop.f32.mrb[0].mxu0
      %v5239 = vadd.f32 0.0, %v5238
      %v5240 = vpop.f32.mrb[0].mxu0
      %v5241 = vpop.f32.mrb[0].mxu0
      %v5242 = vadd.f32 0.0, %v5241
      %v5243 = vpop.f32.mrb[0].mxu0
      %5244 = vmatprep.mubr.bf16.mxu0 0
      %5245 = vmatmul.mubr.bf16.gmra.mrb[0].mxu0 %v5179
      %v5246 = vpop.f32.mrb[0].mxu0
      %v5247 = vadd.f32 0.0, %v5246
      %v5248 = vpop.f32.mrb[0].mxu0
      %v5249 = vpop.f32.mrb[0].mxu0
      %v5250 = vadd.f32 0.0, %v5249
      %v5251 = vpop.f32.mrb[0].mxu0
      %5252 = vmatprep.mubr.bf16.mxu0 0
      %5253 = vmatmul.mubr.bf16.gmra.mrb[0].mxu0 %v5182
      %v5254 = vpop.f32.mrb[0].mxu0
      %v5255 = vadd.f32 0.0, %v5254
      %v5256 = vpop.f32.mrb[0].mxu0
      %v5257 = vpop.f32.mrb[0].mxu0
      %v5258 = vadd.f32 0.0, %v5257
      %v5259 = vpop.f32.mrb[0].mxu0
      %5260 = vmatprep.mubr.bf16.mxu0 0
      %5261 = vmatmul.mubr.bf16.gmra.mrb[0].mxu0 %v5185
      %v5262 = vpop.f32.mrb[0].mxu0
      %v5263 = vadd.f32 0.0, %v5262
      %v5264 = vpop.f32.mrb[0].mxu0
      %v5265 = vpop.f32.mrb[0].mxu0
      %v5266 = vadd.f32 0.0, %v5265
      %v5267 = vpop.f32.mrb[0].mxu0
      %5268 = vmatprep.mubr.bf16.mxu0 0
      %5269 = vmatmul.mubr.bf16.gmra.mrb[0].mxu0 %v5188
      %v5270 = vpop.f32.mrb[0].mxu0
      %v5271 = vadd.f32 0.0, %v5270
      %v5272 = vpop.f32.mrb[0].mxu0
      %v5273 = vpop.f32.mrb[0].mxu0
      %v5274 = vadd.f32 0.0, %v5273
      %v5275 = vpop.f32.mrb[0].mxu0
      %5276 = vmatprep.mubr.bf16.mxu0 0
      %5277 = vmatmul.mubr.bf16.gmra.mrb[0].mxu0 %v5191
      %v5278 = vpop.f32.mrb[0].mxu0
      %v5279 = vadd.f32 0.0, %v5278
      %v5280 = vpop.f32.mrb[0].mxu0
      %v5281 = vpop.f32.mrb[0].mxu0
      %v5282 = vpop.f32.mrb[0].mxu0
      %5283 = vdwg.mxu0
      %v5284 = vadd.f32 %v3938, %v5231
      %v5285 = vadd.f32 %v3939, %v5234
      %v5286 = vadd.f32 %v3940, %v5239
      %v5287 = vadd.f32 %v3941, %v5242
      %v5288 = vadd.f32 %v3942, %v5247
      %v5289 = vadd.f32 %v3943, %v5250
      %v5290 = vadd.f32 %v3944, %v5255
      %v5291 = vadd.f32 %v3945, %v5258
      %v5292 = vadd.f32 %v3946, %v5263
      %v5293 = vadd.f32 %v3947, %v5266
      %v5294 = vadd.f32 %v3948, %v5271
      %v5295 = vadd.f32 %v3949, %v5274
      %v5296 = vadd.f32 %v3950, %v5279
      %v5297 = vld [vmem:[%s3094] sm:$0xe]
      %v5298 = vld [vmem:[%s3094 + $0x4] sm:$0x3]
      %v5299 = vld [vmem:[%s3094 + $0x8] sm:$0xe]
      %v5300 = vld [vmem:[%s3094 + $0xc] sm:$0x3]
      %v5301 = vld [vmem:[%s3094 + $0x10] sm:$0xe]
      %v5302 = vld [vmem:[%s3094 + $0x14] sm:$0x3]
      %v5303 = vld [vmem:[%s3094 + $0x18] sm:$0xe]
      %v5304 = vld [vmem:[%s3094 + $0x1c] sm:$0x3]
      %v5305 = vld [vmem:[%s3094 + $0x20] sm:$0xe]
      %v5306 = vld [vmem:[%s3094 + $0x24] sm:$0x3]
      %v5307 = vld [vmem:[%s3094 + $0x28] sm:$0xe]
      %v5308 = vld [vmem:[%s3094 + $0x2c] sm:$0x3]
      %v5309 = vld [vmem:[%s3094 + $0x30] sm:$0xe]
      %v5310 = vld [vmem:[%s3094 + $0x34] sm:$0x3]
      %v5311 = vld [vmem:[%s3094 + $0x38] sm:$0xe]
      %v5312 = vld [vmem:[%s3094 + $0x3c] sm:$0x3]
      %v5313 = vld [vmem:[%s3094 + $0x40] sm:$0xe]
      %v5314 = vld [vmem:[%s3094 + $0x44] sm:$0x3]
      %v5315 = vld [vmem:[%s3094 + $0x48] sm:$0xe]
      %v5316 = vld [vmem:[%s3094 + $0x4c] sm:$0x3]
      %v5338 = vunpack.c.l.s4 1966171168
      %v5339 = vunpack.c.0.s8 %v5338
      %v5340 = vlaneseq
      %v5341 = vshrl.u32 %v5340, 7
      %v5342 = vsub.s32 %v5339, %v5341
      %v5343 = vrot.slane %v5297, %v5342
      %v5344 = vcombine.high %v5343, %v5343
      %v5346 = vunpack.c.l.s4 1966171168
      %v5347 = vunpack.c.0.s8 %v5346
      %v5348 = vlaneseq
      %v5349 = vshrl.u32 %v5348, 7
      %v5350 = vsub.s32 %v5347, %v5349
      %v5351 = vrot.slane %v5343, %v5350
      %v5353 = vunpack.c.l.s4 1966171168
      %v5354 = vunpack.c.0.s8 %v5353
      %v5355 = vlaneseq
      %v5356 = vshrl.u32 %v5355, 7
      %v5357 = vsub.s32 %v5354, %v5356
      %v5358 = vrot.slane %v5344, %v5357
      %v5359 = vcombine.high %v5351, %v5351
      %v5360 = vcombine.high %v5358, %v5358
      %v5362 = vunpack.c.l.s4 1966171168
      %v5363 = vunpack.c.0.s8 %v5362
      %v5364 = vlaneseq
      %v5365 = vshrl.u32 %v5364, 7
      %v5366 = vsub.s32 %v5363, %v5365
      %v5367 = vrot.slane %v5298, %v5366
      %v5368 = vcombine.high %v5367, %v5367
      %v5370 = vunpack.c.l.s4 1966171168
      %v5371 = vunpack.c.0.s8 %v5370
      %v5372 = vlaneseq
      %v5373 = vshrl.u32 %v5372, 7
      %v5374 = vsub.s32 %v5371, %v5373
      %v5375 = vrot.slane %v5367, %v5374
      %v5377 = vunpack.c.l.s4 1966171168
      %v5378 = vunpack.c.0.s8 %v5377
      %v5379 = vlaneseq
      %v5380 = vshrl.u32 %v5379, 7
      %v5381 = vsub.s32 %v5378, %v5380
      %v5382 = vrot.slane %v5368, %v5381
      %v5384 = vunpack.c.l.s4 1966171168
      %v5385 = vunpack.c.0.s8 %v5384
      %v5386 = vlaneseq
      %v5387 = vshrl.u32 %v5386, 7
      %v5388 = vsub.s32 %v5385, %v5387
      %v5389 = vrot.slane %v5299, %v5388
      %v5390 = vcombine.high %v5389, %v5389
      %v5392 = vunpack.c.l.s4 1966171168
      %v5393 = vunpack.c.0.s8 %v5392
      %v5394 = vlaneseq
      %v5395 = vshrl.u32 %v5394, 7
      %v5396 = vsub.s32 %v5393, %v5395
      %v5397 = vrot.slane %v5389, %v5396
      %v5399 = vunpack.c.l.s4 1966171168
      %v5400 = vunpack.c.0.s8 %v5399
      %v5401 = vlaneseq
      %v5402 = vshrl.u32 %v5401, 7
      %v5403 = vsub.s32 %v5400, %v5402
      %v5404 = vrot.slane %v5390, %v5403
      %v5405 = vcombine.high %v5397, %v5397
      %v5406 = vcombine.high %v5404, %v5404
      %v5408 = vunpack.c.l.s4 1966171168
      %v5409 = vunpack.c.0.s8 %v5408
      %v5410 = vlaneseq
      %v5411 = vshrl.u32 %v5410, 7
      %v5412 = vsub.s32 %v5409, %v5411
      %v5413 = vrot.slane %v5300, %v5412
      %v5414 = vcombine.high %v5413, %v5413
      %v5416 = vunpack.c.l.s4 1966171168
      %v5417 = vunpack.c.0.s8 %v5416
      %v5418 = vlaneseq
      %v5419 = vshrl.u32 %v5418, 7
      %v5420 = vsub.s32 %v5417, %v5419
      %v5421 = vrot.slane %v5413, %v5420
      %v5423 = vunpack.c.l.s4 1966171168
      %v5424 = vunpack.c.0.s8 %v5423
      %v5425 = vlaneseq
      %v5426 = vshrl.u32 %v5425, 7
      %v5427 = vsub.s32 %v5424, %v5426
      %v5428 = vrot.slane %v5414, %v5427
      %v5430 = vunpack.c.l.s4 1966171168
      %v5431 = vunpack.c.0.s8 %v5430
      %v5432 = vlaneseq
      %v5433 = vshrl.u32 %v5432, 7
      %v5434 = vsub.s32 %v5431, %v5433
      %v5435 = vrot.slane %v5301, %v5434
      %v5436 = vcombine.high %v5435, %v5435
      %v5438 = vunpack.c.l.s4 1966171168
      %v5439 = vunpack.c.0.s8 %v5438
      %v5440 = vlaneseq
      %v5441 = vshrl.u32 %v5440, 7
      %v5442 = vsub.s32 %v5439, %v5441
      %v5443 = vrot.slane %v5435, %v5442
      %v5445 = vunpack.c.l.s4 1966171168
      %v5446 = vunpack.c.0.s8 %v5445
      %v5447 = vlaneseq
      %v5448 = vshrl.u32 %v5447, 7
      %v5449 = vsub.s32 %v5446, %v5448
      %v5450 = vrot.slane %v5436, %v5449
      %v5451 = vcombine.high %v5443, %v5443
      %v5452 = vcombine.high %v5450, %v5450
      %v5454 = vunpack.c.l.s4 1966171168
      %v5455 = vunpack.c.0.s8 %v5454
      %v5456 = vlaneseq
      %v5457 = vshrl.u32 %v5456, 7
      %v5458 = vsub.s32 %v5455, %v5457
      %v5459 = vrot.slane %v5302, %v5458
      %v5460 = vcombine.high %v5459, %v5459
      %v5462 = vunpack.c.l.s4 1966171168
      %v5463 = vunpack.c.0.s8 %v5462
      %v5464 = vlaneseq
      %v5465 = vshrl.u32 %v5464, 7
      %v5466 = vsub.s32 %v5463, %v5465
      %v5467 = vrot.slane %v5459, %v5466
      %v5469 = vunpack.c.l.s4 1966171168
      %v5470 = vunpack.c.0.s8 %v5469
      %v5471 = vlaneseq
      %v5472 = vshrl.u32 %v5471, 7
      %v5473 = vsub.s32 %v5470, %v5472
      %v5474 = vrot.slane %v5460, %v5473
      %v5476 = vunpack.c.l.s4 1966171168
      %v5477 = vunpack.c.0.s8 %v5476
      %v5478 = vlaneseq
      %v5479 = vshrl.u32 %v5478, 7
      %v5480 = vsub.s32 %v5477, %v5479
      %v5481 = vrot.slane %v5303, %v5480
      %v5482 = vcombine.high %v5481, %v5481
      %v5484 = vunpack.c.l.s4 1966171168
      %v5485 = vunpack.c.0.s8 %v5484
      %v5486 = vlaneseq
      %v5487 = vshrl.u32 %v5486, 7
      %v5488 = vsub.s32 %v5485, %v5487
      %v5489 = vrot.slane %v5481, %v5488
      %v5491 = vunpack.c.l.s4 1966171168
      %v5492 = vunpack.c.0.s8 %v5491
      %v5493 = vlaneseq
      %v5494 = vshrl.u32 %v5493, 7
      %v5495 = vsub.s32 %v5492, %v5494
      %v5496 = vrot.slane %v5482, %v5495
      %v5497 = vcombine.high %v5489, %v5489
      %v5498 = vcombine.high %v5496, %v5496
      %v5500 = vunpack.c.l.s4 1966171168
      %v5501 = vunpack.c.0.s8 %v5500
      %v5502 = vlaneseq
      %v5503 = vshrl.u32 %v5502, 7
      %v5504 = vsub.s32 %v5501, %v5503
      %v5505 = vrot.slane %v5304, %v5504
      %v5506 = vcombine.high %v5505, %v5505
      %v5508 = vunpack.c.l.s4 1966171168
      %v5509 = vunpack.c.0.s8 %v5508
      %v5510 = vlaneseq
      %v5511 = vshrl.u32 %v5510, 7
      %v5512 = vsub.s32 %v5509, %v5511
      %v5513 = vrot.slane %v5505, %v5512
      %v5515 = vunpack.c.l.s4 1966171168
      %v5516 = vunpack.c.0.s8 %v5515
      %v5517 = vlaneseq
      %v5518 = vshrl.u32 %v5517, 7
      %v5519 = vsub.s32 %v5516, %v5518
      %v5520 = vrot.slane %v5506, %v5519
      %v5522 = vunpack.c.l.s4 1966171168
      %v5523 = vunpack.c.0.s8 %v5522
      %v5524 = vlaneseq
      %v5525 = vshrl.u32 %v5524, 7
      %v5526 = vsub.s32 %v5523, %v5525
      %v5527 = vrot.slane %v5305, %v5526
      %v5528 = vcombine.high %v5527, %v5527
      %v5530 = vunpack.c.l.s4 1966171168
      %v5531 = vunpack.c.0.s8 %v5530
      %v5532 = vlaneseq
      %v5533 = vshrl.u32 %v5532, 7
      %v5534 = vsub.s32 %v5531, %v5533
      %v5535 = vrot.slane %v5527, %v5534
      %v5537 = vunpack.c.l.s4 1966171168
      %v5538 = vunpack.c.0.s8 %v5537
      %v5539 = vlaneseq
      %v5540 = vshrl.u32 %v5539, 7
      %v5541 = vsub.s32 %v5538, %v5540
      %v5542 = vrot.slane %v5528, %v5541
      %v5543 = vcombine.high %v5535, %v5535
      %v5544 = vcombine.high %v5542, %v5542
      %v5546 = vunpack.c.l.s4 1966171168
      %v5547 = vunpack.c.0.s8 %v5546
      %v5548 = vlaneseq
      %v5549 = vshrl.u32 %v5548, 7
      %v5550 = vsub.s32 %v5547, %v5549
      %v5551 = vrot.slane %v5306, %v5550
      %v5552 = vcombine.high %v5551, %v5551
      %v5554 = vunpack.c.l.s4 1966171168
      %v5555 = vunpack.c.0.s8 %v5554
      %v5556 = vlaneseq
      %v5557 = vshrl.u32 %v5556, 7
      %v5558 = vsub.s32 %v5555, %v5557
      %v5559 = vrot.slane %v5551, %v5558
      %v5561 = vunpack.c.l.s4 1966171168
      %v5562 = vunpack.c.0.s8 %v5561
      %v5563 = vlaneseq
      %v5564 = vshrl.u32 %v5563, 7
      %v5565 = vsub.s32 %v5562, %v5564
      %v5566 = vrot.slane %v5552, %v5565
      %v5568 = vunpack.c.l.s4 1966171168
      %v5569 = vunpack.c.0.s8 %v5568
      %v5570 = vlaneseq
      %v5571 = vshrl.u32 %v5570, 7
      %v5572 = vsub.s32 %v5569, %v5571
      %v5573 = vrot.slane %v5307, %v5572
      %v5574 = vcombine.high %v5573, %v5573
      %v5576 = vunpack.c.l.s4 1966171168
      %v5577 = vunpack.c.0.s8 %v5576
      %v5578 = vlaneseq
      %v5579 = vshrl.u32 %v5578, 7
      %v5580 = vsub.s32 %v5577, %v5579
      %v5581 = vrot.slane %v5573, %v5580
      %v5583 = vunpack.c.l.s4 1966171168
      %v5584 = vunpack.c.0.s8 %v5583
      %v5585 = vlaneseq
      %v5586 = vshrl.u32 %v5585, 7
      %v5587 = vsub.s32 %v5584, %v5586
      %v5588 = vrot.slane %v5574, %v5587
      %v5589 = vcombine.high %v5581, %v5581
      %v5590 = vcombine.high %v5588, %v5588
      %v5592 = vunpack.c.l.s4 1966171168
      %v5593 = vunpack.c.0.s8 %v5592
      %v5594 = vlaneseq
      %v5595 = vshrl.u32 %v5594, 7
      %v5596 = vsub.s32 %v5593, %v5595
      %v5597 = vrot.slane %v5308, %v5596
      %v5598 = vcombine.high %v5597, %v5597
      %v5600 = vunpack.c.l.s4 1966171168
      %v5601 = vunpack.c.0.s8 %v5600
      %v5602 = vlaneseq
      %v5603 = vshrl.u32 %v5602, 7
      %v5604 = vsub.s32 %v5601, %v5603
      %v5605 = vrot.slane %v5597, %v5604
      %v5607 = vunpack.c.l.s4 1966171168
      %v5608 = vunpack.c.0.s8 %v5607
      %v5609 = vlaneseq
      %v5610 = vshrl.u32 %v5609, 7
      %v5611 = vsub.s32 %v5608, %v5610
      %v5612 = vrot.slane %v5598, %v5611
      %v5614 = vunpack.c.l.s4 1966171168
      %v5615 = vunpack.c.0.s8 %v5614
      %v5616 = vlaneseq
      %v5617 = vshrl.u32 %v5616, 7
      %v5618 = vsub.s32 %v5615, %v5617
      %v5619 = vrot.slane %v5309, %v5618
      %v5620 = vcombine.high %v5619, %v5619
      %v5622 = vunpack.c.l.s4 1966171168
      %v5623 = vunpack.c.0.s8 %v5622
      %v5624 = vlaneseq
      %v5625 = vshrl.u32 %v5624, 7
      %v5626 = vsub.s32 %v5623, %v5625
      %v5627 = vrot.slane %v5619, %v5626
      %v5629 = vunpack.c.l.s4 1966171168
      %v5630 = vunpack.c.0.s8 %v5629
      %v5631 = vlaneseq
      %v5632 = vshrl.u32 %v5631, 7
      %v5633 = vsub.s32 %v5630, %v5632
      %v5634 = vrot.slane %v5620, %v5633
      %v5635 = vcombine.high %v5627, %v5627
      %v5636 = vcombine.high %v5634, %v5634
      %v5638 = vunpack.c.l.s4 1966171168
      %v5639 = vunpack.c.0.s8 %v5638
      %v5640 = vlaneseq
      %v5641 = vshrl.u32 %v5640, 7
      %v5642 = vsub.s32 %v5639, %v5641
      %v5643 = vrot.slane %v5310, %v5642
      %v5644 = vcombine.high %v5643, %v5643
      %v5646 = vunpack.c.l.s4 1966171168
      %v5647 = vunpack.c.0.s8 %v5646
      %v5648 = vlaneseq
      %v5649 = vshrl.u32 %v5648, 7
      %v5650 = vsub.s32 %v5647, %v5649
      %v5651 = vrot.slane %v5643, %v5650
      %v5653 = vunpack.c.l.s4 1966171168
      %v5654 = vunpack.c.0.s8 %v5653
      %v5655 = vlaneseq
      %v5656 = vshrl.u32 %v5655, 7
      %v5657 = vsub.s32 %v5654, %v5656
      %v5658 = vrot.slane %v5644, %v5657
      %v5660 = vunpack.c.l.s4 1966171168
      %v5661 = vunpack.c.0.s8 %v5660
      %v5662 = vlaneseq
      %v5663 = vshrl.u32 %v5662, 7
      %v5664 = vsub.s32 %v5661, %v5663
      %v5665 = vrot.slane %v5311, %v5664
      %v5666 = vcombine.high %v5665, %v5665
      %v5668 = vunpack.c.l.s4 1966171168
      %v5669 = vunpack.c.0.s8 %v5668
      %v5670 = vlaneseq
      %v5671 = vshrl.u32 %v5670, 7
      %v5672 = vsub.s32 %v5669, %v5671
      %v5673 = vrot.slane %v5665, %v5672
      %v5675 = vunpack.c.l.s4 1966171168
      %v5676 = vunpack.c.0.s8 %v5675
      %v5677 = vlaneseq
      %v5678 = vshrl.u32 %v5677, 7
      %v5679 = vsub.s32 %v5676, %v5678
      %v5680 = vrot.slane %v5666, %v5679
      %v5681 = vcombine.high %v5673, %v5673
      %v5682 = vcombine.high %v5680, %v5680
      %v5684 = vunpack.c.l.s4 1966171168
      %v5685 = vunpack.c.0.s8 %v5684
      %v5686 = vlaneseq
      %v5687 = vshrl.u32 %v5686, 7
      %v5688 = vsub.s32 %v5685, %v5687
      %v5689 = vrot.slane %v5312, %v5688
      %v5690 = vcombine.high %v5689, %v5689
      %v5692 = vunpack.c.l.s4 1966171168
      %v5693 = vunpack.c.0.s8 %v5692
      %v5694 = vlaneseq
      %v5695 = vshrl.u32 %v5694, 7
      %v5696 = vsub.s32 %v5693, %v5695
      %v5697 = vrot.slane %v5689, %v5696
      %v5699 = vunpack.c.l.s4 1966171168
      %v5700 = vunpack.c.0.s8 %v5699
      %v5701 = vlaneseq
      %v5702 = vshrl.u32 %v5701, 7
      %v5703 = vsub.s32 %v5700, %v5702
      %v5704 = vrot.slane %v5690, %v5703
      %v5706 = vunpack.c.l.s4 1966171168
      %v5707 = vunpack.c.0.s8 %v5706
      %v5708 = vlaneseq
      %v5709 = vshrl.u32 %v5708, 7
      %v5710 = vsub.s32 %v5707, %v5709
      %v5711 = vrot.slane %v5313, %v5710
      %v5712 = vcombine.high %v5711, %v5711
      %v5714 = vunpack.c.l.s4 1966171168
      %v5715 = vunpack.c.0.s8 %v5714
      %v5716 = vlaneseq
      %v5717 = vshrl.u32 %v5716, 7
      %v5718 = vsub.s32 %v5715, %v5717
      %v5719 = vrot.slane %v5711, %v5718
      %v5721 = vunpack.c.l.s4 1966171168
      %v5722 = vunpack.c.0.s8 %v5721
      %v5723 = vlaneseq
      %v5724 = vshrl.u32 %v5723, 7
      %v5725 = vsub.s32 %v5722, %v5724
      %v5726 = vrot.slane %v5712, %v5725
      %v5727 = vcombine.high %v5719, %v5719
      %v5728 = vcombine.high %v5726, %v5726
      %v5730 = vunpack.c.l.s4 1966171168
      %v5731 = vunpack.c.0.s8 %v5730
      %v5732 = vlaneseq
      %v5733 = vshrl.u32 %v5732, 7
      %v5734 = vsub.s32 %v5731, %v5733
      %v5735 = vrot.slane %v5314, %v5734
      %v5736 = vcombine.high %v5735, %v5735
      %v5738 = vunpack.c.l.s4 1966171168
      %v5739 = vunpack.c.0.s8 %v5738
      %v5740 = vlaneseq
      %v5741 = vshrl.u32 %v5740, 7
      %v5742 = vsub.s32 %v5739, %v5741
      %v5743 = vrot.slane %v5735, %v5742
      %v5745 = vunpack.c.l.s4 1966171168
      %v5746 = vunpack.c.0.s8 %v5745
      %v5747 = vlaneseq
      %v5748 = vshrl.u32 %v5747, 7
      %v5749 = vsub.s32 %v5746, %v5748
      %v5750 = vrot.slane %v5736, %v5749
      %v5752 = vunpack.c.l.s4 1966171168
      %v5753 = vunpack.c.0.s8 %v5752
      %v5754 = vlaneseq
      %v5755 = vshrl.u32 %v5754, 7
      %v5756 = vsub.s32 %v5753, %v5755
      %v5757 = vrot.slane %v5315, %v5756
      %v5758 = vcombine.high %v5757, %v5757
      %v5760 = vunpack.c.l.s4 1966171168
      %v5761 = vunpack.c.0.s8 %v5760
      %v5762 = vlaneseq
      %v5763 = vshrl.u32 %v5762, 7
      %v5764 = vsub.s32 %v5761, %v5763
      %v5765 = vrot.slane %v5757, %v5764
      %v5767 = vunpack.c.l.s4 1966171168
      %v5768 = vunpack.c.0.s8 %v5767
      %v5769 = vlaneseq
      %v5770 = vshrl.u32 %v5769, 7
      %v5771 = vsub.s32 %v5768, %v5770
      %v5772 = vrot.slane %v5758, %v5771
      %v5773 = vcombine.high %v5765, %v5765
      %v5774 = vcombine.high %v5772, %v5772
      %v5776 = vunpack.c.l.s4 1966171168
      %v5777 = vunpack.c.0.s8 %v5776
      %v5778 = vlaneseq
      %v5779 = vshrl.u32 %v5778, 7
      %v5780 = vsub.s32 %v5777, %v5779
      %v5781 = vrot.slane %v5316, %v5780
      %v5782 = vcombine.high %v5781, %v5781
      %v5784 = vunpack.c.l.s4 1966171168
      %v5785 = vunpack.c.0.s8 %v5784
      %v5786 = vlaneseq
      %v5787 = vshrl.u32 %v5786, 7
      %v5788 = vsub.s32 %v5785, %v5787
      %v5789 = vrot.slane %v5781, %v5788
      %v5791 = vunpack.c.l.s4 1966171168
      %v5792 = vunpack.c.0.s8 %v5791
      %v5793 = vlaneseq
      %v5794 = vshrl.u32 %v5793, 7
      %v5795 = vsub.s32 %v5792, %v5794
      %v5796 = vrot.slane %v5782, %v5795
      %s5797 = scalar_lea.vmem %s1, 20
      %v5798 = vld [vmem:[%s5797] sm:$0xf]
      %v5799 = vcombine.low %v5358, %v5359
      %v5800 = vcombine.low %v5360, %v5375
      %v5801 = vcombine.low %v5382, %v5404
      %v5802 = vcombine.low %v5405, %v5406
      %v5804 = vunpack.c.l.s4 1966171168
      %v5805 = vunpack.c.0.s8 %v5804
      %v5806 = vlaneseq
      %v5807 = vshrl.u32 %v5806, 7
      %v5808 = vsub.s32 %v5805, %v5807
      %v5809 = vrot.slane %v5799, %v5808
      %v5811 = vunpack.c.l.s4 1966171168
      %v5812 = vunpack.c.0.s8 %v5811
      %v5813 = vlaneseq
      %v5814 = vshrl.u32 %v5813, 7
      %v5815 = vsub.s32 %v5812, %v5814
      %v5816 = vrot.slane %v5800, %v5815
      %v5818 = vunpack.c.l.s4 1966171168
      %v5819 = vunpack.c.0.s8 %v5818
      %v5820 = vlaneseq
      %v5821 = vshrl.u32 %v5820, 7
      %v5822 = vsub.s32 %v5819, %v5821
      %v5823 = vrot.slane %v5801, %v5822
      %v5825 = vunpack.c.l.s4 1966171168
      %v5826 = vunpack.c.0.s8 %v5825
      %v5827 = vlaneseq
      %v5828 = vshrl.u32 %v5827, 7
      %v5829 = vsub.s32 %v5826, %v5828
      %v5830 = vrot.slane %v5802, %v5829
      %v5831 = vcombine.low %v5809, %v5816
      %v5832 = vcombine.low %v5823, %v5830
      %v5834 = vunpack.c.l.s4 1966171168
      %v5835 = vunpack.c.0.s8 %v5834
      %v5836 = vlaneseq
      %v5837 = vshrl.u32 %v5836, 7
      %v5838 = vsub.s32 %v5835, %v5837
      %v5839 = vrot.slane %v5831, %v5838
      %v5841 = vunpack.c.l.s4 1966171168
      %v5842 = vunpack.c.0.s8 %v5841
      %v5843 = vlaneseq
      %v5844 = vshrl.u32 %v5843, 7
      %v5845 = vsub.s32 %v5842, %v5844
      %v5846 = vrot.slane %v5832, %v5845
      %v5847 = vcombine.low %v5839, %v5846
      %v5848 = vcombine.low %v5421, %v5428
      %v5849 = vcombine.low %v5450, %v5451
      %v5850 = vcombine.low %v5452, %v5467
      %v5851 = vcombine.low %v5474, %v5496
      %v5853 = vunpack.c.l.s4 1966171168
      %v5854 = vunpack.c.0.s8 %v5853
      %v5855 = vlaneseq
      %v5856 = vshrl.u32 %v5855, 7
      %v5857 = vsub.s32 %v5854, %v5856
      %v5858 = vrot.slane %v5848, %v5857
      %v5860 = vunpack.c.l.s4 1966171168
      %v5861 = vunpack.c.0.s8 %v5860
      %v5862 = vlaneseq
      %v5863 = vshrl.u32 %v5862, 7
      %v5864 = vsub.s32 %v5861, %v5863
      %v5865 = vrot.slane %v5849, %v5864
      %v5867 = vunpack.c.l.s4 1966171168
      %v5868 = vunpack.c.0.s8 %v5867
      %v5869 = vlaneseq
      %v5870 = vshrl.u32 %v5869, 7
      %v5871 = vsub.s32 %v5868, %v5870
      %v5872 = vrot.slane %v5850, %v5871
      %v5874 = vunpack.c.l.s4 1966171168
      %v5875 = vunpack.c.0.s8 %v5874
      %v5876 = vlaneseq
      %v5877 = vshrl.u32 %v5876, 7
      %v5878 = vsub.s32 %v5875, %v5877
      %v5879 = vrot.slane %v5851, %v5878
      %v5880 = vcombine.low %v5858, %v5865
      %v5881 = vcombine.low %v5872, %v5879
      %v5883 = vunpack.c.l.s4 1966171168
      %v5884 = vunpack.c.0.s8 %v5883
      %v5885 = vlaneseq
      %v5886 = vshrl.u32 %v5885, 7
      %v5887 = vsub.s32 %v5884, %v5886
      %v5888 = vrot.slane %v5880, %v5887
      %v5890 = vunpack.c.l.s4 1966171168
      %v5891 = vunpack.c.0.s8 %v5890
      %v5892 = vlaneseq
      %v5893 = vshrl.u32 %v5892, 7
      %v5894 = vsub.s32 %v5891, %v5893
      %v5895 = vrot.slane %v5881, %v5894
      %v5896 = vcombine.low %v5888, %v5895
      %v5897 = vcombine.low %v5497, %v5498
      %v5898 = vcombine.low %v5513, %v5520
      %v5899 = vcombine.low %v5542, %v5543
      %v5900 = vcombine.low %v5544, %v5559
      %v5902 = vunpack.c.l.s4 1966171168
      %v5903 = vunpack.c.0.s8 %v5902
      %v5904 = vlaneseq
      %v5905 = vshrl.u32 %v5904, 7
      %v5906 = vsub.s32 %v5903, %v5905
      %v5907 = vrot.slane %v5897, %v5906
      %v5909 = vunpack.c.l.s4 1966171168
      %v5910 = vunpack.c.0.s8 %v5909
      %v5911 = vlaneseq
      %v5912 = vshrl.u32 %v5911, 7
      %v5913 = vsub.s32 %v5910, %v5912
      %v5914 = vrot.slane %v5898, %v5913
      %v5916 = vunpack.c.l.s4 1966171168
      %v5917 = vunpack.c.0.s8 %v5916
      %v5918 = vlaneseq
      %v5919 = vshrl.u32 %v5918, 7
      %v5920 = vsub.s32 %v5917, %v5919
      %v5921 = vrot.slane %v5899, %v5920
      %v5923 = vunpack.c.l.s4 1966171168
      %v5924 = vunpack.c.0.s8 %v5923
      %v5925 = vlaneseq
      %v5926 = vshrl.u32 %v5925, 7
      %v5927 = vsub.s32 %v5924, %v5926
      %v5928 = vrot.slane %v5900, %v5927
      %v5929 = vcombine.low %v5907, %v5914
      %v5930 = vcombine.low %v5921, %v5928
      %v5932 = vunpack.c.l.s4 1966171168
      %v5933 = vunpack.c.0.s8 %v5932
      %v5934 = vlaneseq
      %v5935 = vshrl.u32 %v5934, 7
      %v5936 = vsub.s32 %v5933, %v5935
      %v5937 = vrot.slane %v5929, %v5936
      %v5939 = vunpack.c.l.s4 1966171168
      %v5940 = vunpack.c.0.s8 %v5939
      %v5941 = vlaneseq
      %v5942 = vshrl.u32 %v5941, 7
      %v5943 = vsub.s32 %v5940, %v5942
      %v5944 = vrot.slane %v5930, %v5943
      %v5945 = vcombine.low %v5937, %v5944
      %v5946 = vcombine.low %v5566, %v5588
      %v5947 = vcombine.low %v5589, %v5590
      %v5948 = vcombine.low %v5605, %v5612
      %v5949 = vcombine.low %v5634, %v5635
      %v5951 = vunpack.c.l.s4 1966171168
      %v5952 = vunpack.c.0.s8 %v5951
      %v5953 = vlaneseq
      %v5954 = vshrl.u32 %v5953, 7
      %v5955 = vsub.s32 %v5952, %v5954
      %v5956 = vrot.slane %v5946, %v5955
      %v5958 = vunpack.c.l.s4 1966171168
      %v5959 = vunpack.c.0.s8 %v5958
      %v5960 = vlaneseq
      %v5961 = vshrl.u32 %v5960, 7
      %v5962 = vsub.s32 %v5959, %v5961
      %v5963 = vrot.slane %v5947, %v5962
      %v5965 = vunpack.c.l.s4 1966171168
      %v5966 = vunpack.c.0.s8 %v5965
      %v5967 = vlaneseq
      %v5968 = vshrl.u32 %v5967, 7
      %v5969 = vsub.s32 %v5966, %v5968
      %v5970 = vrot.slane %v5948, %v5969
      %v5972 = vunpack.c.l.s4 1966171168
      %v5973 = vunpack.c.0.s8 %v5972
      %v5974 = vlaneseq
      %v5975 = vshrl.u32 %v5974, 7
      %v5976 = vsub.s32 %v5973, %v5975
      %v5977 = vrot.slane %v5949, %v5976
      %v5978 = vcombine.low %v5956, %v5963
      %v5979 = vcombine.low %v5970, %v5977
      %v5981 = vunpack.c.l.s4 1966171168
      %v5982 = vunpack.c.0.s8 %v5981
      %v5983 = vlaneseq
      %v5984 = vshrl.u32 %v5983, 7
      %v5985 = vsub.s32 %v5982, %v5984
      %v5986 = vrot.slane %v5978, %v5985
      %v5988 = vunpack.c.l.s4 1966171168
      %v5989 = vunpack.c.0.s8 %v5988
      %v5990 = vlaneseq
      %v5991 = vshrl.u32 %v5990, 7
      %v5992 = vsub.s32 %v5989, %v5991
      %v5993 = vrot.slane %v5979, %v5992
      %v5994 = vcombine.low %v5986, %v5993
      %v5995 = vcombine.low %v5636, %v5651
      %v5996 = vcombine.low %v5658, %v5680
      %v5997 = vcombine.low %v5681, %v5682
      %v5998 = vcombine.low %v5697, %v5704
      %v6000 = vunpack.c.l.s4 1966171168
      %v6001 = vunpack.c.0.s8 %v6000
      %v6002 = vlaneseq
      %v6003 = vshrl.u32 %v6002, 7
      %v6004 = vsub.s32 %v6001, %v6003
      %v6005 = vrot.slane %v5995, %v6004
      %v6007 = vunpack.c.l.s4 1966171168
      %v6008 = vunpack.c.0.s8 %v6007
      %v6009 = vlaneseq
      %v6010 = vshrl.u32 %v6009, 7
      %v6011 = vsub.s32 %v6008, %v6010
      %v6012 = vrot.slane %v5996, %v6011
      %v6014 = vunpack.c.l.s4 1966171168
      %v6015 = vunpack.c.0.s8 %v6014
      %v6016 = vlaneseq
      %v6017 = vshrl.u32 %v6016, 7
      %v6018 = vsub.s32 %v6015, %v6017
      %v6019 = vrot.slane %v5997, %v6018
      %v6021 = vunpack.c.l.s4 1966171168
      %v6022 = vunpack.c.0.s8 %v6021
      %v6023 = vlaneseq
      %v6024 = vshrl.u32 %v6023, 7
      %v6025 = vsub.s32 %v6022, %v6024
      %v6026 = vrot.slane %v5998, %v6025
      %v6027 = vcombine.low %v6005, %v6012
      %v6028 = vcombine.low %v6019, %v6026
      %v6030 = vunpack.c.l.s4 1966171168
      %v6031 = vunpack.c.0.s8 %v6030
      %v6032 = vlaneseq
      %v6033 = vshrl.u32 %v6032, 7
      %v6034 = vsub.s32 %v6031, %v6033
      %v6035 = vrot.slane %v6027, %v6034
      %v6037 = vunpack.c.l.s4 1966171168
      %v6038 = vunpack.c.0.s8 %v6037
      %v6039 = vlaneseq
      %v6040 = vshrl.u32 %v6039, 7
      %v6041 = vsub.s32 %v6038, %v6040
      %v6042 = vrot.slane %v6028, %v6041
      %v6043 = vcombine.low %v6035, %v6042
      %v6044 = vcombine.low %v5726, %v5727
      %v6045 = vcombine.low %v5728, %v5743
      %v6046 = vcombine.low %v5750, %v5772
      %v6047 = vcombine.low %v5773, %v5774
      %v6049 = vunpack.c.l.s4 1966171168
      %v6050 = vunpack.c.0.s8 %v6049
      %v6051 = vlaneseq
      %v6052 = vshrl.u32 %v6051, 7
      %v6053 = vsub.s32 %v6050, %v6052
      %v6054 = vrot.slane %v6044, %v6053
      %v6056 = vunpack.c.l.s4 1966171168
      %v6057 = vunpack.c.0.s8 %v6056
      %v6058 = vlaneseq
      %v6059 = vshrl.u32 %v6058, 7
      %v6060 = vsub.s32 %v6057, %v6059
      %v6061 = vrot.slane %v6045, %v6060
      %v6063 = vunpack.c.l.s4 1966171168
      %v6064 = vunpack.c.0.s8 %v6063
      %v6065 = vlaneseq
      %v6066 = vshrl.u32 %v6065, 7
      %v6067 = vsub.s32 %v6064, %v6066
      %v6068 = vrot.slane %v6046, %v6067
      %v6070 = vunpack.c.l.s4 1966171168
      %v6071 = vunpack.c.0.s8 %v6070
      %v6072 = vlaneseq
      %v6073 = vshrl.u32 %v6072, 7
      %v6074 = vsub.s32 %v6071, %v6073
      %v6075 = vrot.slane %v6047, %v6074
      %v6076 = vcombine.low %v6054, %v6061
      %v6077 = vcombine.low %v6068, %v6075
      %v6079 = vunpack.c.l.s4 1966171168
      %v6080 = vunpack.c.0.s8 %v6079
      %v6081 = vlaneseq
      %v6082 = vshrl.u32 %v6081, 7
      %v6083 = vsub.s32 %v6080, %v6082
      %v6084 = vrot.slane %v6076, %v6083
      %v6086 = vunpack.c.l.s4 1966171168
      %v6087 = vunpack.c.0.s8 %v6086
      %v6088 = vlaneseq
      %v6089 = vshrl.u32 %v6088, 7
      %v6090 = vsub.s32 %v6087, %v6089
      %v6091 = vrot.slane %v6077, %v6090
      %v6092 = vcombine.low %v6084, %v6091
      %v6093 = vcombine.low %v5789, %v5796
      %v6095 = vunpack.c.l.s4 1966171168
      %v6096 = vunpack.c.0.s8 %v6095
      %v6097 = vlaneseq
      %v6098 = vshrl.u32 %v6097, 7
      %v6099 = vsub.s32 %v6096, %v6098
      %v6100 = vrot.slane %v6093, %v6099
      %v6102 = vunpack.c.l.s4 1966171168
      %v6103 = vunpack.c.0.s8 %v6102
      %v6104 = vlaneseq
      %v6105 = vshrl.u32 %v6104, 7
      %v6106 = vsub.s32 %v6103, %v6105
      %v6107 = vrot.slane %v6100, %v6106
      %v6109 = vsel %vm1623, %v5847, 0
      %v6112 = vsel %vm1623, %v5896, 0
      %v6115 = vsel %vm1623, %v5945, 0
      %v6118 = vsel %vm1623, %v5994, 0
      %v6121 = vsel %vm1623, %v6043, 0
      %v6124 = vsel %vm1623, %v6092, 0
      %v6127 = vsel %vm1623, %v6107, 0
      %v6130 = vsel %vm1645, %v5798, 0
      %6132 = vmatprep.subr.bf16.mxu0 0
      %6133 = vmatpush1.bf16.msra.mxu0 %v6130
      %6134 = vmatprep.subr.bf16.mxu0 0
      %6135 = vmatpush1.bf16.msra.mxu0 0
      %6136 = vmatprep.subr.bf16.mxu0 0
      %6137 = vmatpush1.bf16.msra.mxu0 0
      %6138 = vmatprep.subr.bf16.mxu0 0
      %6139 = vmatpush1.bf16.msra.mxu0 0
      %6140 = vmatprep.subr.bf16.mxu0 0
      %6141 = vmatpush1.bf16.msra.mxu0 0
      %6142 = vmatprep.subr.bf16.mxu0 0
      %6143 = vmatpush1.bf16.msra.mxu0 0
      %6144 = vmatprep.subr.bf16.mxu0 0
      %6145 = vmatpush1.bf16.msra.mxu0 0
      %6146 = vmatprep.subr.bf16.mxu0 0
      %6147 = vmatpush1.bf16.msra.mxu0 0
      %6148 = vmatprep.subr.bf16.mxu0 0
      %6149 = vmatpush1.bf16.msra.mxu0 0
      %6150 = vmatprep.subr.bf16.mxu0 0
      %6151 = vmatpush1.bf16.msra.mxu0 0
      %6152 = vmatprep.subr.bf16.mxu0 0
      %6153 = vmatpush1.bf16.msra.mxu0 0
      %6154 = vmatprep.subr.bf16.mxu0 0
      %6155 = vmatpush1.bf16.msra.mxu0 0
      %6156 = vmatprep.subr.bf16.mxu0 0
      %6157 = vmatpush1.bf16.msra.mxu0 0
      %6158 = vmatprep.subr.bf16.mxu0 0
      %6159 = vmatpush1.bf16.msra.mxu0 0
      %6160 = vmatprep.subr.bf16.mxu0 0
      %6161 = vmatpush1.bf16.msra.mxu0 0
      %6162 = vmatprep.subr.bf16.mxu0 0
      %6163 = vmatpush1.bf16.msra.mxu0 0
      %6164 = vmatprep.mubr.bf16.mxu0 0
      %6165 = vmatmul.mubr.bf16.gmra.mrb[0].mxu0 %v6109
      %v6166 = vpop.f32.mrb[0].mxu0
      %v6167 = vadd.f32 0.0, %v6166
      %v6168 = vpop.f32.mrb[0].mxu0
      %v6169 = vpop.f32.mrb[0].mxu0
      %v6170 = vadd.f32 0.0, %v6169
      %v6171 = vpop.f32.mrb[0].mxu0
      %6172 = vmatprep.mubr.bf16.mxu0 0
      %6173 = vmatmul.mubr.bf16.gmra.mrb[0].mxu0 %v6112
      %v6174 = vpop.f32.mrb[0].mxu0
      %v6175 = vadd.f32 0.0, %v6174
      %v6176 = vpop.f32.mrb[0].mxu0
      %v6177 = vpop.f32.mrb[0].mxu0
      %v6178 = vadd.f32 0.0, %v6177
      %v6179 = vpop.f32.mrb[0].mxu0
      %6180 = vmatprep.mubr.bf16.mxu0 0
      %6181 = vmatmul.mubr.bf16.gmra.mrb[0].mxu0 %v6115
      %v6182 = vpop.f32.mrb[0].mxu0
      %v6183 = vadd.f32 0.0, %v6182
      %v6184 = vpop.f32.mrb[0].mxu0
      %v6185 = vpop.f32.mrb[0].mxu0
      %v6186 = vadd.f32 0.0, %v6185
      %v6187 = vpop.f32.mrb[0].mxu0
      %6188 = vmatprep.mubr.bf16.mxu0 0
      %6189 = vmatmul.mubr.bf16.gmra.mrb[0].mxu0 %v6118
      %v6190 = vpop.f32.mrb[0].mxu0
      %v6191 = vadd.f32 0.0, %v6190
      %v6192 = vpop.f32.mrb[0].mxu0
      %v6193 = vpop.f32.mrb[0].mxu0
      %v6194 = vadd.f32 0.0, %v6193
      %v6195 = vpop.f32.mrb[0].mxu0
      %6196 = vmatprep.mubr.bf16.mxu0 0
      %6197 = vmatmul.mubr.bf16.gmra.mrb[0].mxu0 %v6121
      %v6198 = vpop.f32.mrb[0].mxu0
      %v6199 = vadd.f32 0.0, %v6198
      %v6200 = vpop.f32.mrb[0].mxu0
      %v6201 = vpop.f32.mrb[0].mxu0
      %v6202 = vadd.f32 0.0, %v6201
      %v6203 = vpop.f32.mrb[0].mxu0
      %6204 = vmatprep.mubr.bf16.mxu0 0
      %6205 = vmatmul.mubr.bf16.gmra.mrb[0].mxu0 %v6124
      %v6206 = vpop.f32.mrb[0].mxu0
      %v6207 = vadd.f32 0.0, %v6206
      %v6208 = vpop.f32.mrb[0].mxu0
      %v6209 = vpop.f32.mrb[0].mxu0
      %v6210 = vadd.f32 0.0, %v6209
      %v6211 = vpop.f32.mrb[0].mxu0
      %6212 = vmatprep.mubr.bf16.mxu0 0
      %6213 = vmatmul.mubr.bf16.gmra.mrb[0].mxu0 %v6127
      %v6214 = vpop.f32.mrb[0].mxu0
      %v6215 = vadd.f32 0.0, %v6214
      %v6216 = vpop.f32.mrb[0].mxu0
      %v6217 = vpop.f32.mrb[0].mxu0
      %v6218 = vpop.f32.mrb[0].mxu0
      %6219 = vdwg.mxu0
      %v6220 = vadd.f32 %v5284, %v6167
      %v6221 = vadd.f32 %v5285, %v6170
      %v6222 = vadd.f32 %v5286, %v6175
      %v6223 = vadd.f32 %v5287, %v6178
      %v6224 = vadd.f32 %v5288, %v6183
      %v6225 = vadd.f32 %v5289, %v6186
      %v6226 = vadd.f32 %v5290, %v6191
      %v6227 = vadd.f32 %v5291, %v6194
      %v6228 = vadd.f32 %v5292, %v6199
      %v6229 = vadd.f32 %v5293, %v6202
      %v6230 = vadd.f32 %v5294, %v6207
      %v6231 = vadd.f32 %v5295, %v6210
      %v6232 = vadd.f32 %v5296, %v6215
      %s6233 = scalar_lea.vmem %s219, 16
      %v6234 = vld [vmem:[%s6233] sm:$0xf]
      %v6235 = vld [vmem:[%s6233 + $0x4] sm:$0x1]
      %v6236 = vld [vmem:[%s6233 + $0x8] sm:$0xf]
      %v6237 = vld [vmem:[%s6233 + $0xc] sm:$0x1]
      %v6238 = vld [vmem:[%s6233 + $0x10] sm:$0xf]
      %v6239 = vld [vmem:[%s6233 + $0x14] sm:$0x1]
      %v6240 = vld [vmem:[%s6233 + $0x18] sm:$0xf]
      %v6241 = vld [vmem:[%s6233 + $0x1c] sm:$0x1]
      %v6242 = vld [vmem:[%s6233 + $0x20] sm:$0xf]
      %v6243 = vld [vmem:[%s6233 + $0x24] sm:$0x1]
      %v6244 = vld [vmem:[%s6233 + $0x28] sm:$0xf]
      %v6245 = vld [vmem:[%s6233 + $0x2c] sm:$0x1]
      %v6246 = vld [vmem:[%s6233 + $0x30] sm:$0xf]
      %v6247 = vld [vmem:[%s6233 + $0x34] sm:$0x1]
      %v6248 = vld [vmem:[%s6233 + $0x38] sm:$0xf]
      %v6249 = vld [vmem:[%s6233 + $0x3c] sm:$0x1]
      %v6250 = vld [vmem:[%s6233 + $0x40] sm:$0xf]
      %v6251 = vld [vmem:[%s6233 + $0x44] sm:$0x1]
      %v6252 = vld [vmem:[%s6233 + $0x48] sm:$0xf]
      %v6253 = vld [vmem:[%s6233 + $0x4c] sm:$0x1]
      %v6275 = vunpack.c.l.s4 1966171168
      %v6276 = vunpack.c.0.s8 %v6275
      %v6277 = vlaneseq
      %v6278 = vshrl.u32 %v6277, 7
      %v6279 = vsub.s32 %v6276, %v6278
      %v6280 = vrot.slane %v6234, %v6279
      %v6281 = vcombine.high %v6280, %v6280
      %v6283 = vunpack.c.l.s4 1966171168
      %v6284 = vunpack.c.0.s8 %v6283
      %v6285 = vlaneseq
      %v6286 = vshrl.u32 %v6285, 7
      %v6287 = vsub.s32 %v6284, %v6286
      %v6288 = vrot.slane %v6280, %v6287
      %v6290 = vunpack.c.l.s4 1966171168
      %v6291 = vunpack.c.0.s8 %v6290
      %v6292 = vlaneseq
      %v6293 = vshrl.u32 %v6292, 7
      %v6294 = vsub.s32 %v6291, %v6293
      %v6295 = vrot.slane %v6281, %v6294
      %v6296 = vcombine.high %v6288, %v6288
      %v6297 = vcombine.high %v6295, %v6295
      %v6299 = vunpack.c.l.s4 1966171168
      %v6300 = vunpack.c.0.s8 %v6299
      %v6301 = vlaneseq
      %v6302 = vshrl.u32 %v6301, 7
      %v6303 = vsub.s32 %v6300, %v6302
      %v6304 = vrot.slane %v6235, %v6303
      %v6306 = vunpack.c.l.s4 1966171168
      %v6307 = vunpack.c.0.s8 %v6306
      %v6308 = vlaneseq
      %v6309 = vshrl.u32 %v6308, 7
      %v6310 = vsub.s32 %v6307, %v6309
      %v6311 = vrot.slane %v6304, %v6310
      %v6313 = vunpack.c.l.s4 1966171168
      %v6314 = vunpack.c.0.s8 %v6313
      %v6315 = vlaneseq
      %v6316 = vshrl.u32 %v6315, 7
      %v6317 = vsub.s32 %v6314, %v6316
      %v6318 = vrot.slane %v6236, %v6317
      %v6319 = vcombine.high %v6318, %v6318
      %v6321 = vunpack.c.l.s4 1966171168
      %v6322 = vunpack.c.0.s8 %v6321
      %v6323 = vlaneseq
      %v6324 = vshrl.u32 %v6323, 7
      %v6325 = vsub.s32 %v6322, %v6324
      %v6326 = vrot.slane %v6318, %v6325
      %v6328 = vunpack.c.l.s4 1966171168
      %v6329 = vunpack.c.0.s8 %v6328
      %v6330 = vlaneseq
      %v6331 = vshrl.u32 %v6330, 7
      %v6332 = vsub.s32 %v6329, %v6331
      %v6333 = vrot.slane %v6319, %v6332
      %v6334 = vcombine.high %v6326, %v6326
      %v6335 = vcombine.high %v6333, %v6333
      %v6337 = vunpack.c.l.s4 1966171168
      %v6338 = vunpack.c.0.s8 %v6337
      %v6339 = vlaneseq
      %v6340 = vshrl.u32 %v6339, 7
      %v6341 = vsub.s32 %v6338, %v6340
      %v6342 = vrot.slane %v6237, %v6341
      %v6344 = vunpack.c.l.s4 1966171168
      %v6345 = vunpack.c.0.s8 %v6344
      %v6346 = vlaneseq
      %v6347 = vshrl.u32 %v6346, 7
      %v6348 = vsub.s32 %v6345, %v6347
      %v6349 = vrot.slane %v6342, %v6348
      %v6351 = vunpack.c.l.s4 1966171168
      %v6352 = vunpack.c.0.s8 %v6351
      %v6353 = vlaneseq
      %v6354 = vshrl.u32 %v6353, 7
      %v6355 = vsub.s32 %v6352, %v6354
      %v6356 = vrot.slane %v6238, %v6355
      %v6357 = vcombine.high %v6356, %v6356
      %v6359 = vunpack.c.l.s4 1966171168
      %v6360 = vunpack.c.0.s8 %v6359
      %v6361 = vlaneseq
      %v6362 = vshrl.u32 %v6361, 7
      %v6363 = vsub.s32 %v6360, %v6362
      %v6364 = vrot.slane %v6356, %v6363
      %v6366 = vunpack.c.l.s4 1966171168
      %v6367 = vunpack.c.0.s8 %v6366
      %v6368 = vlaneseq
      %v6369 = vshrl.u32 %v6368, 7
      %v6370 = vsub.s32 %v6367, %v6369
      %v6371 = vrot.slane %v6357, %v6370
      %v6372 = vcombine.high %v6364, %v6364
      %v6373 = vcombine.high %v6371, %v6371
      %v6375 = vunpack.c.l.s4 1966171168
      %v6376 = vunpack.c.0.s8 %v6375
      %v6377 = vlaneseq
      %v6378 = vshrl.u32 %v6377, 7
      %v6379 = vsub.s32 %v6376, %v6378
      %v6380 = vrot.slane %v6239, %v6379
      %v6382 = vunpack.c.l.s4 1966171168
      %v6383 = vunpack.c.0.s8 %v6382
      %v6384 = vlaneseq
      %v6385 = vshrl.u32 %v6384, 7
      %v6386 = vsub.s32 %v6383, %v6385
      %v6387 = vrot.slane %v6380, %v6386
      %v6389 = vunpack.c.l.s4 1966171168
      %v6390 = vunpack.c.0.s8 %v6389
      %v6391 = vlaneseq
      %v6392 = vshrl.u32 %v6391, 7
      %v6393 = vsub.s32 %v6390, %v6392
      %v6394 = vrot.slane %v6240, %v6393
      %v6395 = vcombine.high %v6394, %v6394
      %v6397 = vunpack.c.l.s4 1966171168
      %v6398 = vunpack.c.0.s8 %v6397
      %v6399 = vlaneseq
      %v6400 = vshrl.u32 %v6399, 7
      %v6401 = vsub.s32 %v6398, %v6400
      %v6402 = vrot.slane %v6394, %v6401
      %v6404 = vunpack.c.l.s4 1966171168
      %v6405 = vunpack.c.0.s8 %v6404
      %v6406 = vlaneseq
      %v6407 = vshrl.u32 %v6406, 7
      %v6408 = vsub.s32 %v6405, %v6407
      %v6409 = vrot.slane %v6395, %v6408
      %v6410 = vcombine.high %v6402, %v6402
      %v6411 = vcombine.high %v6409, %v6409
      %v6413 = vunpack.c.l.s4 1966171168
      %v6414 = vunpack.c.0.s8 %v6413
      %v6415 = vlaneseq
      %v6416 = vshrl.u32 %v6415, 7
      %v6417 = vsub.s32 %v6414, %v6416
      %v6418 = vrot.slane %v6241, %v6417
      %v6420 = vunpack.c.l.s4 1966171168
      %v6421 = vunpack.c.0.s8 %v6420
      %v6422 = vlaneseq
      %v6423 = vshrl.u32 %v6422, 7
      %v6424 = vsub.s32 %v6421, %v6423
      %v6425 = vrot.slane %v6418, %v6424
      %v6427 = vunpack.c.l.s4 1966171168
      %v6428 = vunpack.c.0.s8 %v6427
      %v6429 = vlaneseq
      %v6430 = vshrl.u32 %v6429, 7
      %v6431 = vsub.s32 %v6428, %v6430
      %v6432 = vrot.slane %v6242, %v6431
      %v6433 = vcombine.high %v6432, %v6432
      %v6435 = vunpack.c.l.s4 1966171168
      %v6436 = vunpack.c.0.s8 %v6435
      %v6437 = vlaneseq
      %v6438 = vshrl.u32 %v6437, 7
      %v6439 = vsub.s32 %v6436, %v6438
      %v6440 = vrot.slane %v6432, %v6439
      %v6442 = vunpack.c.l.s4 1966171168
      %v6443 = vunpack.c.0.s8 %v6442
      %v6444 = vlaneseq
      %v6445 = vshrl.u32 %v6444, 7
      %v6446 = vsub.s32 %v6443, %v6445
      %v6447 = vrot.slane %v6433, %v6446
      %v6448 = vcombine.high %v6440, %v6440
      %v6449 = vcombine.high %v6447, %v6447
      %v6451 = vunpack.c.l.s4 1966171168
      %v6452 = vunpack.c.0.s8 %v6451
      %v6453 = vlaneseq
      %v6454 = vshrl.u32 %v6453, 7
      %v6455 = vsub.s32 %v6452, %v6454
      %v6456 = vrot.slane %v6243, %v6455
      %v6458 = vunpack.c.l.s4 1966171168
      %v6459 = vunpack.c.0.s8 %v6458
      %v6460 = vlaneseq
      %v6461 = vshrl.u32 %v6460, 7
      %v6462 = vsub.s32 %v6459, %v6461
      %v6463 = vrot.slane %v6456, %v6462
      %v6465 = vunpack.c.l.s4 1966171168
      %v6466 = vunpack.c.0.s8 %v6465
      %v6467 = vlaneseq
      %v6468 = vshrl.u32 %v6467, 7
      %v6469 = vsub.s32 %v6466, %v6468
      %v6470 = vrot.slane %v6244, %v6469
      %v6471 = vcombine.high %v6470, %v6470
      %v6473 = vunpack.c.l.s4 1966171168
      %v6474 = vunpack.c.0.s8 %v6473
      %v6475 = vlaneseq
      %v6476 = vshrl.u32 %v6475, 7
      %v6477 = vsub.s32 %v6474, %v6476
      %v6478 = vrot.slane %v6470, %v6477
      %v6480 = vunpack.c.l.s4 1966171168
      %v6481 = vunpack.c.0.s8 %v6480
      %v6482 = vlaneseq
      %v6483 = vshrl.u32 %v6482, 7
      %v6484 = vsub.s32 %v6481, %v6483
      %v6485 = vrot.slane %v6471, %v6484
      %v6486 = vcombine.high %v6478, %v6478
      %v6487 = vcombine.high %v6485, %v6485
      %v6489 = vunpack.c.l.s4 1966171168
      %v6490 = vunpack.c.0.s8 %v6489
      %v6491 = vlaneseq
      %v6492 = vshrl.u32 %v6491, 7
      %v6493 = vsub.s32 %v6490, %v6492
      %v6494 = vrot.slane %v6245, %v6493
      %v6496 = vunpack.c.l.s4 1966171168
      %v6497 = vunpack.c.0.s8 %v6496
      %v6498 = vlaneseq
      %v6499 = vshrl.u32 %v6498, 7
      %v6500 = vsub.s32 %v6497, %v6499
      %v6501 = vrot.slane %v6494, %v6500
      %v6503 = vunpack.c.l.s4 1966171168
      %v6504 = vunpack.c.0.s8 %v6503
      %v6505 = vlaneseq
      %v6506 = vshrl.u32 %v6505, 7
      %v6507 = vsub.s32 %v6504, %v6506
      %v6508 = vrot.slane %v6246, %v6507
      %v6509 = vcombine.high %v6508, %v6508
      %v6511 = vunpack.c.l.s4 1966171168
      %v6512 = vunpack.c.0.s8 %v6511
      %v6513 = vlaneseq
      %v6514 = vshrl.u32 %v6513, 7
      %v6515 = vsub.s32 %v6512, %v6514
      %v6516 = vrot.slane %v6508, %v6515
      %v6518 = vunpack.c.l.s4 1966171168
      %v6519 = vunpack.c.0.s8 %v6518
      %v6520 = vlaneseq
      %v6521 = vshrl.u32 %v6520, 7
      %v6522 = vsub.s32 %v6519, %v6521
      %v6523 = vrot.slane %v6509, %v6522
      %v6524 = vcombine.high %v6516, %v6516
      %v6525 = vcombine.high %v6523, %v6523
      %v6527 = vunpack.c.l.s4 1966171168
      %v6528 = vunpack.c.0.s8 %v6527
      %v6529 = vlaneseq
      %v6530 = vshrl.u32 %v6529, 7
      %v6531 = vsub.s32 %v6528, %v6530
      %v6532 = vrot.slane %v6247, %v6531
      %v6534 = vunpack.c.l.s4 1966171168
      %v6535 = vunpack.c.0.s8 %v6534
      %v6536 = vlaneseq
      %v6537 = vshrl.u32 %v6536, 7
      %v6538 = vsub.s32 %v6535, %v6537
      %v6539 = vrot.slane %v6532, %v6538
      %v6541 = vunpack.c.l.s4 1966171168
      %v6542 = vunpack.c.0.s8 %v6541
      %v6543 = vlaneseq
      %v6544 = vshrl.u32 %v6543, 7
      %v6545 = vsub.s32 %v6542, %v6544
      %v6546 = vrot.slane %v6248, %v6545
      %v6547 = vcombine.high %v6546, %v6546
      %v6549 = vunpack.c.l.s4 1966171168
      %v6550 = vunpack.c.0.s8 %v6549
      %v6551 = vlaneseq
      %v6552 = vshrl.u32 %v6551, 7
      %v6553 = vsub.s32 %v6550, %v6552
      %v6554 = vrot.slane %v6546, %v6553
      %v6556 = vunpack.c.l.s4 1966171168
      %v6557 = vunpack.c.0.s8 %v6556
      %v6558 = vlaneseq
      %v6559 = vshrl.u32 %v6558, 7
      %v6560 = vsub.s32 %v6557, %v6559
      %v6561 = vrot.slane %v6547, %v6560
      %v6562 = vcombine.high %v6554, %v6554
      %v6563 = vcombine.high %v6561, %v6561
      %v6565 = vunpack.c.l.s4 1966171168
      %v6566 = vunpack.c.0.s8 %v6565
      %v6567 = vlaneseq
      %v6568 = vshrl.u32 %v6567, 7
      %v6569 = vsub.s32 %v6566, %v6568
      %v6570 = vrot.slane %v6249, %v6569
      %v6572 = vunpack.c.l.s4 1966171168
      %v6573 = vunpack.c.0.s8 %v6572
      %v6574 = vlaneseq
      %v6575 = vshrl.u32 %v6574, 7
      %v6576 = vsub.s32 %v6573, %v6575
      %v6577 = vrot.slane %v6570, %v6576
      %v6579 = vunpack.c.l.s4 1966171168
      %v6580 = vunpack.c.0.s8 %v6579
      %v6581 = vlaneseq
      %v6582 = vshrl.u32 %v6581, 7
      %v6583 = vsub.s32 %v6580, %v6582
      %v6584 = vrot.slane %v6250, %v6583
      %v6585 = vcombine.high %v6584, %v6584
      %v6587 = vunpack.c.l.s4 1966171168
      %v6588 = vunpack.c.0.s8 %v6587
      %v6589 = vlaneseq
      %v6590 = vshrl.u32 %v6589, 7
      %v6591 = vsub.s32 %v6588, %v6590
      %v6592 = vrot.slane %v6584, %v6591
      %v6594 = vunpack.c.l.s4 1966171168
      %v6595 = vunpack.c.0.s8 %v6594
      %v6596 = vlaneseq
      %v6597 = vshrl.u32 %v6596, 7
      %v6598 = vsub.s32 %v6595, %v6597
      %v6599 = vrot.slane %v6585, %v6598
      %v6600 = vcombine.high %v6592, %v6592
      %v6601 = vcombine.high %v6599, %v6599
      %v6603 = vunpack.c.l.s4 1966171168
      %v6604 = vunpack.c.0.s8 %v6603
      %v6605 = vlaneseq
      %v6606 = vshrl.u32 %v6605, 7
      %v6607 = vsub.s32 %v6604, %v6606
      %v6608 = vrot.slane %v6251, %v6607
      %v6610 = vunpack.c.l.s4 1966171168
      %v6611 = vunpack.c.0.s8 %v6610
      %v6612 = vlaneseq
      %v6613 = vshrl.u32 %v6612, 7
      %v6614 = vsub.s32 %v6611, %v6613
      %v6615 = vrot.slane %v6608, %v6614
      %v6617 = vunpack.c.l.s4 1966171168
      %v6618 = vunpack.c.0.s8 %v6617
      %v6619 = vlaneseq
      %v6620 = vshrl.u32 %v6619, 7
      %v6621 = vsub.s32 %v6618, %v6620
      %v6622 = vrot.slane %v6252, %v6621
      %v6623 = vcombine.high %v6622, %v6622
      %v6625 = vunpack.c.l.s4 1966171168
      %v6626 = vunpack.c.0.s8 %v6625
      %v6627 = vlaneseq
      %v6628 = vshrl.u32 %v6627, 7
      %v6629 = vsub.s32 %v6626, %v6628
      %v6630 = vrot.slane %v6622, %v6629
      %v6632 = vunpack.c.l.s4 1966171168
      %v6633 = vunpack.c.0.s8 %v6632
      %v6634 = vlaneseq
      %v6635 = vshrl.u32 %v6634, 7
      %v6636 = vsub.s32 %v6633, %v6635
      %v6637 = vrot.slane %v6623, %v6636
      %v6638 = vcombine.high %v6630, %v6630
      %v6639 = vcombine.high %v6637, %v6637
      %v6641 = vunpack.c.l.s4 1966171168
      %v6642 = vunpack.c.0.s8 %v6641
      %v6643 = vlaneseq
      %v6644 = vshrl.u32 %v6643, 7
      %v6645 = vsub.s32 %v6642, %v6644
      %v6646 = vrot.slane %v6253, %v6645
      %v6648 = vunpack.c.l.s4 1966171168
      %v6649 = vunpack.c.0.s8 %v6648
      %v6650 = vlaneseq
      %v6651 = vshrl.u32 %v6650, 7
      %v6652 = vsub.s32 %v6649, %v6651
      %v6653 = vrot.slane %v6646, %v6652
      %s6654 = scalar_lea.vmem %s1, 24
      %v6655 = vld [vmem:[%s6654] sm:$0xf]
      %v6656 = vcombine.low %v6288, %v6295
      %v6657 = vcombine.low %v6296, %v6297
      %v6658 = vcombine.low %v6311, %v6326
      %v6659 = vcombine.low %v6333, %v6334
      %v6661 = vunpack.c.l.s4 1966171168
      %v6662 = vunpack.c.0.s8 %v6661
      %v6663 = vlaneseq
      %v6664 = vshrl.u32 %v6663, 7
      %v6665 = vsub.s32 %v6662, %v6664
      %v6666 = vrot.slane %v6656, %v6665
      %v6668 = vunpack.c.l.s4 1966171168
      %v6669 = vunpack.c.0.s8 %v6668
      %v6670 = vlaneseq
      %v6671 = vshrl.u32 %v6670, 7
      %v6672 = vsub.s32 %v6669, %v6671
      %v6673 = vrot.slane %v6657, %v6672
      %v6675 = vunpack.c.l.s4 1966171168
      %v6676 = vunpack.c.0.s8 %v6675
      %v6677 = vlaneseq
      %v6678 = vshrl.u32 %v6677, 7
      %v6679 = vsub.s32 %v6676, %v6678
      %v6680 = vrot.slane %v6658, %v6679
      %v6682 = vunpack.c.l.s4 1966171168
      %v6683 = vunpack.c.0.s8 %v6682
      %v6684 = vlaneseq
      %v6685 = vshrl.u32 %v6684, 7
      %v6686 = vsub.s32 %v6683, %v6685
      %v6687 = vrot.slane %v6659, %v6686
      %v6688 = vcombine.low %v6666, %v6673
      %v6689 = vcombine.low %v6680, %v6687
      %v6691 = vunpack.c.l.s4 1966171168
      %v6692 = vunpack.c.0.s8 %v6691
      %v6693 = vlaneseq
      %v6694 = vshrl.u32 %v6693, 7
      %v6695 = vsub.s32 %v6692, %v6694
      %v6696 = vrot.slane %v6688, %v6695
      %v6698 = vunpack.c.l.s4 1966171168
      %v6699 = vunpack.c.0.s8 %v6698
      %v6700 = vlaneseq
      %v6701 = vshrl.u32 %v6700, 7
      %v6702 = vsub.s32 %v6699, %v6701
      %v6703 = vrot.slane %v6689, %v6702
      %v6704 = vcombine.low %v6696, %v6703
      %v6705 = vcombine.low %v6335, %v6349
      %v6706 = vcombine.low %v6364, %v6371
      %v6707 = vcombine.low %v6372, %v6373
      %v6708 = vcombine.low %v6387, %v6402
      %v6710 = vunpack.c.l.s4 1966171168
      %v6711 = vunpack.c.0.s8 %v6710
      %v6712 = vlaneseq
      %v6713 = vshrl.u32 %v6712, 7
      %v6714 = vsub.s32 %v6711, %v6713
      %v6715 = vrot.slane %v6705, %v6714
      %v6717 = vunpack.c.l.s4 1966171168
      %v6718 = vunpack.c.0.s8 %v6717
      %v6719 = vlaneseq
      %v6720 = vshrl.u32 %v6719, 7
      %v6721 = vsub.s32 %v6718, %v6720
      %v6722 = vrot.slane %v6706, %v6721
      %v6724 = vunpack.c.l.s4 1966171168
      %v6725 = vunpack.c.0.s8 %v6724
      %v6726 = vlaneseq
      %v6727 = vshrl.u32 %v6726, 7
      %v6728 = vsub.s32 %v6725, %v6727
      %v6729 = vrot.slane %v6707, %v6728
      %v6731 = vunpack.c.l.s4 1966171168
      %v6732 = vunpack.c.0.s8 %v6731
      %v6733 = vlaneseq
      %v6734 = vshrl.u32 %v6733, 7
      %v6735 = vsub.s32 %v6732, %v6734
      %v6736 = vrot.slane %v6708, %v6735
      %v6737 = vcombine.low %v6715, %v6722
      %v6738 = vcombine.low %v6729, %v6736
      %v6740 = vunpack.c.l.s4 1966171168
      %v6741 = vunpack.c.0.s8 %v6740
      %v6742 = vlaneseq
      %v6743 = vshrl.u32 %v6742, 7
      %v6744 = vsub.s32 %v6741, %v6743
      %v6745 = vrot.slane %v6737, %v6744
      %v6747 = vunpack.c.l.s4 1966171168
      %v6748 = vunpack.c.0.s8 %v6747
      %v6749 = vlaneseq
      %v6750 = vshrl.u32 %v6749, 7
      %v6751 = vsub.s32 %v6748, %v6750
      %v6752 = vrot.slane %v6738, %v6751
      %v6753 = vcombine.low %v6745, %v6752
      %v6754 = vcombine.low %v6409, %v6410
      %v6755 = vcombine.low %v6411, %v6425
      %v6756 = vcombine.low %v6440, %v6447
      %v6757 = vcombine.low %v6448, %v6449
      %v6759 = vunpack.c.l.s4 1966171168
      %v6760 = vunpack.c.0.s8 %v6759
      %v6761 = vlaneseq
      %v6762 = vshrl.u32 %v6761, 7
      %v6763 = vsub.s32 %v6760, %v6762
      %v6764 = vrot.slane %v6754, %v6763
      %v6766 = vunpack.c.l.s4 1966171168
      %v6767 = vunpack.c.0.s8 %v6766
      %v6768 = vlaneseq
      %v6769 = vshrl.u32 %v6768, 7
      %v6770 = vsub.s32 %v6767, %v6769
      %v6771 = vrot.slane %v6755, %v6770
      %v6773 = vunpack.c.l.s4 1966171168
      %v6774 = vunpack.c.0.s8 %v6773
      %v6775 = vlaneseq
      %v6776 = vshrl.u32 %v6775, 7
      %v6777 = vsub.s32 %v6774, %v6776
      %v6778 = vrot.slane %v6756, %v6777
      %v6780 = vunpack.c.l.s4 1966171168
      %v6781 = vunpack.c.0.s8 %v6780
      %v6782 = vlaneseq
      %v6783 = vshrl.u32 %v6782, 7
      %v6784 = vsub.s32 %v6781, %v6783
      %v6785 = vrot.slane %v6757, %v6784
      %v6786 = vcombine.low %v6764, %v6771
      %v6787 = vcombine.low %v6778, %v6785
      %v6789 = vunpack.c.l.s4 1966171168
      %v6790 = vunpack.c.0.s8 %v6789
      %v6791 = vlaneseq
      %v6792 = vshrl.u32 %v6791, 7
      %v6793 = vsub.s32 %v6790, %v6792
      %v6794 = vrot.slane %v6786, %v6793
      %v6796 = vunpack.c.l.s4 1966171168
      %v6797 = vunpack.c.0.s8 %v6796
      %v6798 = vlaneseq
      %v6799 = vshrl.u32 %v6798, 7
      %v6800 = vsub.s32 %v6797, %v6799
      %v6801 = vrot.slane %v6787, %v6800
      %v6802 = vcombine.low %v6794, %v6801
      %v6803 = vcombine.low %v6463, %v6478
      %v6804 = vcombine.low %v6485, %v6486
      %v6805 = vcombine.low %v6487, %v6501
      %v6806 = vcombine.low %v6516, %v6523
      %v6808 = vunpack.c.l.s4 1966171168
      %v6809 = vunpack.c.0.s8 %v6808
      %v6810 = vlaneseq
      %v6811 = vshrl.u32 %v6810, 7
      %v6812 = vsub.s32 %v6809, %v6811
      %v6813 = vrot.slane %v6803, %v6812
      %v6815 = vunpack.c.l.s4 1966171168
      %v6816 = vunpack.c.0.s8 %v6815
      %v6817 = vlaneseq
      %v6818 = vshrl.u32 %v6817, 7
      %v6819 = vsub.s32 %v6816, %v6818
      %v6820 = vrot.slane %v6804, %v6819
      %v6822 = vunpack.c.l.s4 1966171168
      %v6823 = vunpack.c.0.s8 %v6822
      %v6824 = vlaneseq
      %v6825 = vshrl.u32 %v6824, 7
      %v6826 = vsub.s32 %v6823, %v6825
      %v6827 = vrot.slane %v6805, %v6826
      %v6829 = vunpack.c.l.s4 1966171168
      %v6830 = vunpack.c.0.s8 %v6829
      %v6831 = vlaneseq
      %v6832 = vshrl.u32 %v6831, 7
      %v6833 = vsub.s32 %v6830, %v6832
      %v6834 = vrot.slane %v6806, %v6833
      %v6835 = vcombine.low %v6813, %v6820
      %v6836 = vcombine.low %v6827, %v6834
      %v6838 = vunpack.c.l.s4 1966171168
      %v6839 = vunpack.c.0.s8 %v6838
      %v6840 = vlaneseq
      %v6841 = vshrl.u32 %v6840, 7
      %v6842 = vsub.s32 %v6839, %v6841
      %v6843 = vrot.slane %v6835, %v6842
      %v6845 = vunpack.c.l.s4 1966171168
      %v6846 = vunpack.c.0.s8 %v6845
      %v6847 = vlaneseq
      %v6848 = vshrl.u32 %v6847, 7
      %v6849 = vsub.s32 %v6846, %v6848
      %v6850 = vrot.slane %v6836, %v6849
      %v6851 = vcombine.low %v6843, %v6850
      %v6852 = vcombine.low %v6524, %v6525
      %v6853 = vcombine.low %v6539, %v6554
      %v6854 = vcombine.low %v6561, %v6562
      %v6855 = vcombine.low %v6563, %v6577
      %v6857 = vunpack.c.l.s4 1966171168
      %v6858 = vunpack.c.0.s8 %v6857
      %v6859 = vlaneseq
      %v6860 = vshrl.u32 %v6859, 7
      %v6861 = vsub.s32 %v6858, %v6860
      %v6862 = vrot.slane %v6852, %v6861
      %v6864 = vunpack.c.l.s4 1966171168
      %v6865 = vunpack.c.0.s8 %v6864
      %v6866 = vlaneseq
      %v6867 = vshrl.u32 %v6866, 7
      %v6868 = vsub.s32 %v6865, %v6867
      %v6869 = vrot.slane %v6853, %v6868
      %v6871 = vunpack.c.l.s4 1966171168
      %v6872 = vunpack.c.0.s8 %v6871
      %v6873 = vlaneseq
      %v6874 = vshrl.u32 %v6873, 7
      %v6875 = vsub.s32 %v6872, %v6874
      %v6876 = vrot.slane %v6854, %v6875
      %v6878 = vunpack.c.l.s4 1966171168
      %v6879 = vunpack.c.0.s8 %v6878
      %v6880 = vlaneseq
      %v6881 = vshrl.u32 %v6880, 7
      %v6882 = vsub.s32 %v6879, %v6881
      %v6883 = vrot.slane %v6855, %v6882
      %v6884 = vcombine.low %v6862, %v6869
      %v6885 = vcombine.low %v6876, %v6883
      %v6887 = vunpack.c.l.s4 1966171168
      %v6888 = vunpack.c.0.s8 %v6887
      %v6889 = vlaneseq
      %v6890 = vshrl.u32 %v6889, 7
      %v6891 = vsub.s32 %v6888, %v6890
      %v6892 = vrot.slane %v6884, %v6891
      %v6894 = vunpack.c.l.s4 1966171168
      %v6895 = vunpack.c.0.s8 %v6894
      %v6896 = vlaneseq
      %v6897 = vshrl.u32 %v6896, 7
      %v6898 = vsub.s32 %v6895, %v6897
      %v6899 = vrot.slane %v6885, %v6898
      %v6900 = vcombine.low %v6892, %v6899
      %v6901 = vcombine.low %v6592, %v6599
      %v6902 = vcombine.low %v6600, %v6601
      %v6903 = vcombine.low %v6615, %v6630
      %v6904 = vcombine.low %v6637, %v6638
      %v6906 = vunpack.c.l.s4 1966171168
      %v6907 = vunpack.c.0.s8 %v6906
      %v6908 = vlaneseq
      %v6909 = vshrl.u32 %v6908, 7
      %v6910 = vsub.s32 %v6907, %v6909
      %v6911 = vrot.slane %v6901, %v6910
      %v6913 = vunpack.c.l.s4 1966171168
      %v6914 = vunpack.c.0.s8 %v6913
      %v6915 = vlaneseq
      %v6916 = vshrl.u32 %v6915, 7
      %v6917 = vsub.s32 %v6914, %v6916
      %v6918 = vrot.slane %v6902, %v6917
      %v6920 = vunpack.c.l.s4 1966171168
      %v6921 = vunpack.c.0.s8 %v6920
      %v6922 = vlaneseq
      %v6923 = vshrl.u32 %v6922, 7
      %v6924 = vsub.s32 %v6921, %v6923
      %v6925 = vrot.slane %v6903, %v6924
      %v6927 = vunpack.c.l.s4 1966171168
      %v6928 = vunpack.c.0.s8 %v6927
      %v6929 = vlaneseq
      %v6930 = vshrl.u32 %v6929, 7
      %v6931 = vsub.s32 %v6928, %v6930
      %v6932 = vrot.slane %v6904, %v6931
      %v6933 = vcombine.low %v6911, %v6918
      %v6934 = vcombine.low %v6925, %v6932
      %v6936 = vunpack.c.l.s4 1966171168
      %v6937 = vunpack.c.0.s8 %v6936
      %v6938 = vlaneseq
      %v6939 = vshrl.u32 %v6938, 7
      %v6940 = vsub.s32 %v6937, %v6939
      %v6941 = vrot.slane %v6933, %v6940
      %v6943 = vunpack.c.l.s4 1966171168
      %v6944 = vunpack.c.0.s8 %v6943
      %v6945 = vlaneseq
      %v6946 = vshrl.u32 %v6945, 7
      %v6947 = vsub.s32 %v6944, %v6946
      %v6948 = vrot.slane %v6934, %v6947
      %v6949 = vcombine.low %v6941, %v6948
      %v6950 = vcombine.low %v6639, %v6653
      %v6952 = vunpack.c.l.s4 1966171168
      %v6953 = vunpack.c.0.s8 %v6952
      %v6954 = vlaneseq
      %v6955 = vshrl.u32 %v6954, 7
      %v6956 = vsub.s32 %v6953, %v6955
      %v6957 = vrot.slane %v6950, %v6956
      %v6959 = vunpack.c.l.s4 1966171168
      %v6960 = vunpack.c.0.s8 %v6959
      %v6961 = vlaneseq
      %v6962 = vshrl.u32 %v6961, 7
      %v6963 = vsub.s32 %v6960, %v6962
      %v6964 = vrot.slane %v6957, %v6963
      %v6966 = vsel %vm1623, %v6704, 0
      %v6969 = vsel %vm1623, %v6753, 0
      %v6972 = vsel %vm1623, %v6802, 0
      %v6975 = vsel %vm1623, %v6851, 0
      %v6978 = vsel %vm1623, %v6900, 0
      %v6981 = vsel %vm1623, %v6949, 0
      %v6984 = vsel %vm1623, %v6964, 0
      %v6987 = vsel %vm1645, %v6655, 0
      %6989 = vmatprep.subr.bf16.mxu0 0
      %6990 = vmatpush1.bf16.msra.mxu0 %v6987
      %6991 = vmatprep.subr.bf16.mxu0 0
      %6992 = vmatpush1.bf16.msra.mxu0 0
      %6993 = vmatprep.subr.bf16.mxu0 0
      %6994 = vmatpush1.bf16.msra.mxu0 0
      %6995 = vmatprep.subr.bf16.mxu0 0
      %6996 = vmatpush1.bf16.msra.mxu0 0
      %6997 = vmatprep.subr.bf16.mxu0 0
      %6998 = vmatpush1.bf16.msra.mxu0 0
      %6999 = vmatprep.subr.bf16.mxu0 0
      %7000 = vmatpush1.bf16.msra.mxu0 0
      %7001 = vmatprep.subr.bf16.mxu0 0
      %7002 = vmatpush1.bf16.msra.mxu0 0
      %7003 = vmatprep.subr.bf16.mxu0 0
      %7004 = vmatpush1.bf16.msra.mxu0 0
      %7005 = vmatprep.subr.bf16.mxu0 0
      %7006 = vmatpush1.bf16.msra.mxu0 0
      %7007 = vmatprep.subr.bf16.mxu0 0
      %7008 = vmatpush1.bf16.msra.mxu0 0
      %7009 = vmatprep.subr.bf16.mxu0 0
      %7010 = vmatpush1.bf16.msra.mxu0 0
      %7011 = vmatprep.subr.bf16.mxu0 0
      %7012 = vmatpush1.bf16.msra.mxu0 0
      %7013 = vmatprep.subr.bf16.mxu0 0
      %7014 = vmatpush1.bf16.msra.mxu0 0
      %7015 = vmatprep.subr.bf16.mxu0 0
      %7016 = vmatpush1.bf16.msra.mxu0 0
      %7017 = vmatprep.subr.bf16.mxu0 0
      %7018 = vmatpush1.bf16.msra.mxu0 0
      %7019 = vmatprep.subr.bf16.mxu0 0
      %7020 = vmatpush1.bf16.msra.mxu0 0
      %7021 = vmatprep.mubr.bf16.mxu0 0
      %7022 = vmatmul.mubr.bf16.gmra.mrb[0].mxu0 %v6966
      %v7023 = vpop.f32.mrb[0].mxu0
      %v7024 = vadd.f32 0.0, %v7023
      %v7025 = vpop.f32.mrb[0].mxu0
      %v7026 = vpop.f32.mrb[0].mxu0
      %v7027 = vadd.f32 0.0, %v7026
      %v7028 = vpop.f32.mrb[0].mxu0
      %7029 = vmatprep.mubr.bf16.mxu0 0
      %7030 = vmatmul.mubr.bf16.gmra.mrb[0].mxu0 %v6969
      %v7031 = vpop.f32.mrb[0].mxu0
      %v7032 = vadd.f32 0.0, %v7031
      %v7033 = vpop.f32.mrb[0].mxu0
      %v7034 = vpop.f32.mrb[0].mxu0
      %v7035 = vadd.f32 0.0, %v7034
      %v7036 = vpop.f32.mrb[0].mxu0
      %7037 = vmatprep.mubr.bf16.mxu0 0
      %7038 = vmatmul.mubr.bf16.gmra.mrb[0].mxu0 %v6972
      %v7039 = vpop.f32.mrb[0].mxu0
      %v7040 = vadd.f32 0.0, %v7039
      %v7041 = vpop.f32.mrb[0].mxu0
      %v7042 = vpop.f32.mrb[0].mxu0
      %v7043 = vadd.f32 0.0, %v7042
      %v7044 = vpop.f32.mrb[0].mxu0
      %7045 = vmatprep.mubr.bf16.mxu0 0
      %7046 = vmatmul.mubr.bf16.gmra.mrb[0].mxu0 %v6975
      %v7047 = vpop.f32.mrb[0].mxu0
      %v7048 = vadd.f32 0.0, %v7047
      %v7049 = vpop.f32.mrb[0].mxu0
      %v7050 = vpop.f32.mrb[0].mxu0
      %v7051 = vadd.f32 0.0, %v7050
      %v7052 = vpop.f32.mrb[0].mxu0
      %7053 = vmatprep.mubr.bf16.mxu0 0
      %7054 = vmatmul.mubr.bf16.gmra.mrb[0].mxu0 %v6978
      %v7055 = vpop.f32.mrb[0].mxu0
      %v7056 = vadd.f32 0.0, %v7055
      %v7057 = vpop.f32.mrb[0].mxu0
      %v7058 = vpop.f32.mrb[0].mxu0
      %v7059 = vadd.f32 0.0, %v7058
      %v7060 = vpop.f32.mrb[0].mxu0
      %7061 = vmatprep.mubr.bf16.mxu0 0
      %7062 = vmatmul.mubr.bf16.gmra.mrb[0].mxu0 %v6981
      %v7063 = vpop.f32.mrb[0].mxu0
      %v7064 = vadd.f32 0.0, %v7063
      %v7065 = vpop.f32.mrb[0].mxu0
      %v7066 = vpop.f32.mrb[0].mxu0
      %v7067 = vadd.f32 0.0, %v7066
      %v7068 = vpop.f32.mrb[0].mxu0
      %7069 = vmatprep.mubr.bf16.mxu0 0
      %7070 = vmatmul.mubr.bf16.gmra.mrb[0].mxu0 %v6984
      %v7071 = vpop.f32.mrb[0].mxu0
      %v7072 = vadd.f32 0.0, %v7071
      %v7073 = vpop.f32.mrb[0].mxu0
      %v7074 = vpop.f32.mrb[0].mxu0
      %v7075 = vpop.f32.mrb[0].mxu0
      %7076 = vdwg.mxu0
      %v7077 = vadd.f32 %v6220, %v7024
      %v7078 = vadd.f32 %v6221, %v7027
      %v7079 = vadd.f32 %v6222, %v7032
      %v7080 = vadd.f32 %v6223, %v7035
      %v7081 = vadd.f32 %v6224, %v7040
      %v7082 = vadd.f32 %v6225, %v7043
      %v7083 = vadd.f32 %v6226, %v7048
      %v7084 = vadd.f32 %v6227, %v7051
      %v7085 = vadd.f32 %v6228, %v7056
      %v7086 = vadd.f32 %v6229, %v7059
      %v7087 = vadd.f32 %v6230, %v7064
      %v7088 = vadd.f32 %v6231, %v7067
      %v7089 = vadd.f32 %v6232, %v7072
      %v7090 = vld [vmem:[%s6233] sm:$0xf]
      %v7091 = vld [vmem:[%s6233 + $0x4] sm:$0x3]
      %v7092 = vld [vmem:[%s6233 + $0x8] sm:$0xf]
      %v7093 = vld [vmem:[%s6233 + $0xc] sm:$0x3]
      %v7094 = vld [vmem:[%s6233 + $0x10] sm:$0xf]
      %v7095 = vld [vmem:[%s6233 + $0x14] sm:$0x3]
      %v7096 = vld [vmem:[%s6233 + $0x18] sm:$0xf]
      %v7097 = vld [vmem:[%s6233 + $0x1c] sm:$0x3]
      %v7098 = vld [vmem:[%s6233 + $0x20] sm:$0xf]
      %v7099 = vld [vmem:[%s6233 + $0x24] sm:$0x3]
      %v7100 = vld [vmem:[%s6233 + $0x28] sm:$0xf]
      %v7101 = vld [vmem:[%s6233 + $0x2c] sm:$0x3]
      %v7102 = vld [vmem:[%s6233 + $0x30] sm:$0xf]
      %v7103 = vld [vmem:[%s6233 + $0x34] sm:$0x3]
      %v7104 = vld [vmem:[%s6233 + $0x38] sm:$0xf]
      %v7105 = vld [vmem:[%s6233 + $0x3c] sm:$0x3]
      %v7106 = vld [vmem:[%s6233 + $0x40] sm:$0xf]
      %v7107 = vld [vmem:[%s6233 + $0x44] sm:$0x3]
      %v7108 = vld [vmem:[%s6233 + $0x48] sm:$0xf]
      %v7109 = vld [vmem:[%s6233 + $0x4c] sm:$0x3]
      %v7131 = vunpack.c.l.s4 1966171168
      %v7132 = vunpack.c.0.s8 %v7131
      %v7133 = vlaneseq
      %v7134 = vshrl.u32 %v7133, 7
      %v7135 = vsub.s32 %v7132, %v7134
      %v7136 = vrot.slane %v7090, %v7135
      %v7137 = vcombine.high %v7136, %v7136
      %v7139 = vunpack.c.l.s4 1966171168
      %v7140 = vunpack.c.0.s8 %v7139
      %v7141 = vlaneseq
      %v7142 = vshrl.u32 %v7141, 7
      %v7143 = vsub.s32 %v7140, %v7142
      %v7144 = vrot.slane %v7136, %v7143
      %v7146 = vunpack.c.l.s4 1966171168
      %v7147 = vunpack.c.0.s8 %v7146
      %v7148 = vlaneseq
      %v7149 = vshrl.u32 %v7148, 7
      %v7150 = vsub.s32 %v7147, %v7149
      %v7151 = vrot.slane %v7137, %v7150
      %v7152 = vcombine.high %v7144, %v7144
      %v7153 = vcombine.high %v7151, %v7151
      %v7155 = vunpack.c.l.s4 1966171168
      %v7156 = vunpack.c.0.s8 %v7155
      %v7157 = vlaneseq
      %v7158 = vshrl.u32 %v7157, 7
      %v7159 = vsub.s32 %v7156, %v7158
      %v7160 = vrot.slane %v7091, %v7159
      %v7161 = vcombine.high %v7160, %v7160
      %v7163 = vunpack.c.l.s4 1966171168
      %v7164 = vunpack.c.0.s8 %v7163
      %v7165 = vlaneseq
      %v7166 = vshrl.u32 %v7165, 7
      %v7167 = vsub.s32 %v7164, %v7166
      %v7168 = vrot.slane %v7160, %v7167
      %v7170 = vunpack.c.l.s4 1966171168
      %v7171 = vunpack.c.0.s8 %v7170
      %v7172 = vlaneseq
      %v7173 = vshrl.u32 %v7172, 7
      %v7174 = vsub.s32 %v7171, %v7173
      %v7175 = vrot.slane %v7161, %v7174
      %v7177 = vunpack.c.l.s4 1966171168
      %v7178 = vunpack.c.0.s8 %v7177
      %v7179 = vlaneseq
      %v7180 = vshrl.u32 %v7179, 7
      %v7181 = vsub.s32 %v7178, %v7180
      %v7182 = vrot.slane %v7092, %v7181
      %v7183 = vcombine.high %v7182, %v7182
      %v7185 = vunpack.c.l.s4 1966171168
      %v7186 = vunpack.c.0.s8 %v7185
      %v7187 = vlaneseq
      %v7188 = vshrl.u32 %v7187, 7
      %v7189 = vsub.s32 %v7186, %v7188
      %v7190 = vrot.slane %v7182, %v7189
      %v7192 = vunpack.c.l.s4 1966171168
      %v7193 = vunpack.c.0.s8 %v7192
      %v7194 = vlaneseq
      %v7195 = vshrl.u32 %v7194, 7
      %v7196 = vsub.s32 %v7193, %v7195
      %v7197 = vrot.slane %v7183, %v7196
      %v7198 = vcombine.high %v7190, %v7190
      %v7199 = vcombine.high %v7197, %v7197
      %v7201 = vunpack.c.l.s4 1966171168
      %v7202 = vunpack.c.0.s8 %v7201
      %v7203 = vlaneseq
      %v7204 = vshrl.u32 %v7203, 7
      %v7205 = vsub.s32 %v7202, %v7204
      %v7206 = vrot.slane %v7093, %v7205
      %v7207 = vcombine.high %v7206, %v7206
      %v7209 = vunpack.c.l.s4 1966171168
      %v7210 = vunpack.c.0.s8 %v7209
      %v7211 = vlaneseq
      %v7212 = vshrl.u32 %v7211, 7
      %v7213 = vsub.s32 %v7210, %v7212
      %v7214 = vrot.slane %v7206, %v7213
      %v7216 = vunpack.c.l.s4 1966171168
      %v7217 = vunpack.c.0.s8 %v7216
      %v7218 = vlaneseq
      %v7219 = vshrl.u32 %v7218, 7
      %v7220 = vsub.s32 %v7217, %v7219
      %v7221 = vrot.slane %v7207, %v7220
      %v7223 = vunpack.c.l.s4 1966171168
      %v7224 = vunpack.c.0.s8 %v7223
      %v7225 = vlaneseq
      %v7226 = vshrl.u32 %v7225, 7
      %v7227 = vsub.s32 %v7224, %v7226
      %v7228 = vrot.slane %v7094, %v7227
      %v7229 = vcombine.high %v7228, %v7228
      %v7231 = vunpack.c.l.s4 1966171168
      %v7232 = vunpack.c.0.s8 %v7231
      %v7233 = vlaneseq
      %v7234 = vshrl.u32 %v7233, 7
      %v7235 = vsub.s32 %v7232, %v7234
      %v7236 = vrot.slane %v7228, %v7235
      %v7238 = vunpack.c.l.s4 1966171168
      %v7239 = vunpack.c.0.s8 %v7238
      %v7240 = vlaneseq
      %v7241 = vshrl.u32 %v7240, 7
      %v7242 = vsub.s32 %v7239, %v7241
      %v7243 = vrot.slane %v7229, %v7242
      %v7244 = vcombine.high %v7236, %v7236
      %v7245 = vcombine.high %v7243, %v7243
      %v7247 = vunpack.c.l.s4 1966171168
      %v7248 = vunpack.c.0.s8 %v7247
      %v7249 = vlaneseq
      %v7250 = vshrl.u32 %v7249, 7
      %v7251 = vsub.s32 %v7248, %v7250
      %v7252 = vrot.slane %v7095, %v7251
      %v7253 = vcombine.high %v7252, %v7252
      %v7255 = vunpack.c.l.s4 1966171168
      %v7256 = vunpack.c.0.s8 %v7255
      %v7257 = vlaneseq
      %v7258 = vshrl.u32 %v7257, 7
      %v7259 = vsub.s32 %v7256, %v7258
      %v7260 = vrot.slane %v7252, %v7259
      %v7262 = vunpack.c.l.s4 1966171168
      %v7263 = vunpack.c.0.s8 %v7262
      %v7264 = vlaneseq
      %v7265 = vshrl.u32 %v7264, 7
      %v7266 = vsub.s32 %v7263, %v7265
      %v7267 = vrot.slane %v7253, %v7266
      %v7269 = vunpack.c.l.s4 1966171168
      %v7270 = vunpack.c.0.s8 %v7269
      %v7271 = vlaneseq
      %v7272 = vshrl.u32 %v7271, 7
      %v7273 = vsub.s32 %v7270, %v7272
      %v7274 = vrot.slane %v7096, %v7273
      %v7275 = vcombine.high %v7274, %v7274
      %v7277 = vunpack.c.l.s4 1966171168
      %v7278 = vunpack.c.0.s8 %v7277
      %v7279 = vlaneseq
      %v7280 = vshrl.u32 %v7279, 7
      %v7281 = vsub.s32 %v7278, %v7280
      %v7282 = vrot.slane %v7274, %v7281
      %v7284 = vunpack.c.l.s4 1966171168
      %v7285 = vunpack.c.0.s8 %v7284
      %v7286 = vlaneseq
      %v7287 = vshrl.u32 %v7286, 7
      %v7288 = vsub.s32 %v7285, %v7287
      %v7289 = vrot.slane %v7275, %v7288
      %v7290 = vcombine.high %v7282, %v7282
      %v7291 = vcombine.high %v7289, %v7289
      %v7293 = vunpack.c.l.s4 1966171168
      %v7294 = vunpack.c.0.s8 %v7293
      %v7295 = vlaneseq
      %v7296 = vshrl.u32 %v7295, 7
      %v7297 = vsub.s32 %v7294, %v7296
      %v7298 = vrot.slane %v7097, %v7297
      %v7299 = vcombine.high %v7298, %v7298
      %v7301 = vunpack.c.l.s4 1966171168
      %v7302 = vunpack.c.0.s8 %v7301
      %v7303 = vlaneseq
      %v7304 = vshrl.u32 %v7303, 7
      %v7305 = vsub.s32 %v7302, %v7304
      %v7306 = vrot.slane %v7298, %v7305
      %v7308 = vunpack.c.l.s4 1966171168
      %v7309 = vunpack.c.0.s8 %v7308
      %v7310 = vlaneseq
      %v7311 = vshrl.u32 %v7310, 7
      %v7312 = vsub.s32 %v7309, %v7311
      %v7313 = vrot.slane %v7299, %v7312
      %v7315 = vunpack.c.l.s4 1966171168
      %v7316 = vunpack.c.0.s8 %v7315
      %v7317 = vlaneseq
      %v7318 = vshrl.u32 %v7317, 7
      %v7319 = vsub.s32 %v7316, %v7318
      %v7320 = vrot.slane %v7098, %v7319
      %v7321 = vcombine.high %v7320, %v7320
      %v7323 = vunpack.c.l.s4 1966171168
      %v7324 = vunpack.c.0.s8 %v7323
      %v7325 = vlaneseq
      %v7326 = vshrl.u32 %v7325, 7
      %v7327 = vsub.s32 %v7324, %v7326
      %v7328 = vrot.slane %v7320, %v7327
      %v7330 = vunpack.c.l.s4 1966171168
      %v7331 = vunpack.c.0.s8 %v7330
      %v7332 = vlaneseq
      %v7333 = vshrl.u32 %v7332, 7
      %v7334 = vsub.s32 %v7331, %v7333
      %v7335 = vrot.slane %v7321, %v7334
      %v7336 = vcombine.high %v7328, %v7328
      %v7337 = vcombine.high %v7335, %v7335
      %v7339 = vunpack.c.l.s4 1966171168
      %v7340 = vunpack.c.0.s8 %v7339
      %v7341 = vlaneseq
      %v7342 = vshrl.u32 %v7341, 7
      %v7343 = vsub.s32 %v7340, %v7342
      %v7344 = vrot.slane %v7099, %v7343
      %v7345 = vcombine.high %v7344, %v7344
      %v7347 = vunpack.c.l.s4 1966171168
      %v7348 = vunpack.c.0.s8 %v7347
      %v7349 = vlaneseq
      %v7350 = vshrl.u32 %v7349, 7
      %v7351 = vsub.s32 %v7348, %v7350
      %v7352 = vrot.slane %v7344, %v7351
      %v7354 = vunpack.c.l.s4 1966171168
      %v7355 = vunpack.c.0.s8 %v7354
      %v7356 = vlaneseq
      %v7357 = vshrl.u32 %v7356, 7
      %v7358 = vsub.s32 %v7355, %v7357
      %v7359 = vrot.slane %v7345, %v7358
      %v7361 = vunpack.c.l.s4 1966171168
      %v7362 = vunpack.c.0.s8 %v7361
      %v7363 = vlaneseq
      %v7364 = vshrl.u32 %v7363, 7
      %v7365 = vsub.s32 %v7362, %v7364
      %v7366 = vrot.slane %v7100, %v7365
      %v7367 = vcombine.high %v7366, %v7366
      %v7369 = vunpack.c.l.s4 1966171168
      %v7370 = vunpack.c.0.s8 %v7369
      %v7371 = vlaneseq
      %v7372 = vshrl.u32 %v7371, 7
      %v7373 = vsub.s32 %v7370, %v7372
      %v7374 = vrot.slane %v7366, %v7373
      %v7376 = vunpack.c.l.s4 1966171168
      %v7377 = vunpack.c.0.s8 %v7376
      %v7378 = vlaneseq
      %v7379 = vshrl.u32 %v7378, 7
      %v7380 = vsub.s32 %v7377, %v7379
      %v7381 = vrot.slane %v7367, %v7380
      %v7382 = vcombine.high %v7374, %v7374
      %v7383 = vcombine.high %v7381, %v7381
      %v7385 = vunpack.c.l.s4 1966171168
      %v7386 = vunpack.c.0.s8 %v7385
      %v7387 = vlaneseq
      %v7388 = vshrl.u32 %v7387, 7
      %v7389 = vsub.s32 %v7386, %v7388
      %v7390 = vrot.slane %v7101, %v7389
      %v7391 = vcombine.high %v7390, %v7390
      %v7393 = vunpack.c.l.s4 1966171168
      %v7394 = vunpack.c.0.s8 %v7393
      %v7395 = vlaneseq
      %v7396 = vshrl.u32 %v7395, 7
      %v7397 = vsub.s32 %v7394, %v7396
      %v7398 = vrot.slane %v7390, %v7397
      %v7400 = vunpack.c.l.s4 1966171168
      %v7401 = vunpack.c.0.s8 %v7400
      %v7402 = vlaneseq
      %v7403 = vshrl.u32 %v7402, 7
      %v7404 = vsub.s32 %v7401, %v7403
      %v7405 = vrot.slane %v7391, %v7404
      %v7407 = vunpack.c.l.s4 1966171168
      %v7408 = vunpack.c.0.s8 %v7407
      %v7409 = vlaneseq
      %v7410 = vshrl.u32 %v7409, 7
      %v7411 = vsub.s32 %v7408, %v7410
      %v7412 = vrot.slane %v7102, %v7411
      %v7413 = vcombine.high %v7412, %v7412
      %v7415 = vunpack.c.l.s4 1966171168
      %v7416 = vunpack.c.0.s8 %v7415
      %v7417 = vlaneseq
      %v7418 = vshrl.u32 %v7417, 7
      %v7419 = vsub.s32 %v7416, %v7418
      %v7420 = vrot.slane %v7412, %v7419
      %v7422 = vunpack.c.l.s4 1966171168
      %v7423 = vunpack.c.0.s8 %v7422
      %v7424 = vlaneseq
      %v7425 = vshrl.u32 %v7424, 7
      %v7426 = vsub.s32 %v7423, %v7425
      %v7427 = vrot.slane %v7413, %v7426
      %v7428 = vcombine.high %v7420, %v7420
      %v7429 = vcombine.high %v7427, %v7427
      %v7431 = vunpack.c.l.s4 1966171168
      %v7432 = vunpack.c.0.s8 %v7431
      %v7433 = vlaneseq
      %v7434 = vshrl.u32 %v7433, 7
      %v7435 = vsub.s32 %v7432, %v7434
      %v7436 = vrot.slane %v7103, %v7435
      %v7437 = vcombine.high %v7436, %v7436
      %v7439 = vunpack.c.l.s4 1966171168
      %v7440 = vunpack.c.0.s8 %v7439
      %v7441 = vlaneseq
      %v7442 = vshrl.u32 %v7441, 7
      %v7443 = vsub.s32 %v7440, %v7442
      %v7444 = vrot.slane %v7436, %v7443
      %v7446 = vunpack.c.l.s4 1966171168
      %v7447 = vunpack.c.0.s8 %v7446
      %v7448 = vlaneseq
      %v7449 = vshrl.u32 %v7448, 7
      %v7450 = vsub.s32 %v7447, %v7449
      %v7451 = vrot.slane %v7437, %v7450
      %v7453 = vunpack.c.l.s4 1966171168
      %v7454 = vunpack.c.0.s8 %v7453
      %v7455 = vlaneseq
      %v7456 = vshrl.u32 %v7455, 7
      %v7457 = vsub.s32 %v7454, %v7456
      %v7458 = vrot.slane %v7104, %v7457
      %v7459 = vcombine.high %v7458, %v7458
      %v7461 = vunpack.c.l.s4 1966171168
      %v7462 = vunpack.c.0.s8 %v7461
      %v7463 = vlaneseq
      %v7464 = vshrl.u32 %v7463, 7
      %v7465 = vsub.s32 %v7462, %v7464
      %v7466 = vrot.slane %v7458, %v7465
      %v7468 = vunpack.c.l.s4 1966171168
      %v7469 = vunpack.c.0.s8 %v7468
      %v7470 = vlaneseq
      %v7471 = vshrl.u32 %v7470, 7
      %v7472 = vsub.s32 %v7469, %v7471
      %v7473 = vrot.slane %v7459, %v7472
      %v7474 = vcombine.high %v7466, %v7466
      %v7475 = vcombine.high %v7473, %v7473
      %v7477 = vunpack.c.l.s4 1966171168
      %v7478 = vunpack.c.0.s8 %v7477
      %v7479 = vlaneseq
      %v7480 = vshrl.u32 %v7479, 7
      %v7481 = vsub.s32 %v7478, %v7480
      %v7482 = vrot.slane %v7105, %v7481
      %v7483 = vcombine.high %v7482, %v7482
      %v7485 = vunpack.c.l.s4 1966171168
      %v7486 = vunpack.c.0.s8 %v7485
      %v7487 = vlaneseq
      %v7488 = vshrl.u32 %v7487, 7
      %v7489 = vsub.s32 %v7486, %v7488
      %v7490 = vrot.slane %v7482, %v7489
      %v7492 = vunpack.c.l.s4 1966171168
      %v7493 = vunpack.c.0.s8 %v7492
      %v7494 = vlaneseq
      %v7495 = vshrl.u32 %v7494, 7
      %v7496 = vsub.s32 %v7493, %v7495
      %v7497 = vrot.slane %v7483, %v7496
      %v7499 = vunpack.c.l.s4 1966171168
      %v7500 = vunpack.c.0.s8 %v7499
      %v7501 = vlaneseq
      %v7502 = vshrl.u32 %v7501, 7
      %v7503 = vsub.s32 %v7500, %v7502
      %v7504 = vrot.slane %v7106, %v7503
      %v7505 = vcombine.high %v7504, %v7504
      %v7507 = vunpack.c.l.s4 1966171168
      %v7508 = vunpack.c.0.s8 %v7507
      %v7509 = vlaneseq
      %v7510 = vshrl.u32 %v7509, 7
      %v7511 = vsub.s32 %v7508, %v7510
      %v7512 = vrot.slane %v7504, %v7511
      %v7514 = vunpack.c.l.s4 1966171168
      %v7515 = vunpack.c.0.s8 %v7514
      %v7516 = vlaneseq
      %v7517 = vshrl.u32 %v7516, 7
      %v7518 = vsub.s32 %v7515, %v7517
      %v7519 = vrot.slane %v7505, %v7518
      %v7520 = vcombine.high %v7512, %v7512
      %v7521 = vcombine.high %v7519, %v7519
      %v7523 = vunpack.c.l.s4 1966171168
      %v7524 = vunpack.c.0.s8 %v7523
      %v7525 = vlaneseq
      %v7526 = vshrl.u32 %v7525, 7
      %v7527 = vsub.s32 %v7524, %v7526
      %v7528 = vrot.slane %v7107, %v7527
      %v7529 = vcombine.high %v7528, %v7528
      %v7531 = vunpack.c.l.s4 1966171168
      %v7532 = vunpack.c.0.s8 %v7531
      %v7533 = vlaneseq
      %v7534 = vshrl.u32 %v7533, 7
      %v7535 = vsub.s32 %v7532, %v7534
      %v7536 = vrot.slane %v7528, %v7535
      %v7538 = vunpack.c.l.s4 1966171168
      %v7539 = vunpack.c.0.s8 %v7538
      %v7540 = vlaneseq
      %v7541 = vshrl.u32 %v7540, 7
      %v7542 = vsub.s32 %v7539, %v7541
      %v7543 = vrot.slane %v7529, %v7542
      %v7545 = vunpack.c.l.s4 1966171168
      %v7546 = vunpack.c.0.s8 %v7545
      %v7547 = vlaneseq
      %v7548 = vshrl.u32 %v7547, 7
      %v7549 = vsub.s32 %v7546, %v7548
      %v7550 = vrot.slane %v7108, %v7549
      %v7551 = vcombine.high %v7550, %v7550
      %v7553 = vunpack.c.l.s4 1966171168
      %v7554 = vunpack.c.0.s8 %v7553
      %v7555 = vlaneseq
      %v7556 = vshrl.u32 %v7555, 7
      %v7557 = vsub.s32 %v7554, %v7556
      %v7558 = vrot.slane %v7550, %v7557
      %v7560 = vunpack.c.l.s4 1966171168
      %v7561 = vunpack.c.0.s8 %v7560
      %v7562 = vlaneseq
      %v7563 = vshrl.u32 %v7562, 7
      %v7564 = vsub.s32 %v7561, %v7563
      %v7565 = vrot.slane %v7551, %v7564
      %v7566 = vcombine.high %v7558, %v7558
      %v7567 = vcombine.high %v7565, %v7565
      %v7569 = vunpack.c.l.s4 1966171168
      %v7570 = vunpack.c.0.s8 %v7569
      %v7571 = vlaneseq
      %v7572 = vshrl.u32 %v7571, 7
      %v7573 = vsub.s32 %v7570, %v7572
      %v7574 = vrot.slane %v7109, %v7573
      %v7575 = vcombine.high %v7574, %v7574
      %v7577 = vunpack.c.l.s4 1966171168
      %v7578 = vunpack.c.0.s8 %v7577
      %v7579 = vlaneseq
      %v7580 = vshrl.u32 %v7579, 7
      %v7581 = vsub.s32 %v7578, %v7580
      %v7582 = vrot.slane %v7574, %v7581
      %v7584 = vunpack.c.l.s4 1966171168
      %v7585 = vunpack.c.0.s8 %v7584
      %v7586 = vlaneseq
      %v7587 = vshrl.u32 %v7586, 7
      %v7588 = vsub.s32 %v7585, %v7587
      %v7589 = vrot.slane %v7575, %v7588
      %v7591 = vshrl.u32 %v7144, 16
      %v7593 = vrot.slane %v7591, 7
      %v7594 = vrot.slane %v7593, 1
      %v7596 = vshll.u32 %v7151, 16
      %v7598 = vsel %vm901, %v7594, %v7596
      %v7599 = vshrl.u32 %v7151, 16
      %v7601 = vrot.slane %v7599, 7
      %v7602 = vrot.slane %v7601, 1
      %v7604 = vshll.u32 %v7152, 16
      %v7606 = vsel %vm901, %v7602, %v7604
      %v7607 = vshrl.u32 %v7152, 16
      %v7609 = vrot.slane %v7607, 7
      %v7610 = vrot.slane %v7609, 1
      %v7612 = vshll.u32 %v7153, 16
      %v7614 = vsel %vm901, %v7610, %v7612
      %v7615 = vshrl.u32 %v7153, 16
      %v7617 = vrot.slane %v7615, 7
      %v7618 = vrot.slane %v7617, 1
      %v7620 = vshll.u32 %v7168, 16
      %v7622 = vsel %vm901, %v7618, %v7620
      %v7623 = vshrl.u32 %v7168, 16
      %v7625 = vrot.slane %v7623, 7
      %v7626 = vrot.slane %v7625, 1
      %v7628 = vshll.u32 %v7175, 16
      %v7630 = vsel %vm901, %v7626, %v7628
      %v7632 = vshrl.u32 %v7190, 16
      %v7634 = vrot.slane %v7632, 7
      %v7635 = vrot.slane %v7634, 1
      %v7637 = vshll.u32 %v7197, 16
      %v7639 = vsel %vm901, %v7635, %v7637
      %v7640 = vshrl.u32 %v7197, 16
      %v7642 = vrot.slane %v7640, 7
      %v7643 = vrot.slane %v7642, 1
      %v7645 = vshll.u32 %v7198, 16
      %v7647 = vsel %vm901, %v7643, %v7645
      %v7648 = vshrl.u32 %v7198, 16
      %v7650 = vrot.slane %v7648, 7
      %v7651 = vrot.slane %v7650, 1
      %v7653 = vshll.u32 %v7199, 16
      %v7655 = vsel %vm901, %v7651, %v7653
      %v7656 = vshrl.u32 %v7199, 16
      %v7658 = vrot.slane %v7656, 7
      %v7659 = vrot.slane %v7658, 1
      %v7661 = vshll.u32 %v7214, 16
      %v7663 = vsel %vm901, %v7659, %v7661
      %v7664 = vshrl.u32 %v7214, 16
      %v7666 = vrot.slane %v7664, 7
      %v7667 = vrot.slane %v7666, 1
      %v7669 = vshll.u32 %v7221, 16
      %v7671 = vsel %vm901, %v7667, %v7669
      %v7673 = vshrl.u32 %v7236, 16
      %v7675 = vrot.slane %v7673, 7
      %v7676 = vrot.slane %v7675, 1
      %v7678 = vshll.u32 %v7243, 16
      %v7680 = vsel %vm901, %v7676, %v7678
      %v7681 = vshrl.u32 %v7243, 16
      %v7683 = vrot.slane %v7681, 7
      %v7684 = vrot.slane %v7683, 1
      %v7686 = vshll.u32 %v7244, 16
      %v7688 = vsel %vm901, %v7684, %v7686
      %v7689 = vshrl.u32 %v7244, 16
      %v7691 = vrot.slane %v7689, 7
      %v7692 = vrot.slane %v7691, 1
      %v7694 = vshll.u32 %v7245, 16
      %v7696 = vsel %vm901, %v7692, %v7694
      %v7697 = vshrl.u32 %v7245, 16
      %v7699 = vrot.slane %v7697, 7
      %v7700 = vrot.slane %v7699, 1
      %v7702 = vshll.u32 %v7260, 16
      %v7704 = vsel %vm901, %v7700, %v7702
      %v7705 = vshrl.u32 %v7260, 16
      %v7707 = vrot.slane %v7705, 7
      %v7708 = vrot.slane %v7707, 1
      %v7710 = vshll.u32 %v7267, 16
      %v7712 = vsel %vm901, %v7708, %v7710
      %v7714 = vshrl.u32 %v7282, 16
      %v7716 = vrot.slane %v7714, 7
      %v7717 = vrot.slane %v7716, 1
      %v7719 = vshll.u32 %v7289, 16
      %v7721 = vsel %vm901, %v7717, %v7719
      %v7722 = vshrl.u32 %v7289, 16
      %v7724 = vrot.slane %v7722, 7
      %v7725 = vrot.slane %v7724, 1
      %v7727 = vshll.u32 %v7290, 16
      %v7729 = vsel %vm901, %v7725, %v7727
      %v7730 = vshrl.u32 %v7290, 16
      %v7732 = vrot.slane %v7730, 7
      %v7733 = vrot.slane %v7732, 1
      %v7735 = vshll.u32 %v7291, 16
      %v7737 = vsel %vm901, %v7733, %v7735
      %v7738 = vshrl.u32 %v7291, 16
      %v7740 = vrot.slane %v7738, 7
      %v7741 = vrot.slane %v7740, 1
      %v7743 = vshll.u32 %v7306, 16
      %v7745 = vsel %vm901, %v7741, %v7743
      %v7746 = vshrl.u32 %v7306, 16
      %v7748 = vrot.slane %v7746, 7
      %v7749 = vrot.slane %v7748, 1
      %v7751 = vshll.u32 %v7313, 16
      %v7753 = vsel %vm901, %v7749, %v7751
      %v7755 = vshrl.u32 %v7328, 16
      %v7757 = vrot.slane %v7755, 7
      %v7758 = vrot.slane %v7757, 1
      %v7760 = vshll.u32 %v7335, 16
      %v7762 = vsel %vm901, %v7758, %v7760
      %v7763 = vshrl.u32 %v7335, 16
      %v7765 = vrot.slane %v7763, 7
      %v7766 = vrot.slane %v7765, 1
      %v7768 = vshll.u32 %v7336, 16
      %v7770 = vsel %vm901, %v7766, %v7768
      %v7771 = vshrl.u32 %v7336, 16
      %v7773 = vrot.slane %v7771, 7
      %v7774 = vrot.slane %v7773, 1
      %v7776 = vshll.u32 %v7337, 16
      %v7778 = vsel %vm901, %v7774, %v7776
      %v7779 = vshrl.u32 %v7337, 16
      %v7781 = vrot.slane %v7779, 7
      %v7782 = vrot.slane %v7781, 1
      %v7784 = vshll.u32 %v7352, 16
      %v7786 = vsel %vm901, %v7782, %v7784
      %v7787 = vshrl.u32 %v7352, 16
      %v7789 = vrot.slane %v7787, 7
      %v7790 = vrot.slane %v7789, 1
      %v7792 = vshll.u32 %v7359, 16
      %v7794 = vsel %vm901, %v7790, %v7792
      %v7796 = vshrl.u32 %v7374, 16
      %v7798 = vrot.slane %v7796, 7
      %v7799 = vrot.slane %v7798, 1
      %v7801 = vshll.u32 %v7381, 16
      %v7803 = vsel %vm901, %v7799, %v7801
      %v7804 = vshrl.u32 %v7381, 16
      %v7806 = vrot.slane %v7804, 7
      %v7807 = vrot.slane %v7806, 1
      %v7809 = vshll.u32 %v7382, 16
      %v7811 = vsel %vm901, %v7807, %v7809
      %v7812 = vshrl.u32 %v7382, 16
      %v7814 = vrot.slane %v7812, 7
      %v7815 = vrot.slane %v7814, 1
      %v7817 = vshll.u32 %v7383, 16
      %v7819 = vsel %vm901, %v7815, %v7817
      %v7820 = vshrl.u32 %v7383, 16
      %v7822 = vrot.slane %v7820, 7
      %v7823 = vrot.slane %v7822, 1
      %v7825 = vshll.u32 %v7398, 16
      %v7827 = vsel %vm901, %v7823, %v7825
      %v7828 = vshrl.u32 %v7398, 16
      %v7830 = vrot.slane %v7828, 7
      %v7831 = vrot.slane %v7830, 1
      %v7833 = vshll.u32 %v7405, 16
      %v7835 = vsel %vm901, %v7831, %v7833
      %v7837 = vshrl.u32 %v7420, 16
      %v7839 = vrot.slane %v7837, 7
      %v7840 = vrot.slane %v7839, 1
      %v7842 = vshll.u32 %v7427, 16
      %v7844 = vsel %vm901, %v7840, %v7842
      %v7845 = vshrl.u32 %v7427, 16
      %v7847 = vrot.slane %v7845, 7
      %v7848 = vrot.slane %v7847, 1
      %v7850 = vshll.u32 %v7428, 16
      %v7852 = vsel %vm901, %v7848, %v7850
      %v7853 = vshrl.u32 %v7428, 16
      %v7855 = vrot.slane %v7853, 7
      %v7856 = vrot.slane %v7855, 1
      %v7858 = vshll.u32 %v7429, 16
      %v7860 = vsel %vm901, %v7856, %v7858
      %v7861 = vshrl.u32 %v7429, 16
      %v7863 = vrot.slane %v7861, 7
      %v7864 = vrot.slane %v7863, 1
      %v7866 = vshll.u32 %v7444, 16
      %v7868 = vsel %vm901, %v7864, %v7866
      %v7869 = vshrl.u32 %v7444, 16
      %v7871 = vrot.slane %v7869, 7
      %v7872 = vrot.slane %v7871, 1
      %v7874 = vshll.u32 %v7451, 16
      %v7876 = vsel %vm901, %v7872, %v7874
      %v7878 = vshrl.u32 %v7466, 16
      %v7880 = vrot.slane %v7878, 7
      %v7881 = vrot.slane %v7880, 1
      %v7883 = vshll.u32 %v7473, 16
      %v7885 = vsel %vm901, %v7881, %v7883
      %v7886 = vshrl.u32 %v7473, 16
      %v7888 = vrot.slane %v7886, 7
      %v7889 = vrot.slane %v7888, 1
      %v7891 = vshll.u32 %v7474, 16
      %v7893 = vsel %vm901, %v7889, %v7891
      %v7894 = vshrl.u32 %v7474, 16
      %v7896 = vrot.slane %v7894, 7
      %v7897 = vrot.slane %v7896, 1
      %v7899 = vshll.u32 %v7475, 16
      %v7901 = vsel %vm901, %v7897, %v7899
      %v7902 = vshrl.u32 %v7475, 16
      %v7904 = vrot.slane %v7902, 7
      %v7905 = vrot.slane %v7904, 1
      %v7907 = vshll.u32 %v7490, 16
      %v7909 = vsel %vm901, %v7905, %v7907
      %v7910 = vshrl.u32 %v7490, 16
      %v7912 = vrot.slane %v7910, 7
      %v7913 = vrot.slane %v7912, 1
      %v7915 = vshll.u32 %v7497, 16
      %v7917 = vsel %vm901, %v7913, %v7915
      %v7919 = vshrl.u32 %v7512, 16
      %v7921 = vrot.slane %v7919, 7
      %v7922 = vrot.slane %v7921, 1
      %v7924 = vshll.u32 %v7519, 16
      %v7926 = vsel %vm901, %v7922, %v7924
      %v7927 = vshrl.u32 %v7519, 16
      %v7929 = vrot.slane %v7927, 7
      %v7930 = vrot.slane %v7929, 1
      %v7932 = vshll.u32 %v7520, 16
      %v7934 = vsel %vm901, %v7930, %v7932
      %v7935 = vshrl.u32 %v7520, 16
      %v7937 = vrot.slane %v7935, 7
      %v7938 = vrot.slane %v7937, 1
      %v7940 = vshll.u32 %v7521, 16
      %v7942 = vsel %vm901, %v7938, %v7940
      %v7943 = vshrl.u32 %v7521, 16
      %v7945 = vrot.slane %v7943, 7
      %v7946 = vrot.slane %v7945, 1
      %v7948 = vshll.u32 %v7536, 16
      %v7950 = vsel %vm901, %v7946, %v7948
      %v7951 = vshrl.u32 %v7536, 16
      %v7953 = vrot.slane %v7951, 7
      %v7954 = vrot.slane %v7953, 1
      %v7956 = vshll.u32 %v7543, 16
      %v7958 = vsel %vm901, %v7954, %v7956
      %v7960 = vshrl.u32 %v7558, 16
      %v7962 = vrot.slane %v7960, 7
      %v7963 = vrot.slane %v7962, 1
      %v7965 = vshll.u32 %v7565, 16
      %v7967 = vsel %vm901, %v7963, %v7965
      %v7968 = vshrl.u32 %v7565, 16
      %v7970 = vrot.slane %v7968, 7
      %v7971 = vrot.slane %v7970, 1
      %v7973 = vshll.u32 %v7566, 16
      %v7975 = vsel %vm901, %v7971, %v7973
      %v7976 = vshrl.u32 %v7566, 16
      %v7978 = vrot.slane %v7976, 7
      %v7979 = vrot.slane %v7978, 1
      %v7981 = vshll.u32 %v7567, 16
      %v7983 = vsel %vm901, %v7979, %v7981
      %v7984 = vshrl.u32 %v7567, 16
      %v7986 = vrot.slane %v7984, 7
      %v7987 = vrot.slane %v7986, 1
      %v7989 = vshll.u32 %v7582, 16
      %v7991 = vsel %vm901, %v7987, %v7989
      %v7992 = vshrl.u32 %v7582, 16
      %v7994 = vrot.slane %v7992, 7
      %v7995 = vrot.slane %v7994, 1
      %v7997 = vshll.u32 %v7589, 16
      %v7999 = vsel %vm901, %v7995, %v7997
      %s8000 = scalar_lea.vmem %s1, 28
      %v8001 = vld [vmem:[%s8000] sm:$0xf]
      %v8002 = vcombine.low %v7598, %v7606
      %v8003 = vcombine.low %v7614, %v7622
      %v8004 = vcombine.low %v7630, %v7639
      %v8005 = vcombine.low %v7647, %v7655
      %v8007 = vunpack.c.l.s4 1966171168
      %v8008 = vunpack.c.0.s8 %v8007
      %v8009 = vlaneseq
      %v8010 = vshrl.u32 %v8009, 7
      %v8011 = vsub.s32 %v8008, %v8010
      %v8012 = vrot.slane %v8002, %v8011
      %v8014 = vunpack.c.l.s4 1966171168
      %v8015 = vunpack.c.0.s8 %v8014
      %v8016 = vlaneseq
      %v8017 = vshrl.u32 %v8016, 7
      %v8018 = vsub.s32 %v8015, %v8017
      %v8019 = vrot.slane %v8003, %v8018
      %v8021 = vunpack.c.l.s4 1966171168
      %v8022 = vunpack.c.0.s8 %v8021
      %v8023 = vlaneseq
      %v8024 = vshrl.u32 %v8023, 7
      %v8025 = vsub.s32 %v8022, %v8024
      %v8026 = vrot.slane %v8004, %v8025
      %v8028 = vunpack.c.l.s4 1966171168
      %v8029 = vunpack.c.0.s8 %v8028
      %v8030 = vlaneseq
      %v8031 = vshrl.u32 %v8030, 7
      %v8032 = vsub.s32 %v8029, %v8031
      %v8033 = vrot.slane %v8005, %v8032
      %v8034 = vcombine.low %v8012, %v8019
      %v8035 = vcombine.low %v8026, %v8033
      %v8037 = vunpack.c.l.s4 1966171168
      %v8038 = vunpack.c.0.s8 %v8037
      %v8039 = vlaneseq
      %v8040 = vshrl.u32 %v8039, 7
      %v8041 = vsub.s32 %v8038, %v8040
      %v8042 = vrot.slane %v8034, %v8041
      %v8044 = vunpack.c.l.s4 1966171168
      %v8045 = vunpack.c.0.s8 %v8044
      %v8046 = vlaneseq
      %v8047 = vshrl.u32 %v8046, 7
      %v8048 = vsub.s32 %v8045, %v8047
      %v8049 = vrot.slane %v8035, %v8048
      %v8050 = vcombine.low %v8042, %v8049
      %v8051 = vcombine.low %v7663, %v7671
      %v8052 = vcombine.low %v7680, %v7688
      %v8053 = vcombine.low %v7696, %v7704
      %v8054 = vcombine.low %v7712, %v7721
      %v8056 = vunpack.c.l.s4 1966171168
      %v8057 = vunpack.c.0.s8 %v8056
      %v8058 = vlaneseq
      %v8059 = vshrl.u32 %v8058, 7
      %v8060 = vsub.s32 %v8057, %v8059
      %v8061 = vrot.slane %v8051, %v8060
      %v8063 = vunpack.c.l.s4 1966171168
      %v8064 = vunpack.c.0.s8 %v8063
      %v8065 = vlaneseq
      %v8066 = vshrl.u32 %v8065, 7
      %v8067 = vsub.s32 %v8064, %v8066
      %v8068 = vrot.slane %v8052, %v8067
      %v8070 = vunpack.c.l.s4 1966171168
      %v8071 = vunpack.c.0.s8 %v8070
      %v8072 = vlaneseq
      %v8073 = vshrl.u32 %v8072, 7
      %v8074 = vsub.s32 %v8071, %v8073
      %v8075 = vrot.slane %v8053, %v8074
      %v8077 = vunpack.c.l.s4 1966171168
      %v8078 = vunpack.c.0.s8 %v8077
      %v8079 = vlaneseq
      %v8080 = vshrl.u32 %v8079, 7
      %v8081 = vsub.s32 %v8078, %v8080
      %v8082 = vrot.slane %v8054, %v8081
      %v8083 = vcombine.low %v8061, %v8068
      %v8084 = vcombine.low %v8075, %v8082
      %v8086 = vunpack.c.l.s4 1966171168
      %v8087 = vunpack.c.0.s8 %v8086
      %v8088 = vlaneseq
      %v8089 = vshrl.u32 %v8088, 7
      %v8090 = vsub.s32 %v8087, %v8089
      %v8091 = vrot.slane %v8083, %v8090
      %v8093 = vunpack.c.l.s4 1966171168
      %v8094 = vunpack.c.0.s8 %v8093
      %v8095 = vlaneseq
      %v8096 = vshrl.u32 %v8095, 7
      %v8097 = vsub.s32 %v8094, %v8096
      %v8098 = vrot.slane %v8084, %v8097
      %v8099 = vcombine.low %v8091, %v8098
      %v8100 = vcombine.low %v7729, %v7737
      %v8101 = vcombine.low %v7745, %v7753
      %v8102 = vcombine.low %v7762, %v7770
      %v8103 = vcombine.low %v7778, %v7786
      %v8105 = vunpack.c.l.s4 1966171168
      %v8106 = vunpack.c.0.s8 %v8105
      %v8107 = vlaneseq
      %v8108 = vshrl.u32 %v8107, 7
      %v8109 = vsub.s32 %v8106, %v8108
      %v8110 = vrot.slane %v8100, %v8109
      %v8112 = vunpack.c.l.s4 1966171168
      %v8113 = vunpack.c.0.s8 %v8112
      %v8114 = vlaneseq
      %v8115 = vshrl.u32 %v8114, 7
      %v8116 = vsub.s32 %v8113, %v8115
      %v8117 = vrot.slane %v8101, %v8116
      %v8119 = vunpack.c.l.s4 1966171168
      %v8120 = vunpack.c.0.s8 %v8119
      %v8121 = vlaneseq
      %v8122 = vshrl.u32 %v8121, 7
      %v8123 = vsub.s32 %v8120, %v8122
      %v8124 = vrot.slane %v8102, %v8123
      %v8126 = vunpack.c.l.s4 1966171168
      %v8127 = vunpack.c.0.s8 %v8126
      %v8128 = vlaneseq
      %v8129 = vshrl.u32 %v8128, 7
      %v8130 = vsub.s32 %v8127, %v8129
      %v8131 = vrot.slane %v8103, %v8130
      %v8132 = vcombine.low %v8110, %v8117
      %v8133 = vcombine.low %v8124, %v8131
      %v8135 = vunpack.c.l.s4 1966171168
      %v8136 = vunpack.c.0.s8 %v8135
      %v8137 = vlaneseq
      %v8138 = vshrl.u32 %v8137, 7
      %v8139 = vsub.s32 %v8136, %v8138
      %v8140 = vrot.slane %v8132, %v8139
      %v8142 = vunpack.c.l.s4 1966171168
      %v8143 = vunpack.c.0.s8 %v8142
      %v8144 = vlaneseq
      %v8145 = vshrl.u32 %v8144, 7
      %v8146 = vsub.s32 %v8143, %v8145
      %v8147 = vrot.slane %v8133, %v8146
      %v8148 = vcombine.low %v8140, %v8147
      %v8149 = vcombine.low %v7794, %v7803
      %v8150 = vcombine.low %v7811, %v7819
      %v8151 = vcombine.low %v7827, %v7835
      %v8152 = vcombine.low %v7844, %v7852
      %v8154 = vunpack.c.l.s4 1966171168
      %v8155 = vunpack.c.0.s8 %v8154
      %v8156 = vlaneseq
      %v8157 = vshrl.u32 %v8156, 7
      %v8158 = vsub.s32 %v8155, %v8157
      %v8159 = vrot.slane %v8149, %v8158
      %v8161 = vunpack.c.l.s4 1966171168
      %v8162 = vunpack.c.0.s8 %v8161
      %v8163 = vlaneseq
      %v8164 = vshrl.u32 %v8163, 7
      %v8165 = vsub.s32 %v8162, %v8164
      %v8166 = vrot.slane %v8150, %v8165
      %v8168 = vunpack.c.l.s4 1966171168
      %v8169 = vunpack.c.0.s8 %v8168
      %v8170 = vlaneseq
      %v8171 = vshrl.u32 %v8170, 7
      %v8172 = vsub.s32 %v8169, %v8171
      %v8173 = vrot.slane %v8151, %v8172
      %v8175 = vunpack.c.l.s4 1966171168
      %v8176 = vunpack.c.0.s8 %v8175
      %v8177 = vlaneseq
      %v8178 = vshrl.u32 %v8177, 7
      %v8179 = vsub.s32 %v8176, %v8178
      %v8180 = vrot.slane %v8152, %v8179
      %v8181 = vcombine.low %v8159, %v8166
      %v8182 = vcombine.low %v8173, %v8180
      %v8184 = vunpack.c.l.s4 1966171168
      %v8185 = vunpack.c.0.s8 %v8184
      %v8186 = vlaneseq
      %v8187 = vshrl.u32 %v8186, 7
      %v8188 = vsub.s32 %v8185, %v8187
      %v8189 = vrot.slane %v8181, %v8188
      %v8191 = vunpack.c.l.s4 1966171168
      %v8192 = vunpack.c.0.s8 %v8191
      %v8193 = vlaneseq
      %v8194 = vshrl.u32 %v8193, 7
      %v8195 = vsub.s32 %v8192, %v8194
      %v8196 = vrot.slane %v8182, %v8195
      %v8197 = vcombine.low %v8189, %v8196
      %v8198 = vcombine.low %v7860, %v7868
      %v8199 = vcombine.low %v7876, %v7885
      %v8200 = vcombine.low %v7893, %v7901
      %v8201 = vcombine.low %v7909, %v7917
      %v8203 = vunpack.c.l.s4 1966171168
      %v8204 = vunpack.c.0.s8 %v8203
      %v8205 = vlaneseq
      %v8206 = vshrl.u32 %v8205, 7
      %v8207 = vsub.s32 %v8204, %v8206
      %v8208 = vrot.slane %v8198, %v8207
      %v8210 = vunpack.c.l.s4 1966171168
      %v8211 = vunpack.c.0.s8 %v8210
      %v8212 = vlaneseq
      %v8213 = vshrl.u32 %v8212, 7
      %v8214 = vsub.s32 %v8211, %v8213
      %v8215 = vrot.slane %v8199, %v8214
      %v8217 = vunpack.c.l.s4 1966171168
      %v8218 = vunpack.c.0.s8 %v8217
      %v8219 = vlaneseq
      %v8220 = vshrl.u32 %v8219, 7
      %v8221 = vsub.s32 %v8218, %v8220
      %v8222 = vrot.slane %v8200, %v8221
      %v8224 = vunpack.c.l.s4 1966171168
      %v8225 = vunpack.c.0.s8 %v8224
      %v8226 = vlaneseq
      %v8227 = vshrl.u32 %v8226, 7
      %v8228 = vsub.s32 %v8225, %v8227
      %v8229 = vrot.slane %v8201, %v8228
      %v8230 = vcombine.low %v8208, %v8215
      %v8231 = vcombine.low %v8222, %v8229
      %v8233 = vunpack.c.l.s4 1966171168
      %v8234 = vunpack.c.0.s8 %v8233
      %v8235 = vlaneseq
      %v8236 = vshrl.u32 %v8235, 7
      %v8237 = vsub.s32 %v8234, %v8236
      %v8238 = vrot.slane %v8230, %v8237
      %v8240 = vunpack.c.l.s4 1966171168
      %v8241 = vunpack.c.0.s8 %v8240
      %v8242 = vlaneseq
      %v8243 = vshrl.u32 %v8242, 7
      %v8244 = vsub.s32 %v8241, %v8243
      %v8245 = vrot.slane %v8231, %v8244
      %v8246 = vcombine.low %v8238, %v8245
      %v8247 = vcombine.low %v7926, %v7934
      %v8248 = vcombine.low %v7942, %v7950
      %v8249 = vcombine.low %v7958, %v7967
      %v8250 = vcombine.low %v7975, %v7983
      %v8252 = vunpack.c.l.s4 1966171168
      %v8253 = vunpack.c.0.s8 %v8252
      %v8254 = vlaneseq
      %v8255 = vshrl.u32 %v8254, 7
      %v8256 = vsub.s32 %v8253, %v8255
      %v8257 = vrot.slane %v8247, %v8256
      %v8259 = vunpack.c.l.s4 1966171168
      %v8260 = vunpack.c.0.s8 %v8259
      %v8261 = vlaneseq
      %v8262 = vshrl.u32 %v8261, 7
      %v8263 = vsub.s32 %v8260, %v8262
      %v8264 = vrot.slane %v8248, %v8263
      %v8266 = vunpack.c.l.s4 1966171168
      %v8267 = vunpack.c.0.s8 %v8266
      %v8268 = vlaneseq
      %v8269 = vshrl.u32 %v8268, 7
      %v8270 = vsub.s32 %v8267, %v8269
      %v8271 = vrot.slane %v8249, %v8270
      %v8273 = vunpack.c.l.s4 1966171168
      %v8274 = vunpack.c.0.s8 %v8273
      %v8275 = vlaneseq
      %v8276 = vshrl.u32 %v8275, 7
      %v8277 = vsub.s32 %v8274, %v8276
      %v8278 = vrot.slane %v8250, %v8277
      %v8279 = vcombine.low %v8257, %v8264
      %v8280 = vcombine.low %v8271, %v8278
      %v8282 = vunpack.c.l.s4 1966171168
      %v8283 = vunpack.c.0.s8 %v8282
      %v8284 = vlaneseq
      %v8285 = vshrl.u32 %v8284, 7
      %v8286 = vsub.s32 %v8283, %v8285
      %v8287 = vrot.slane %v8279, %v8286
      %v8289 = vunpack.c.l.s4 1966171168
      %v8290 = vunpack.c.0.s8 %v8289
      %v8291 = vlaneseq
      %v8292 = vshrl.u32 %v8291, 7
      %v8293 = vsub.s32 %v8290, %v8292
      %v8294 = vrot.slane %v8280, %v8293
      %v8295 = vcombine.low %v8287, %v8294
      %v8296 = vcombine.low %v7991, %v7999
      %v8298 = vunpack.c.l.s4 1966171168
      %v8299 = vunpack.c.0.s8 %v8298
      %v8300 = vlaneseq
      %v8301 = vshrl.u32 %v8300, 7
      %v8302 = vsub.s32 %v8299, %v8301
      %v8303 = vrot.slane %v8296, %v8302
      %v8305 = vunpack.c.l.s4 1966171168
      %v8306 = vunpack.c.0.s8 %v8305
      %v8307 = vlaneseq
      %v8308 = vshrl.u32 %v8307, 7
      %v8309 = vsub.s32 %v8306, %v8308
      %v8310 = vrot.slane %v8303, %v8309
      %v8312 = vsel %vm1623, %v8050, 0
      %v8315 = vsel %vm1623, %v8099, 0
      %v8318 = vsel %vm1623, %v8148, 0
      %v8321 = vsel %vm1623, %v8197, 0
      %v8324 = vsel %vm1623, %v8246, 0
      %v8327 = vsel %vm1623, %v8295, 0
      %v8330 = vsel %vm1623, %v8310, 0
      %v8333 = vsel %vm1645, %v8001, 0
      %8335 = vmatprep.subr.bf16.mxu0 0
      %8336 = vmatpush1.bf16.msra.mxu0 %v8333
      %8337 = vmatprep.subr.bf16.mxu0 0
      %8338 = vmatpush1.bf16.msra.mxu0 0
      %8339 = vmatprep.subr.bf16.mxu0 0
      %8340 = vmatpush1.bf16.msra.mxu0 0
      %8341 = vmatprep.subr.bf16.mxu0 0
      %8342 = vmatpush1.bf16.msra.mxu0 0
      %8343 = vmatprep.subr.bf16.mxu0 0
      %8344 = vmatpush1.bf16.msra.mxu0 0
      %8345 = vmatprep.subr.bf16.mxu0 0
      %8346 = vmatpush1.bf16.msra.mxu0 0
      %8347 = vmatprep.subr.bf16.mxu0 0
      %8348 = vmatpush1.bf16.msra.mxu0 0
      %8349 = vmatprep.subr.bf16.mxu0 0
      %8350 = vmatpush1.bf16.msra.mxu0 0
      %8351 = vmatprep.subr.bf16.mxu0 0
      %8352 = vmatpush1.bf16.msra.mxu0 0
      %8353 = vmatprep.subr.bf16.mxu0 0
      %8354 = vmatpush1.bf16.msra.mxu0 0
      %8355 = vmatprep.subr.bf16.mxu0 0
      %8356 = vmatpush1.bf16.msra.mxu0 0
      %8357 = vmatprep.subr.bf16.mxu0 0
      %8358 = vmatpush1.bf16.msra.mxu0 0
      %8359 = vmatprep.subr.bf16.mxu0 0
      %8360 = vmatpush1.bf16.msra.mxu0 0
      %8361 = vmatprep.subr.bf16.mxu0 0
      %8362 = vmatpush1.bf16.msra.mxu0 0
      %8363 = vmatprep.subr.bf16.mxu0 0
      %8364 = vmatpush1.bf16.msra.mxu0 0
      %8365 = vmatprep.subr.bf16.mxu0 0
      %8366 = vmatpush1.bf16.msra.mxu0 0
      %8367 = vmatprep.mubr.bf16.mxu0 0
      %8368 = vmatmul.mubr.bf16.gmra.mrb[0].mxu0 %v8312
      %v8369 = vpop.f32.mrb[0].mxu0
      %v8370 = vadd.f32 0.0, %v8369
      %v8371 = vpop.f32.mrb[0].mxu0
      %v8372 = vpop.f32.mrb[0].mxu0
      %v8373 = vadd.f32 0.0, %v8372
      %v8374 = vpop.f32.mrb[0].mxu0
      %8375 = vmatprep.mubr.bf16.mxu0 0
      %8376 = vmatmul.mubr.bf16.gmra.mrb[0].mxu0 %v8315
      %v8377 = vpop.f32.mrb[0].mxu0
      %v8378 = vadd.f32 0.0, %v8377
      %v8379 = vpop.f32.mrb[0].mxu0
      %v8380 = vpop.f32.mrb[0].mxu0
      %v8381 = vadd.f32 0.0, %v8380
      %v8382 = vpop.f32.mrb[0].mxu0
      %8383 = vmatprep.mubr.bf16.mxu0 0
      %8384 = vmatmul.mubr.bf16.gmra.mrb[0].mxu0 %v8318
      %v8385 = vpop.f32.mrb[0].mxu0
      %v8386 = vadd.f32 0.0, %v8385
      %v8387 = vpop.f32.mrb[0].mxu0
      %v8388 = vpop.f32.mrb[0].mxu0
      %v8389 = vadd.f32 0.0, %v8388
      %v8390 = vpop.f32.mrb[0].mxu0
      %8391 = vmatprep.mubr.bf16.mxu0 0
      %8392 = vmatmul.mubr.bf16.gmra.mrb[0].mxu0 %v8321
      %v8393 = vpop.f32.mrb[0].mxu0
      %v8394 = vadd.f32 0.0, %v8393
      %v8395 = vpop.f32.mrb[0].mxu0
      %v8396 = vpop.f32.mrb[0].mxu0
      %v8397 = vadd.f32 0.0, %v8396
      %v8398 = vpop.f32.mrb[0].mxu0
      %8399 = vmatprep.mubr.bf16.mxu0 0
      %8400 = vmatmul.mubr.bf16.gmra.mrb[0].mxu0 %v8324
      %v8401 = vpop.f32.mrb[0].mxu0
      %v8402 = vadd.f32 0.0, %v8401
      %v8403 = vpop.f32.mrb[0].mxu0
      %v8404 = vpop.f32.mrb[0].mxu0
      %v8405 = vadd.f32 0.0, %v8404
      %v8406 = vpop.f32.mrb[0].mxu0
      %8407 = vmatprep.mubr.bf16.mxu0 0
      %8408 = vmatmul.mubr.bf16.gmra.mrb[0].mxu0 %v8327
      %v8409 = vpop.f32.mrb[0].mxu0
      %v8410 = vadd.f32 0.0, %v8409
      %v8411 = vpop.f32.mrb[0].mxu0
      %v8412 = vpop.f32.mrb[0].mxu0
      %v8413 = vadd.f32 0.0, %v8412
      %v8414 = vpop.f32.mrb[0].mxu0
      %8415 = vmatprep.mubr.bf16.mxu0 0
      %8416 = vmatmul.mubr.bf16.gmra.mrb[0].mxu0 %v8330
      %v8417 = vpop.f32.mrb[0].mxu0
      %v8418 = vadd.f32 0.0, %v8417
      %v8419 = vpop.f32.mrb[0].mxu0
      %v8420 = vpop.f32.mrb[0].mxu0
      %v8421 = vpop.f32.mrb[0].mxu0
      %8422 = vdwg.mxu0
      %v8423 = vadd.f32 %v7077, %v8370
      %v8424 = vadd.f32 %v7078, %v8373
      %v8425 = vadd.f32 %v7079, %v8378
      %v8426 = vadd.f32 %v7080, %v8381
      %v8427 = vadd.f32 %v7081, %v8386
      %v8428 = vadd.f32 %v7082, %v8389
      %v8429 = vadd.f32 %v7083, %v8394
      %v8430 = vadd.f32 %v7084, %v8397
      %v8431 = vadd.f32 %v7085, %v8402
      %v8432 = vadd.f32 %v7086, %v8405
      %v8433 = vadd.f32 %v7087, %v8410
      %v8434 = vadd.f32 %v7088, %v8413
      %v8435 = vadd.f32 %v7089, %v8418
      %v8436 = vld [vmem:[%s6233] sm:$0xe]
      %v8437 = vld [vmem:[%s6233 + $0x4] sm:$0x3]
      %v8438 = vld [vmem:[%s6233 + $0x8] sm:$0xe]
      %v8439 = vld [vmem:[%s6233 + $0xc] sm:$0x3]
      %v8440 = vld [vmem:[%s6233 + $0x10] sm:$0xe]
      %v8441 = vld [vmem:[%s6233 + $0x14] sm:$0x3]
      %v8442 = vld [vmem:[%s6233 + $0x18] sm:$0xe]
      %v8443 = vld [vmem:[%s6233 + $0x1c] sm:$0x3]
      %v8444 = vld [vmem:[%s6233 + $0x20] sm:$0xe]
      %v8445 = vld [vmem:[%s6233 + $0x24] sm:$0x3]
      %v8446 = vld [vmem:[%s6233 + $0x28] sm:$0xe]
      %v8447 = vld [vmem:[%s6233 + $0x2c] sm:$0x3]
      %v8448 = vld [vmem:[%s6233 + $0x30] sm:$0xe]
      %v8449 = vld [vmem:[%s6233 + $0x34] sm:$0x3]
      %v8450 = vld [vmem:[%s6233 + $0x38] sm:$0xe]
      %v8451 = vld [vmem:[%s6233 + $0x3c] sm:$0x3]
      %v8452 = vld [vmem:[%s6233 + $0x40] sm:$0xe]
      %v8453 = vld [vmem:[%s6233 + $0x44] sm:$0x3]
      %v8454 = vld [vmem:[%s6233 + $0x48] sm:$0xe]
      %v8455 = vld [vmem:[%s6233 + $0x4c] sm:$0x3]
      %v8477 = vunpack.c.l.s4 1966171168
      %v8478 = vunpack.c.0.s8 %v8477
      %v8479 = vlaneseq
      %v8480 = vshrl.u32 %v8479, 7
      %v8481 = vsub.s32 %v8478, %v8480
      %v8482 = vrot.slane %v8436, %v8481
      %v8483 = vcombine.high %v8482, %v8482
      %v8485 = vunpack.c.l.s4 1966171168
      %v8486 = vunpack.c.0.s8 %v8485
      %v8487 = vlaneseq
      %v8488 = vshrl.u32 %v8487, 7
      %v8489 = vsub.s32 %v8486, %v8488
      %v8490 = vrot.slane %v8482, %v8489
      %v8492 = vunpack.c.l.s4 1966171168
      %v8493 = vunpack.c.0.s8 %v8492
      %v8494 = vlaneseq
      %v8495 = vshrl.u32 %v8494, 7
      %v8496 = vsub.s32 %v8493, %v8495
      %v8497 = vrot.slane %v8483, %v8496
      %v8498 = vcombine.high %v8490, %v8490
      %v8499 = vcombine.high %v8497, %v8497
      %v8501 = vunpack.c.l.s4 1966171168
      %v8502 = vunpack.c.0.s8 %v8501
      %v8503 = vlaneseq
      %v8504 = vshrl.u32 %v8503, 7
      %v8505 = vsub.s32 %v8502, %v8504
      %v8506 = vrot.slane %v8437, %v8505
      %v8507 = vcombine.high %v8506, %v8506
      %v8509 = vunpack.c.l.s4 1966171168
      %v8510 = vunpack.c.0.s8 %v8509
      %v8511 = vlaneseq
      %v8512 = vshrl.u32 %v8511, 7
      %v8513 = vsub.s32 %v8510, %v8512
      %v8514 = vrot.slane %v8506, %v8513
      %v8516 = vunpack.c.l.s4 1966171168
      %v8517 = vunpack.c.0.s8 %v8516
      %v8518 = vlaneseq
      %v8519 = vshrl.u32 %v8518, 7
      %v8520 = vsub.s32 %v8517, %v8519
      %v8521 = vrot.slane %v8507, %v8520
      %v8523 = vunpack.c.l.s4 1966171168
      %v8524 = vunpack.c.0.s8 %v8523
      %v8525 = vlaneseq
      %v8526 = vshrl.u32 %v8525, 7
      %v8527 = vsub.s32 %v8524, %v8526
      %v8528 = vrot.slane %v8438, %v8527
      %v8529 = vcombine.high %v8528, %v8528
      %v8531 = vunpack.c.l.s4 1966171168
      %v8532 = vunpack.c.0.s8 %v8531
      %v8533 = vlaneseq
      %v8534 = vshrl.u32 %v8533, 7
      %v8535 = vsub.s32 %v8532, %v8534
      %v8536 = vrot.slane %v8528, %v8535
      %v8538 = vunpack.c.l.s4 1966171168
      %v8539 = vunpack.c.0.s8 %v8538
      %v8540 = vlaneseq
      %v8541 = vshrl.u32 %v8540, 7
      %v8542 = vsub.s32 %v8539, %v8541
      %v8543 = vrot.slane %v8529, %v8542
      %v8544 = vcombine.high %v8536, %v8536
      %v8545 = vcombine.high %v8543, %v8543
      %v8547 = vunpack.c.l.s4 1966171168
      %v8548 = vunpack.c.0.s8 %v8547
      %v8549 = vlaneseq
      %v8550 = vshrl.u32 %v8549, 7
      %v8551 = vsub.s32 %v8548, %v8550
      %v8552 = vrot.slane %v8439, %v8551
      %v8553 = vcombine.high %v8552, %v8552
      %v8555 = vunpack.c.l.s4 1966171168
      %v8556 = vunpack.c.0.s8 %v8555
      %v8557 = vlaneseq
      %v8558 = vshrl.u32 %v8557, 7
      %v8559 = vsub.s32 %v8556, %v8558
      %v8560 = vrot.slane %v8552, %v8559
      %v8562 = vunpack.c.l.s4 1966171168
      %v8563 = vunpack.c.0.s8 %v8562
      %v8564 = vlaneseq
      %v8565 = vshrl.u32 %v8564, 7
      %v8566 = vsub.s32 %v8563, %v8565
      %v8567 = vrot.slane %v8553, %v8566
      %v8569 = vunpack.c.l.s4 1966171168
      %v8570 = vunpack.c.0.s8 %v8569
      %v8571 = vlaneseq
      %v8572 = vshrl.u32 %v8571, 7
      %v8573 = vsub.s32 %v8570, %v8572
      %v8574 = vrot.slane %v8440, %v8573
      %v8575 = vcombine.high %v8574, %v8574
      %v8577 = vunpack.c.l.s4 1966171168
      %v8578 = vunpack.c.0.s8 %v8577
      %v8579 = vlaneseq
      %v8580 = vshrl.u32 %v8579, 7
      %v8581 = vsub.s32 %v8578, %v8580
      %v8582 = vrot.slane %v8574, %v8581
      %v8584 = vunpack.c.l.s4 1966171168
      %v8585 = vunpack.c.0.s8 %v8584
      %v8586 = vlaneseq
      %v8587 = vshrl.u32 %v8586, 7
      %v8588 = vsub.s32 %v8585, %v8587
      %v8589 = vrot.slane %v8575, %v8588
      %v8590 = vcombine.high %v8582, %v8582
      %v8591 = vcombine.high %v8589, %v8589
      %v8593 = vunpack.c.l.s4 1966171168
      %v8594 = vunpack.c.0.s8 %v8593
      %v8595 = vlaneseq
      %v8596 = vshrl.u32 %v8595, 7
      %v8597 = vsub.s32 %v8594, %v8596
      %v8598 = vrot.slane %v8441, %v8597
      %v8599 = vcombine.high %v8598, %v8598
      %v8601 = vunpack.c.l.s4 1966171168
      %v8602 = vunpack.c.0.s8 %v8601
      %v8603 = vlaneseq
      %v8604 = vshrl.u32 %v8603, 7
      %v8605 = vsub.s32 %v8602, %v8604
      %v8606 = vrot.slane %v8598, %v8605
      %v8608 = vunpack.c.l.s4 1966171168
      %v8609 = vunpack.c.0.s8 %v8608
      %v8610 = vlaneseq
      %v8611 = vshrl.u32 %v8610, 7
      %v8612 = vsub.s32 %v8609, %v8611
      %v8613 = vrot.slane %v8599, %v8612
      %v8615 = vunpack.c.l.s4 1966171168
      %v8616 = vunpack.c.0.s8 %v8615
      %v8617 = vlaneseq
      %v8618 = vshrl.u32 %v8617, 7
      %v8619 = vsub.s32 %v8616, %v8618
      %v8620 = vrot.slane %v8442, %v8619
      %v8621 = vcombine.high %v8620, %v8620
      %v8623 = vunpack.c.l.s4 1966171168
      %v8624 = vunpack.c.0.s8 %v8623
      %v8625 = vlaneseq
      %v8626 = vshrl.u32 %v8625, 7
      %v8627 = vsub.s32 %v8624, %v8626
      %v8628 = vrot.slane %v8620, %v8627
      %v8630 = vunpack.c.l.s4 1966171168
      %v8631 = vunpack.c.0.s8 %v8630
      %v8632 = vlaneseq
      %v8633 = vshrl.u32 %v8632, 7
      %v8634 = vsub.s32 %v8631, %v8633
      %v8635 = vrot.slane %v8621, %v8634
      %v8636 = vcombine.high %v8628, %v8628
      %v8637 = vcombine.high %v8635, %v8635
      %v8639 = vunpack.c.l.s4 1966171168
      %v8640 = vunpack.c.0.s8 %v8639
      %v8641 = vlaneseq
      %v8642 = vshrl.u32 %v8641, 7
      %v8643 = vsub.s32 %v8640, %v8642
      %v8644 = vrot.slane %v8443, %v8643
      %v8645 = vcombine.high %v8644, %v8644
      %v8647 = vunpack.c.l.s4 1966171168
      %v8648 = vunpack.c.0.s8 %v8647
      %v8649 = vlaneseq
      %v8650 = vshrl.u32 %v8649, 7
      %v8651 = vsub.s32 %v8648, %v8650
      %v8652 = vrot.slane %v8644, %v8651
      %v8654 = vunpack.c.l.s4 1966171168
      %v8655 = vunpack.c.0.s8 %v8654
      %v8656 = vlaneseq
      %v8657 = vshrl.u32 %v8656, 7
      %v8658 = vsub.s32 %v8655, %v8657
      %v8659 = vrot.slane %v8645, %v8658
      %v8661 = vunpack.c.l.s4 1966171168
      %v8662 = vunpack.c.0.s8 %v8661
      %v8663 = vlaneseq
      %v8664 = vshrl.u32 %v8663, 7
      %v8665 = vsub.s32 %v8662, %v8664
      %v8666 = vrot.slane %v8444, %v8665
      %v8667 = vcombine.high %v8666, %v8666
      %v8669 = vunpack.c.l.s4 1966171168
      %v8670 = vunpack.c.0.s8 %v8669
      %v8671 = vlaneseq
      %v8672 = vshrl.u32 %v8671, 7
      %v8673 = vsub.s32 %v8670, %v8672
      %v8674 = vrot.slane %v8666, %v8673
      %v8676 = vunpack.c.l.s4 1966171168
      %v8677 = vunpack.c.0.s8 %v8676
      %v8678 = vlaneseq
      %v8679 = vshrl.u32 %v8678, 7
      %v8680 = vsub.s32 %v8677, %v8679
      %v8681 = vrot.slane %v8667, %v8680
      %v8682 = vcombine.high %v8674, %v8674
      %v8683 = vcombine.high %v8681, %v8681
      %v8685 = vunpack.c.l.s4 1966171168
      %v8686 = vunpack.c.0.s8 %v8685
      %v8687 = vlaneseq
      %v8688 = vshrl.u32 %v8687, 7
      %v8689 = vsub.s32 %v8686, %v8688
      %v8690 = vrot.slane %v8445, %v8689
      %v8691 = vcombine.high %v8690, %v8690
      %v8693 = vunpack.c.l.s4 1966171168
      %v8694 = vunpack.c.0.s8 %v8693
      %v8695 = vlaneseq
      %v8696 = vshrl.u32 %v8695, 7
      %v8697 = vsub.s32 %v8694, %v8696
      %v8698 = vrot.slane %v8690, %v8697
      %v8700 = vunpack.c.l.s4 1966171168
      %v8701 = vunpack.c.0.s8 %v8700
      %v8702 = vlaneseq
      %v8703 = vshrl.u32 %v8702, 7
      %v8704 = vsub.s32 %v8701, %v8703
      %v8705 = vrot.slane %v8691, %v8704
      %v8707 = vunpack.c.l.s4 1966171168
      %v8708 = vunpack.c.0.s8 %v8707
      %v8709 = vlaneseq
      %v8710 = vshrl.u32 %v8709, 7
      %v8711 = vsub.s32 %v8708, %v8710
      %v8712 = vrot.slane %v8446, %v8711
      %v8713 = vcombine.high %v8712, %v8712
      %v8715 = vunpack.c.l.s4 1966171168
      %v8716 = vunpack.c.0.s8 %v8715
      %v8717 = vlaneseq
      %v8718 = vshrl.u32 %v8717, 7
      %v8719 = vsub.s32 %v8716, %v8718
      %v8720 = vrot.slane %v8712, %v8719
      %v8722 = vunpack.c.l.s4 1966171168
      %v8723 = vunpack.c.0.s8 %v8722
      %v8724 = vlaneseq
      %v8725 = vshrl.u32 %v8724, 7
      %v8726 = vsub.s32 %v8723, %v8725
      %v8727 = vrot.slane %v8713, %v8726
      %v8728 = vcombine.high %v8720, %v8720
      %v8729 = vcombine.high %v8727, %v8727
      %v8731 = vunpack.c.l.s4 1966171168
      %v8732 = vunpack.c.0.s8 %v8731
      %v8733 = vlaneseq
      %v8734 = vshrl.u32 %v8733, 7
      %v8735 = vsub.s32 %v8732, %v8734
      %v8736 = vrot.slane %v8447, %v8735
      %v8737 = vcombine.high %v8736, %v8736
      %v8739 = vunpack.c.l.s4 1966171168
      %v8740 = vunpack.c.0.s8 %v8739
      %v8741 = vlaneseq
      %v8742 = vshrl.u32 %v8741, 7
      %v8743 = vsub.s32 %v8740, %v8742
      %v8744 = vrot.slane %v8736, %v8743
      %v8746 = vunpack.c.l.s4 1966171168
      %v8747 = vunpack.c.0.s8 %v8746
      %v8748 = vlaneseq
      %v8749 = vshrl.u32 %v8748, 7
      %v8750 = vsub.s32 %v8747, %v8749
      %v8751 = vrot.slane %v8737, %v8750
      %v8753 = vunpack.c.l.s4 1966171168
      %v8754 = vunpack.c.0.s8 %v8753
      %v8755 = vlaneseq
      %v8756 = vshrl.u32 %v8755, 7
      %v8757 = vsub.s32 %v8754, %v8756
      %v8758 = vrot.slane %v8448, %v8757
      %v8759 = vcombine.high %v8758, %v8758
      %v8761 = vunpack.c.l.s4 1966171168
      %v8762 = vunpack.c.0.s8 %v8761
      %v8763 = vlaneseq
      %v8764 = vshrl.u32 %v8763, 7
      %v8765 = vsub.s32 %v8762, %v8764
      %v8766 = vrot.slane %v8758, %v8765
      %v8768 = vunpack.c.l.s4 1966171168
      %v8769 = vunpack.c.0.s8 %v8768
      %v8770 = vlaneseq
      %v8771 = vshrl.u32 %v8770, 7
      %v8772 = vsub.s32 %v8769, %v8771
      %v8773 = vrot.slane %v8759, %v8772
      %v8774 = vcombine.high %v8766, %v8766
      %v8775 = vcombine.high %v8773, %v8773
      %v8777 = vunpack.c.l.s4 1966171168
      %v8778 = vunpack.c.0.s8 %v8777
      %v8779 = vlaneseq
      %v8780 = vshrl.u32 %v8779, 7
      %v8781 = vsub.s32 %v8778, %v8780
      %v8782 = vrot.slane %v8449, %v8781
      %v8783 = vcombine.high %v8782, %v8782
      %v8785 = vunpack.c.l.s4 1966171168
      %v8786 = vunpack.c.0.s8 %v8785
      %v8787 = vlaneseq
      %v8788 = vshrl.u32 %v8787, 7
      %v8789 = vsub.s32 %v8786, %v8788
      %v8790 = vrot.slane %v8782, %v8789
      %v8792 = vunpack.c.l.s4 1966171168
      %v8793 = vunpack.c.0.s8 %v8792
      %v8794 = vlaneseq
      %v8795 = vshrl.u32 %v8794, 7
      %v8796 = vsub.s32 %v8793, %v8795
      %v8797 = vrot.slane %v8783, %v8796
      %v8799 = vunpack.c.l.s4 1966171168
      %v8800 = vunpack.c.0.s8 %v8799
      %v8801 = vlaneseq
      %v8802 = vshrl.u32 %v8801, 7
      %v8803 = vsub.s32 %v8800, %v8802
      %v8804 = vrot.slane %v8450, %v8803
      %v8805 = vcombine.high %v8804, %v8804
      %v8807 = vunpack.c.l.s4 1966171168
      %v8808 = vunpack.c.0.s8 %v8807
      %v8809 = vlaneseq
      %v8810 = vshrl.u32 %v8809, 7
      %v8811 = vsub.s32 %v8808, %v8810
      %v8812 = vrot.slane %v8804, %v8811
      %v8814 = vunpack.c.l.s4 1966171168
      %v8815 = vunpack.c.0.s8 %v8814
      %v8816 = vlaneseq
      %v8817 = vshrl.u32 %v8816, 7
      %v8818 = vsub.s32 %v8815, %v8817
      %v8819 = vrot.slane %v8805, %v8818
      %v8820 = vcombine.high %v8812, %v8812
      %v8821 = vcombine.high %v8819, %v8819
      %v8823 = vunpack.c.l.s4 1966171168
      %v8824 = vunpack.c.0.s8 %v8823
      %v8825 = vlaneseq
      %v8826 = vshrl.u32 %v8825, 7
      %v8827 = vsub.s32 %v8824, %v8826
      %v8828 = vrot.slane %v8451, %v8827
      %v8829 = vcombine.high %v8828, %v8828
      %v8831 = vunpack.c.l.s4 1966171168
      %v8832 = vunpack.c.0.s8 %v8831
      %v8833 = vlaneseq
      %v8834 = vshrl.u32 %v8833, 7
      %v8835 = vsub.s32 %v8832, %v8834
      %v8836 = vrot.slane %v8828, %v8835
      %v8838 = vunpack.c.l.s4 1966171168
      %v8839 = vunpack.c.0.s8 %v8838
      %v8840 = vlaneseq
      %v8841 = vshrl.u32 %v8840, 7
      %v8842 = vsub.s32 %v8839, %v8841
      %v8843 = vrot.slane %v8829, %v8842
      %v8845 = vunpack.c.l.s4 1966171168
      %v8846 = vunpack.c.0.s8 %v8845
      %v8847 = vlaneseq
      %v8848 = vshrl.u32 %v8847, 7
      %v8849 = vsub.s32 %v8846, %v8848
      %v8850 = vrot.slane %v8452, %v8849
      %v8851 = vcombine.high %v8850, %v8850
      %v8853 = vunpack.c.l.s4 1966171168
      %v8854 = vunpack.c.0.s8 %v8853
      %v8855 = vlaneseq
      %v8856 = vshrl.u32 %v8855, 7
      %v8857 = vsub.s32 %v8854, %v8856
      %v8858 = vrot.slane %v8850, %v8857
      %v8860 = vunpack.c.l.s4 1966171168
      %v8861 = vunpack.c.0.s8 %v8860
      %v8862 = vlaneseq
      %v8863 = vshrl.u32 %v8862, 7
      %v8864 = vsub.s32 %v8861, %v8863
      %v8865 = vrot.slane %v8851, %v8864
      %v8866 = vcombine.high %v8858, %v8858
      %v8867 = vcombine.high %v8865, %v8865
      %v8869 = vunpack.c.l.s4 1966171168
      %v8870 = vunpack.c.0.s8 %v8869
      %v8871 = vlaneseq
      %v8872 = vshrl.u32 %v8871, 7
      %v8873 = vsub.s32 %v8870, %v8872
      %v8874 = vrot.slane %v8453, %v8873
      %v8875 = vcombine.high %v8874, %v8874
      %v8877 = vunpack.c.l.s4 1966171168
      %v8878 = vunpack.c.0.s8 %v8877
      %v8879 = vlaneseq
      %v8880 = vshrl.u32 %v8879, 7
      %v8881 = vsub.s32 %v8878, %v8880
      %v8882 = vrot.slane %v8874, %v8881
      %v8884 = vunpack.c.l.s4 1966171168
      %v8885 = vunpack.c.0.s8 %v8884
      %v8886 = vlaneseq
      %v8887 = vshrl.u32 %v8886, 7
      %v8888 = vsub.s32 %v8885, %v8887
      %v8889 = vrot.slane %v8875, %v8888
      %v8891 = vunpack.c.l.s4 1966171168
      %v8892 = vunpack.c.0.s8 %v8891
      %v8893 = vlaneseq
      %v8894 = vshrl.u32 %v8893, 7
      %v8895 = vsub.s32 %v8892, %v8894
      %v8896 = vrot.slane %v8454, %v8895
      %v8897 = vcombine.high %v8896, %v8896
      %v8899 = vunpack.c.l.s4 1966171168
      %v8900 = vunpack.c.0.s8 %v8899
      %v8901 = vlaneseq
      %v8902 = vshrl.u32 %v8901, 7
      %v8903 = vsub.s32 %v8900, %v8902
      %v8904 = vrot.slane %v8896, %v8903
      %v8906 = vunpack.c.l.s4 1966171168
      %v8907 = vunpack.c.0.s8 %v8906
      %v8908 = vlaneseq
      %v8909 = vshrl.u32 %v8908, 7
      %v8910 = vsub.s32 %v8907, %v8909
      %v8911 = vrot.slane %v8897, %v8910
      %v8912 = vcombine.high %v8904, %v8904
      %v8913 = vcombine.high %v8911, %v8911
      %v8915 = vunpack.c.l.s4 1966171168
      %v8916 = vunpack.c.0.s8 %v8915
      %v8917 = vlaneseq
      %v8918 = vshrl.u32 %v8917, 7
      %v8919 = vsub.s32 %v8916, %v8918
      %v8920 = vrot.slane %v8455, %v8919
      %v8921 = vcombine.high %v8920, %v8920
      %v8923 = vunpack.c.l.s4 1966171168
      %v8924 = vunpack.c.0.s8 %v8923
      %v8925 = vlaneseq
      %v8926 = vshrl.u32 %v8925, 7
      %v8927 = vsub.s32 %v8924, %v8926
      %v8928 = vrot.slane %v8920, %v8927
      %v8930 = vunpack.c.l.s4 1966171168
      %v8931 = vunpack.c.0.s8 %v8930
      %v8932 = vlaneseq
      %v8933 = vshrl.u32 %v8932, 7
      %v8934 = vsub.s32 %v8931, %v8933
      %v8935 = vrot.slane %v8921, %v8934
      %s8936 = scalar_lea.vmem %s1, 32
      %v8937 = vld [vmem:[%s8936] sm:$0xf]
      %v8938 = vcombine.low %v8497, %v8498
      %v8939 = vcombine.low %v8499, %v8514
      %v8940 = vcombine.low %v8521, %v8543
      %v8941 = vcombine.low %v8544, %v8545
      %v8943 = vunpack.c.l.s4 1966171168
      %v8944 = vunpack.c.0.s8 %v8943
      %v8945 = vlaneseq
      %v8946 = vshrl.u32 %v8945, 7
      %v8947 = vsub.s32 %v8944, %v8946
      %v8948 = vrot.slane %v8938, %v8947
      %v8950 = vunpack.c.l.s4 1966171168
      %v8951 = vunpack.c.0.s8 %v8950
      %v8952 = vlaneseq
      %v8953 = vshrl.u32 %v8952, 7
      %v8954 = vsub.s32 %v8951, %v8953
      %v8955 = vrot.slane %v8939, %v8954
      %v8957 = vunpack.c.l.s4 1966171168
      %v8958 = vunpack.c.0.s8 %v8957
      %v8959 = vlaneseq
      %v8960 = vshrl.u32 %v8959, 7
      %v8961 = vsub.s32 %v8958, %v8960
      %v8962 = vrot.slane %v8940, %v8961
      %v8964 = vunpack.c.l.s4 1966171168
      %v8965 = vunpack.c.0.s8 %v8964
      %v8966 = vlaneseq
      %v8967 = vshrl.u32 %v8966, 7
      %v8968 = vsub.s32 %v8965, %v8967
      %v8969 = vrot.slane %v8941, %v8968
      %v8970 = vcombine.low %v8948, %v8955
      %v8971 = vcombine.low %v8962, %v8969
      %v8973 = vunpack.c.l.s4 1966171168
      %v8974 = vunpack.c.0.s8 %v8973
      %v8975 = vlaneseq
      %v8976 = vshrl.u32 %v8975, 7
      %v8977 = vsub.s32 %v8974, %v8976
      %v8978 = vrot.slane %v8970, %v8977
      %v8980 = vunpack.c.l.s4 1966171168
      %v8981 = vunpack.c.0.s8 %v8980
      %v8982 = vlaneseq
      %v8983 = vshrl.u32 %v8982, 7
      %v8984 = vsub.s32 %v8981, %v8983
      %v8985 = vrot.slane %v8971, %v8984
      %v8986 = vcombine.low %v8978, %v8985
      %v8987 = vcombine.low %v8560, %v8567
      %v8988 = vcombine.low %v8589, %v8590
      %v8989 = vcombine.low %v8591, %v8606
      %v8990 = vcombine.low %v8613, %v8635
      %v8992 = vunpack.c.l.s4 1966171168
      %v8993 = vunpack.c.0.s8 %v8992
      %v8994 = vlaneseq
      %v8995 = vshrl.u32 %v8994, 7
      %v8996 = vsub.s32 %v8993, %v8995
      %v8997 = vrot.slane %v8987, %v8996
      %v8999 = vunpack.c.l.s4 1966171168
      %v9000 = vunpack.c.0.s8 %v8999
      %v9001 = vlaneseq
      %v9002 = vshrl.u32 %v9001, 7
      %v9003 = vsub.s32 %v9000, %v9002
      %v9004 = vrot.slane %v8988, %v9003
      %v9006 = vunpack.c.l.s4 1966171168
      %v9007 = vunpack.c.0.s8 %v9006
      %v9008 = vlaneseq
      %v9009 = vshrl.u32 %v9008, 7
      %v9010 = vsub.s32 %v9007, %v9009
      %v9011 = vrot.slane %v8989, %v9010
      %v9013 = vunpack.c.l.s4 1966171168
      %v9014 = vunpack.c.0.s8 %v9013
      %v9015 = vlaneseq
      %v9016 = vshrl.u32 %v9015, 7
      %v9017 = vsub.s32 %v9014, %v9016
      %v9018 = vrot.slane %v8990, %v9017
      %v9019 = vcombine.low %v8997, %v9004
      %v9020 = vcombine.low %v9011, %v9018
      %v9022 = vunpack.c.l.s4 1966171168
      %v9023 = vunpack.c.0.s8 %v9022
      %v9024 = vlaneseq
      %v9025 = vshrl.u32 %v9024, 7
      %v9026 = vsub.s32 %v9023, %v9025
      %v9027 = vrot.slane %v9019, %v9026
      %v9029 = vunpack.c.l.s4 1966171168
      %v9030 = vunpack.c.0.s8 %v9029
      %v9031 = vlaneseq
      %v9032 = vshrl.u32 %v9031, 7
      %v9033 = vsub.s32 %v9030, %v9032
      %v9034 = vrot.slane %v9020, %v9033
      %v9035 = vcombine.low %v9027, %v9034
      %v9036 = vcombine.low %v8636, %v8637
      %v9037 = vcombine.low %v8652, %v8659
      %v9038 = vcombine.low %v8681, %v8682
      %v9039 = vcombine.low %v8683, %v8698
      %v9041 = vunpack.c.l.s4 1966171168
      %v9042 = vunpack.c.0.s8 %v9041
      %v9043 = vlaneseq
      %v9044 = vshrl.u32 %v9043, 7
      %v9045 = vsub.s32 %v9042, %v9044
      %v9046 = vrot.slane %v9036, %v9045
      %v9048 = vunpack.c.l.s4 1966171168
      %v9049 = vunpack.c.0.s8 %v9048
      %v9050 = vlaneseq
      %v9051 = vshrl.u32 %v9050, 7
      %v9052 = vsub.s32 %v9049, %v9051
      %v9053 = vrot.slane %v9037, %v9052
      %v9055 = vunpack.c.l.s4 1966171168
      %v9056 = vunpack.c.0.s8 %v9055
      %v9057 = vlaneseq
      %v9058 = vshrl.u32 %v9057, 7
      %v9059 = vsub.s32 %v9056, %v9058
      %v9060 = vrot.slane %v9038, %v9059
      %v9062 = vunpack.c.l.s4 1966171168
      %v9063 = vunpack.c.0.s8 %v9062
      %v9064 = vlaneseq
      %v9065 = vshrl.u32 %v9064, 7
      %v9066 = vsub.s32 %v9063, %v9065
      %v9067 = vrot.slane %v9039, %v9066
      %v9068 = vcombine.low %v9046, %v9053
      %v9069 = vcombine.low %v9060, %v9067
      %v9071 = vunpack.c.l.s4 1966171168
      %v9072 = vunpack.c.0.s8 %v9071
      %v9073 = vlaneseq
      %v9074 = vshrl.u32 %v9073, 7
      %v9075 = vsub.s32 %v9072, %v9074
      %v9076 = vrot.slane %v9068, %v9075
      %v9078 = vunpack.c.l.s4 1966171168
      %v9079 = vunpack.c.0.s8 %v9078
      %v9080 = vlaneseq
      %v9081 = vshrl.u32 %v9080, 7
      %v9082 = vsub.s32 %v9079, %v9081
      %v9083 = vrot.slane %v9069, %v9082
      %v9084 = vcombine.low %v9076, %v9083
      %v9085 = vcombine.low %v8705, %v8727
      %v9086 = vcombine.low %v8728, %v8729
      %v9087 = vcombine.low %v8744, %v8751
      %v9088 = vcombine.low %v8773, %v8774
      %v9090 = vunpack.c.l.s4 1966171168
      %v9091 = vunpack.c.0.s8 %v9090
      %v9092 = vlaneseq
      %v9093 = vshrl.u32 %v9092, 7
      %v9094 = vsub.s32 %v9091, %v9093
      %v9095 = vrot.slane %v9085, %v9094
      %v9097 = vunpack.c.l.s4 1966171168
      %v9098 = vunpack.c.0.s8 %v9097
      %v9099 = vlaneseq
      %v9100 = vshrl.u32 %v9099, 7
      %v9101 = vsub.s32 %v9098, %v9100
      %v9102 = vrot.slane %v9086, %v9101
      %v9104 = vunpack.c.l.s4 1966171168
      %v9105 = vunpack.c.0.s8 %v9104
      %v9106 = vlaneseq
      %v9107 = vshrl.u32 %v9106, 7
      %v9108 = vsub.s32 %v9105, %v9107
      %v9109 = vrot.slane %v9087, %v9108
      %v9111 = vunpack.c.l.s4 1966171168
      %v9112 = vunpack.c.0.s8 %v9111
      %v9113 = vlaneseq
      %v9114 = vshrl.u32 %v9113, 7
      %v9115 = vsub.s32 %v9112, %v9114
      %v9116 = vrot.slane %v9088, %v9115
      %v9117 = vcombine.low %v9095, %v9102
      %v9118 = vcombine.low %v9109, %v9116
      %v9120 = vunpack.c.l.s4 1966171168
      %v9121 = vunpack.c.0.s8 %v9120
      %v9122 = vlaneseq
      %v9123 = vshrl.u32 %v9122, 7
      %v9124 = vsub.s32 %v9121, %v9123
      %v9125 = vrot.slane %v9117, %v9124
      %v9127 = vunpack.c.l.s4 1966171168
      %v9128 = vunpack.c.0.s8 %v9127
      %v9129 = vlaneseq
      %v9130 = vshrl.u32 %v9129, 7
      %v9131 = vsub.s32 %v9128, %v9130
      %v9132 = vrot.slane %v9118, %v9131
      %v9133 = vcombine.low %v9125, %v9132
      %v9134 = vcombine.low %v8775, %v8790
      %v9135 = vcombine.low %v8797, %v8819
      %v9136 = vcombine.low %v8820, %v8821
      %v9137 = vcombine.low %v8836, %v8843
      %v9139 = vunpack.c.l.s4 1966171168
      %v9140 = vunpack.c.0.s8 %v9139
      %v9141 = vlaneseq
      %v9142 = vshrl.u32 %v9141, 7
      %v9143 = vsub.s32 %v9140, %v9142
      %v9144 = vrot.slane %v9134, %v9143
      %v9146 = vunpack.c.l.s4 1966171168
      %v9147 = vunpack.c.0.s8 %v9146
      %v9148 = vlaneseq
      %v9149 = vshrl.u32 %v9148, 7
      %v9150 = vsub.s32 %v9147, %v9149
      %v9151 = vrot.slane %v9135, %v9150
      %v9153 = vunpack.c.l.s4 1966171168
      %v9154 = vunpack.c.0.s8 %v9153
      %v9155 = vlaneseq
      %v9156 = vshrl.u32 %v9155, 7
      %v9157 = vsub.s32 %v9154, %v9156
      %v9158 = vrot.slane %v9136, %v9157
      %v9160 = vunpack.c.l.s4 1966171168
      %v9161 = vunpack.c.0.s8 %v9160
      %v9162 = vlaneseq
      %v9163 = vshrl.u32 %v9162, 7
      %v9164 = vsub.s32 %v9161, %v9163
      %v9165 = vrot.slane %v9137, %v9164
      %v9166 = vcombine.low %v9144, %v9151
      %v9167 = vcombine.low %v9158, %v9165
      %v9169 = vunpack.c.l.s4 1966171168
      %v9170 = vunpack.c.0.s8 %v9169
      %v9171 = vlaneseq
      %v9172 = vshrl.u32 %v9171, 7
      %v9173 = vsub.s32 %v9170, %v9172
      %v9174 = vrot.slane %v9166, %v9173
      %v9176 = vunpack.c.l.s4 1966171168
      %v9177 = vunpack.c.0.s8 %v9176
      %v9178 = vlaneseq
      %v9179 = vshrl.u32 %v9178, 7
      %v9180 = vsub.s32 %v9177, %v9179
      %v9181 = vrot.slane %v9167, %v9180
      %v9182 = vcombine.low %v9174, %v9181
      %v9183 = vcombine.low %v8865, %v8866
      %v9184 = vcombine.low %v8867, %v8882
      %v9185 = vcombine.low %v8889, %v8911
      %v9186 = vcombine.low %v8912, %v8913
      %v9188 = vunpack.c.l.s4 1966171168
      %v9189 = vunpack.c.0.s8 %v9188
      %v9190 = vlaneseq
      %v9191 = vshrl.u32 %v9190, 7
      %v9192 = vsub.s32 %v9189, %v9191
      %v9193 = vrot.slane %v9183, %v9192
      %v9195 = vunpack.c.l.s4 1966171168
      %v9196 = vunpack.c.0.s8 %v9195
      %v9197 = vlaneseq
      %v9198 = vshrl.u32 %v9197, 7
      %v9199 = vsub.s32 %v9196, %v9198
      %v9200 = vrot.slane %v9184, %v9199
      %v9202 = vunpack.c.l.s4 1966171168
      %v9203 = vunpack.c.0.s8 %v9202
      %v9204 = vlaneseq
      %v9205 = vshrl.u32 %v9204, 7
      %v9206 = vsub.s32 %v9203, %v9205
      %v9207 = vrot.slane %v9185, %v9206
      %v9209 = vunpack.c.l.s4 1966171168
      %v9210 = vunpack.c.0.s8 %v9209
      %v9211 = vlaneseq
      %v9212 = vshrl.u32 %v9211, 7
      %v9213 = vsub.s32 %v9210, %v9212
      %v9214 = vrot.slane %v9186, %v9213
      %v9215 = vcombine.low %v9193, %v9200
      %v9216 = vcombine.low %v9207, %v9214
      %v9218 = vunpack.c.l.s4 1966171168
      %v9219 = vunpack.c.0.s8 %v9218
      %v9220 = vlaneseq
      %v9221 = vshrl.u32 %v9220, 7
      %v9222 = vsub.s32 %v9219, %v9221
      %v9223 = vrot.slane %v9215, %v9222
      %v9225 = vunpack.c.l.s4 1966171168
      %v9226 = vunpack.c.0.s8 %v9225
      %v9227 = vlaneseq
      %v9228 = vshrl.u32 %v9227, 7
      %v9229 = vsub.s32 %v9226, %v9228
      %v9230 = vrot.slane %v9216, %v9229
      %v9231 = vcombine.low %v9223, %v9230
      %v9232 = vcombine.low %v8928, %v8935
      %v9234 = vunpack.c.l.s4 1966171168
      %v9235 = vunpack.c.0.s8 %v9234
      %v9236 = vlaneseq
      %v9237 = vshrl.u32 %v9236, 7
      %v9238 = vsub.s32 %v9235, %v9237
      %v9239 = vrot.slane %v9232, %v9238
      %v9241 = vunpack.c.l.s4 1966171168
      %v9242 = vunpack.c.0.s8 %v9241
      %v9243 = vlaneseq
      %v9244 = vshrl.u32 %v9243, 7
      %v9245 = vsub.s32 %v9242, %v9244
      %v9246 = vrot.slane %v9239, %v9245
      %v9248 = vsel %vm1623, %v8986, 0
      %v9251 = vsel %vm1623, %v9035, 0
      %v9254 = vsel %vm1623, %v9084, 0
      %v9257 = vsel %vm1623, %v9133, 0
      %v9260 = vsel %vm1623, %v9182, 0
      %v9263 = vsel %vm1623, %v9231, 0
      %v9266 = vsel %vm1623, %v9246, 0
      %v9269 = vsel %vm1645, %v8937, 0
      %9271 = vmatprep.subr.bf16.mxu0 0
      %9272 = vmatpush1.bf16.msra.mxu0 %v9269
      %9273 = vmatprep.subr.bf16.mxu0 0
      %9274 = vmatpush1.bf16.msra.mxu0 0
      %9275 = vmatprep.subr.bf16.mxu0 0
      %9276 = vmatpush1.bf16.msra.mxu0 0
      %9277 = vmatprep.subr.bf16.mxu0 0
      %9278 = vmatpush1.bf16.msra.mxu0 0
      %9279 = vmatprep.subr.bf16.mxu0 0
      %9280 = vmatpush1.bf16.msra.mxu0 0
      %9281 = vmatprep.subr.bf16.mxu0 0
      %9282 = vmatpush1.bf16.msra.mxu0 0
      %9283 = vmatprep.subr.bf16.mxu0 0
      %9284 = vmatpush1.bf16.msra.mxu0 0
      %9285 = vmatprep.subr.bf16.mxu0 0
      %9286 = vmatpush1.bf16.msra.mxu0 0
      %9287 = vmatprep.subr.bf16.mxu0 0
      %9288 = vmatpush1.bf16.msra.mxu0 0
      %9289 = vmatprep.subr.bf16.mxu0 0
      %9290 = vmatpush1.bf16.msra.mxu0 0
      %9291 = vmatprep.subr.bf16.mxu0 0
      %9292 = vmatpush1.bf16.msra.mxu0 0
      %9293 = vmatprep.subr.bf16.mxu0 0
      %9294 = vmatpush1.bf16.msra.mxu0 0
      %9295 = vmatprep.subr.bf16.mxu0 0
      %9296 = vmatpush1.bf16.msra.mxu0 0
      %9297 = vmatprep.subr.bf16.mxu0 0
      %9298 = vmatpush1.bf16.msra.mxu0 0
      %9299 = vmatprep.subr.bf16.mxu0 0
      %9300 = vmatpush1.bf16.msra.mxu0 0
      %9301 = vmatprep.subr.bf16.mxu0 0
      %9302 = vmatpush1.bf16.msra.mxu0 0
      %9303 = vmatprep.mubr.bf16.mxu0 0
      %9304 = vmatmul.mubr.bf16.gmra.mrb[0].mxu0 %v9248
      %v9305 = vpop.f32.mrb[0].mxu0
      %v9306 = vadd.f32 0.0, %v9305
      %v9307 = vpop.f32.mrb[0].mxu0
      %v9308 = vpop.f32.mrb[0].mxu0
      %v9309 = vadd.f32 0.0, %v9308
      %v9310 = vpop.f32.mrb[0].mxu0
      %9311 = vmatprep.mubr.bf16.mxu0 0
      %9312 = vmatmul.mubr.bf16.gmra.mrb[0].mxu0 %v9251
      %v9313 = vpop.f32.mrb[0].mxu0
      %v9314 = vadd.f32 0.0, %v9313
      %v9315 = vpop.f32.mrb[0].mxu0
      %v9316 = vpop.f32.mrb[0].mxu0
      %v9317 = vadd.f32 0.0, %v9316
      %v9318 = vpop.f32.mrb[0].mxu0
      %9319 = vmatprep.mubr.bf16.mxu0 0
      %9320 = vmatmul.mubr.bf16.gmra.mrb[0].mxu0 %v9254
      %v9321 = vpop.f32.mrb[0].mxu0
      %v9322 = vadd.f32 0.0, %v9321
      %v9323 = vpop.f32.mrb[0].mxu0
      %v9324 = vpop.f32.mrb[0].mxu0
      %v9325 = vadd.f32 0.0, %v9324
      %v9326 = vpop.f32.mrb[0].mxu0
      %9327 = vmatprep.mubr.bf16.mxu0 0
      %9328 = vmatmul.mubr.bf16.gmra.mrb[0].mxu0 %v9257
      %v9329 = vpop.f32.mrb[0].mxu0
      %v9330 = vadd.f32 0.0, %v9329
      %v9331 = vpop.f32.mrb[0].mxu0
      %v9332 = vpop.f32.mrb[0].mxu0
      %v9333 = vadd.f32 0.0, %v9332
      %v9334 = vpop.f32.mrb[0].mxu0
      %9335 = vmatprep.mubr.bf16.mxu0 0
      %9336 = vmatmul.mubr.bf16.gmra.mrb[0].mxu0 %v9260
      %v9337 = vpop.f32.mrb[0].mxu0
      %v9338 = vadd.f32 0.0, %v9337
      %v9339 = vpop.f32.mrb[0].mxu0
      %v9340 = vpop.f32.mrb[0].mxu0
      %v9341 = vadd.f32 0.0, %v9340
      %v9342 = vpop.f32.mrb[0].mxu0
      %9343 = vmatprep.mubr.bf16.mxu0 0
      %9344 = vmatmul.mubr.bf16.gmra.mrb[0].mxu0 %v9263
      %v9345 = vpop.f32.mrb[0].mxu0
      %v9346 = vadd.f32 0.0, %v9345
      %v9347 = vpop.f32.mrb[0].mxu0
      %v9348 = vpop.f32.mrb[0].mxu0
      %v9349 = vadd.f32 0.0, %v9348
      %v9350 = vpop.f32.mrb[0].mxu0
      %9351 = vmatprep.mubr.bf16.mxu0 0
      %9352 = vmatmul.mubr.bf16.gmra.mrb[0].mxu0 %v9266
      %v9353 = vpop.f32.mrb[0].mxu0
      %v9354 = vadd.f32 0.0, %v9353
      %v9355 = vpop.f32.mrb[0].mxu0
      %v9356 = vpop.f32.mrb[0].mxu0
      %v9357 = vpop.f32.mrb[0].mxu0
      %9358 = vdwg.mxu0
      %v9359 = vadd.f32 %v8423, %v9306
      %v9360 = vadd.f32 %v8424, %v9309
      %v9361 = vadd.f32 %v8425, %v9314
      %v9362 = vadd.f32 %v8426, %v9317
      %v9363 = vadd.f32 %v8427, %v9322
      %v9364 = vadd.f32 %v8428, %v9325
      %v9365 = vadd.f32 %v8429, %v9330
      %v9366 = vadd.f32 %v8430, %v9333
      %v9367 = vadd.f32 %v8431, %v9338
      %v9368 = vadd.f32 %v8432, %v9341
      %v9369 = vadd.f32 %v8433, %v9346
      %v9370 = vadd.f32 %v8434, %v9349
      %v9371 = vadd.f32 %v8435, %v9354
      %v9372 = vld [vmem:[%s3] sm:$0x1]
      %v9374 = vlaneseq
      %v9375 = vshrl.u32 %v9374, 7
      %v9376 = vsub.s32 0, %v9375
      %v9377 = vrot.slane %v9372, %v9376
      %v9379 = vadd.f32 %v9359, %v9377
      %v9380 = vadd.f32 %v9360, %v9377
      %v9381 = vadd.f32 %v9361, %v9377
      %v9382 = vadd.f32 %v9362, %v9377
      %v9383 = vadd.f32 %v9363, %v9377
      %v9384 = vadd.f32 %v9364, %v9377
      %v9385 = vadd.f32 %v9365, %v9377
      %v9386 = vadd.f32 %v9366, %v9377
      %v9387 = vadd.f32 %v9367, %v9377
      %v9388 = vadd.f32 %v9368, %v9377
      %v9389 = vadd.f32 %v9369, %v9377
      %v9390 = vadd.f32 %v9370, %v9377
      %v9391 = vadd.f32 %v9371, %v9377
      %v9392 = vmax.f32 %v9379, 0.0
      %v9393 = vmax.f32 %v9380, 0.0
      %v9394 = vmax.f32 %v9381, 0.0
      %v9395 = vmax.f32 %v9382, 0.0
      %v9396 = vmax.f32 %v9383, 0.0
      %v9397 = vmax.f32 %v9384, 0.0
      %v9398 = vmax.f32 %v9385, 0.0
      %v9399 = vmax.f32 %v9386, 0.0
      %v9400 = vmax.f32 %v9387, 0.0
      %v9401 = vmax.f32 %v9388, 0.0
      %v9402 = vmax.f32 %v9389, 0.0
      %v9403 = vmax.f32 %v9390, 0.0
      %v9404 = vmax.f32 %v9391, 0.0
      %v9418 = vcombine.high %v9392, %v9392
      %v9420 = vunpack.c.l.s4 1983009808
      %v9421 = vunpack.c.0.s8 %v9420
      %v9422 = vlaneseq
      %v9423 = vshrl.u32 %v9422, 7
      %v9424 = vsub.s32 %v9421, %v9423
      %v9425 = vrot.slane %v9392, %v9424
      %v9427 = vunpack.c.l.s4 1983009808
      %v9428 = vunpack.c.0.s8 %v9427
      %v9429 = vlaneseq
      %v9430 = vshrl.u32 %v9429, 7
      %v9431 = vsub.s32 %v9428, %v9430
      %v9432 = vrot.slane %v9418, %v9431
      %v9433 = vcombine.high %v9425, %v9425
      %v9434 = vcombine.high %v9432, %v9432
      %v9435 = vcombine.high %v9393, %v9393
      %v9437 = vunpack.c.l.s4 1983009808
      %v9438 = vunpack.c.0.s8 %v9437
      %v9439 = vlaneseq
      %v9440 = vshrl.u32 %v9439, 7
      %v9441 = vsub.s32 %v9438, %v9440
      %v9442 = vrot.slane %v9393, %v9441
      %v9444 = vunpack.c.l.s4 1983009808
      %v9445 = vunpack.c.0.s8 %v9444
      %v9446 = vlaneseq
      %v9447 = vshrl.u32 %v9446, 7
      %v9448 = vsub.s32 %v9445, %v9447
      %v9449 = vrot.slane %v9435, %v9448
      %v9450 = vcombine.high %v9442, %v9442
      %v9451 = vcombine.high %v9449, %v9449
      %v9452 = vcombine.high %v9394, %v9394
      %v9454 = vunpack.c.l.s4 1983009808
      %v9455 = vunpack.c.0.s8 %v9454
      %v9456 = vlaneseq
      %v9457 = vshrl.u32 %v9456, 7
      %v9458 = vsub.s32 %v9455, %v9457
      %v9459 = vrot.slane %v9394, %v9458
      %v9461 = vunpack.c.l.s4 1983009808
      %v9462 = vunpack.c.0.s8 %v9461
      %v9463 = vlaneseq
      %v9464 = vshrl.u32 %v9463, 7
      %v9465 = vsub.s32 %v9462, %v9464
      %v9466 = vrot.slane %v9452, %v9465
      %v9467 = vcombine.high %v9459, %v9459
      %v9468 = vcombine.high %v9466, %v9466
      %v9469 = vcombine.high %v9395, %v9395
      %v9471 = vunpack.c.l.s4 1983009808
      %v9472 = vunpack.c.0.s8 %v9471
      %v9473 = vlaneseq
      %v9474 = vshrl.u32 %v9473, 7
      %v9475 = vsub.s32 %v9472, %v9474
      %v9476 = vrot.slane %v9395, %v9475
      %v9478 = vunpack.c.l.s4 1983009808
      %v9479 = vunpack.c.0.s8 %v9478
      %v9480 = vlaneseq
      %v9481 = vshrl.u32 %v9480, 7
      %v9482 = vsub.s32 %v9479, %v9481
      %v9483 = vrot.slane %v9469, %v9482
      %v9484 = vcombine.high %v9476, %v9476
      %v9485 = vcombine.high %v9483, %v9483
      %v9486 = vcombine.high %v9396, %v9396
      %v9488 = vunpack.c.l.s4 1983009808
      %v9489 = vunpack.c.0.s8 %v9488
      %v9490 = vlaneseq
      %v9491 = vshrl.u32 %v9490, 7
      %v9492 = vsub.s32 %v9489, %v9491
      %v9493 = vrot.slane %v9396, %v9492
      %v9495 = vunpack.c.l.s4 1983009808
      %v9496 = vunpack.c.0.s8 %v9495
      %v9497 = vlaneseq
      %v9498 = vshrl.u32 %v9497, 7
      %v9499 = vsub.s32 %v9496, %v9498
      %v9500 = vrot.slane %v9486, %v9499
      %v9501 = vcombine.high %v9493, %v9493
      %v9502 = vcombine.high %v9500, %v9500
      %v9503 = vcombine.high %v9397, %v9397
      %v9505 = vunpack.c.l.s4 1983009808
      %v9506 = vunpack.c.0.s8 %v9505
      %v9507 = vlaneseq
      %v9508 = vshrl.u32 %v9507, 7
      %v9509 = vsub.s32 %v9506, %v9508
      %v9510 = vrot.slane %v9397, %v9509
      %v9512 = vunpack.c.l.s4 1983009808
      %v9513 = vunpack.c.0.s8 %v9512
      %v9514 = vlaneseq
      %v9515 = vshrl.u32 %v9514, 7
      %v9516 = vsub.s32 %v9513, %v9515
      %v9517 = vrot.slane %v9503, %v9516
      %v9518 = vcombine.high %v9510, %v9510
      %v9519 = vcombine.high %v9517, %v9517
      %v9520 = vcombine.high %v9398, %v9398
      %v9522 = vunpack.c.l.s4 1983009808
      %v9523 = vunpack.c.0.s8 %v9522
      %v9524 = vlaneseq
      %v9525 = vshrl.u32 %v9524, 7
      %v9526 = vsub.s32 %v9523, %v9525
      %v9527 = vrot.slane %v9398, %v9526
      %v9529 = vunpack.c.l.s4 1983009808
      %v9530 = vunpack.c.0.s8 %v9529
      %v9531 = vlaneseq
      %v9532 = vshrl.u32 %v9531, 7
      %v9533 = vsub.s32 %v9530, %v9532
      %v9534 = vrot.slane %v9520, %v9533
      %v9535 = vcombine.high %v9527, %v9527
      %v9536 = vcombine.high %v9534, %v9534
      %v9537 = vcombine.high %v9399, %v9399
      %v9539 = vunpack.c.l.s4 1983009808
      %v9540 = vunpack.c.0.s8 %v9539
      %v9541 = vlaneseq
      %v9542 = vshrl.u32 %v9541, 7
      %v9543 = vsub.s32 %v9540, %v9542
      %v9544 = vrot.slane %v9399, %v9543
      %v9546 = vunpack.c.l.s4 1983009808
      %v9547 = vunpack.c.0.s8 %v9546
      %v9548 = vlaneseq
      %v9549 = vshrl.u32 %v9548, 7
      %v9550 = vsub.s32 %v9547, %v9549
      %v9551 = vrot.slane %v9537, %v9550
      %v9552 = vcombine.high %v9544, %v9544
      %v9553 = vcombine.high %v9551, %v9551
      %v9554 = vcombine.high %v9400, %v9400
      %v9556 = vunpack.c.l.s4 1983009808
      %v9557 = vunpack.c.0.s8 %v9556
      %v9558 = vlaneseq
      %v9559 = vshrl.u32 %v9558, 7
      %v9560 = vsub.s32 %v9557, %v9559
      %v9561 = vrot.slane %v9400, %v9560
      %v9563 = vunpack.c.l.s4 1983009808
      %v9564 = vunpack.c.0.s8 %v9563
      %v9565 = vlaneseq
      %v9566 = vshrl.u32 %v9565, 7
      %v9567 = vsub.s32 %v9564, %v9566
      %v9568 = vrot.slane %v9554, %v9567
      %v9569 = vcombine.high %v9561, %v9561
      %v9570 = vcombine.high %v9568, %v9568
      %v9571 = vcombine.high %v9401, %v9401
      %v9573 = vunpack.c.l.s4 1983009808
      %v9574 = vunpack.c.0.s8 %v9573
      %v9575 = vlaneseq
      %v9576 = vshrl.u32 %v9575, 7
      %v9577 = vsub.s32 %v9574, %v9576
      %v9578 = vrot.slane %v9401, %v9577
      %v9580 = vunpack.c.l.s4 1983009808
      %v9581 = vunpack.c.0.s8 %v9580
      %v9582 = vlaneseq
      %v9583 = vshrl.u32 %v9582, 7
      %v9584 = vsub.s32 %v9581, %v9583
      %v9585 = vrot.slane %v9571, %v9584
      %v9586 = vcombine.high %v9578, %v9578
      %v9587 = vcombine.high %v9585, %v9585
      %v9588 = vcombine.high %v9402, %v9402
      %v9590 = vunpack.c.l.s4 1983009808
      %v9591 = vunpack.c.0.s8 %v9590
      %v9592 = vlaneseq
      %v9593 = vshrl.u32 %v9592, 7
      %v9594 = vsub.s32 %v9591, %v9593
      %v9595 = vrot.slane %v9402, %v9594
      %v9597 = vunpack.c.l.s4 1983009808
      %v9598 = vunpack.c.0.s8 %v9597
      %v9599 = vlaneseq
      %v9600 = vshrl.u32 %v9599, 7
      %v9601 = vsub.s32 %v9598, %v9600
      %v9602 = vrot.slane %v9588, %v9601
      %v9603 = vcombine.high %v9595, %v9595
      %v9604 = vcombine.high %v9602, %v9602
      %v9605 = vcombine.high %v9403, %v9403
      %v9607 = vunpack.c.l.s4 1983009808
      %v9608 = vunpack.c.0.s8 %v9607
      %v9609 = vlaneseq
      %v9610 = vshrl.u32 %v9609, 7
      %v9611 = vsub.s32 %v9608, %v9610
      %v9612 = vrot.slane %v9403, %v9611
      %v9614 = vunpack.c.l.s4 1983009808
      %v9615 = vunpack.c.0.s8 %v9614
      %v9616 = vlaneseq
      %v9617 = vshrl.u32 %v9616, 7
      %v9618 = vsub.s32 %v9615, %v9617
      %v9619 = vrot.slane %v9605, %v9618
      %v9620 = vcombine.high %v9612, %v9612
      %v9621 = vcombine.high %v9619, %v9619
      %v9623 = vunpack.c.l.s4 1983009808
      %v9624 = vunpack.c.0.s8 %v9623
      %v9625 = vlaneseq
      %v9626 = vshrl.u32 %v9625, 7
      %v9627 = vsub.s32 %v9624, %v9626
      %v9628 = vrot.slane %v9404, %v9627
      %v9629 = vcombine.high %v9628, %v9628
      %v9630 = vlaneseq
      %v9631 = vshrl.u32 %v9630, 7
      %v9632 = vadd.s32 %v9631, 8
      %vm9633 = vcmp.ge.s32.totalorder %v9631, 1
      %vm9634 = vcmp.ge.s32.totalorder %v9632, 1
      %vm9635 = vmand 0, %vm9633
      %vm9636 = vmand 0, %vm9634
      %vm9637 = vmand 1, %vm9633
      %vm9638 = vmand 1, %vm9634
      %vm9639 = vcmp.le.s32.totalorder %v9631, 8
      %vm9640 = vcmp.le.s32.totalorder %v9632, 8
      %vm9641 = vmand %vm9635, %vm9639
      %vm9642 = vmand %vm9636, %vm9640
      %vm9643 = vmand %vm9637, %vm9639
      %vm9644 = vmand %vm9638, %vm9640
      %v9645 = vcombine.low %v9425, %v9433
      %v9646 = vcombine.low %v9432, %v9434
      %v9648 = vunpack.c.l.s4 1983009808
      %v9649 = vunpack.c.0.s8 %v9648
      %v9650 = vlaneseq
      %v9651 = vshrl.u32 %v9650, 7
      %v9652 = vsub.s32 %v9649, %v9651
      %v9653 = vrot.slane %v9645, %v9652
      %v9655 = vunpack.c.l.s4 1983009808
      %v9656 = vunpack.c.0.s8 %v9655
      %v9657 = vlaneseq
      %v9658 = vshrl.u32 %v9657, 7
      %v9659 = vsub.s32 %v9656, %v9658
      %v9660 = vrot.slane %v9646, %v9659
      %v9661 = vcombine.low %v9653, %v9660
      %v9663 = vunpack.c.l.s4 1983009808
      %v9664 = vunpack.c.0.s8 %v9663
      %v9665 = vlaneseq
      %v9666 = vshrl.u32 %v9665, 7
      %v9667 = vsub.s32 %v9664, %v9666
      %v9668 = vrot.slane %v9442, %v9667
      %v9669 = vcombine.low %v9450, %v9449
      %v9670 = vcombine.low %v9451, %v9459
      %v9672 = vunpack.c.l.s4 1983009808
      %v9673 = vunpack.c.0.s8 %v9672
      %v9674 = vlaneseq
      %v9675 = vshrl.u32 %v9674, 7
      %v9676 = vsub.s32 %v9673, %v9675
      %v9677 = vrot.slane %v9669, %v9676
      %v9679 = vunpack.c.l.s4 1983009808
      %v9680 = vunpack.c.0.s8 %v9679
      %v9681 = vlaneseq
      %v9682 = vshrl.u32 %v9681, 7
      %v9683 = vsub.s32 %v9680, %v9682
      %v9684 = vrot.slane %v9670, %v9683
      %v9685 = vcombine.low %v9677, %v9684
      %v9687 = vunpack.c.l.s4 1983009808
      %v9688 = vunpack.c.0.s8 %v9687
      %v9689 = vlaneseq
      %v9690 = vshrl.u32 %v9689, 7
      %v9691 = vsub.s32 %v9688, %v9690
      %v9692 = vrot.slane %v9467, %v9691
      %v9693 = vcombine.low %v9466, %v9468
      %v9694 = vcombine.low %v9476, %v9484
      %v9696 = vunpack.c.l.s4 1983009808
      %v9697 = vunpack.c.0.s8 %v9696
      %v9698 = vlaneseq
      %v9699 = vshrl.u32 %v9698, 7
      %v9700 = vsub.s32 %v9697, %v9699
      %v9701 = vrot.slane %v9693, %v9700
      %v9703 = vunpack.c.l.s4 1983009808
      %v9704 = vunpack.c.0.s8 %v9703
      %v9705 = vlaneseq
      %v9706 = vshrl.u32 %v9705, 7
      %v9707 = vsub.s32 %v9704, %v9706
      %v9708 = vrot.slane %v9694, %v9707
      %v9709 = vcombine.low %v9701, %v9708
      %v9711 = vunpack.c.l.s4 1983009808
      %v9712 = vunpack.c.0.s8 %v9711
      %v9713 = vlaneseq
      %v9714 = vshrl.u32 %v9713, 7
      %v9715 = vsub.s32 %v9712, %v9714
      %v9716 = vrot.slane %v9483, %v9715
      %v9717 = vcombine.low %v9485, %v9493
      %v9718 = vcombine.low %v9501, %v9500
      %v9720 = vunpack.c.l.s4 1983009808
      %v9721 = vunpack.c.0.s8 %v9720
      %v9722 = vlaneseq
      %v9723 = vshrl.u32 %v9722, 7
      %v9724 = vsub.s32 %v9721, %v9723
      %v9725 = vrot.slane %v9717, %v9724
      %v9727 = vunpack.c.l.s4 1983009808
      %v9728 = vunpack.c.0.s8 %v9727
      %v9729 = vlaneseq
      %v9730 = vshrl.u32 %v9729, 7
      %v9731 = vsub.s32 %v9728, %v9730
      %v9732 = vrot.slane %v9718, %v9731
      %v9733 = vcombine.low %v9725, %v9732
      %v9735 = vunpack.c.l.s4 1983009808
      %v9736 = vunpack.c.0.s8 %v9735
      %v9737 = vlaneseq
      %v9738 = vshrl.u32 %v9737, 7
      %v9739 = vsub.s32 %v9736, %v9738
      %v9740 = vrot.slane %v9502, %v9739
      %v9741 = vcombine.low %v9510, %v9518
      %v9742 = vcombine.low %v9517, %v9519
      %v9744 = vunpack.c.l.s4 1983009808
      %v9745 = vunpack.c.0.s8 %v9744
      %v9746 = vlaneseq
      %v9747 = vshrl.u32 %v9746, 7
      %v9748 = vsub.s32 %v9745, %v9747
      %v9749 = vrot.slane %v9741, %v9748
      %v9751 = vunpack.c.l.s4 1983009808
      %v9752 = vunpack.c.0.s8 %v9751
      %v9753 = vlaneseq
      %v9754 = vshrl.u32 %v9753, 7
      %v9755 = vsub.s32 %v9752, %v9754
      %v9756 = vrot.slane %v9742, %v9755
      %v9757 = vcombine.low %v9749, %v9756
      %v9759 = vunpack.c.l.s4 1983009808
      %v9760 = vunpack.c.0.s8 %v9759
      %v9761 = vlaneseq
      %v9762 = vshrl.u32 %v9761, 7
      %v9763 = vsub.s32 %v9760, %v9762
      %v9764 = vrot.slane %v9527, %v9763
      %v9765 = vcombine.low %v9535, %v9534
      %v9766 = vcombine.low %v9536, %v9544
      %v9768 = vunpack.c.l.s4 1983009808
      %v9769 = vunpack.c.0.s8 %v9768
      %v9770 = vlaneseq
      %v9771 = vshrl.u32 %v9770, 7
      %v9772 = vsub.s32 %v9769, %v9771
      %v9773 = vrot.slane %v9765, %v9772
      %v9775 = vunpack.c.l.s4 1983009808
      %v9776 = vunpack.c.0.s8 %v9775
      %v9777 = vlaneseq
      %v9778 = vshrl.u32 %v9777, 7
      %v9779 = vsub.s32 %v9776, %v9778
      %v9780 = vrot.slane %v9766, %v9779
      %v9781 = vcombine.low %v9773, %v9780
      %v9783 = vunpack.c.l.s4 1983009808
      %v9784 = vunpack.c.0.s8 %v9783
      %v9785 = vlaneseq
      %v9786 = vshrl.u32 %v9785, 7
      %v9787 = vsub.s32 %v9784, %v9786
      %v9788 = vrot.slane %v9552, %v9787
      %v9789 = vcombine.low %v9551, %v9553
      %v9790 = vcombine.low %v9561, %v9569
      %v9792 = vunpack.c.l.s4 1983009808
      %v9793 = vunpack.c.0.s8 %v9792
      %v9794 = vlaneseq
      %v9795 = vshrl.u32 %v9794, 7
      %v9796 = vsub.s32 %v9793, %v9795
      %v9797 = vrot.slane %v9789, %v9796
      %v9799 = vunpack.c.l.s4 1983009808
      %v9800 = vunpack.c.0.s8 %v9799
      %v9801 = vlaneseq
      %v9802 = vshrl.u32 %v9801, 7
      %v9803 = vsub.s32 %v9800, %v9802
      %v9804 = vrot.slane %v9790, %v9803
      %v9805 = vcombine.low %v9797, %v9804
      %v9807 = vunpack.c.l.s4 1983009808
      %v9808 = vunpack.c.0.s8 %v9807
      %v9809 = vlaneseq
      %v9810 = vshrl.u32 %v9809, 7
      %v9811 = vsub.s32 %v9808, %v9810
      %v9812 = vrot.slane %v9568, %v9811
      %v9813 = vcombine.low %v9570, %v9578
      %v9814 = vcombine.low %v9586, %v9585
      %v9816 = vunpack.c.l.s4 1983009808
      %v9817 = vunpack.c.0.s8 %v9816
      %v9818 = vlaneseq
      %v9819 = vshrl.u32 %v9818, 7
      %v9820 = vsub.s32 %v9817, %v9819
      %v9821 = vrot.slane %v9813, %v9820
      %v9823 = vunpack.c.l.s4 1983009808
      %v9824 = vunpack.c.0.s8 %v9823
      %v9825 = vlaneseq
      %v9826 = vshrl.u32 %v9825, 7
      %v9827 = vsub.s32 %v9824, %v9826
      %v9828 = vrot.slane %v9814, %v9827
      %v9829 = vcombine.low %v9821, %v9828
      %v9831 = vunpack.c.l.s4 1983009808
      %v9832 = vunpack.c.0.s8 %v9831
      %v9833 = vlaneseq
      %v9834 = vshrl.u32 %v9833, 7
      %v9835 = vsub.s32 %v9832, %v9834
      %v9836 = vrot.slane %v9587, %v9835
      %v9837 = vcombine.low %v9595, %v9603
      %v9838 = vcombine.low %v9602, %v9604
      %v9840 = vunpack.c.l.s4 1983009808
      %v9841 = vunpack.c.0.s8 %v9840
      %v9842 = vlaneseq
      %v9843 = vshrl.u32 %v9842, 7
      %v9844 = vsub.s32 %v9841, %v9843
      %v9845 = vrot.slane %v9837, %v9844
      %v9847 = vunpack.c.l.s4 1983009808
      %v9848 = vunpack.c.0.s8 %v9847
      %v9849 = vlaneseq
      %v9850 = vshrl.u32 %v9849, 7
      %v9851 = vsub.s32 %v9848, %v9850
      %v9852 = vrot.slane %v9838, %v9851
      %v9853 = vcombine.low %v9845, %v9852
      %v9855 = vunpack.c.l.s4 1983009808
      %v9856 = vunpack.c.0.s8 %v9855
      %v9857 = vlaneseq
      %v9858 = vshrl.u32 %v9857, 7
      %v9859 = vsub.s32 %v9856, %v9858
      %v9860 = vrot.slane %v9612, %v9859
      %v9861 = vcombine.low %v9620, %v9619
      %v9862 = vcombine.low %v9621, %v9628
      %v9864 = vunpack.c.l.s4 1983009808
      %v9865 = vunpack.c.0.s8 %v9864
      %v9866 = vlaneseq
      %v9867 = vshrl.u32 %v9866, 7
      %v9868 = vsub.s32 %v9865, %v9867
      %v9869 = vrot.slane %v9861, %v9868
      %v9871 = vunpack.c.l.s4 1983009808
      %v9872 = vunpack.c.0.s8 %v9871
      %v9873 = vlaneseq
      %v9874 = vshrl.u32 %v9873, 7
      %v9875 = vsub.s32 %v9872, %v9874
      %v9876 = vrot.slane %v9862, %v9875
      %v9877 = vcombine.low %v9869, %v9876
      %v9879 = vunpack.c.l.s4 1983009808
      %v9880 = vunpack.c.0.s8 %v9879
      %v9881 = vlaneseq
      %v9882 = vshrl.u32 %v9881, 7
      %v9883 = vsub.s32 %v9880, %v9882
      %v9884 = vrot.slane %v9629, %v9883
      %v9905 = vsel %vm9641, %v9661, 0.0
      %v9906 = vsel %vm9642, %v9668, 0.0
      %v9907 = vsel %vm9643, %v9685, 0.0
      %v9908 = vsel %vm9644, %v9692, 0.0
      %v9909 = vsel %vm9643, %v9709, 0.0
      %v9910 = vsel %vm9644, %v9716, 0.0
      %v9911 = vsel %vm9643, %v9733, 0.0
      %v9912 = vsel %vm9644, %v9740, 0.0
      %v9913 = vsel %vm9643, %v9757, 0.0
      %v9914 = vsel %vm9644, %v9764, 0.0
      %v9915 = vsel %vm9643, %v9781, 0.0
      %v9916 = vsel %vm9644, %v9788, 0.0
      %v9917 = vsel %vm9643, %v9805, 0.0
      %v9918 = vsel %vm9644, %v9812, 0.0
      %v9919 = vsel %vm9643, %v9829, 0.0
      %v9920 = vsel %vm9644, %v9836, 0.0
      %v9921 = vsel %vm9643, %v9853, 0.0
      %v9922 = vsel %vm9644, %v9860, 0.0
      %v9923 = vsel %vm9641, %v9877, 0.0
      %v9924 = vsel %vm9642, %v9884, 0.0
      %v9925 = vpack.c.bf16 %v9906, %v9905
      %v9926 = vpack.c.bf16 %v9908, %v9907
      %v9927 = vpack.c.bf16 %v9910, %v9909
      %v9928 = vpack.c.bf16 %v9912, %v9911
      %v9929 = vpack.c.bf16 %v9914, %v9913
      %v9930 = vpack.c.bf16 %v9916, %v9915
      %v9931 = vpack.c.bf16 %v9918, %v9917
      %v9932 = vpack.c.bf16 %v9920, %v9919
      %v9933 = vpack.c.bf16 %v9922, %v9921
      %v9934 = vpack.c.bf16 %v9924, %v9923
      %v9945 = vunpack.c.l.b16 %v9925
      %v9946 = vunpack.c.h.b16 %v9925
      %v9947 = vunpack.c.l.b16 %v9926
      %v9948 = vunpack.c.h.b16 %v9926
      %v9949 = vunpack.c.l.b16 %v9927
      %v9950 = vunpack.c.h.b16 %v9927
      %v9951 = vunpack.c.l.b16 %v9928
      %v9952 = vunpack.c.h.b16 %v9928
      %v9953 = vunpack.c.l.b16 %v9929
      %v9954 = vunpack.c.h.b16 %v9929
      %v9955 = vunpack.c.l.b16 %v9930
      %v9956 = vunpack.c.h.b16 %v9930
      %v9957 = vunpack.c.l.b16 %v9931
      %v9958 = vunpack.c.h.b16 %v9931
      %v9959 = vunpack.c.l.b16 %v9932
      %v9960 = vunpack.c.h.b16 %v9932
      %v9961 = vunpack.c.l.b16 %v9933
      %v9962 = vunpack.c.h.b16 %v9933
      %v9963 = vunpack.c.l.b16 %v9934
      %v9964 = vunpack.c.h.b16 %v9934
      %v9965 = vpack.c.b16 %v9945, %v9945
      %v9966 = vpack.c.b16 %v9946, %v9946
      %v9967 = vpack.c.b16 %v9947, %v9947
      %v9968 = vpack.c.b16 %v9948, %v9948
      %v9969 = vpack.c.b16 %v9949, %v9949
      %v9970 = vpack.c.b16 %v9950, %v9950
      %v9971 = vpack.c.b16 %v9951, %v9951
      %v9972 = vpack.c.b16 %v9952, %v9952
      %v9973 = vpack.c.b16 %v9953, %v9953
      %v9974 = vpack.c.b16 %v9954, %v9954
      %v9975 = vpack.c.b16 %v9955, %v9955
      %v9976 = vpack.c.b16 %v9956, %v9956
      %v9977 = vpack.c.b16 %v9957, %v9957
      %v9978 = vpack.c.b16 %v9958, %v9958
      %v9979 = vpack.c.b16 %v9959, %v9959
      %v9980 = vpack.c.b16 %v9960, %v9960
      %v9981 = vpack.c.b16 %v9961, %v9961
      %v9982 = vpack.c.b16 %v9962, %v9962
      %v9983 = vpack.c.b16 %v9963, %v9963
      %v9984 = vpack.c.b16 %v9964, %v9964
      %vm10005 = vcmask 60416
      %10006 = vst.msk [vmem:[#allocation2] sm:$0xf] %vm10005, %v9965
      %vm10007 = vcmask 57344
      %10008 = vst.msk [vmem:[#allocation2 + $0x4] sm:$0x1] %vm10007, %v9966
      %10009 = vst.msk [vmem:[#allocation2 + $0x8] sm:$0xf] %vm10005, %v9967
      %10010 = vst.msk [vmem:[#allocation2 + $0xc] sm:$0x1] %vm10007, %v9968
      %10011 = vst.msk [vmem:[#allocation2 + $0x10] sm:$0xf] %vm10005, %v9969
      %10012 = vst.msk [vmem:[#allocation2 + $0x14] sm:$0x1] %vm10007, %v9970
      %10013 = vst.msk [vmem:[#allocation2 + $0x18] sm:$0xf] %vm10005, %v9971
      %10014 = vst.msk [vmem:[#allocation2 + $0x1c] sm:$0x1] %vm10007, %v9972
      %10015 = vst.msk [vmem:[#allocation2 + $0x20] sm:$0xf] %vm10005, %v9973
      %10016 = vst.msk [vmem:[#allocation2 + $0x24] sm:$0x1] %vm10007, %v9974
      %10017 = vst.msk [vmem:[#allocation2 + $0x28] sm:$0xf] %vm10005, %v9975
      %10018 = vst.msk [vmem:[#allocation2 + $0x2c] sm:$0x1] %vm10007, %v9976
      %10019 = vst.msk [vmem:[#allocation2 + $0x30] sm:$0xf] %vm10005, %v9977
      %10020 = vst.msk [vmem:[#allocation2 + $0x34] sm:$0x1] %vm10007, %v9978
      %10021 = vst.msk [vmem:[#allocation2 + $0x38] sm:$0xf] %vm10005, %v9979
      %10022 = vst.msk [vmem:[#allocation2 + $0x3c] sm:$0x1] %vm10007, %v9980
      %10023 = vst.msk [vmem:[#allocation2 + $0x40] sm:$0xf] %vm10005, %v9981
      %10024 = vst.msk [vmem:[#allocation2 + $0x44] sm:$0x1] %vm10007, %v9982
      %10025 = vst.msk [vmem:[#allocation2 + $0x48] sm:$0xf] %vm10005, %v9983
      %10026 = vst.msk [vmem:[#allocation2 + $0x4c] sm:$0x1] %vm10007, %v9984
      %v10027 = vld [vmem:[#allocation2] sm:$0xf]
      %v10028 = vld [vmem:[#allocation2 + $0x8] sm:$0xf]
      %v10029 = vld [vmem:[#allocation2 + $0x10] sm:$0xf]
      %v10030 = vld [vmem:[#allocation2 + $0x18] sm:$0xf]
      %v10031 = vld [vmem:[#allocation2 + $0x20] sm:$0xf]
      %v10032 = vld [vmem:[#allocation2 + $0x28] sm:$0xf]
      %v10033 = vld [vmem:[#allocation2 + $0x30] sm:$0xf]
      %v10034 = vld [vmem:[#allocation2 + $0x38] sm:$0xf]
      %v10035 = vld [vmem:[%s2] sm:$0xf]
      %v10036 = vld [vmem:[#allocation2 + $0x4] sm:$0x1]
      %v10037 = vld [vmem:[#allocation2 + $0xc] sm:$0x1]
      %v10038 = vld [vmem:[#allocation2 + $0x14] sm:$0x1]
      %v10039 = vld [vmem:[#allocation2 + $0x1c] sm:$0x1]
      %v10040 = vld [vmem:[#allocation2 + $0x24] sm:$0x1]
      %v10041 = vld [vmem:[#allocation2 + $0x2c] sm:$0x1]
      %v10042 = vld [vmem:[#allocation2 + $0x34] sm:$0x1]
      %v10043 = vld [vmem:[#allocation2 + $0x3c] sm:$0x1]
      %vm10044 = vsmask.f32 3328
      %vm10045 = vsmask.f32 7440
      %vm10046 = vmor %vm10044, %vm10045
      %v10048 = vshrl.u32 %v10027, 16
      %v10050 = vrot.slane %v10048, 4
      %v10051 = vshll.u32 %v10027, 16
      %v10053 = vrot.slane %v10051, 5
      %v10054 = vor.u32 %v10050, %v10053
      %v10055 = vrot.slane %v10054, 4
      %v10057 = vshll.u32 %v10036, 16
      %v10059 = vrot.slane %v10057, 5
      %v10060 = vsel %vm10046, %v10055, %v10059
      %v10062 = vshrl.u32 %v10028, 16
      %v10064 = vrot.slane %v10062, 4
      %v10065 = vshll.u32 %v10028, 16
      %v10067 = vrot.slane %v10065, 5
      %v10068 = vor.u32 %v10064, %v10067
      %v10069 = vrot.slane %v10068, 4
      %v10071 = vshll.u32 %v10037, 16
      %v10073 = vrot.slane %v10071, 5
      %v10074 = vsel %vm10046, %v10069, %v10073
      %v10076 = vshrl.u32 %v10029, 16
      %v10078 = vrot.slane %v10076, 4
      %v10079 = vshll.u32 %v10029, 16
      %v10081 = vrot.slane %v10079, 5
      %v10082 = vor.u32 %v10078, %v10081
      %v10083 = vrot.slane %v10082, 4
      %v10085 = vshll.u32 %v10038, 16
      %v10087 = vrot.slane %v10085, 5
      %v10088 = vsel %vm10046, %v10083, %v10087
      %v10090 = vshrl.u32 %v10030, 16
      %v10092 = vrot.slane %v10090, 4
      %v10093 = vshll.u32 %v10030, 16
      %v10095 = vrot.slane %v10093, 5
      %v10096 = vor.u32 %v10092, %v10095
      %v10097 = vrot.slane %v10096, 4
      %v10099 = vshll.u32 %v10039, 16
      %v10101 = vrot.slane %v10099, 5
      %v10102 = vsel %vm10046, %v10097, %v10101
      %v10104 = vshrl.u32 %v10031, 16
      %v10106 = vrot.slane %v10104, 4
      %v10107 = vshll.u32 %v10031, 16
      %v10109 = vrot.slane %v10107, 5
      %v10110 = vor.u32 %v10106, %v10109
      %v10111 = vrot.slane %v10110, 4
      %v10113 = vshll.u32 %v10040, 16
      %v10115 = vrot.slane %v10113, 5
      %v10116 = vsel %vm10046, %v10111, %v10115
      %v10118 = vshrl.u32 %v10032, 16
      %v10120 = vrot.slane %v10118, 4
      %v10121 = vshll.u32 %v10032, 16
      %v10123 = vrot.slane %v10121, 5
      %v10124 = vor.u32 %v10120, %v10123
      %v10125 = vrot.slane %v10124, 4
      %v10127 = vshll.u32 %v10041, 16
      %v10129 = vrot.slane %v10127, 5
      %v10130 = vsel %vm10046, %v10125, %v10129
      %v10132 = vshrl.u32 %v10033, 16
      %v10134 = vrot.slane %v10132, 4
      %v10135 = vshll.u32 %v10033, 16
      %v10137 = vrot.slane %v10135, 5
      %v10138 = vor.u32 %v10134, %v10137
      %v10139 = vrot.slane %v10138, 4
      %v10141 = vshll.u32 %v10042, 16
      %v10143 = vrot.slane %v10141, 5
      %v10144 = vsel %vm10046, %v10139, %v10143
      %v10146 = vshrl.u32 %v10034, 16
      %v10148 = vrot.slane %v10146, 4
      %v10149 = vshll.u32 %v10034, 16
      %v10151 = vrot.slane %v10149, 5
      %v10152 = vor.u32 %v10148, %v10151
      %v10153 = vrot.slane %v10152, 4
      %v10155 = vshll.u32 %v10043, 16
      %v10157 = vrot.slane %v10155, 5
      %v10158 = vsel %vm10046, %v10153, %v10157
      %s10159 = scalar_lea.vmem %s2, 4
      %v10160 = vld [vmem:[%s10159] sm:$0xf]
      %v10161 = vunpack.c.l.b16 %v10060
      %v10162 = vunpack.c.l.b16 %v10074
      %v10163 = vunpack.c.l.b16 %v10088
      %v10164 = vunpack.c.l.b16 %v10102
      %v10165 = vunpack.c.l.b16 %v10116
      %v10166 = vunpack.c.l.b16 %v10130
      %v10167 = vunpack.c.l.b16 %v10144
      %v10168 = vunpack.c.l.b16 %v10158
      %v10169 = vpack.c.b16 %v10162, %v10161
      %v10170 = vpack.c.b16 %v10164, %v10163
      %v10171 = vpack.c.b16 %v10166, %v10165
      %v10172 = vpack.c.b16 %v10168, %v10167
      %v10174 = vsel %vm1623, %v10169, 0
      %v10177 = vsel %vm1623, %v10170, 0
      %v10180 = vsel %vm1623, %v10171, 0
      %v10183 = vsel %vm1623, %v10172, 0
      %v10186 = vsel %vm1645, %v10160, 0
      %10188 = vmatprep.subr.bf16.mxu0 0
      %10189 = vmatpush1.bf16.msra.mxu0 %v10186
      %10190 = vmatprep.subr.bf16.mxu0 0
      %10191 = vmatpush1.bf16.msra.mxu0 0
      %10192 = vmatprep.subr.bf16.mxu0 0
      %10193 = vmatpush1.bf16.msra.mxu0 0
      %10194 = vmatprep.subr.bf16.mxu0 0
      %10195 = vmatpush1.bf16.msra.mxu0 0
      %10196 = vmatprep.subr.bf16.mxu0 0
      %10197 = vmatpush1.bf16.msra.mxu0 0
      %10198 = vmatprep.subr.bf16.mxu0 0
      %10199 = vmatpush1.bf16.msra.mxu0 0
      %10200 = vmatprep.subr.bf16.mxu0 0
      %10201 = vmatpush1.bf16.msra.mxu0 0
      %10202 = vmatprep.subr.bf16.mxu0 0
      %10203 = vmatpush1.bf16.msra.mxu0 0
      %10204 = vmatprep.subr.bf16.mxu0 0
      %10205 = vmatpush1.bf16.msra.mxu0 0
      %10206 = vmatprep.subr.bf16.mxu0 0
      %10207 = vmatpush1.bf16.msra.mxu0 0
      %10208 = vmatprep.subr.bf16.mxu0 0
      %10209 = vmatpush1.bf16.msra.mxu0 0
      %10210 = vmatprep.subr.bf16.mxu0 0
      %10211 = vmatpush1.bf16.msra.mxu0 0
      %10212 = vmatprep.subr.bf16.mxu0 0
      %10213 = vmatpush1.bf16.msra.mxu0 0
      %10214 = vmatprep.subr.bf16.mxu0 0
      %10215 = vmatpush1.bf16.msra.mxu0 0
      %10216 = vmatprep.subr.bf16.mxu0 0
      %10217 = vmatpush1.bf16.msra.mxu0 0
      %10218 = vmatprep.subr.bf16.mxu0 0
      %10219 = vmatpush1.bf16.msra.mxu0 0
      %10220 = vmatprep.mubr.bf16.mxu0 0
      %10221 = vmatmul.mubr.bf16.gmra.mrb[0].mxu0 %v10174
      %v10222 = vpop.f32.mrb[0].mxu0
      %v10223 = vadd.f32 0.0, %v10222
      %v10224 = vpop.f32.mrb[0].mxu0
      %v10225 = vpop.f32.mrb[0].mxu0
      %v10226 = vadd.f32 0.0, %v10225
      %v10227 = vpop.f32.mrb[0].mxu0
      %10228 = vmatprep.mubr.bf16.mxu0 0
      %10229 = vmatmul.mubr.bf16.gmra.mrb[0].mxu0 %v10177
      %v10230 = vpop.f32.mrb[0].mxu0
      %v10231 = vadd.f32 0.0, %v10230
      %v10232 = vpop.f32.mrb[0].mxu0
      %v10233 = vpop.f32.mrb[0].mxu0
      %v10234 = vadd.f32 0.0, %v10233
      %v10235 = vpop.f32.mrb[0].mxu0
      %10236 = vmatprep.mubr.bf16.mxu0 0
      %10237 = vmatmul.mubr.bf16.gmra.mrb[0].mxu0 %v10180
      %v10238 = vpop.f32.mrb[0].mxu0
      %v10239 = vadd.f32 0.0, %v10238
      %v10240 = vpop.f32.mrb[0].mxu0
      %v10241 = vpop.f32.mrb[0].mxu0
      %v10242 = vadd.f32 0.0, %v10241
      %v10243 = vpop.f32.mrb[0].mxu0
      %10244 = vmatprep.mubr.bf16.mxu0 0
      %10245 = vmatmul.mubr.bf16.gmra.mrb[0].mxu0 %v10183
      %v10246 = vpop.f32.mrb[0].mxu0
      %v10247 = vadd.f32 0.0, %v10246
      %v10248 = vpop.f32.mrb[0].mxu0
      %v10249 = vpop.f32.mrb[0].mxu0
      %v10250 = vadd.f32 0.0, %v10249
      %v10251 = vpop.f32.mrb[0].mxu0
      %10252 = vdwg.mxu0
      %v10261 = vunpack.c.l.b16 %v10027
      %v10262 = vunpack.c.l.b16 %v10028
      %v10263 = vunpack.c.l.b16 %v10029
      %v10264 = vunpack.c.l.b16 %v10030
      %v10265 = vunpack.c.l.b16 %v10031
      %v10266 = vunpack.c.l.b16 %v10032
      %v10267 = vunpack.c.l.b16 %v10033
      %v10268 = vunpack.c.l.b16 %v10034
      %v10269 = vpack.c.b16 %v10262, %v10261
      %v10270 = vpack.c.b16 %v10264, %v10263
      %v10271 = vpack.c.b16 %v10266, %v10265
      %v10272 = vpack.c.b16 %v10268, %v10267
      %v10274 = vsel %vm1623, %v10269, 0
      %v10277 = vsel %vm1623, %v10270, 0
      %v10280 = vsel %vm1623, %v10271, 0
      %v10283 = vsel %vm1623, %v10272, 0
      %v10286 = vsel %vm1645, %v10035, 0
      %10288 = vmatprep.subr.bf16.mxu0 0
      %10289 = vmatpush1.bf16.msra.mxu0 %v10286
      %10290 = vmatprep.subr.bf16.mxu0 0
      %10291 = vmatpush1.bf16.msra.mxu0 0
      %10292 = vmatprep.subr.bf16.mxu0 0
      %10293 = vmatpush1.bf16.msra.mxu0 0
      %10294 = vmatprep.subr.bf16.mxu0 0
      %10295 = vmatpush1.bf16.msra.mxu0 0
      %10296 = vmatprep.subr.bf16.mxu0 0
      %10297 = vmatpush1.bf16.msra.mxu0 0
      %10298 = vmatprep.subr.bf16.mxu0 0
      %10299 = vmatpush1.bf16.msra.mxu0 0
      %10300 = vmatprep.subr.bf16.mxu0 0
      %10301 = vmatpush1.bf16.msra.mxu0 0
      %10302 = vmatprep.subr.bf16.mxu0 0
      %10303 = vmatpush1.bf16.msra.mxu0 0
      %10304 = vmatprep.subr.bf16.mxu0 0
      %10305 = vmatpush1.bf16.msra.mxu0 0
      %10306 = vmatprep.subr.bf16.mxu0 0
      %10307 = vmatpush1.bf16.msra.mxu0 0
      %10308 = vmatprep.subr.bf16.mxu0 0
      %10309 = vmatpush1.bf16.msra.mxu0 0
      %10310 = vmatprep.subr.bf16.mxu0 0
      %10311 = vmatpush1.bf16.msra.mxu0 0
      %10312 = vmatprep.subr.bf16.mxu0 0
      %10313 = vmatpush1.bf16.msra.mxu0 0
      %10314 = vmatprep.subr.bf16.mxu0 0
      %10315 = vmatpush1.bf16.msra.mxu0 0
      %10316 = vmatprep.subr.bf16.mxu0 0
      %10317 = vmatpush1.bf16.msra.mxu0 0
      %10318 = vmatprep.subr.bf16.mxu0 0
      %10319 = vmatpush1.bf16.msra.mxu0 0
      %10320 = vmatprep.mubr.bf16.mxu0 0
      %10321 = vmatmul.mubr.bf16.gmra.mrb[0].mxu0 %v10274
      %v10322 = vpop.f32.mrb[0].mxu0
      %v10323 = vadd.f32 %v10223, %v10322
      %v10324 = vpop.f32.mrb[0].mxu0
      %v10325 = vpop.f32.mrb[0].mxu0
      %v10326 = vadd.f32 %v10226, %v10325
      %v10327 = vpop.f32.mrb[0].mxu0
      %10328 = vmatprep.mubr.bf16.mxu0 0
      %10329 = vmatmul.mubr.bf16.gmra.mrb[0].mxu0 %v10277
      %v10330 = vpop.f32.mrb[0].mxu0
      %v10331 = vadd.f32 %v10231, %v10330
      %v10332 = vpop.f32.mrb[0].mxu0
      %v10333 = vpop.f32.mrb[0].mxu0
      %v10334 = vadd.f32 %v10234, %v10333
      %v10335 = vpop.f32.mrb[0].mxu0
      %10336 = vmatprep.mubr.bf16.mxu0 0
      %10337 = vmatmul.mubr.bf16.gmra.mrb[0].mxu0 %v10280
      %v10338 = vpop.f32.mrb[0].mxu0
      %v10339 = vadd.f32 %v10239, %v10338
      %v10340 = vpop.f32.mrb[0].mxu0
      %v10341 = vpop.f32.mrb[0].mxu0
      %v10342 = vadd.f32 %v10242, %v10341
      %v10343 = vpop.f32.mrb[0].mxu0
      %10344 = vmatprep.mubr.bf16.mxu0 0
      %10345 = vmatmul.mubr.bf16.gmra.mrb[0].mxu0 %v10283
      %v10346 = vpop.f32.mrb[0].mxu0
      %v10347 = vadd.f32 %v10247, %v10346
      %v10348 = vpop.f32.mrb[0].mxu0
      %v10349 = vpop.f32.mrb[0].mxu0
      %v10350 = vadd.f32 %v10250, %v10349
      %v10351 = vpop.f32.mrb[0].mxu0
      %10352 = vdwg.mxu0
      %v10353 = vld [vmem:[#allocation2] sm:$0xe]
      %v10354 = vld [vmem:[#allocation2 + $0x8] sm:$0xe]
      %v10355 = vld [vmem:[#allocation2 + $0x10] sm:$0xe]
      %v10356 = vld [vmem:[#allocation2 + $0x18] sm:$0xe]
      %v10357 = vld [vmem:[#allocation2 + $0x20] sm:$0xe]
      %v10358 = vld [vmem:[#allocation2 + $0x28] sm:$0xe]
      %v10359 = vld [vmem:[#allocation2 + $0x30] sm:$0xe]
      %v10360 = vld [vmem:[#allocation2 + $0x38] sm:$0xe]
      %vm10377 = vcmask 1042432
      %vm10378 = vcmask 1046532
      %vm10379 = vmor %vm10377, %vm10378
      %v10380 = vrot.slane %v10353, 5
      %v10381 = vrot.slane %v10380, 4
      %v10382 = vrot.slane %v10036, 5
      %v10383 = vsel %vm10379, %v10381, %v10382
      %v10384 = vrot.slane %v10354, 5
      %v10385 = vrot.slane %v10384, 4
      %v10386 = vrot.slane %v10037, 5
      %v10387 = vsel %vm10379, %v10385, %v10386
      %v10388 = vrot.slane %v10355, 5
      %v10389 = vrot.slane %v10388, 4
      %v10390 = vrot.slane %v10038, 5
      %v10391 = vsel %vm10379, %v10389, %v10390
      %v10392 = vrot.slane %v10356, 5
      %v10393 = vrot.slane %v10392, 4
      %v10394 = vrot.slane %v10039, 5
      %v10395 = vsel %vm10379, %v10393, %v10394
      %v10396 = vrot.slane %v10357, 5
      %v10397 = vrot.slane %v10396, 4
      %v10398 = vrot.slane %v10040, 5
      %v10399 = vsel %vm10379, %v10397, %v10398
      %v10400 = vrot.slane %v10358, 5
      %v10401 = vrot.slane %v10400, 4
      %v10402 = vrot.slane %v10041, 5
      %v10403 = vsel %vm10379, %v10401, %v10402
      %v10404 = vrot.slane %v10359, 5
      %v10405 = vrot.slane %v10404, 4
      %v10406 = vrot.slane %v10042, 5
      %v10407 = vsel %vm10379, %v10405, %v10406
      %v10408 = vrot.slane %v10360, 5
      %v10409 = vrot.slane %v10408, 4
      %v10410 = vrot.slane %v10043, 5
      %v10411 = vsel %vm10379, %v10409, %v10410
      %s10412 = scalar_lea.vmem %s2, 8
      %v10413 = vld [vmem:[%s10412] sm:$0xf]
      %v10414 = vunpack.c.l.b16 %v10383
      %v10415 = vunpack.c.l.b16 %v10387
      %v10416 = vunpack.c.l.b16 %v10391
      %v10417 = vunpack.c.l.b16 %v10395
      %v10418 = vunpack.c.l.b16 %v10399
      %v10419 = vunpack.c.l.b16 %v10403
      %v10420 = vunpack.c.l.b16 %v10407
      %v10421 = vunpack.c.l.b16 %v10411
      %v10422 = vpack.c.b16 %v10415, %v10414
      %v10423 = vpack.c.b16 %v10417, %v10416
      %v10424 = vpack.c.b16 %v10419, %v10418
      %v10425 = vpack.c.b16 %v10421, %v10420
      %v10427 = vsel %vm1623, %v10422, 0
      %v10430 = vsel %vm1623, %v10423, 0
      %v10433 = vsel %vm1623, %v10424, 0
      %v10436 = vsel %vm1623, %v10425, 0
      %v10439 = vsel %vm1645, %v10413, 0
      %10441 = vmatprep.subr.bf16.mxu0 0
      %10442 = vmatpush1.bf16.msra.mxu0 %v10439
      %10443 = vmatprep.subr.bf16.mxu0 0
      %10444 = vmatpush1.bf16.msra.mxu0 0
      %10445 = vmatprep.subr.bf16.mxu0 0
      %10446 = vmatpush1.bf16.msra.mxu0 0
      %10447 = vmatprep.subr.bf16.mxu0 0
      %10448 = vmatpush1.bf16.msra.mxu0 0
      %10449 = vmatprep.subr.bf16.mxu0 0
      %10450 = vmatpush1.bf16.msra.mxu0 0
      %10451 = vmatprep.subr.bf16.mxu0 0
      %10452 = vmatpush1.bf16.msra.mxu0 0
      %10453 = vmatprep.subr.bf16.mxu0 0
      %10454 = vmatpush1.bf16.msra.mxu0 0
      %10455 = vmatprep.subr.bf16.mxu0 0
      %10456 = vmatpush1.bf16.msra.mxu0 0
      %10457 = vmatprep.subr.bf16.mxu0 0
      %10458 = vmatpush1.bf16.msra.mxu0 0
      %10459 = vmatprep.subr.bf16.mxu0 0
      %10460 = vmatpush1.bf16.msra.mxu0 0
      %10461 = vmatprep.subr.bf16.mxu0 0
      %10462 = vmatpush1.bf16.msra.mxu0 0
      %10463 = vmatprep.subr.bf16.mxu0 0
      %10464 = vmatpush1.bf16.msra.mxu0 0
      %10465 = vmatprep.subr.bf16.mxu0 0
      %10466 = vmatpush1.bf16.msra.mxu0 0
      %10467 = vmatprep.subr.bf16.mxu0 0
      %10468 = vmatpush1.bf16.msra.mxu0 0
      %10469 = vmatprep.subr.bf16.mxu0 0
      %10470 = vmatpush1.bf16.msra.mxu0 0
      %10471 = vmatprep.subr.bf16.mxu0 0
      %10472 = vmatpush1.bf16.msra.mxu0 0
      %10473 = vmatprep.mubr.bf16.mxu0 0
      %10474 = vmatmul.mubr.bf16.gmra.mrb[0].mxu0 %v10427
      %v10475 = vpop.f32.mrb[0].mxu0
      %v10476 = vadd.f32 0.0, %v10475
      %v10477 = vpop.f32.mrb[0].mxu0
      %v10478 = vpop.f32.mrb[0].mxu0
      %v10479 = vadd.f32 0.0, %v10478
      %v10480 = vpop.f32.mrb[0].mxu0
      %10481 = vmatprep.mubr.bf16.mxu0 0
      %10482 = vmatmul.mubr.bf16.gmra.mrb[0].mxu0 %v10430
      %v10483 = vpop.f32.mrb[0].mxu0
      %v10484 = vadd.f32 0.0, %v10483
      %v10485 = vpop.f32.mrb[0].mxu0
      %v10486 = vpop.f32.mrb[0].mxu0
      %v10487 = vadd.f32 0.0, %v10486
      %v10488 = vpop.f32.mrb[0].mxu0
      %10489 = vmatprep.mubr.bf16.mxu0 0
      %10490 = vmatmul.mubr.bf16.gmra.mrb[0].mxu0 %v10433
      %v10491 = vpop.f32.mrb[0].mxu0
      %v10492 = vadd.f32 0.0, %v10491
      %v10493 = vpop.f32.mrb[0].mxu0
      %v10494 = vpop.f32.mrb[0].mxu0
      %v10495 = vadd.f32 0.0, %v10494
      %v10496 = vpop.f32.mrb[0].mxu0
      %10497 = vmatprep.mubr.bf16.mxu0 0
      %10498 = vmatmul.mubr.bf16.gmra.mrb[0].mxu0 %v10436
      %v10499 = vpop.f32.mrb[0].mxu0
      %v10500 = vadd.f32 0.0, %v10499
      %v10501 = vpop.f32.mrb[0].mxu0
      %v10502 = vpop.f32.mrb[0].mxu0
      %v10503 = vadd.f32 0.0, %v10502
      %v10504 = vpop.f32.mrb[0].mxu0
      %10505 = vdwg.mxu0
      %v10506 = vadd.f32 %v10323, %v10476
      %v10507 = vadd.f32 %v10326, %v10479
      %v10508 = vadd.f32 %v10331, %v10484
      %v10509 = vadd.f32 %v10334, %v10487
      %v10510 = vadd.f32 %v10339, %v10492
      %v10511 = vadd.f32 %v10342, %v10495
      %v10512 = vadd.f32 %v10347, %v10500
      %v10513 = vadd.f32 %v10350, %v10503
      %s10514 = scalar_lea.vmem [#allocation2], 8
      %v10515 = vld [vmem:[%s10514] sm:$0xf]
      %v10516 = vld [vmem:[%s10514 + $0x8] sm:$0xf]
      %v10517 = vld [vmem:[%s10514 + $0x10] sm:$0xf]
      %v10518 = vld [vmem:[%s10514 + $0x18] sm:$0xf]
      %v10519 = vld [vmem:[%s10514 + $0x20] sm:$0xf]
      %v10520 = vld [vmem:[%s10514 + $0x28] sm:$0xf]
      %v10521 = vld [vmem:[%s10514 + $0x30] sm:$0xf]
      %v10522 = vld [vmem:[%s10514 + $0x38] sm:$0xf]
      %s10523 = scalar_lea.vmem %s2, 12
      %v10524 = vld [vmem:[%s10523] sm:$0xf]
      %v10533 = vunpack.c.l.b16 %v10515
      %v10534 = vunpack.c.l.b16 %v10516
      %v10535 = vunpack.c.l.b16 %v10517
      %v10536 = vunpack.c.l.b16 %v10518
      %v10537 = vunpack.c.l.b16 %v10519
      %v10538 = vunpack.c.l.b16 %v10520
      %v10539 = vunpack.c.l.b16 %v10521
      %v10540 = vunpack.c.l.b16 %v10522
      %v10541 = vpack.c.b16 %v10534, %v10533
      %v10542 = vpack.c.b16 %v10536, %v10535
      %v10543 = vpack.c.b16 %v10538, %v10537
      %v10544 = vpack.c.b16 %v10540, %v10539
      %v10546 = vsel %vm1623, %v10541, 0
      %v10549 = vsel %vm1623, %v10542, 0
      %v10552 = vsel %vm1623, %v10543, 0
      %v10555 = vsel %vm1623, %v10544, 0
      %v10558 = vsel %vm1645, %v10524, 0
      %10560 = vmatprep.subr.bf16.mxu0 0
      %10561 = vmatpush1.bf16.msra.mxu0 %v10558
      %10562 = vmatprep.subr.bf16.mxu0 0
      %10563 = vmatpush1.bf16.msra.mxu0 0
      %10564 = vmatprep.subr.bf16.mxu0 0
      %10565 = vmatpush1.bf16.msra.mxu0 0
      %10566 = vmatprep.subr.bf16.mxu0 0
      %10567 = vmatpush1.bf16.msra.mxu0 0
      %10568 = vmatprep.subr.bf16.mxu0 0
      %10569 = vmatpush1.bf16.msra.mxu0 0
      %10570 = vmatprep.subr.bf16.mxu0 0
      %10571 = vmatpush1.bf16.msra.mxu0 0
      %10572 = vmatprep.subr.bf16.mxu0 0
      %10573 = vmatpush1.bf16.msra.mxu0 0
      %10574 = vmatprep.subr.bf16.mxu0 0
      %10575 = vmatpush1.bf16.msra.mxu0 0
      %10576 = vmatprep.subr.bf16.mxu0 0
      %10577 = vmatpush1.bf16.msra.mxu0 0
      %10578 = vmatprep.subr.bf16.mxu0 0
      %10579 = vmatpush1.bf16.msra.mxu0 0
      %10580 = vmatprep.subr.bf16.mxu0 0
      %10581 = vmatpush1.bf16.msra.mxu0 0
      %10582 = vmatprep.subr.bf16.mxu0 0
      %10583 = vmatpush1.bf16.msra.mxu0 0
      %10584 = vmatprep.subr.bf16.mxu0 0
      %10585 = vmatpush1.bf16.msra.mxu0 0
      %10586 = vmatprep.subr.bf16.mxu0 0
      %10587 = vmatpush1.bf16.msra.mxu0 0
      %10588 = vmatprep.subr.bf16.mxu0 0
      %10589 = vmatpush1.bf16.msra.mxu0 0
      %10590 = vmatprep.subr.bf16.mxu0 0
      %10591 = vmatpush1.bf16.msra.mxu0 0
      %10592 = vmatprep.mubr.bf16.mxu0 0
      %10593 = vmatmul.mubr.bf16.gmra.mrb[0].mxu0 %v10546
      %v10594 = vpop.f32.mrb[0].mxu0
      %v10595 = vadd.f32 0.0, %v10594
      %v10596 = vpop.f32.mrb[0].mxu0
      %v10597 = vpop.f32.mrb[0].mxu0
      %v10598 = vadd.f32 0.0, %v10597
      %v10599 = vpop.f32.mrb[0].mxu0
      %10600 = vmatprep.mubr.bf16.mxu0 0
      %10601 = vmatmul.mubr.bf16.gmra.mrb[0].mxu0 %v10549
      %v10602 = vpop.f32.mrb[0].mxu0
      %v10603 = vadd.f32 0.0, %v10602
      %v10604 = vpop.f32.mrb[0].mxu0
      %v10605 = vpop.f32.mrb[0].mxu0
      %v10606 = vadd.f32 0.0, %v10605
      %v10607 = vpop.f32.mrb[0].mxu0
      %10608 = vmatprep.mubr.bf16.mxu0 0
      %10609 = vmatmul.mubr.bf16.gmra.mrb[0].mxu0 %v10552
      %v10610 = vpop.f32.mrb[0].mxu0
      %v10611 = vadd.f32 0.0, %v10610
      %v10612 = vpop.f32.mrb[0].mxu0
      %v10613 = vpop.f32.mrb[0].mxu0
      %v10614 = vadd.f32 0.0, %v10613
      %v10615 = vpop.f32.mrb[0].mxu0
      %10616 = vmatprep.mubr.bf16.mxu0 0
      %10617 = vmatmul.mubr.bf16.gmra.mrb[0].mxu0 %v10555
      %v10618 = vpop.f32.mrb[0].mxu0
      %v10619 = vadd.f32 0.0, %v10618
      %v10620 = vpop.f32.mrb[0].mxu0
      %v10621 = vpop.f32.mrb[0].mxu0
      %v10622 = vadd.f32 0.0, %v10621
      %v10623 = vpop.f32.mrb[0].mxu0
      %10624 = vdwg.mxu0
      %v10625 = vadd.f32 %v10506, %v10595
      %v10626 = vadd.f32 %v10507, %v10598
      %v10627 = vadd.f32 %v10508, %v10603
      %v10628 = vadd.f32 %v10509, %v10606
      %v10629 = vadd.f32 %v10510, %v10611
      %v10630 = vadd.f32 %v10511, %v10614
      %v10631 = vadd.f32 %v10512, %v10619
      %v10632 = vadd.f32 %v10513, %v10622
      %v10633 = vld [vmem:[%s10514] sm:$0xf]
      %v10634 = vld [vmem:[%s10514 + $0x4] sm:$0x1]
      %v10635 = vld [vmem:[%s10514 + $0x8] sm:$0xf]
      %v10636 = vld [vmem:[%s10514 + $0xc] sm:$0x1]
      %v10637 = vld [vmem:[%s10514 + $0x10] sm:$0xf]
      %v10638 = vld [vmem:[%s10514 + $0x14] sm:$0x1]
      %v10639 = vld [vmem:[%s10514 + $0x18] sm:$0xf]
      %v10640 = vld [vmem:[%s10514 + $0x1c] sm:$0x1]
      %v10641 = vld [vmem:[%s10514 + $0x20] sm:$0xf]
      %v10642 = vld [vmem:[%s10514 + $0x24] sm:$0x1]
      %v10643 = vld [vmem:[%s10514 + $0x28] sm:$0xf]
      %v10644 = vld [vmem:[%s10514 + $0x2c] sm:$0x1]
      %v10645 = vld [vmem:[%s10514 + $0x30] sm:$0xf]
      %v10646 = vld [vmem:[%s10514 + $0x34] sm:$0x1]
      %v10647 = vld [vmem:[%s10514 + $0x38] sm:$0xf]
      %v10648 = vld [vmem:[%s10514 + $0x3c] sm:$0x1]
      %v10650 = vshrl.u32 %v10633, 16
      %v10652 = vrot.slane %v10650, 4
      %v10653 = vshll.u32 %v10633, 16
      %v10655 = vrot.slane %v10653, 5
      %v10656 = vor.u32 %v10652, %v10655
      %v10657 = vrot.slane %v10656, 4
      %v10659 = vshll.u32 %v10634, 16
      %v10661 = vrot.slane %v10659, 5
      %v10662 = vsel %vm10046, %v10657, %v10661
      %v10664 = vshrl.u32 %v10635, 16
      %v10666 = vrot.slane %v10664, 4
      %v10667 = vshll.u32 %v10635, 16
      %v10669 = vrot.slane %v10667, 5
      %v10670 = vor.u32 %v10666, %v10669
      %v10671 = vrot.slane %v10670, 4
      %v10673 = vshll.u32 %v10636, 16
      %v10675 = vrot.slane %v10673, 5
      %v10676 = vsel %vm10046, %v10671, %v10675
      %v10678 = vshrl.u32 %v10637, 16
      %v10680 = vrot.slane %v10678, 4
      %v10681 = vshll.u32 %v10637, 16
      %v10683 = vrot.slane %v10681, 5
      %v10684 = vor.u32 %v10680, %v10683
      %v10685 = vrot.slane %v10684, 4
      %v10687 = vshll.u32 %v10638, 16
      %v10689 = vrot.slane %v10687, 5
      %v10690 = vsel %vm10046, %v10685, %v10689
      %v10692 = vshrl.u32 %v10639, 16
      %v10694 = vrot.slane %v10692, 4
      %v10695 = vshll.u32 %v10639, 16
      %v10697 = vrot.slane %v10695, 5
      %v10698 = vor.u32 %v10694, %v10697
      %v10699 = vrot.slane %v10698, 4
      %v10701 = vshll.u32 %v10640, 16
      %v10703 = vrot.slane %v10701, 5
      %v10704 = vsel %vm10046, %v10699, %v10703
      %v10706 = vshrl.u32 %v10641, 16
      %v10708 = vrot.slane %v10706, 4
      %v10709 = vshll.u32 %v10641, 16
      %v10711 = vrot.slane %v10709, 5
      %v10712 = vor.u32 %v10708, %v10711
      %v10713 = vrot.slane %v10712, 4
      %v10715 = vshll.u32 %v10642, 16
      %v10717 = vrot.slane %v10715, 5
      %v10718 = vsel %vm10046, %v10713, %v10717
      %v10720 = vshrl.u32 %v10643, 16
      %v10722 = vrot.slane %v10720, 4
      %v10723 = vshll.u32 %v10643, 16
      %v10725 = vrot.slane %v10723, 5
      %v10726 = vor.u32 %v10722, %v10725
      %v10727 = vrot.slane %v10726, 4
      %v10729 = vshll.u32 %v10644, 16
      %v10731 = vrot.slane %v10729, 5
      %v10732 = vsel %vm10046, %v10727, %v10731
      %v10734 = vshrl.u32 %v10645, 16
      %v10736 = vrot.slane %v10734, 4
      %v10737 = vshll.u32 %v10645, 16
      %v10739 = vrot.slane %v10737, 5
      %v10740 = vor.u32 %v10736, %v10739
      %v10741 = vrot.slane %v10740, 4
      %v10743 = vshll.u32 %v10646, 16
      %v10745 = vrot.slane %v10743, 5
      %v10746 = vsel %vm10046, %v10741, %v10745
      %v10748 = vshrl.u32 %v10647, 16
      %v10750 = vrot.slane %v10748, 4
      %v10751 = vshll.u32 %v10647, 16
      %v10753 = vrot.slane %v10751, 5
      %v10754 = vor.u32 %v10750, %v10753
      %v10755 = vrot.slane %v10754, 4
      %v10757 = vshll.u32 %v10648, 16
      %v10759 = vrot.slane %v10757, 5
      %v10760 = vsel %vm10046, %v10755, %v10759
      %s10761 = scalar_lea.vmem %s2, 16
      %v10762 = vld [vmem:[%s10761] sm:$0xf]
      %v10763 = vunpack.c.l.b16 %v10662
      %v10764 = vunpack.c.l.b16 %v10676
      %v10765 = vunpack.c.l.b16 %v10690
      %v10766 = vunpack.c.l.b16 %v10704
      %v10767 = vunpack.c.l.b16 %v10718
      %v10768 = vunpack.c.l.b16 %v10732
      %v10769 = vunpack.c.l.b16 %v10746
      %v10770 = vunpack.c.l.b16 %v10760
      %v10771 = vpack.c.b16 %v10764, %v10763
      %v10772 = vpack.c.b16 %v10766, %v10765
      %v10773 = vpack.c.b16 %v10768, %v10767
      %v10774 = vpack.c.b16 %v10770, %v10769
      %v10776 = vsel %vm1623, %v10771, 0
      %v10779 = vsel %vm1623, %v10772, 0
      %v10782 = vsel %vm1623, %v10773, 0
      %v10785 = vsel %vm1623, %v10774, 0
      %v10788 = vsel %vm1645, %v10762, 0
      %10790 = vmatprep.subr.bf16.mxu0 0
      %10791 = vmatpush1.bf16.msra.mxu0 %v10788
      %10792 = vmatprep.subr.bf16.mxu0 0
      %10793 = vmatpush1.bf16.msra.mxu0 0
      %10794 = vmatprep.subr.bf16.mxu0 0
      %10795 = vmatpush1.bf16.msra.mxu0 0
      %10796 = vmatprep.subr.bf16.mxu0 0
      %10797 = vmatpush1.bf16.msra.mxu0 0
      %10798 = vmatprep.subr.bf16.mxu0 0
      %10799 = vmatpush1.bf16.msra.mxu0 0
      %10800 = vmatprep.subr.bf16.mxu0 0
      %10801 = vmatpush1.bf16.msra.mxu0 0
      %10802 = vmatprep.subr.bf16.mxu0 0
      %10803 = vmatpush1.bf16.msra.mxu0 0
      %10804 = vmatprep.subr.bf16.mxu0 0
      %10805 = vmatpush1.bf16.msra.mxu0 0
      %10806 = vmatprep.subr.bf16.mxu0 0
      %10807 = vmatpush1.bf16.msra.mxu0 0
      %10808 = vmatprep.subr.bf16.mxu0 0
      %10809 = vmatpush1.bf16.msra.mxu0 0
      %10810 = vmatprep.subr.bf16.mxu0 0
      %10811 = vmatpush1.bf16.msra.mxu0 0
      %10812 = vmatprep.subr.bf16.mxu0 0
      %10813 = vmatpush1.bf16.msra.mxu0 0
      %10814 = vmatprep.subr.bf16.mxu0 0
      %10815 = vmatpush1.bf16.msra.mxu0 0
      %10816 = vmatprep.subr.bf16.mxu0 0
      %10817 = vmatpush1.bf16.msra.mxu0 0
      %10818 = vmatprep.subr.bf16.mxu0 0
      %10819 = vmatpush1.bf16.msra.mxu0 0
      %10820 = vmatprep.subr.bf16.mxu0 0
      %10821 = vmatpush1.bf16.msra.mxu0 0
      %10822 = vmatprep.mubr.bf16.mxu0 0
      %10823 = vmatmul.mubr.bf16.gmra.mrb[0].mxu0 %v10776
      %v10824 = vpop.f32.mrb[0].mxu0
      %v10825 = vadd.f32 0.0, %v10824
      %v10826 = vpop.f32.mrb[0].mxu0
      %v10827 = vpop.f32.mrb[0].mxu0
      %v10828 = vadd.f32 0.0, %v10827
      %v10829 = vpop.f32.mrb[0].mxu0
      %10830 = vmatprep.mubr.bf16.mxu0 0
      %10831 = vmatmul.mubr.bf16.gmra.mrb[0].mxu0 %v10779
      %v10832 = vpop.f32.mrb[0].mxu0
      %v10833 = vadd.f32 0.0, %v10832
      %v10834 = vpop.f32.mrb[0].mxu0
      %v10835 = vpop.f32.mrb[0].mxu0
      %v10836 = vadd.f32 0.0, %v10835
      %v10837 = vpop.f32.mrb[0].mxu0
      %10838 = vmatprep.mubr.bf16.mxu0 0
      %10839 = vmatmul.mubr.bf16.gmra.mrb[0].mxu0 %v10782
      %v10840 = vpop.f32.mrb[0].mxu0
      %v10841 = vadd.f32 0.0, %v10840
      %v10842 = vpop.f32.mrb[0].mxu0
      %v10843 = vpop.f32.mrb[0].mxu0
      %v10844 = vadd.f32 0.0, %v10843
      %v10845 = vpop.f32.mrb[0].mxu0
      %10846 = vmatprep.mubr.bf16.mxu0 0
      %10847 = vmatmul.mubr.bf16.gmra.mrb[0].mxu0 %v10785
      %v10848 = vpop.f32.mrb[0].mxu0
      %v10849 = vadd.f32 0.0, %v10848
      %v10850 = vpop.f32.mrb[0].mxu0
      %v10851 = vpop.f32.mrb[0].mxu0
      %v10852 = vadd.f32 0.0, %v10851
      %v10853 = vpop.f32.mrb[0].mxu0
      %10854 = vdwg.mxu0
      %v10855 = vadd.f32 %v10625, %v10825
      %v10856 = vadd.f32 %v10626, %v10828
      %v10857 = vadd.f32 %v10627, %v10833
      %v10858 = vadd.f32 %v10628, %v10836
      %v10859 = vadd.f32 %v10629, %v10841
      %v10860 = vadd.f32 %v10630, %v10844
      %v10861 = vadd.f32 %v10631, %v10849
      %v10862 = vadd.f32 %v10632, %v10852
      %v10863 = vld [vmem:[%s10514] sm:$0xe]
      %v10864 = vld [vmem:[%s10514 + $0x8] sm:$0xe]
      %v10865 = vld [vmem:[%s10514 + $0x10] sm:$0xe]
      %v10866 = vld [vmem:[%s10514 + $0x18] sm:$0xe]
      %v10867 = vld [vmem:[%s10514 + $0x20] sm:$0xe]
      %v10868 = vld [vmem:[%s10514 + $0x28] sm:$0xe]
      %v10869 = vld [vmem:[%s10514 + $0x30] sm:$0xe]
      %v10870 = vld [vmem:[%s10514 + $0x38] sm:$0xe]
      %v10887 = vrot.slane %v10863, 5
      %v10888 = vrot.slane %v10887, 4
      %v10889 = vrot.slane %v10634, 5
      %v10890 = vsel %vm10379, %v10888, %v10889
      %v10891 = vrot.slane %v10864, 5
      %v10892 = vrot.slane %v10891, 4
      %v10893 = vrot.slane %v10636, 5
      %v10894 = vsel %vm10379, %v10892, %v10893
      %v10895 = vrot.slane %v10865, 5
      %v10896 = vrot.slane %v10895, 4
      %v10897 = vrot.slane %v10638, 5
      %v10898 = vsel %vm10379, %v10896, %v10897
      %v10899 = vrot.slane %v10866, 5
      %v10900 = vrot.slane %v10899, 4
      %v10901 = vrot.slane %v10640, 5
      %v10902 = vsel %vm10379, %v10900, %v10901
      %v10903 = vrot.slane %v10867, 5
      %v10904 = vrot.slane %v10903, 4
      %v10905 = vrot.slane %v10642, 5
      %v10906 = vsel %vm10379, %v10904, %v10905
      %v10907 = vrot.slane %v10868, 5
      %v10908 = vrot.slane %v10907, 4
      %v10909 = vrot.slane %v10644, 5
      %v10910 = vsel %vm10379, %v10908, %v10909
      %v10911 = vrot.slane %v10869, 5
      %v10912 = vrot.slane %v10911, 4
      %v10913 = vrot.slane %v10646, 5
      %v10914 = vsel %vm10379, %v10912, %v10913
      %v10915 = vrot.slane %v10870, 5
      %v10916 = vrot.slane %v10915, 4
      %v10917 = vrot.slane %v10648, 5
      %v10918 = vsel %vm10379, %v10916, %v10917
      %s10919 = scalar_lea.vmem %s2, 20
      %v10920 = vld [vmem:[%s10919] sm:$0xf]
      %v10921 = vunpack.c.l.b16 %v10890
      %v10922 = vunpack.c.l.b16 %v10894
      %v10923 = vunpack.c.l.b16 %v10898
      %v10924 = vunpack.c.l.b16 %v10902
      %v10925 = vunpack.c.l.b16 %v10906
      %v10926 = vunpack.c.l.b16 %v10910
      %v10927 = vunpack.c.l.b16 %v10914
      %v10928 = vunpack.c.l.b16 %v10918
      %v10929 = vpack.c.b16 %v10922, %v10921
      %v10930 = vpack.c.b16 %v10924, %v10923
      %v10931 = vpack.c.b16 %v10926, %v10925
      %v10932 = vpack.c.b16 %v10928, %v10927
      %v10934 = vsel %vm1623, %v10929, 0
      %v10937 = vsel %vm1623, %v10930, 0
      %v10940 = vsel %vm1623, %v10931, 0
      %v10943 = vsel %vm1623, %v10932, 0
      %v10946 = vsel %vm1645, %v10920, 0
      %10948 = vmatprep.subr.bf16.mxu0 0
      %10949 = vmatpush1.bf16.msra.mxu0 %v10946
      %10950 = vmatprep.subr.bf16.mxu0 0
      %10951 = vmatpush1.bf16.msra.mxu0 0
      %10952 = vmatprep.subr.bf16.mxu0 0
      %10953 = vmatpush1.bf16.msra.mxu0 0
      %10954 = vmatprep.subr.bf16.mxu0 0
      %10955 = vmatpush1.bf16.msra.mxu0 0
      %10956 = vmatprep.subr.bf16.mxu0 0
      %10957 = vmatpush1.bf16.msra.mxu0 0
      %10958 = vmatprep.subr.bf16.mxu0 0
      %10959 = vmatpush1.bf16.msra.mxu0 0
      %10960 = vmatprep.subr.bf16.mxu0 0
      %10961 = vmatpush1.bf16.msra.mxu0 0
      %10962 = vmatprep.subr.bf16.mxu0 0
      %10963 = vmatpush1.bf16.msra.mxu0 0
      %10964 = vmatprep.subr.bf16.mxu0 0
      %10965 = vmatpush1.bf16.msra.mxu0 0
      %10966 = vmatprep.subr.bf16.mxu0 0
      %10967 = vmatpush1.bf16.msra.mxu0 0
      %10968 = vmatprep.subr.bf16.mxu0 0
      %10969 = vmatpush1.bf16.msra.mxu0 0
      %10970 = vmatprep.subr.bf16.mxu0 0
      %10971 = vmatpush1.bf16.msra.mxu0 0
      %10972 = vmatprep.subr.bf16.mxu0 0
      %10973 = vmatpush1.bf16.msra.mxu0 0
      %10974 = vmatprep.subr.bf16.mxu0 0
      %10975 = vmatpush1.bf16.msra.mxu0 0
      %10976 = vmatprep.subr.bf16.mxu0 0
      %10977 = vmatpush1.bf16.msra.mxu0 0
      %10978 = vmatprep.subr.bf16.mxu0 0
      %10979 = vmatpush1.bf16.msra.mxu0 0
      %10980 = vmatprep.mubr.bf16.mxu0 0
      %10981 = vmatmul.mubr.bf16.gmra.mrb[0].mxu0 %v10934
      %v10982 = vpop.f32.mrb[0].mxu0
      %v10983 = vadd.f32 0.0, %v10982
      %v10984 = vpop.f32.mrb[0].mxu0
      %v10985 = vpop.f32.mrb[0].mxu0
      %v10986 = vadd.f32 0.0, %v10985
      %v10987 = vpop.f32.mrb[0].mxu0
      %10988 = vmatprep.mubr.bf16.mxu0 0
      %10989 = vmatmul.mubr.bf16.gmra.mrb[0].mxu0 %v10937
      %v10990 = vpop.f32.mrb[0].mxu0
      %v10991 = vadd.f32 0.0, %v10990
      %v10992 = vpop.f32.mrb[0].mxu0
      %v10993 = vpop.f32.mrb[0].mxu0
      %v10994 = vadd.f32 0.0, %v10993
      %v10995 = vpop.f32.mrb[0].mxu0
      %10996 = vmatprep.mubr.bf16.mxu0 0
      %10997 = vmatmul.mubr.bf16.gmra.mrb[0].mxu0 %v10940
      %v10998 = vpop.f32.mrb[0].mxu0
      %v10999 = vadd.f32 0.0, %v10998
      %v11000 = vpop.f32.mrb[0].mxu0
      %v11001 = vpop.f32.mrb[0].mxu0
      %v11002 = vadd.f32 0.0, %v11001
      %v11003 = vpop.f32.mrb[0].mxu0
      %11004 = vmatprep.mubr.bf16.mxu0 0
      %11005 = vmatmul.mubr.bf16.gmra.mrb[0].mxu0 %v10943
      %v11006 = vpop.f32.mrb[0].mxu0
      %v11007 = vadd.f32 0.0, %v11006
      %v11008 = vpop.f32.mrb[0].mxu0
      %v11009 = vpop.f32.mrb[0].mxu0
      %v11010 = vadd.f32 0.0, %v11009
      %v11011 = vpop.f32.mrb[0].mxu0
      %11012 = vdwg.mxu0
      %v11013 = vadd.f32 %v10855, %v10983
      %v11014 = vadd.f32 %v10856, %v10986
      %v11015 = vadd.f32 %v10857, %v10991
      %v11016 = vadd.f32 %v10858, %v10994
      %v11017 = vadd.f32 %v10859, %v10999
      %v11018 = vadd.f32 %v10860, %v11002
      %v11019 = vadd.f32 %v10861, %v11007
      %v11020 = vadd.f32 %v10862, %v11010
      %s11021 = scalar_lea.vmem [#allocation2], 16
      %v11022 = vld [vmem:[%s11021] sm:$0xf]
      %v11023 = vld [vmem:[%s11021 + $0x8] sm:$0xf]
      %v11024 = vld [vmem:[%s11021 + $0x10] sm:$0xf]
      %v11025 = vld [vmem:[%s11021 + $0x18] sm:$0xf]
      %v11026 = vld [vmem:[%s11021 + $0x20] sm:$0xf]
      %v11027 = vld [vmem:[%s11021 + $0x28] sm:$0xf]
      %v11028 = vld [vmem:[%s11021 + $0x30] sm:$0xf]
      %v11029 = vld [vmem:[%s11021 + $0x38] sm:$0xf]
      %s11030 = scalar_lea.vmem %s2, 24
      %v11031 = vld [vmem:[%s11030] sm:$0xf]
      %v11040 = vunpack.c.l.b16 %v11022
      %v11041 = vunpack.c.l.b16 %v11023
      %v11042 = vunpack.c.l.b16 %v11024
      %v11043 = vunpack.c.l.b16 %v11025
      %v11044 = vunpack.c.l.b16 %v11026
      %v11045 = vunpack.c.l.b16 %v11027
      %v11046 = vunpack.c.l.b16 %v11028
      %v11047 = vunpack.c.l.b16 %v11029
      %v11048 = vpack.c.b16 %v11041, %v11040
      %v11049 = vpack.c.b16 %v11043, %v11042
      %v11050 = vpack.c.b16 %v11045, %v11044
      %v11051 = vpack.c.b16 %v11047, %v11046
      %v11053 = vsel %vm1623, %v11048, 0
      %v11056 = vsel %vm1623, %v11049, 0
      %v11059 = vsel %vm1623, %v11050, 0
      %v11062 = vsel %vm1623, %v11051, 0
      %v11065 = vsel %vm1645, %v11031, 0
      %11067 = vmatprep.subr.bf16.mxu0 0
      %11068 = vmatpush1.bf16.msra.mxu0 %v11065
      %11069 = vmatprep.subr.bf16.mxu0 0
      %11070 = vmatpush1.bf16.msra.mxu0 0
      %11071 = vmatprep.subr.bf16.mxu0 0
      %11072 = vmatpush1.bf16.msra.mxu0 0
      %11073 = vmatprep.subr.bf16.mxu0 0
      %11074 = vmatpush1.bf16.msra.mxu0 0
      %11075 = vmatprep.subr.bf16.mxu0 0
      %11076 = vmatpush1.bf16.msra.mxu0 0
      %11077 = vmatprep.subr.bf16.mxu0 0
      %11078 = vmatpush1.bf16.msra.mxu0 0
      %11079 = vmatprep.subr.bf16.mxu0 0
      %11080 = vmatpush1.bf16.msra.mxu0 0
      %11081 = vmatprep.subr.bf16.mxu0 0
      %11082 = vmatpush1.bf16.msra.mxu0 0
      %11083 = vmatprep.subr.bf16.mxu0 0
      %11084 = vmatpush1.bf16.msra.mxu0 0
      %11085 = vmatprep.subr.bf16.mxu0 0
      %11086 = vmatpush1.bf16.msra.mxu0 0
      %11087 = vmatprep.subr.bf16.mxu0 0
      %11088 = vmatpush1.bf16.msra.mxu0 0
      %11089 = vmatprep.subr.bf16.mxu0 0
      %11090 = vmatpush1.bf16.msra.mxu0 0
      %11091 = vmatprep.subr.bf16.mxu0 0
      %11092 = vmatpush1.bf16.msra.mxu0 0
      %11093 = vmatprep.subr.bf16.mxu0 0
      %11094 = vmatpush1.bf16.msra.mxu0 0
      %11095 = vmatprep.subr.bf16.mxu0 0
      %11096 = vmatpush1.bf16.msra.mxu0 0
      %11097 = vmatprep.subr.bf16.mxu0 0
      %11098 = vmatpush1.bf16.msra.mxu0 0
      %11099 = vmatprep.mubr.bf16.mxu0 0
      %11100 = vmatmul.mubr.bf16.gmra.mrb[0].mxu0 %v11053
      %v11101 = vpop.f32.mrb[0].mxu0
      %v11102 = vadd.f32 0.0, %v11101
      %v11103 = vpop.f32.mrb[0].mxu0
      %v11104 = vpop.f32.mrb[0].mxu0
      %v11105 = vadd.f32 0.0, %v11104
      %v11106 = vpop.f32.mrb[0].mxu0
      %11107 = vmatprep.mubr.bf16.mxu0 0
      %11108 = vmatmul.mubr.bf16.gmra.mrb[0].mxu0 %v11056
      %v11109 = vpop.f32.mrb[0].mxu0
      %v11110 = vadd.f32 0.0, %v11109
      %v11111 = vpop.f32.mrb[0].mxu0
      %v11112 = vpop.f32.mrb[0].mxu0
      %v11113 = vadd.f32 0.0, %v11112
      %v11114 = vpop.f32.mrb[0].mxu0
      %11115 = vmatprep.mubr.bf16.mxu0 0
      %11116 = vmatmul.mubr.bf16.gmra.mrb[0].mxu0 %v11059
      %v11117 = vpop.f32.mrb[0].mxu0
      %v11118 = vadd.f32 0.0, %v11117
      %v11119 = vpop.f32.mrb[0].mxu0
      %v11120 = vpop.f32.mrb[0].mxu0
      %v11121 = vadd.f32 0.0, %v11120
      %v11122 = vpop.f32.mrb[0].mxu0
      %11123 = vmatprep.mubr.bf16.mxu0 0
      %11124 = vmatmul.mubr.bf16.gmra.mrb[0].mxu0 %v11062
      %v11125 = vpop.f32.mrb[0].mxu0
      %v11126 = vadd.f32 0.0, %v11125
      %v11127 = vpop.f32.mrb[0].mxu0
      %v11128 = vpop.f32.mrb[0].mxu0
      %v11129 = vadd.f32 0.0, %v11128
      %v11130 = vpop.f32.mrb[0].mxu0
      %11131 = vdwg.mxu0
      %v11132 = vadd.f32 %v11013, %v11102
      %v11133 = vadd.f32 %v11014, %v11105
      %v11134 = vadd.f32 %v11015, %v11110
      %v11135 = vadd.f32 %v11016, %v11113
      %v11136 = vadd.f32 %v11017, %v11118
      %v11137 = vadd.f32 %v11018, %v11121
      %v11138 = vadd.f32 %v11019, %v11126
      %v11139 = vadd.f32 %v11020, %v11129
      %v11140 = vld [vmem:[%s11021] sm:$0xf]
      %v11141 = vld [vmem:[%s11021 + $0x4] sm:$0x1]
      %v11142 = vld [vmem:[%s11021 + $0x8] sm:$0xf]
      %v11143 = vld [vmem:[%s11021 + $0xc] sm:$0x1]
      %v11144 = vld [vmem:[%s11021 + $0x10] sm:$0xf]
      %v11145 = vld [vmem:[%s11021 + $0x14] sm:$0x1]
      %v11146 = vld [vmem:[%s11021 + $0x18] sm:$0xf]
      %v11147 = vld [vmem:[%s11021 + $0x1c] sm:$0x1]
      %v11148 = vld [vmem:[%s11021 + $0x20] sm:$0xf]
      %v11149 = vld [vmem:[%s11021 + $0x24] sm:$0x1]
      %v11150 = vld [vmem:[%s11021 + $0x28] sm:$0xf]
      %v11151 = vld [vmem:[%s11021 + $0x2c] sm:$0x1]
      %v11152 = vld [vmem:[%s11021 + $0x30] sm:$0xf]
      %v11153 = vld [vmem:[%s11021 + $0x34] sm:$0x1]
      %v11154 = vld [vmem:[%s11021 + $0x38] sm:$0xf]
      %v11155 = vld [vmem:[%s11021 + $0x3c] sm:$0x1]
      %v11157 = vshrl.u32 %v11140, 16
      %v11159 = vrot.slane %v11157, 4
      %v11160 = vshll.u32 %v11140, 16
      %v11162 = vrot.slane %v11160, 5
      %v11163 = vor.u32 %v11159, %v11162
      %v11164 = vrot.slane %v11163, 4
      %v11166 = vshll.u32 %v11141, 16
      %v11168 = vrot.slane %v11166, 5
      %v11169 = vsel %vm10046, %v11164, %v11168
      %v11171 = vshrl.u32 %v11142, 16
      %v11173 = vrot.slane %v11171, 4
      %v11174 = vshll.u32 %v11142, 16
      %v11176 = vrot.slane %v11174, 5
      %v11177 = vor.u32 %v11173, %v11176
      %v11178 = vrot.slane %v11177, 4
      %v11180 = vshll.u32 %v11143, 16
      %v11182 = vrot.slane %v11180, 5
      %v11183 = vsel %vm10046, %v11178, %v11182
      %v11185 = vshrl.u32 %v11144, 16
      %v11187 = vrot.slane %v11185, 4
      %v11188 = vshll.u32 %v11144, 16
      %v11190 = vrot.slane %v11188, 5
      %v11191 = vor.u32 %v11187, %v11190
      %v11192 = vrot.slane %v11191, 4
      %v11194 = vshll.u32 %v11145, 16
      %v11196 = vrot.slane %v11194, 5
      %v11197 = vsel %vm10046, %v11192, %v11196
      %v11199 = vshrl.u32 %v11146, 16
      %v11201 = vrot.slane %v11199, 4
      %v11202 = vshll.u32 %v11146, 16
      %v11204 = vrot.slane %v11202, 5
      %v11205 = vor.u32 %v11201, %v11204
      %v11206 = vrot.slane %v11205, 4
      %v11208 = vshll.u32 %v11147, 16
      %v11210 = vrot.slane %v11208, 5
      %v11211 = vsel %vm10046, %v11206, %v11210
      %v11213 = vshrl.u32 %v11148, 16
      %v11215 = vrot.slane %v11213, 4
      %v11216 = vshll.u32 %v11148, 16
      %v11218 = vrot.slane %v11216, 5
      %v11219 = vor.u32 %v11215, %v11218
      %v11220 = vrot.slane %v11219, 4
      %v11222 = vshll.u32 %v11149, 16
      %v11224 = vrot.slane %v11222, 5
      %v11225 = vsel %vm10046, %v11220, %v11224
      %v11227 = vshrl.u32 %v11150, 16
      %v11229 = vrot.slane %v11227, 4
      %v11230 = vshll.u32 %v11150, 16
      %v11232 = vrot.slane %v11230, 5
      %v11233 = vor.u32 %v11229, %v11232
      %v11234 = vrot.slane %v11233, 4
      %v11236 = vshll.u32 %v11151, 16
      %v11238 = vrot.slane %v11236, 5
      %v11239 = vsel %vm10046, %v11234, %v11238
      %v11241 = vshrl.u32 %v11152, 16
      %v11243 = vrot.slane %v11241, 4
      %v11244 = vshll.u32 %v11152, 16
      %v11246 = vrot.slane %v11244, 5
      %v11247 = vor.u32 %v11243, %v11246
      %v11248 = vrot.slane %v11247, 4
      %v11250 = vshll.u32 %v11153, 16
      %v11252 = vrot.slane %v11250, 5
      %v11253 = vsel %vm10046, %v11248, %v11252
      %v11255 = vshrl.u32 %v11154, 16
      %v11257 = vrot.slane %v11255, 4
      %v11258 = vshll.u32 %v11154, 16
      %v11260 = vrot.slane %v11258, 5
      %v11261 = vor.u32 %v11257, %v11260
      %v11262 = vrot.slane %v11261, 4
      %v11264 = vshll.u32 %v11155, 16
      %v11266 = vrot.slane %v11264, 5
      %v11267 = vsel %vm10046, %v11262, %v11266
      %s11268 = scalar_lea.vmem %s2, 28
      %v11269 = vld [vmem:[%s11268] sm:$0xf]
      %v11270 = vunpack.c.l.b16 %v11169
      %v11271 = vunpack.c.l.b16 %v11183
      %v11272 = vunpack.c.l.b16 %v11197
      %v11273 = vunpack.c.l.b16 %v11211
      %v11274 = vunpack.c.l.b16 %v11225
      %v11275 = vunpack.c.l.b16 %v11239
      %v11276 = vunpack.c.l.b16 %v11253
      %v11277 = vunpack.c.l.b16 %v11267
      %v11278 = vpack.c.b16 %v11271, %v11270
      %v11279 = vpack.c.b16 %v11273, %v11272
      %v11280 = vpack.c.b16 %v11275, %v11274
      %v11281 = vpack.c.b16 %v11277, %v11276
      %v11283 = vsel %vm1623, %v11278, 0
      %v11286 = vsel %vm1623, %v11279, 0
      %v11289 = vsel %vm1623, %v11280, 0
      %v11292 = vsel %vm1623, %v11281, 0
      %v11295 = vsel %vm1645, %v11269, 0
      %11297 = vmatprep.subr.bf16.mxu0 0
      %11298 = vmatpush1.bf16.msra.mxu0 %v11295
      %11299 = vmatprep.subr.bf16.mxu0 0
      %11300 = vmatpush1.bf16.msra.mxu0 0
      %11301 = vmatprep.subr.bf16.mxu0 0
      %11302 = vmatpush1.bf16.msra.mxu0 0
      %11303 = vmatprep.subr.bf16.mxu0 0
      %11304 = vmatpush1.bf16.msra.mxu0 0
      %11305 = vmatprep.subr.bf16.mxu0 0
      %11306 = vmatpush1.bf16.msra.mxu0 0
      %11307 = vmatprep.subr.bf16.mxu0 0
      %11308 = vmatpush1.bf16.msra.mxu0 0
      %11309 = vmatprep.subr.bf16.mxu0 0
      %11310 = vmatpush1.bf16.msra.mxu0 0
      %11311 = vmatprep.subr.bf16.mxu0 0
      %11312 = vmatpush1.bf16.msra.mxu0 0
      %11313 = vmatprep.subr.bf16.mxu0 0
      %11314 = vmatpush1.bf16.msra.mxu0 0
      %11315 = vmatprep.subr.bf16.mxu0 0
      %11316 = vmatpush1.bf16.msra.mxu0 0
      %11317 = vmatprep.subr.bf16.mxu0 0
      %11318 = vmatpush1.bf16.msra.mxu0 0
      %11319 = vmatprep.subr.bf16.mxu0 0
      %11320 = vmatpush1.bf16.msra.mxu0 0
      %11321 = vmatprep.subr.bf16.mxu0 0
      %11322 = vmatpush1.bf16.msra.mxu0 0
      %11323 = vmatprep.subr.bf16.mxu0 0
      %11324 = vmatpush1.bf16.msra.mxu0 0
      %11325 = vmatprep.subr.bf16.mxu0 0
      %11326 = vmatpush1.bf16.msra.mxu0 0
      %11327 = vmatprep.subr.bf16.mxu0 0
      %11328 = vmatpush1.bf16.msra.mxu0 0
      %11329 = vmatprep.mubr.bf16.mxu0 0
      %11330 = vmatmul.mubr.bf16.gmra.mrb[0].mxu0 %v11283
      %v11331 = vpop.f32.mrb[0].mxu0
      %v11332 = vadd.f32 0.0, %v11331
      %v11333 = vpop.f32.mrb[0].mxu0
      %v11334 = vpop.f32.mrb[0].mxu0
      %v11335 = vadd.f32 0.0, %v11334
      %v11336 = vpop.f32.mrb[0].mxu0
      %11337 = vmatprep.mubr.bf16.mxu0 0
      %11338 = vmatmul.mubr.bf16.gmra.mrb[0].mxu0 %v11286
      %v11339 = vpop.f32.mrb[0].mxu0
      %v11340 = vadd.f32 0.0, %v11339
      %v11341 = vpop.f32.mrb[0].mxu0
      %v11342 = vpop.f32.mrb[0].mxu0
      %v11343 = vadd.f32 0.0, %v11342
      %v11344 = vpop.f32.mrb[0].mxu0
      %11345 = vmatprep.mubr.bf16.mxu0 0
      %11346 = vmatmul.mubr.bf16.gmra.mrb[0].mxu0 %v11289
      %v11347 = vpop.f32.mrb[0].mxu0
      %v11348 = vadd.f32 0.0, %v11347
      %v11349 = vpop.f32.mrb[0].mxu0
      %v11350 = vpop.f32.mrb[0].mxu0
      %v11351 = vadd.f32 0.0, %v11350
      %v11352 = vpop.f32.mrb[0].mxu0
      %11353 = vmatprep.mubr.bf16.mxu0 0
      %11354 = vmatmul.mubr.bf16.gmra.mrb[0].mxu0 %v11292
      %v11355 = vpop.f32.mrb[0].mxu0
      %v11356 = vadd.f32 0.0, %v11355
      %v11357 = vpop.f32.mrb[0].mxu0
      %v11358 = vpop.f32.mrb[0].mxu0
      %v11359 = vadd.f32 0.0, %v11358
      %v11360 = vpop.f32.mrb[0].mxu0
      %11361 = vdwg.mxu0
      %v11362 = vadd.f32 %v11132, %v11332
      %v11363 = vadd.f32 %v11133, %v11335
      %v11364 = vadd.f32 %v11134, %v11340
      %v11365 = vadd.f32 %v11135, %v11343
      %v11366 = vadd.f32 %v11136, %v11348
      %v11367 = vadd.f32 %v11137, %v11351
      %v11368 = vadd.f32 %v11138, %v11356
      %v11369 = vadd.f32 %v11139, %v11359
      %v11370 = vld [vmem:[%s11021] sm:$0xe]
      %v11371 = vld [vmem:[%s11021 + $0x8] sm:$0xe]
      %v11372 = vld [vmem:[%s11021 + $0x10] sm:$0xe]
      %v11373 = vld [vmem:[%s11021 + $0x18] sm:$0xe]
      %v11374 = vld [vmem:[%s11021 + $0x20] sm:$0xe]
      %v11375 = vld [vmem:[%s11021 + $0x28] sm:$0xe]
      %v11376 = vld [vmem:[%s11021 + $0x30] sm:$0xe]
      %v11377 = vld [vmem:[%s11021 + $0x38] sm:$0xe]
      %v11394 = vrot.slane %v11370, 5
      %v11395 = vrot.slane %v11394, 4
      %v11396 = vrot.slane %v11141, 5
      %v11397 = vsel %vm10379, %v11395, %v11396
      %v11398 = vrot.slane %v11371, 5
      %v11399 = vrot.slane %v11398, 4
      %v11400 = vrot.slane %v11143, 5
      %v11401 = vsel %vm10379, %v11399, %v11400
      %v11402 = vrot.slane %v11372, 5
      %v11403 = vrot.slane %v11402, 4
      %v11404 = vrot.slane %v11145, 5
      %v11405 = vsel %vm10379, %v11403, %v11404
      %v11406 = vrot.slane %v11373, 5
      %v11407 = vrot.slane %v11406, 4
      %v11408 = vrot.slane %v11147, 5
      %v11409 = vsel %vm10379, %v11407, %v11408
      %v11410 = vrot.slane %v11374, 5
      %v11411 = vrot.slane %v11410, 4
      %v11412 = vrot.slane %v11149, 5
      %v11413 = vsel %vm10379, %v11411, %v11412
      %v11414 = vrot.slane %v11375, 5
      %v11415 = vrot.slane %v11414, 4
      %v11416 = vrot.slane %v11151, 5
      %v11417 = vsel %vm10379, %v11415, %v11416
      %v11418 = vrot.slane %v11376, 5
      %v11419 = vrot.slane %v11418, 4
      %v11420 = vrot.slane %v11153, 5
      %v11421 = vsel %vm10379, %v11419, %v11420
      %v11422 = vrot.slane %v11377, 5
      %v11423 = vrot.slane %v11422, 4
      %v11424 = vrot.slane %v11155, 5
      %v11425 = vsel %vm10379, %v11423, %v11424
      %s11426 = scalar_lea.vmem %s2, 32
      %v11427 = vld [vmem:[%s11426] sm:$0xf]
      %v11428 = vunpack.c.l.b16 %v11397
      %v11429 = vunpack.c.l.b16 %v11401
      %v11430 = vunpack.c.l.b16 %v11405
      %v11431 = vunpack.c.l.b16 %v11409
      %v11432 = vunpack.c.l.b16 %v11413
      %v11433 = vunpack.c.l.b16 %v11417
      %v11434 = vunpack.c.l.b16 %v11421
      %v11435 = vunpack.c.l.b16 %v11425
      %v11436 = vpack.c.b16 %v11429, %v11428
      %v11437 = vpack.c.b16 %v11431, %v11430
      %v11438 = vpack.c.b16 %v11433, %v11432
      %v11439 = vpack.c.b16 %v11435, %v11434
      %v11441 = vsel %vm1623, %v11436, 0
      %v11444 = vsel %vm1623, %v11437, 0
      %v11447 = vsel %vm1623, %v11438, 0
      %v11450 = vsel %vm1623, %v11439, 0
      %v11453 = vsel %vm1645, %v11427, 0
      %11455 = vmatprep.subr.bf16.mxu0 0
      %11456 = vmatpush1.bf16.msra.mxu0 %v11453
      %11457 = vmatprep.subr.bf16.mxu0 0
      %11458 = vmatpush1.bf16.msra.mxu0 0
      %11459 = vmatprep.subr.bf16.mxu0 0
      %11460 = vmatpush1.bf16.msra.mxu0 0
      %11461 = vmatprep.subr.bf16.mxu0 0
      %11462 = vmatpush1.bf16.msra.mxu0 0
      %11463 = vmatprep.subr.bf16.mxu0 0
      %11464 = vmatpush1.bf16.msra.mxu0 0
      %11465 = vmatprep.subr.bf16.mxu0 0
      %11466 = vmatpush1.bf16.msra.mxu0 0
      %11467 = vmatprep.subr.bf16.mxu0 0
      %11468 = vmatpush1.bf16.msra.mxu0 0
      %11469 = vmatprep.subr.bf16.mxu0 0
      %11470 = vmatpush1.bf16.msra.mxu0 0
      %11471 = vmatprep.subr.bf16.mxu0 0
      %11472 = vmatpush1.bf16.msra.mxu0 0
      %11473 = vmatprep.subr.bf16.mxu0 0
      %11474 = vmatpush1.bf16.msra.mxu0 0
      %11475 = vmatprep.subr.bf16.mxu0 0
      %11476 = vmatpush1.bf16.msra.mxu0 0
      %11477 = vmatprep.subr.bf16.mxu0 0
      %11478 = vmatpush1.bf16.msra.mxu0 0
      %11479 = vmatprep.subr.bf16.mxu0 0
      %11480 = vmatpush1.bf16.msra.mxu0 0
      %11481 = vmatprep.subr.bf16.mxu0 0
      %11482 = vmatpush1.bf16.msra.mxu0 0
      %11483 = vmatprep.subr.bf16.mxu0 0
      %11484 = vmatpush1.bf16.msra.mxu0 0
      %11485 = vmatprep.subr.bf16.mxu0 0
      %11486 = vmatpush1.bf16.msra.mxu0 0
      %11487 = vmatprep.mubr.bf16.mxu0 0
      %11488 = vmatmul.mubr.bf16.gmra.mrb[0].mxu0 %v11441
      %v11489 = vpop.f32.mrb[0].mxu0
      %v11490 = vadd.f32 0.0, %v11489
      %v11491 = vpop.f32.mrb[0].mxu0
      %v11492 = vpop.f32.mrb[0].mxu0
      %v11493 = vadd.f32 0.0, %v11492
      %v11494 = vpop.f32.mrb[0].mxu0
      %11495 = vmatprep.mubr.bf16.mxu0 0
      %11496 = vmatmul.mubr.bf16.gmra.mrb[0].mxu0 %v11444
      %v11497 = vpop.f32.mrb[0].mxu0
      %v11498 = vadd.f32 0.0, %v11497
      %v11499 = vpop.f32.mrb[0].mxu0
      %v11500 = vpop.f32.mrb[0].mxu0
      %v11501 = vadd.f32 0.0, %v11500
      %v11502 = vpop.f32.mrb[0].mxu0
      %11503 = vmatprep.mubr.bf16.mxu0 0
      %11504 = vmatmul.mubr.bf16.gmra.mrb[0].mxu0 %v11447
      %v11505 = vpop.f32.mrb[0].mxu0
      %v11506 = vadd.f32 0.0, %v11505
      %v11507 = vpop.f32.mrb[0].mxu0
      %v11508 = vpop.f32.mrb[0].mxu0
      %v11509 = vadd.f32 0.0, %v11508
      %v11510 = vpop.f32.mrb[0].mxu0
      %11511 = vmatprep.mubr.bf16.mxu0 0
      %11512 = vmatmul.mubr.bf16.gmra.mrb[0].mxu0 %v11450
      %v11513 = vpop.f32.mrb[0].mxu0
      %v11514 = vadd.f32 0.0, %v11513
      %v11515 = vpop.f32.mrb[0].mxu0
      %v11516 = vpop.f32.mrb[0].mxu0
      %v11517 = vadd.f32 0.0, %v11516
      %v11518 = vpop.f32.mrb[0].mxu0
      %11519 = vdwg.mxu0
      %v11520 = vadd.f32 %v11362, %v11490
      %v11521 = vadd.f32 %v11363, %v11493
      %v11522 = vadd.f32 %v11364, %v11498
      %v11523 = vadd.f32 %v11365, %v11501
      %v11524 = vadd.f32 %v11366, %v11506
      %v11525 = vadd.f32 %v11367, %v11509
      %v11526 = vadd.f32 %v11368, %v11514
      %v11527 = vadd.f32 %v11369, %v11517
      %v11528 = vld [vmem:[%s6233] sm:$0xe]
      %v11529 = vld [vmem:[%s6233 + $0x4] sm:$0x1]
      %v11530 = vld [vmem:[%s6233 + $0x8] sm:$0xe]
      %v11531 = vld [vmem:[%s6233 + $0xc] sm:$0x1]
      %v11532 = vld [vmem:[%s6233 + $0x10] sm:$0xe]
      %v11533 = vld [vmem:[%s6233 + $0x14] sm:$0x1]
      %v11534 = vld [vmem:[%s6233 + $0x18] sm:$0xe]
      %v11535 = vld [vmem:[%s6233 + $0x1c] sm:$0x1]
      %v11536 = vld [vmem:[%s6233 + $0x20] sm:$0xe]
      %v11537 = vld [vmem:[%s6233 + $0x24] sm:$0x1]
      %v11538 = vld [vmem:[%s6233 + $0x28] sm:$0xe]
      %v11539 = vld [vmem:[%s6233 + $0x2c] sm:$0x1]
      %v11540 = vld [vmem:[%s6233 + $0x30] sm:$0xe]
      %v11541 = vld [vmem:[%s6233 + $0x34] sm:$0x1]
      %v11542 = vld [vmem:[%s6233 + $0x38] sm:$0xe]
      %v11543 = vld [vmem:[%s6233 + $0x3c] sm:$0x1]
      %v11560 = vrot.slane %v11528, 5
      %v11561 = vrot.slane %v11560, 4
      %v11562 = vrot.slane %v11529, 5
      %v11563 = vsel %vm10379, %v11561, %v11562
      %v11564 = vrot.slane %v11530, 5
      %v11565 = vrot.slane %v11564, 4
      %v11566 = vrot.slane %v11531, 5
      %v11567 = vsel %vm10379, %v11565, %v11566
      %v11568 = vrot.slane %v11532, 5
      %v11569 = vrot.slane %v11568, 4
      %v11570 = vrot.slane %v11533, 5
      %v11571 = vsel %vm10379, %v11569, %v11570
      %v11572 = vrot.slane %v11534, 5
      %v11573 = vrot.slane %v11572, 4
      %v11574 = vrot.slane %v11535, 5
      %v11575 = vsel %vm10379, %v11573, %v11574
      %v11576 = vrot.slane %v11536, 5
      %v11577 = vrot.slane %v11576, 4
      %v11578 = vrot.slane %v11537, 5
      %v11579 = vsel %vm10379, %v11577, %v11578
      %v11580 = vrot.slane %v11538, 5
      %v11581 = vrot.slane %v11580, 4
      %v11582 = vrot.slane %v11539, 5
      %v11583 = vsel %vm10379, %v11581, %v11582
      %v11584 = vrot.slane %v11540, 5
      %v11585 = vrot.slane %v11584, 4
      %v11586 = vrot.slane %v11541, 5
      %v11587 = vsel %vm10379, %v11585, %v11586
      %v11588 = vrot.slane %v11542, 5
      %v11589 = vrot.slane %v11588, 4
      %v11590 = vrot.slane %v11543, 5
      %v11591 = vsel %vm10379, %v11589, %v11590
      %v11600 = vld [vmem:[%s4] sm:$0x1]
      %v11602 = vlaneseq
      %v11603 = vshrl.u32 %v11602, 7
      %v11604 = vsub.s32 0, %v11603
      %v11605 = vrot.slane %v11600, %v11604
      %v11607 = vadd.f32 %v11520, %v11605
      %v11608 = vadd.f32 %v11521, %v11605
      %v11609 = vadd.f32 %v11522, %v11605
      %v11610 = vadd.f32 %v11523, %v11605
      %v11611 = vadd.f32 %v11524, %v11605
      %v11612 = vadd.f32 %v11525, %v11605
      %v11613 = vadd.f32 %v11526, %v11605
      %v11614 = vadd.f32 %v11527, %v11605
      %v11615 = vunpack.c.l.bf16 %v11563
      %v11616 = vunpack.c.l.bf16 %v11567
      %v11617 = vunpack.c.l.bf16 %v11571
      %v11618 = vunpack.c.l.bf16 %v11575
      %v11619 = vunpack.c.l.bf16 %v11579
      %v11620 = vunpack.c.l.bf16 %v11583
      %v11621 = vunpack.c.l.bf16 %v11587
      %v11622 = vunpack.c.l.bf16 %v11591
      %v11623 = vadd.f32 %v11607, %v11615
      %v11624 = vadd.f32 %v11608, %v11616
      %v11625 = vadd.f32 %v11609, %v11617
      %v11626 = vadd.f32 %v11610, %v11618
      %v11627 = vadd.f32 %v11611, %v11619
      %v11628 = vadd.f32 %v11612, %v11620
      %v11629 = vadd.f32 %v11613, %v11621
      %v11630 = vadd.f32 %v11614, %v11622
      %v11631 = vmax.f32 %v11623, 0.0
      %v11632 = vmax.f32 %v11624, 0.0
      %v11633 = vmax.f32 %v11625, 0.0
      %v11634 = vmax.f32 %v11626, 0.0
      %v11635 = vmax.f32 %v11627, 0.0
      %v11636 = vmax.f32 %v11628, 0.0
      %v11637 = vmax.f32 %v11629, 0.0
      %v11638 = vmax.f32 %v11630, 0.0
      %11639 = vst.msk [vmem:[%s224] sm:$0xff] %vm1623, %v11631
      %11640 = vst.msk [vmem:[%s224 + $0x8] sm:$0xff] %vm1623, %v11632
      %11641 = vst.msk [vmem:[%s224 + $0x10] sm:$0xff] %vm1623, %v11633
      %11642 = vst.msk [vmem:[%s224 + $0x18] sm:$0xff] %vm1623, %v11634
      %11643 = vst.msk [vmem:[%s224 + $0x20] sm:$0xff] %vm1623, %v11635
      %11644 = vst.msk [vmem:[%s224 + $0x28] sm:$0xff] %vm1623, %v11636
      %11645 = vst.msk [vmem:[%s224 + $0x30] sm:$0xff] %vm1623, %v11637
      %11646 = vst.msk [vmem:[%s224 + $0x38] sm:$0xff] %vm1623, %v11638
      %p11647 = scmp.lt.s32.totalorder %s16, 1
      %s11648 = scalar_select %p11647, %s16, 1
      %s11649 = smul.addr %s11648, 8
      %s11650 = smul.addr %s11649, 8
      %s11651 = scalar_lea.vmem %s5, %s11650
      // Predicated region
      $region41: #{baseblock_forward.1} parent=39 // pred_check
        %p11652 = pneg %p144
      $region42: #{baseblock_forward.1} parent=39 // pred_check_branch
        %11654 = sbr.rel (%p11652) target = $region44
      $region43: #{baseblock_forward.1} parent=39 // pred_region
        _
      $region44: #{baseblock_forward.1} parent=39 // pred_fallthru
        _
    $region40: #{baseblock_forward.1} parent=5 // pred_fallthru
      _
    %p11655 = scmp.le.s32.totalorder 2, %s11
    // Predicated region
    $region45: #{baseblock_forward.1} parent=5 // pred_check
      %p11656 = pneg %p11655
    $region46: #{baseblock_forward.1} parent=5 // pred_check_branch
      %11658 = sbr.rel (%p11656) target = $region48
    $region47: #{baseblock_forward.1} parent=5 // pred_region
      %s11659 = ssub.s32 %s11, 2
      // Predicated region
      $region49: #{baseblock_forward.1} parent=47 // pred_check
        %p11660 = pneg %p150
      $region50: #{baseblock_forward.1} parent=47 // pred_check_branch
        %11662 = sbr.rel (%p11660) target = $region52
      $region51: #{baseblock_forward.1} parent=47 // pred_region
        %p11663 = scmp.lt.s32.totalorder %s17, 1
        %s11664 = scalar_select %p11663, %s17, 1
        %s11665 = smul.addr %s11664, 8
        %s11666 = smul.addr %s11665, 8
        %s11667 = scalar_lea.vmem %s5, %s11666
      $region52: #{baseblock_forward.1} parent=47 // pred_fallthru
        _
    $region48: #{baseblock_forward.1} parent=5 // pred_fallthru
      _
  $region6: #{baseblock_forward.1} parent=0 // loop_footer
    %s15 = sadd.s32 1, %s11
  $region7: #{baseblock_forward.1} parent=0 // loop_footer_branch
    %10 = sbr.rel target = $region3
  $region8: #{baseblock_forward.1} parent=0 // loop_exit
    _

</llo_original>
